<compile_context>
chip_gen: v5e
topology: v5e:2x2
jax: 0.10.0
libtpu: 0.0.40
codegen_flags: <defaults>
</compile_context>

<pallas_src>
import numpy as np
import jax
import jax.numpy as jnp
from jax.experimental import pallas as pl
from jax.experimental.pallas import tpu as pltpu

C_IN, C_OUT = 3, 3
H_IN, W_IN = 16, 16
H_OUT, W_OUT = 28, 28
GRAY_COEF = (0.2989, 0.587, 0.114)
B_BLOCK = 32                      # images per grid step: 32*16=512 / 32*28=896 lanes


def _aa_bilinear_matrix(in_size, out_size):
    """(out,in) row-stochastic resampling matrix matching
    torchvision resize(..., bilinear, antialias=True).
    For upsampling (in < out) this equals plain bilinear interpolation."""
    scale = in_size / out_size
    support_scale = max(scale, 1.0)
    support = 1.0 * support_scale
    mat = np.zeros((out_size, in_size), dtype=np.float64)
    for i in range(out_size):
        center = scale * (i + 0.5)
        xmin = max(int(center - support + 0.5), 0)
        xmax = min(int(center + support + 0.5), in_size)
        ws = [max(0.0, 1.0 - abs((j - center + 0.5) / support_scale))
              for j in range(xmin, xmax)]
        total = sum(ws)
        for k, j in enumerate(range(xmin, xmax)):
            mat[i, j] = ws[k] / total
    return mat.astype(np.float32)


def transform_kernel(x_ref, w_ref, b_ref, cmask_ref, rh_ref, rwbd_ref, o_ref,
                     pad_ref):
    # x_ref:     (3, 16, B*16)      batch block, images side by side on the lane axis
    # w_ref:     (81,)   SMEM       flattened OIHW conv weight
    # b_ref:     (3,)    SMEM       conv bias
    # cmask_ref: (2, B*16)          per-image column validity for kx=0 / kx=2 taps
    # rh_ref:    (28, 16)           row resample matrix, vflip folded in
    # rwbd_ref:  (B*16, B*28)       block-diag column resample matrix, hflip folded in
    # o_ref:     (28, B*28)         output slab (lane-dense)
    # pad_ref:   (3, 18, B*16+2)    VMEM scratch providing the conv's zero padding
    bw = x_ref.shape[2]

    # Zero-pad in VMEM (cheap; re-done every step so it is safe under
    # "parallel" grid sharding across TensorCores).
    pad_ref[...] = jnp.zeros_like(pad_ref)
    pad_ref[:, 1:H_IN + 1, 1:bw + 1] = x_ref[...]

    mask_l = cmask_ref[0:1, :]        # zero where w_local == 0   (kx = 0 tap)
    mask_r = cmask_ref[1:2, :]        # zero where w_local == W-1 (kx = 2 tap)

    # conv3x3 + bias as slab-wide MACs (each op uses full vregs over 32 images)
    accs = [jnp.zeros((H_IN, bw), jnp.float32) + b_ref[co] for co in range(C_OUT)]
    for ci in range(C_IN):
        base = pad_ref[ci]                        # (18, bw+2)
        cols = []
        for kx in range(3):
            c = base[:, kx:kx + bw]               # (18, bw) column-shifted slab
            if kx == 0:
                c = c * mask_l                    # kill cross-image leakage
            elif kx == 2:
                c = c * mask_r
            cols.append(c)
        for ky in range(3):
            for kx in range(3):
                s = cols[kx][ky:ky + H_IN, :]     # (16, bw) shifted window
                for co in range(C_OUT):
                    wv = w_ref[((co * C_IN + ci) * 3 + ky) * 3 + kx]
                    accs[co] = accs[co] + wv * s

    # ReLU then grayscale on the 16x16 grid (grayscale & resize commute -> exact)
    gray = (GRAY_COEF[0] * jnp.maximum(accs[0], 0.0)
            + GRAY_COEF[1] * jnp.maximum(accs[1], 0.0)
            + GRAY_COEF[2] * jnp.maximum(accs[2], 0.0))          # (16, bw)

    # Batched separable bilinear resize with both flips folded into the matrices:
    #   (28,16) @ (16, B*16) -> (28, B*16)
    #   (28, B*16) @ block-diag(B*16, B*28) -> (28, B*28)
    t = jnp.dot(rh_ref[...], gray, preferred_element_type=jnp.float32)
    o_ref[...] = jnp.dot(t, rwbd_ref[...], preferred_element_type=jnp.float32)


def transformation_model(x, conv_w, conv_b, *, block=B_BLOCK):
    n = x.shape[0]
    nb = max(-(-n // block), 1)
    n_pad = nb * block
    bw, bo = block * W_IN, block * W_OUT

    if n_pad != n:                                # pad batch to a block multiple
        x = jnp.pad(x, ((0, n_pad - n), (0, 0), (0, 0), (0, 0)))
    # Layout plumbing only: put the batch on the lane axis -> (C, H, N*W)
    x_t = jnp.transpose(x, (1, 2, 0, 3)).reshape(C_IN, H_IN, n_pad * W_IN)

    # Host-side constants (flips folded into the resample matrices)
    rh_f = _aa_bilinear_matrix(H_IN, H_OUT)[::-1, :]            # (28, 16), vflip
    rwt_f = _aa_bilinear_matrix(W_IN, W_OUT).T[:, ::-1]         # (16, 28), hflip
    rwbd = np.zeros((bw, bo), np.float32)
    for i in range(block):
        rwbd[i * W_IN:(i + 1) * W_IN, i * W_OUT:(i + 1) * W_OUT] = rwt_f
    wloc = np.arange(bw) % W_IN
    cmask = np.stack([(wloc != 0), (wloc != W_IN - 1)]).astype(np.float32)

    out_slab = pl.pallas_call(
        transform_kernel,
        out_shape=jax.ShapeDtypeStruct((H_OUT, n_pad * W_OUT), jnp.float32),
        grid=(nb,),
        in_specs=[
            pl.BlockSpec((C_IN, H_IN, bw), lambda i: (0, 0, i)),
            pl.BlockSpec(memory_space=pltpu.MemorySpace.SMEM),   # conv weight scalars
            pl.BlockSpec(memory_space=pltpu.MemorySpace.SMEM),   # conv bias scalars
            pl.BlockSpec((2, bw), lambda i: (0, 0)),             # column masks
            pl.BlockSpec((H_OUT, H_IN), lambda i: (0, 0)),       # rh_f
            pl.BlockSpec((bw, bo), lambda i: (0, 0)),            # block-diag rw
        ],
        out_specs=pl.BlockSpec((H_OUT, bo), lambda i: (0, i)),
        scratch_shapes=[pltpu.VMEM((C_IN, H_IN + 2, bw + 2), jnp.float32)],
        compiler_params=pltpu.CompilerParams(
            dimension_semantics=("parallel",)),
    )(x_t, conv_w.reshape(-1).astype(jnp.float32), conv_b.astype(jnp.float32),
      jnp.asarray(cmask), jnp.asarray(rh_f), jnp.asarray(rwbd))

    out = out_slab.reshape(H_OUT, n_pad, W_OUT).transpose(1, 0, 2)[:n]
    return out[:, None, :, :]                                   # (N, 1, 28, 28)


def reference(x, conv_w, conv_b):
    """Pure-JAX reference of the same forward pass (high precision)."""
    hi = jax.lax.Precision.HIGHEST
    y = jax.lax.conv_general_dilated(
        x, conv_w, window_strides=(1, 1), padding=((1, 1), (1, 1)),
        dimension_numbers=("NCHW", "OIHW", "NCHW"), precision=hi)
    y = jax.nn.relu(y + conv_b[None, :, None, None])
    rh = jnp.asarray(_aa_bilinear_matrix(H_IN, H_OUT))
    rw = jnp.asarray(_aa_bilinear_matrix(W_IN, W_OUT))
    res = jnp.einsum("ih,nchw,jw->ncij", rh, y, rw, precision=hi)
    coef = jnp.asarray(GRAY_COEF, jnp.float32)
    gray = jnp.einsum("c,ncij->nij", coef, res)[:, None]         # (N,1,28,28)
    return gray[..., ::-1, ::-1]                                 # hflip + vflip


if __name__ == "__main__":
    key = jax.random.PRNGKey(0)
    kx, kw, kb = jax.random.split(key, 3)
    x = jax.random.uniform(kx, (2, C_IN, H_IN, W_IN), jnp.float32)
    fan_in = C_IN * 3 * 3
    bound = 1.0 / np.sqrt(fan_in)
    conv_w = jax.random.uniform(kw, (C_OUT, C_IN, 3, 3), jnp.float32, -bound, bound)
    conv_b = jax.random.uniform(kb, (C_OUT,), jnp.float32, -bound, bound)

    out = jax.block_until_ready(transformation_model(x, conv_w, conv_b))
    assert out.shape == (2, 1, H_OUT, W_OUT) and out.dtype == jnp.float32

    ref = jax.block_until_ready(reference(x, conv_w, conv_b))
    # Tightened from 2e-2; 2e-3 keeps margin for MXU f32 pass rounding differences.
    np.testing.assert_allclose(np.asarray(out), np.asarray(ref), rtol=2e-3, atol=2e-3)
    print("KERNEL_OK")
</pallas_src>

<mosaic_0001>
module attributes {stable_mosaic.version = 11 : i64} {
  func.func @transform_kernel(%arg0: i32, %arg1: memref<3x16x512xf32, #tpu.memory_space<vmem>>, %arg2: memref<81xf32, #tpu.memory_space<smem>>, %arg3: memref<3xf32, #tpu.memory_space<smem>>, %arg4: memref<2x512xf32, #tpu.memory_space<vmem>>, %arg5: memref<28x16xf32, #tpu.memory_space<vmem>>, %arg6: memref<512x896xf32, #tpu.memory_space<vmem>>, %arg7: memref<28x896xf32, #tpu.memory_space<vmem>>, %arg8: memref<3x18x514xf32, #tpu.memory_space<vmem>>) attributes {dimension_semantics = [#tpu.dimension_semantics<parallel>], iteration_bounds = array<i64: 1>, scalar_prefetch = 0 : i64, scratch_operands = 1 : i64, tpu.core_type = #tpu.core_type<tc>, window_params = [{transform_indices = @transform_0, window_bounds = array<i64: 3, 16, 512>}, {transform_indices = @transform_1, window_bounds = array<i64: 81>}, {transform_indices = @transform_2, window_bounds = array<i64: 3>}, {pipeline_mode = #tpu.pipeline_mode<synchronous>, transform_indices = @transform_3, window_bounds = array<i64: 2, 512>}, {pipeline_mode = #tpu.pipeline_mode<synchronous>, transform_indices = @transform_4, window_bounds = array<i64: 28, 16>}, {pipeline_mode = #tpu.pipeline_mode<synchronous>, transform_indices = @transform_5, window_bounds = array<i64: 512, 896>}, {transform_indices = @transform_6, window_bounds = array<i64: 28, 896>}]} {
    %cst = arith.constant 0.000000e+00 : f32
    %0 = vector.broadcast %cst : f32 to vector<3x18x514xf32>
    %c0 = arith.constant 0 : index
    %c0_0 = arith.constant 0 : index
    %c0_1 = arith.constant 0 : index
    %1 = vector.load %arg8[%c0, %c0_0, %c0_1] : memref<3x18x514xf32, #tpu.memory_space<vmem>>, vector<3x18x514xf32>
    tpu.vector_store %arg8[%c0, %c0_0, %c0_1], %0 {strides = array<i32>} : memref<3x18x514xf32, #tpu.memory_space<vmem>>, vector<3x18x514xf32>,
    %c0_2 = arith.constant 0 : index
    %c0_3 = arith.constant 0 : index
    %c0_4 = arith.constant 0 : index
    %2 = vector.load %arg1[%c0_2, %c0_3, %c0_4] : memref<3x16x512xf32, #tpu.memory_space<vmem>>, vector<3x16x512xf32>
    %c0_5 = arith.constant 0 : index
    %c1 = arith.constant 1 : index
    %c1_6 = arith.constant 1 : index
    %3 = vector.load %arg8[%c0_5, %c1, %c1_6] : memref<3x18x514xf32, #tpu.memory_space<vmem>>, vector<3x16x512xf32>
    tpu.vector_store %arg8[%c0_5, %c1, %c1_6], %2 {strides = array<i32>} : memref<3x18x514xf32, #tpu.memory_space<vmem>>, vector<3x16x512xf32>,
    %c0_7 = arith.constant 0 : index
    %c0_8 = arith.constant 0 : index
    %4 = vector.load %arg4[%c0_7, %c0_8] : memref<2x512xf32, #tpu.memory_space<vmem>>, vector<1x512xf32>
    %c1_9 = arith.constant 1 : index
    %c0_10 = arith.constant 0 : index
    %5 = vector.load %arg4[%c1_9, %c0_10] : memref<2x512xf32, #tpu.memory_space<vmem>>, vector<1x512xf32>
    %cst_11 = arith.constant 0.000000e+00 : f32
    %6 = vector.broadcast %cst_11 : f32 to vector<16x512xf32>
    %c0_12 = arith.constant 0 : index
    %7 = memref.load %arg3[%c0_12] : memref<3xf32, #tpu.memory_space<smem>>
    %8 = vector.broadcast %7 : f32 to vector<16x512xf32>
    %9 = arith.addf %6, %8 : vector<16x512xf32>
    %cst_13 = arith.constant 0.000000e+00 : f32
    %10 = vector.broadcast %cst_13 : f32 to vector<16x512xf32>
    %c1_14 = arith.constant 1 : index
    %11 = memref.load %arg3[%c1_14] : memref<3xf32, #tpu.memory_space<smem>>
    %12 = vector.broadcast %11 : f32 to vector<16x512xf32>
    %13 = arith.addf %10, %12 : vector<16x512xf32>
    %cst_15 = arith.constant 0.000000e+00 : f32
    %14 = vector.broadcast %cst_15 : f32 to vector<16x512xf32>
    %c2 = arith.constant 2 : index
    %15 = memref.load %arg3[%c2] : memref<3xf32, #tpu.memory_space<smem>>
    %16 = vector.broadcast %15 : f32 to vector<16x512xf32>
    %17 = arith.addf %14, %16 : vector<16x512xf32>
    %c0_16 = arith.constant 0 : index
    %c0_17 = arith.constant 0 : index
    %c0_18 = arith.constant 0 : index
    %18 = vector.load %arg8[%c0_16, %c0_17, %c0_18] : memref<3x18x514xf32, #tpu.memory_space<vmem>>, vector<1x18x514xf32>
    %19 = vector.shape_cast %18 : vector<1x18x514xf32> to vector<18x514xf32>
    %20 = vector.extract_strided_slice %19 {offsets = [0, 0], sizes = [18, 512], strides = [1, 1]} : vector<18x514xf32> to vector<18x512xf32>
    %21 = vector.broadcast %4 : vector<1x512xf32> to vector<18x512xf32>
    %22 = arith.mulf %20, %21 : vector<18x512xf32>
    %23 = vector.extract_strided_slice %19 {offsets = [0, 1], sizes = [18, 512], strides = [1, 1]} : vector<18x514xf32> to vector<18x512xf32>
    %24 = vector.extract_strided_slice %19 {offsets = [0, 2], sizes = [18, 512], strides = [1, 1]} : vector<18x514xf32> to vector<18x512xf32>
    %25 = vector.broadcast %5 : vector<1x512xf32> to vector<18x512xf32>
    %26 = arith.mulf %24, %25 : vector<18x512xf32>
    %27 = vector.extract_strided_slice %22 {offsets = [0, 0], sizes = [16, 512], strides = [1, 1]} : vector<18x512xf32> to vector<16x512xf32>
    %c0_19 = arith.constant 0 : index
    %28 = memref.load %arg2[%c0_19] : memref<81xf32, #tpu.memory_space<smem>>
    %29 = vector.broadcast %28 : f32 to vector<16x512xf32>
    %30 = arith.mulf %29, %27 : vector<16x512xf32>
    %31 = arith.addf %9, %30 : vector<16x512xf32>
    %c27 = arith.constant 27 : index
    %32 = memref.load %arg2[%c27] : memref<81xf32, #tpu.memory_space<smem>>
    %33 = vector.broadcast %32 : f32 to vector<16x512xf32>
    %34 = arith.mulf %33, %27 : vector<16x512xf32>
    %35 = arith.addf %13, %34 : vector<16x512xf32>
    %c54 = arith.constant 54 : index
    %36 = memref.load %arg2[%c54] : memref<81xf32, #tpu.memory_space<smem>>
    %37 = vector.broadcast %36 : f32 to vector<16x512xf32>
    %38 = arith.mulf %37, %27 : vector<16x512xf32>
    %39 = arith.addf %17, %38 : vector<16x512xf32>
    %40 = vector.extract_strided_slice %23 {offsets = [0, 0], sizes = [16, 512], strides = [1, 1]} : vector<18x512xf32> to vector<16x512xf32>
    %c1_20 = arith.constant 1 : index
    %41 = memref.load %arg2[%c1_20] : memref<81xf32, #tpu.memory_space<smem>>
    %42 = vector.broadcast %41 : f32 to vector<16x512xf32>
    %43 = arith.mulf %42, %40 : vector<16x512xf32>
    %44 = arith.addf %31, %43 : vector<16x512xf32>
    %c28 = arith.constant 28 : index
    %45 = memref.load %arg2[%c28] : memref<81xf32, #tpu.memory_space<smem>>
    %46 = vector.broadcast %45 : f32 to vector<16x512xf32>
    %47 = arith.mulf %46, %40 : vector<16x512xf32>
    %48 = arith.addf %35, %47 : vector<16x512xf32>
    %c55 = arith.constant 55 : index
    %49 = memref.load %arg2[%c55] : memref<81xf32, #tpu.memory_space<smem>>
    %50 = vector.broadcast %49 : f32 to vector<16x512xf32>
    %51 = arith.mulf %50, %40 : vector<16x512xf32>
    %52 = arith.addf %39, %51 : vector<16x512xf32>
    %53 = vector.extract_strided_slice %26 {offsets = [0, 0], sizes = [16, 512], strides = [1, 1]} : vector<18x512xf32> to vector<16x512xf32>
    %c2_21 = arith.constant 2 : index
    %54 = memref.load %arg2[%c2_21] : memref<81xf32, #tpu.memory_space<smem>>
    %55 = vector.broadcast %54 : f32 to vector<16x512xf32>
    %56 = arith.mulf %55, %53 : vector<16x512xf32>
    %57 = arith.addf %44, %56 : vector<16x512xf32>
    %c29 = arith.constant 29 : index
    %58 = memref.load %arg2[%c29] : memref<81xf32, #tpu.memory_space<smem>>
    %59 = vector.broadcast %58 : f32 to vector<16x512xf32>
    %60 = arith.mulf %59, %53 : vector<16x512xf32>
    %61 = arith.addf %48, %60 : vector<16x512xf32>
    %c56 = arith.constant 56 : index
    %62 = memref.load %arg2[%c56] : memref<81xf32, #tpu.memory_space<smem>>
    %63 = vector.broadcast %62 : f32 to vector<16x512xf32>
    %64 = arith.mulf %63, %53 : vector<16x512xf32>
    %65 = arith.addf %52, %64 : vector<16x512xf32>
    %66 = vector.extract_strided_slice %22 {offsets = [1, 0], sizes = [16, 512], strides = [1, 1]} : vector<18x512xf32> to vector<16x512xf32>
    %c3 = arith.constant 3 : index
    %67 = memref.load %arg2[%c3] : memref<81xf32, #tpu.memory_space<smem>>
    %68 = vector.broadcast %67 : f32 to vector<16x512xf32>
    %69 = arith.mulf %68, %66 : vector<16x512xf32>
    %70 = arith.addf %57, %69 : vector<16x512xf32>
    %c30 = arith.constant 30 : index
    %71 = memref.load %arg2[%c30] : memref<81xf32, #tpu.memory_space<smem>>
    %72 = vector.broadcast %71 : f32 to vector<16x512xf32>
    %73 = arith.mulf %72, %66 : vector<16x512xf32>
    %74 = arith.addf %61, %73 : vector<16x512xf32>
    %c57 = arith.constant 57 : index
    %75 = memref.load %arg2[%c57] : memref<81xf32, #tpu.memory_space<smem>>
    %76 = vector.broadcast %75 : f32 to vector<16x512xf32>
    %77 = arith.mulf %76, %66 : vector<16x512xf32>
    %78 = arith.addf %65, %77 : vector<16x512xf32>
    %79 = vector.extract_strided_slice %23 {offsets = [1, 0], sizes = [16, 512], strides = [1, 1]} : vector<18x512xf32> to vector<16x512xf32>
    %c4 = arith.constant 4 : index
    %80 = memref.load %arg2[%c4] : memref<81xf32, #tpu.memory_space<smem>>
    %81 = vector.broadcast %80 : f32 to vector<16x512xf32>
    %82 = arith.mulf %81, %79 : vector<16x512xf32>
    %83 = arith.addf %70, %82 : vector<16x512xf32>
    %c31 = arith.constant 31 : index
    %84 = memref.load %arg2[%c31] : memref<81xf32, #tpu.memory_space<smem>>
    %85 = vector.broadcast %84 : f32 to vector<16x512xf32>
    %86 = arith.mulf %85, %79 : vector<16x512xf32>
    %87 = arith.addf %74, %86 : vector<16x512xf32>
    %c58 = arith.constant 58 : index
    %88 = memref.load %arg2[%c58] : memref<81xf32, #tpu.memory_space<smem>>
    %89 = vector.broadcast %88 : f32 to vector<16x512xf32>
    %90 = arith.mulf %89, %79 : vector<16x512xf32>
    %91 = arith.addf %78, %90 : vector<16x512xf32>
    %92 = vector.extract_strided_slice %26 {offsets = [1, 0], sizes = [16, 512], strides = [1, 1]} : vector<18x512xf32> to vector<16x512xf32>
    %c5 = arith.constant 5 : index
    %93 = memref.load %arg2[%c5] : memref<81xf32, #tpu.memory_space<smem>>
    %94 = vector.broadcast %93 : f32 to vector<16x512xf32>
    %95 = arith.mulf %94, %92 : vector<16x512xf32>
    %96 = arith.addf %83, %95 : vector<16x512xf32>
    %c32 = arith.constant 32 : index
    %97 = memref.load %arg2[%c32] : memref<81xf32, #tpu.memory_space<smem>>
    %98 = vector.broadcast %97 : f32 to vector<16x512xf32>
    %99 = arith.mulf %98, %92 : vector<16x512xf32>
    %100 = arith.addf %87, %99 : vector<16x512xf32>
    %c59 = arith.constant 59 : index
    %101 = memref.load %arg2[%c59] : memref<81xf32, #tpu.memory_space<smem>>
    %102 = vector.broadcast %101 : f32 to vector<16x512xf32>
    %103 = arith.mulf %102, %92 : vector<16x512xf32>
    %104 = arith.addf %91, %103 : vector<16x512xf32>
    %105 = vector.extract_strided_slice %22 {offsets = [2, 0], sizes = [16, 512], strides = [1, 1]} : vector<18x512xf32> to vector<16x512xf32>
    %c6 = arith.constant 6 : index
    %106 = memref.load %arg2[%c6] : memref<81xf32, #tpu.memory_space<smem>>
    %107 = vector.broadcast %106 : f32 to vector<16x512xf32>
    %108 = arith.mulf %107, %105 : vector<16x512xf32>
    %109 = arith.addf %96, %108 : vector<16x512xf32>
    %c33 = arith.constant 33 : index
    %110 = memref.load %arg2[%c33] : memref<81xf32, #tpu.memory_space<smem>>
    %111 = vector.broadcast %110 : f32 to vector<16x512xf32>
    %112 = arith.mulf %111, %105 : vector<16x512xf32>
    %113 = arith.addf %100, %112 : vector<16x512xf32>
    %c60 = arith.constant 60 : index
    %114 = memref.load %arg2[%c60] : memref<81xf32, #tpu.memory_space<smem>>
    %115 = vector.broadcast %114 : f32 to vector<16x512xf32>
    %116 = arith.mulf %115, %105 : vector<16x512xf32>
    %117 = arith.addf %104, %116 : vector<16x512xf32>
    %118 = vector.extract_strided_slice %23 {offsets = [2, 0], sizes = [16, 512], strides = [1, 1]} : vector<18x512xf32> to vector<16x512xf32>
    %c7 = arith.constant 7 : index
    %119 = memref.load %arg2[%c7] : memref<81xf32, #tpu.memory_space<smem>>
    %120 = vector.broadcast %119 : f32 to vector<16x512xf32>
    %121 = arith.mulf %120, %118 : vector<16x512xf32>
    %122 = arith.addf %109, %121 : vector<16x512xf32>
    %c34 = arith.constant 34 : index
    %123 = memref.load %arg2[%c34] : memref<81xf32, #tpu.memory_space<smem>>
    %124 = vector.broadcast %123 : f32 to vector<16x512xf32>
    %125 = arith.mulf %124, %118 : vector<16x512xf32>
    %126 = arith.addf %113, %125 : vector<16x512xf32>
    %c61 = arith.constant 61 : index
    %127 = memref.load %arg2[%c61] : memref<81xf32, #tpu.memory_space<smem>>
    %128 = vector.broadcast %127 : f32 to vector<16x512xf32>
    %129 = arith.mulf %128, %118 : vector<16x512xf32>
    %130 = arith.addf %117, %129 : vector<16x512xf32>
    %131 = vector.extract_strided_slice %26 {offsets = [2, 0], sizes = [16, 512], strides = [1, 1]} : vector<18x512xf32> to vector<16x512xf32>
    %c8 = arith.constant 8 : index
    %132 = memref.load %arg2[%c8] : memref<81xf32, #tpu.memory_space<smem>>
    %133 = vector.broadcast %132 : f32 to vector<16x512xf32>
    %134 = arith.mulf %133, %131 : vector<16x512xf32>
    %135 = arith.addf %122, %134 : vector<16x512xf32>
    %c35 = arith.constant 35 : index
    %136 = memref.load %arg2[%c35] : memref<81xf32, #tpu.memory_space<smem>>
    %137 = vector.broadcast %136 : f32 to vector<16x512xf32>
    %138 = arith.mulf %137, %131 : vector<16x512xf32>
    %139 = arith.addf %126, %138 : vector<16x512xf32>
    %c62 = arith.constant 62 : index
    %140 = memref.load %arg2[%c62] : memref<81xf32, #tpu.memory_space<smem>>
    %141 = vector.broadcast %140 : f32 to vector<16x512xf32>
    %142 = arith.mulf %141, %131 : vector<16x512xf32>
    %143 = arith.addf %130, %142 : vector<16x512xf32>
    %c1_22 = arith.constant 1 : index
    %c0_23 = arith.constant 0 : index
    %c0_24 = arith.constant 0 : index
    %144 = vector.load %arg8[%c1_22, %c0_23, %c0_24] : memref<3x18x514xf32, #tpu.memory_space<vmem>>, vector<1x18x514xf32>
    %145 = vector.shape_cast %144 : vector<1x18x514xf32> to vector<18x514xf32>
    %146 = vector.extract_strided_slice %145 {offsets = [0, 0], sizes = [18, 512], strides = [1, 1]} : vector<18x514xf32> to vector<18x512xf32>
    %147 = vector.broadcast %4 : vector<1x512xf32> to vector<18x512xf32>
    %148 = arith.mulf %146, %147 : vector<18x512xf32>
    %149 = vector.extract_strided_slice %145 {offsets = [0, 1], sizes = [18, 512], strides = [1, 1]} : vector<18x514xf32> to vector<18x512xf32>
    %150 = vector.extract_strided_slice %145 {offsets = [0, 2], sizes = [18, 512], strides = [1, 1]} : vector<18x514xf32> to vector<18x512xf32>
    %151 = vector.broadcast %5 : vector<1x512xf32> to vector<18x512xf32>
    %152 = arith.mulf %150, %151 : vector<18x512xf32>
    %153 = vector.extract_strided_slice %148 {offsets = [0, 0], sizes = [16, 512], strides = [1, 1]} : vector<18x512xf32> to vector<16x512xf32>
    %c9 = arith.constant 9 : index
    %154 = memref.load %arg2[%c9] : memref<81xf32, #tpu.memory_space<smem>>
    %155 = vector.broadcast %154 : f32 to vector<16x512xf32>
    %156 = arith.mulf %155, %153 : vector<16x512xf32>
    %157 = arith.addf %135, %156 : vector<16x512xf32>
    %c36 = arith.constant 36 : index
    %158 = memref.load %arg2[%c36] : memref<81xf32, #tpu.memory_space<smem>>
    %159 = vector.broadcast %158 : f32 to vector<16x512xf32>
    %160 = arith.mulf %159, %153 : vector<16x512xf32>
    %161 = arith.addf %139, %160 : vector<16x512xf32>
    %c63 = arith.constant 63 : index
    %162 = memref.load %arg2[%c63] : memref<81xf32, #tpu.memory_space<smem>>
    %163 = vector.broadcast %162 : f32 to vector<16x512xf32>
    %164 = arith.mulf %163, %153 : vector<16x512xf32>
    %165 = arith.addf %143, %164 : vector<16x512xf32>
    %166 = vector.extract_strided_slice %149 {offsets = [0, 0], sizes = [16, 512], strides = [1, 1]} : vector<18x512xf32> to vector<16x512xf32>
    %c10 = arith.constant 10 : index
    %167 = memref.load %arg2[%c10] : memref<81xf32, #tpu.memory_space<smem>>
    %168 = vector.broadcast %167 : f32 to vector<16x512xf32>
    %169 = arith.mulf %168, %166 : vector<16x512xf32>
    %170 = arith.addf %157, %169 : vector<16x512xf32>
    %c37 = arith.constant 37 : index
    %171 = memref.load %arg2[%c37] : memref<81xf32, #tpu.memory_space<smem>>
    %172 = vector.broadcast %171 : f32 to vector<16x512xf32>
    %173 = arith.mulf %172, %166 : vector<16x512xf32>
    %174 = arith.addf %161, %173 : vector<16x512xf32>
    %c64 = arith.constant 64 : index
    %175 = memref.load %arg2[%c64] : memref<81xf32, #tpu.memory_space<smem>>
    %176 = vector.broadcast %175 : f32 to vector<16x512xf32>
    %177 = arith.mulf %176, %166 : vector<16x512xf32>
    %178 = arith.addf %165, %177 : vector<16x512xf32>
    %179 = vector.extract_strided_slice %152 {offsets = [0, 0], sizes = [16, 512], strides = [1, 1]} : vector<18x512xf32> to vector<16x512xf32>
    %c11 = arith.constant 11 : index
    %180 = memref.load %arg2[%c11] : memref<81xf32, #tpu.memory_space<smem>>
    %181 = vector.broadcast %180 : f32 to vector<16x512xf32>
    %182 = arith.mulf %181, %179 : vector<16x512xf32>
    %183 = arith.addf %170, %182 : vector<16x512xf32>
    %c38 = arith.constant 38 : index
    %184 = memref.load %arg2[%c38] : memref<81xf32, #tpu.memory_space<smem>>
    %185 = vector.broadcast %184 : f32 to vector<16x512xf32>
    %186 = arith.mulf %185, %179 : vector<16x512xf32>
    %187 = arith.addf %174, %186 : vector<16x512xf32>
    %c65 = arith.constant 65 : index
    %188 = memref.load %arg2[%c65] : memref<81xf32, #tpu.memory_space<smem>>
    %189 = vector.broadcast %188 : f32 to vector<16x512xf32>
    %190 = arith.mulf %189, %179 : vector<16x512xf32>
    %191 = arith.addf %178, %190 : vector<16x512xf32>
    %192 = vector.extract_strided_slice %148 {offsets = [1, 0], sizes = [16, 512], strides = [1, 1]} : vector<18x512xf32> to vector<16x512xf32>
    %c12 = arith.constant 12 : index
    %193 = memref.load %arg2[%c12] : memref<81xf32, #tpu.memory_space<smem>>
    %194 = vector.broadcast %193 : f32 to vector<16x512xf32>
    %195 = arith.mulf %194, %192 : vector<16x512xf32>
    %196 = arith.addf %183, %195 : vector<16x512xf32>
    %c39 = arith.constant 39 : index
    %197 = memref.load %arg2[%c39] : memref<81xf32, #tpu.memory_space<smem>>
    %198 = vector.broadcast %197 : f32 to vector<16x512xf32>
    %199 = arith.mulf %198, %192 : vector<16x512xf32>
    %200 = arith.addf %187, %199 : vector<16x512xf32>
    %c66 = arith.constant 66 : index
    %201 = memref.load %arg2[%c66] : memref<81xf32, #tpu.memory_space<smem>>
    %202 = vector.broadcast %201 : f32 to vector<16x512xf32>
    %203 = arith.mulf %202, %192 : vector<16x512xf32>
    %204 = arith.addf %191, %203 : vector<16x512xf32>
    %205 = vector.extract_strided_slice %149 {offsets = [1, 0], sizes = [16, 512], strides = [1, 1]} : vector<18x512xf32> to vector<16x512xf32>
    %c13 = arith.constant 13 : index
    %206 = memref.load %arg2[%c13] : memref<81xf32, #tpu.memory_space<smem>>
    %207 = vector.broadcast %206 : f32 to vector<16x512xf32>
    %208 = arith.mulf %207, %205 : vector<16x512xf32>
    %209 = arith.addf %196, %208 : vector<16x512xf32>
    %c40 = arith.constant 40 : index
    %210 = memref.load %arg2[%c40] : memref<81xf32, #tpu.memory_space<smem>>
    %211 = vector.broadcast %210 : f32 to vector<16x512xf32>
    %212 = arith.mulf %211, %205 : vector<16x512xf32>
    %213 = arith.addf %200, %212 : vector<16x512xf32>
    %c67 = arith.constant 67 : index
    %214 = memref.load %arg2[%c67] : memref<81xf32, #tpu.memory_space<smem>>
    %215 = vector.broadcast %214 : f32 to vector<16x512xf32>
    %216 = arith.mulf %215, %205 : vector<16x512xf32>
    %217 = arith.addf %204, %216 : vector<16x512xf32>
    %218 = vector.extract_strided_slice %152 {offsets = [1, 0], sizes = [16, 512], strides = [1, 1]} : vector<18x512xf32> to vector<16x512xf32>
    %c14 = arith.constant 14 : index
    %219 = memref.load %arg2[%c14] : memref<81xf32, #tpu.memory_space<smem>>
    %220 = vector.broadcast %219 : f32 to vector<16x512xf32>
    %221 = arith.mulf %220, %218 : vector<16x512xf32>
    %222 = arith.addf %209, %221 : vector<16x512xf32>
    %c41 = arith.constant 41 : index
    %223 = memref.load %arg2[%c41] : memref<81xf32, #tpu.memory_space<smem>>
    %224 = vector.broadcast %223 : f32 to vector<16x512xf32>
    %225 = arith.mulf %224, %218 : vector<16x512xf32>
    %226 = arith.addf %213, %225 : vector<16x512xf32>
    %c68 = arith.constant 68 : index
    %227 = memref.load %arg2[%c68] : memref<81xf32, #tpu.memory_space<smem>>
    %228 = vector.broadcast %227 : f32 to vector<16x512xf32>
    %229 = arith.mulf %228, %218 : vector<16x512xf32>
    %230 = arith.addf %217, %229 : vector<16x512xf32>
    %231 = vector.extract_strided_slice %148 {offsets = [2, 0], sizes = [16, 512], strides = [1, 1]} : vector<18x512xf32> to vector<16x512xf32>
    %c15 = arith.constant 15 : index
    %232 = memref.load %arg2[%c15] : memref<81xf32, #tpu.memory_space<smem>>
    %233 = vector.broadcast %232 : f32 to vector<16x512xf32>
    %234 = arith.mulf %233, %231 : vector<16x512xf32>
    %235 = arith.addf %222, %234 : vector<16x512xf32>
    %c42 = arith.constant 42 : index
    %236 = memref.load %arg2[%c42] : memref<81xf32, #tpu.memory_space<smem>>
    %237 = vector.broadcast %236 : f32 to vector<16x512xf32>
    %238 = arith.mulf %237, %231 : vector<16x512xf32>
    %239 = arith.addf %226, %238 : vector<16x512xf32>
    %c69 = arith.constant 69 : index
    %240 = memref.load %arg2[%c69] : memref<81xf32, #tpu.memory_space<smem>>
    %241 = vector.broadcast %240 : f32 to vector<16x512xf32>
    %242 = arith.mulf %241, %231 : vector<16x512xf32>
    %243 = arith.addf %230, %242 : vector<16x512xf32>
    %244 = vector.extract_strided_slice %149 {offsets = [2, 0], sizes = [16, 512], strides = [1, 1]} : vector<18x512xf32> to vector<16x512xf32>
    %c16 = arith.constant 16 : index
    %245 = memref.load %arg2[%c16] : memref<81xf32, #tpu.memory_space<smem>>
    %246 = vector.broadcast %245 : f32 to vector<16x512xf32>
    %247 = arith.mulf %246, %244 : vector<16x512xf32>
    %248 = arith.addf %235, %247 : vector<16x512xf32>
    %c43 = arith.constant 43 : index
    %249 = memref.load %arg2[%c43] : memref<81xf32, #tpu.memory_space<smem>>
    %250 = vector.broadcast %249 : f32 to vector<16x512xf32>
    %251 = arith.mulf %250, %244 : vector<16x512xf32>
    %252 = arith.addf %239, %251 : vector<16x512xf32>
    %c70 = arith.constant 70 : index
    %253 = memref.load %arg2[%c70] : memref<81xf32, #tpu.memory_space<smem>>
    %254 = vector.broadcast %253 : f32 to vector<16x512xf32>
    %255 = arith.mulf %254, %244 : vector<16x512xf32>
    %256 = arith.addf %243, %255 : vector<16x512xf32>
    %257 = vector.extract_strided_slice %152 {offsets = [2, 0], sizes = [16, 512], strides = [1, 1]} : vector<18x512xf32> to vector<16x512xf32>
    %c17 = arith.constant 17 : index
    %258 = memref.load %arg2[%c17] : memref<81xf32, #tpu.memory_space<smem>>
    %259 = vector.broadcast %258 : f32 to vector<16x512xf32>
    %260 = arith.mulf %259, %257 : vector<16x512xf32>
    %261 = arith.addf %248, %260 : vector<16x512xf32>
    %c44 = arith.constant 44 : index
    %262 = memref.load %arg2[%c44] : memref<81xf32, #tpu.memory_space<smem>>
    %263 = vector.broadcast %262 : f32 to vector<16x512xf32>
    %264 = arith.mulf %263, %257 : vector<16x512xf32>
    %265 = arith.addf %252, %264 : vector<16x512xf32>
    %c71 = arith.constant 71 : index
    %266 = memref.load %arg2[%c71] : memref<81xf32, #tpu.memory_space<smem>>
    %267 = vector.broadcast %266 : f32 to vector<16x512xf32>
    %268 = arith.mulf %267, %257 : vector<16x512xf32>
    %269 = arith.addf %256, %268 : vector<16x512xf32>
    %c2_25 = arith.constant 2 : index
    %c0_26 = arith.constant 0 : index
    %c0_27 = arith.constant 0 : index
    %270 = vector.load %arg8[%c2_25, %c0_26, %c0_27] : memref<3x18x514xf32, #tpu.memory_space<vmem>>, vector<1x18x514xf32>
    %271 = vector.shape_cast %270 : vector<1x18x514xf32> to vector<18x514xf32>
    %272 = vector.extract_strided_slice %271 {offsets = [0, 0], sizes = [18, 512], strides = [1, 1]} : vector<18x514xf32> to vector<18x512xf32>
    %273 = vector.broadcast %4 : vector<1x512xf32> to vector<18x512xf32>
    %274 = arith.mulf %272, %273 : vector<18x512xf32>
    %275 = vector.extract_strided_slice %271 {offsets = [0, 1], sizes = [18, 512], strides = [1, 1]} : vector<18x514xf32> to vector<18x512xf32>
    %276 = vector.extract_strided_slice %271 {offsets = [0, 2], sizes = [18, 512], strides = [1, 1]} : vector<18x514xf32> to vector<18x512xf32>
    %277 = vector.broadcast %5 : vector<1x512xf32> to vector<18x512xf32>
    %278 = arith.mulf %276, %277 : vector<18x512xf32>
    %279 = vector.extract_strided_slice %274 {offsets = [0, 0], sizes = [16, 512], strides = [1, 1]} : vector<18x512xf32> to vector<16x512xf32>
    %c18 = arith.constant 18 : index
    %280 = memref.load %arg2[%c18] : memref<81xf32, #tpu.memory_space<smem>>
    %281 = vector.broadcast %280 : f32 to vector<16x512xf32>
    %282 = arith.mulf %281, %279 : vector<16x512xf32>
    %283 = arith.addf %261, %282 : vector<16x512xf32>
    %c45 = arith.constant 45 : index
    %284 = memref.load %arg2[%c45] : memref<81xf32, #tpu.memory_space<smem>>
    %285 = vector.broadcast %284 : f32 to vector<16x512xf32>
    %286 = arith.mulf %285, %279 : vector<16x512xf32>
    %287 = arith.addf %265, %286 : vector<16x512xf32>
    %c72 = arith.constant 72 : index
    %288 = memref.load %arg2[%c72] : memref<81xf32, #tpu.memory_space<smem>>
    %289 = vector.broadcast %288 : f32 to vector<16x512xf32>
    %290 = arith.mulf %289, %279 : vector<16x512xf32>
    %291 = arith.addf %269, %290 : vector<16x512xf32>
    %292 = vector.extract_strided_slice %275 {offsets = [0, 0], sizes = [16, 512], strides = [1, 1]} : vector<18x512xf32> to vector<16x512xf32>
    %c19 = arith.constant 19 : index
    %293 = memref.load %arg2[%c19] : memref<81xf32, #tpu.memory_space<smem>>
    %294 = vector.broadcast %293 : f32 to vector<16x512xf32>
    %295 = arith.mulf %294, %292 : vector<16x512xf32>
    %296 = arith.addf %283, %295 : vector<16x512xf32>
    %c46 = arith.constant 46 : index
    %297 = memref.load %arg2[%c46] : memref<81xf32, #tpu.memory_space<smem>>
    %298 = vector.broadcast %297 : f32 to vector<16x512xf32>
    %299 = arith.mulf %298, %292 : vector<16x512xf32>
    %300 = arith.addf %287, %299 : vector<16x512xf32>
    %c73 = arith.constant 73 : index
    %301 = memref.load %arg2[%c73] : memref<81xf32, #tpu.memory_space<smem>>
    %302 = vector.broadcast %301 : f32 to vector<16x512xf32>
    %303 = arith.mulf %302, %292 : vector<16x512xf32>
    %304 = arith.addf %291, %303 : vector<16x512xf32>
    %305 = vector.extract_strided_slice %278 {offsets = [0, 0], sizes = [16, 512], strides = [1, 1]} : vector<18x512xf32> to vector<16x512xf32>
    %c20 = arith.constant 20 : index
    %306 = memref.load %arg2[%c20] : memref<81xf32, #tpu.memory_space<smem>>
    %307 = vector.broadcast %306 : f32 to vector<16x512xf32>
    %308 = arith.mulf %307, %305 : vector<16x512xf32>
    %309 = arith.addf %296, %308 : vector<16x512xf32>
    %c47 = arith.constant 47 : index
    %310 = memref.load %arg2[%c47] : memref<81xf32, #tpu.memory_space<smem>>
    %311 = vector.broadcast %310 : f32 to vector<16x512xf32>
    %312 = arith.mulf %311, %305 : vector<16x512xf32>
    %313 = arith.addf %300, %312 : vector<16x512xf32>
    %c74 = arith.constant 74 : index
    %314 = memref.load %arg2[%c74] : memref<81xf32, #tpu.memory_space<smem>>
    %315 = vector.broadcast %314 : f32 to vector<16x512xf32>
    %316 = arith.mulf %315, %305 : vector<16x512xf32>
    %317 = arith.addf %304, %316 : vector<16x512xf32>
    %318 = vector.extract_strided_slice %274 {offsets = [1, 0], sizes = [16, 512], strides = [1, 1]} : vector<18x512xf32> to vector<16x512xf32>
    %c21 = arith.constant 21 : index
    %319 = memref.load %arg2[%c21] : memref<81xf32, #tpu.memory_space<smem>>
    %320 = vector.broadcast %319 : f32 to vector<16x512xf32>
    %321 = arith.mulf %320, %318 : vector<16x512xf32>
    %322 = arith.addf %309, %321 : vector<16x512xf32>
    %c48 = arith.constant 48 : index
    %323 = memref.load %arg2[%c48] : memref<81xf32, #tpu.memory_space<smem>>
    %324 = vector.broadcast %323 : f32 to vector<16x512xf32>
    %325 = arith.mulf %324, %318 : vector<16x512xf32>
    %326 = arith.addf %313, %325 : vector<16x512xf32>
    %c75 = arith.constant 75 : index
    %327 = memref.load %arg2[%c75] : memref<81xf32, #tpu.memory_space<smem>>
    %328 = vector.broadcast %327 : f32 to vector<16x512xf32>
    %329 = arith.mulf %328, %318 : vector<16x512xf32>
    %330 = arith.addf %317, %329 : vector<16x512xf32>
    %331 = vector.extract_strided_slice %275 {offsets = [1, 0], sizes = [16, 512], strides = [1, 1]} : vector<18x512xf32> to vector<16x512xf32>
    %c22 = arith.constant 22 : index
    %332 = memref.load %arg2[%c22] : memref<81xf32, #tpu.memory_space<smem>>
    %333 = vector.broadcast %332 : f32 to vector<16x512xf32>
    %334 = arith.mulf %333, %331 : vector<16x512xf32>
    %335 = arith.addf %322, %334 : vector<16x512xf32>
    %c49 = arith.constant 49 : index
    %336 = memref.load %arg2[%c49] : memref<81xf32, #tpu.memory_space<smem>>
    %337 = vector.broadcast %336 : f32 to vector<16x512xf32>
    %338 = arith.mulf %337, %331 : vector<16x512xf32>
    %339 = arith.addf %326, %338 : vector<16x512xf32>
    %c76 = arith.constant 76 : index
    %340 = memref.load %arg2[%c76] : memref<81xf32, #tpu.memory_space<smem>>
    %341 = vector.broadcast %340 : f32 to vector<16x512xf32>
    %342 = arith.mulf %341, %331 : vector<16x512xf32>
    %343 = arith.addf %330, %342 : vector<16x512xf32>
    %344 = vector.extract_strided_slice %278 {offsets = [1, 0], sizes = [16, 512], strides = [1, 1]} : vector<18x512xf32> to vector<16x512xf32>
    %c23 = arith.constant 23 : index
    %345 = memref.load %arg2[%c23] : memref<81xf32, #tpu.memory_space<smem>>
    %346 = vector.broadcast %345 : f32 to vector<16x512xf32>
    %347 = arith.mulf %346, %344 : vector<16x512xf32>
    %348 = arith.addf %335, %347 : vector<16x512xf32>
    %c50 = arith.constant 50 : index
    %349 = memref.load %arg2[%c50] : memref<81xf32, #tpu.memory_space<smem>>
    %350 = vector.broadcast %349 : f32 to vector<16x512xf32>
    %351 = arith.mulf %350, %344 : vector<16x512xf32>
    %352 = arith.addf %339, %351 : vector<16x512xf32>
    %c77 = arith.constant 77 : index
    %353 = memref.load %arg2[%c77] : memref<81xf32, #tpu.memory_space<smem>>
    %354 = vector.broadcast %353 : f32 to vector<16x512xf32>
    %355 = arith.mulf %354, %344 : vector<16x512xf32>
    %356 = arith.addf %343, %355 : vector<16x512xf32>
    %357 = vector.extract_strided_slice %274 {offsets = [2, 0], sizes = [16, 512], strides = [1, 1]} : vector<18x512xf32> to vector<16x512xf32>
    %c24 = arith.constant 24 : index
    %358 = memref.load %arg2[%c24] : memref<81xf32, #tpu.memory_space<smem>>
    %359 = vector.broadcast %358 : f32 to vector<16x512xf32>
    %360 = arith.mulf %359, %357 : vector<16x512xf32>
    %361 = arith.addf %348, %360 : vector<16x512xf32>
    %c51 = arith.constant 51 : index
    %362 = memref.load %arg2[%c51] : memref<81xf32, #tpu.memory_space<smem>>
    %363 = vector.broadcast %362 : f32 to vector<16x512xf32>
    %364 = arith.mulf %363, %357 : vector<16x512xf32>
    %365 = arith.addf %352, %364 : vector<16x512xf32>
    %c78 = arith.constant 78 : index
    %366 = memref.load %arg2[%c78] : memref<81xf32, #tpu.memory_space<smem>>
    %367 = vector.broadcast %366 : f32 to vector<16x512xf32>
    %368 = arith.mulf %367, %357 : vector<16x512xf32>
    %369 = arith.addf %356, %368 : vector<16x512xf32>
    %370 = vector.extract_strided_slice %275 {offsets = [2, 0], sizes = [16, 512], strides = [1, 1]} : vector<18x512xf32> to vector<16x512xf32>
    %c25 = arith.constant 25 : index
    %371 = memref.load %arg2[%c25] : memref<81xf32, #tpu.memory_space<smem>>
    %372 = vector.broadcast %371 : f32 to vector<16x512xf32>
    %373 = arith.mulf %372, %370 : vector<16x512xf32>
    %374 = arith.addf %361, %373 : vector<16x512xf32>
    %c52 = arith.constant 52 : index
    %375 = memref.load %arg2[%c52] : memref<81xf32, #tpu.memory_space<smem>>
    %376 = vector.broadcast %375 : f32 to vector<16x512xf32>
    %377 = arith.mulf %376, %370 : vector<16x512xf32>
    %378 = arith.addf %365, %377 : vector<16x512xf32>
    %c79 = arith.constant 79 : index
    %379 = memref.load %arg2[%c79] : memref<81xf32, #tpu.memory_space<smem>>
    %380 = vector.broadcast %379 : f32 to vector<16x512xf32>
    %381 = arith.mulf %380, %370 : vector<16x512xf32>
    %382 = arith.addf %369, %381 : vector<16x512xf32>
    %383 = vector.extract_strided_slice %278 {offsets = [2, 0], sizes = [16, 512], strides = [1, 1]} : vector<18x512xf32> to vector<16x512xf32>
    %c26 = arith.constant 26 : index
    %384 = memref.load %arg2[%c26] : memref<81xf32, #tpu.memory_space<smem>>
    %385 = vector.broadcast %384 : f32 to vector<16x512xf32>
    %386 = arith.mulf %385, %383 : vector<16x512xf32>
    %387 = arith.addf %374, %386 : vector<16x512xf32>
    %c53 = arith.constant 53 : index
    %388 = memref.load %arg2[%c53] : memref<81xf32, #tpu.memory_space<smem>>
    %389 = vector.broadcast %388 : f32 to vector<16x512xf32>
    %390 = arith.mulf %389, %383 : vector<16x512xf32>
    %391 = arith.addf %378, %390 : vector<16x512xf32>
    %c80 = arith.constant 80 : index
    %392 = memref.load %arg2[%c80] : memref<81xf32, #tpu.memory_space<smem>>
    %393 = vector.broadcast %392 : f32 to vector<16x512xf32>
    %394 = arith.mulf %393, %383 : vector<16x512xf32>
    %395 = arith.addf %382, %394 : vector<16x512xf32>
    %cst_28 = arith.constant 0.000000e+00 : f32
    %396 = vector.broadcast %cst_28 : f32 to vector<16x512xf32>
    %397 = arith.maximumf %387, %396 : vector<16x512xf32>
    %cst_29 = arith.constant 2.989000e-01 : f32
    %398 = vector.broadcast %cst_29 : f32 to vector<16x512xf32>
    %399 = arith.mulf %398, %397 : vector<16x512xf32>
    %cst_30 = arith.constant 0.000000e+00 : f32
    %400 = vector.broadcast %cst_30 : f32 to vector<16x512xf32>
    %401 = arith.maximumf %391, %400 : vector<16x512xf32>
    %cst_31 = arith.constant 5.870000e-01 : f32
    %402 = vector.broadcast %cst_31 : f32 to vector<16x512xf32>
    %403 = arith.mulf %402, %401 : vector<16x512xf32>
    %404 = arith.addf %399, %403 : vector<16x512xf32>
    %cst_32 = arith.constant 0.000000e+00 : f32
    %405 = vector.broadcast %cst_32 : f32 to vector<16x512xf32>
    %406 = arith.maximumf %395, %405 : vector<16x512xf32>
    %cst_33 = arith.constant 1.140000e-01 : f32
    %407 = vector.broadcast %cst_33 : f32 to vector<16x512xf32>
    %408 = arith.mulf %407, %406 : vector<16x512xf32>
    %409 = arith.addf %404, %408 : vector<16x512xf32>
    %c0_34 = arith.constant 0 : index
    %c0_35 = arith.constant 0 : index
    %410 = vector.load %arg5[%c0_34, %c0_35] : memref<28x16xf32, #tpu.memory_space<vmem>>, vector<28x16xf32>
    %cst_36 = arith.constant dense<0.000000e+00> : vector<28x512xf32>
    %411 = tpu.matmul %410, %409, %cst_36 {dimension_numbers = #tpu.dot_dimension_numbers<[1], [0], [0], [1], [0, 0, 1, 1], [], []>} : vector<28x16xf32>, vector<16x512xf32>, vector<28x512xf32> -> vector<28x512xf32>
    %c0_37 = arith.constant 0 : index
    %c0_38 = arith.constant 0 : index
    %412 = vector.load %arg6[%c0_37, %c0_38] : memref<512x896xf32, #tpu.memory_space<vmem>>, vector<512x896xf32>
    %cst_39 = arith.constant dense<0.000000e+00> : vector<28x896xf32>
    %413 = tpu.matmul %411, %412, %cst_39 {dimension_numbers = #tpu.dot_dimension_numbers<[1], [0], [0], [1], [0, 0, 1, 1], [], []>} : vector<28x512xf32>, vector<512x896xf32>, vector<28x896xf32> -> vector<28x896xf32>
    %c0_40 = arith.constant 0 : index
    %c0_41 = arith.constant 0 : index
    %414 = vector.load %arg7[%c0_40, %c0_41] : memref<28x896xf32, #tpu.memory_space<vmem>>, vector<28x896xf32>
    tpu.vector_store %arg7[%c0_40, %c0_41], %413 {strides = array<i32>} : memref<28x896xf32, #tpu.memory_space<vmem>>, vector<28x896xf32>,
    return
  }
  func.func @transform_0(%arg0: i32) -> (i32, i32, i32) {
    %c0_i32 = arith.constant 0 : i32
    %c0_i32_0 = arith.constant 0 : i32
    %c0_i32_1 = arith.constant 0 : i32
    return %c0_i32, %c0_i32_0, %arg0 : i32, i32, i32
  }
  func.func @transform_1(%arg0: i32) -> i32 {
    %c0_i32 = arith.constant 0 : i32
    %c0_i32_0 = arith.constant 0 : i32
    return %c0_i32 : i32
  }
  func.func @transform_2(%arg0: i32) -> i32 {
    %c0_i32 = arith.constant 0 : i32
    %c0_i32_0 = arith.constant 0 : i32
    return %c0_i32 : i32
  }
  func.func @transform_3(%arg0: i32) -> (i32, i32) {
    %c0_i32 = arith.constant 0 : i32
    %c0_i32_0 = arith.constant 0 : i32
    %c0_i32_1 = arith.constant 0 : i32
    return %c0_i32, %c0_i32_0 : i32, i32
  }
  func.func @transform_4(%arg0: i32) -> (i32, i32) {
    %c0_i32 = arith.constant 0 : i32
    %c0_i32_0 = arith.constant 0 : i32
    %c0_i32_1 = arith.constant 0 : i32
    return %c0_i32, %c0_i32_0 : i32, i32
  }
  func.func @transform_5(%arg0: i32) -> (i32, i32) {
    %c0_i32 = arith.constant 0 : i32
    %c0_i32_0 = arith.constant 0 : i32
    %c0_i32_1 = arith.constant 0 : i32
    return %c0_i32, %c0_i32_0 : i32, i32
  }
  func.func @transform_6(%arg0: i32) -> (i32, i32) {
    %c0_i32 = arith.constant 0 : i32
    %c0_i32_0 = arith.constant 0 : i32
    return %c0_i32, %arg0 : i32, i32
  }
}

</mosaic_0001>

<llo_original>
// kernel: tpu_custom_call.1
$region0: #{tpu_custom_call.1}
  #allocation0 [shape = 'u32[]', space=smem, size = 0x4, offset = 0x4, fixed_abs, tag = 'smem constant byte address 0x4 - core index']
  #allocation1 [shape = 'u32[72,128]{1,0:T(1,128)}', space=vmem, size = 0x9000, scoped, tag = 'internal scratch']
  #allocation2 [shape = 'f32[3,18,514]{2,1,0:T(8,128)}', space=vmem, size = 0x2d000, scoped, tag = 'scratch operand']
  %s0 = inlined_call_operand.hbm [shape: f32[3,16,512], index: 0, kind: input, shape index: {}]
  %s1 = inlined_call_operand.hbm [shape: f32[81], index: 1, kind: input, shape index: {}]
  %s2 = inlined_call_operand.hbm [shape: f32[3], index: 2, kind: input, shape index: {}]
  %s3 = inlined_call_operand.hbm [shape: f32[2,512], index: 3, kind: input, shape index: {}]
  %s4 = inlined_call_operand.vmem [shape: f32[28,16], index: 4, kind: input, shape index: {}]
  %s5 = inlined_call_operand.hbm [shape: f32[512,896], index: 5, kind: input, shape index: {}]
  %s6 = inlined_call_operand.hbm [shape: f32[28,896], index: 6, kind: output, shape index: {}]
  %s7 = sld [smem:[#allocation0]]
  $region54: #{tpu_custom_call.1} parent=0
    _
  %s9 = ssub.s32 1, %s7
  %s10 = scalar_select 0, %s9, %s7
  $region1: #{tpu_custom_call.1} parent=0
    #allocation3 [shape = 'u8[98304]{0}', space=vmem, size = 0x18000, scoped, tag = 'input window, operand 0, single buffered']
    #allocation4 [shape = 's32[1]{0}', space=sflag, size = 0x4, scoped, tag = 'scoped memory for tpu_custom_call.1']
    #allocation5 [shape = 's32[1]{0}', space=sflag, size = 0x4, scoped, tag = 'scoped memory for tpu_custom_call.1']
    #allocation6 [shape = 's32[1]{0}', space=sflag, size = 0x4, scoped, tag = 'scoped memory for tpu_custom_call.1']
    #allocation7 [shape = 'u8[512]{0}', space=smem, size = 0x200, scoped, tag = 'input window, operand 1, single buffered']
    #allocation8 [shape = 'u8[512]{0}', space=smem, size = 0x200, scoped, tag = 'input window, operand 2, single buffered']
    #allocation9 [shape = 's32[1]{0}', space=sflag, size = 0x4, scoped, tag = 'scoped memory for tpu_custom_call.1']
    #allocation10 [shape = 'u8[4096]{0}', space=vmem, size = 0x1000, scoped, tag = 'input window, operand 3, single buffered']
    #allocation11 [shape = 's32[1]{0}', space=sflag, size = 0x4, scoped, tag = 'scoped memory for tpu_custom_call.1']
    #allocation12 [shape = 'u8[1835008]{0}', space=vmem, size = 0x1c0000, scoped, tag = 'input window, operand 5, single buffered']
    #allocation13 [shape = 'u8[114688]{0}', space=vmem, size = 0x1c000, scoped, tag = 'output window, operand 0, single buffered']
    %11 = vsyncpa [#allocation4], 0
    %12 = vsyncpa [#allocation6], 0
    %13 = vsyncpa [#allocation9], 0
    %14 = vsyncpa [#allocation11], 0
    %15 = vsyncpa [#allocation5], 0
    // Predicated region
    $region2: #{tpu_custom_call.1} parent=1 // pred_check
      _
    $region3: #{tpu_custom_call.1} parent=1 // pred_check_branch
      %17 = sbr.rel (0) target = $region5
    $region4: #{tpu_custom_call.1} parent=1 // pred_region
      %19 = vsyncadd [#allocation4], 0
      %s20 = sshll.u32 %s0, 4
      %s21 = int_to_ptr.hbm [resolvable:$true] %s20
      %s22 = sshll.u32 [#allocation3], 4
      %s23 = int_to_ptr.vmem [resolvable:$true] %s22
      %28 = dma.hbm_to_vmem [thread:$0]  %s21, 3072, %s23, [#allocation4], 512, 512, 32
    $region5: #{tpu_custom_call.1} parent=1 // pred_fallthru
      _
    // Predicated region
    $region6: #{tpu_custom_call.1} parent=1 // pred_check
      _
    $region7: #{tpu_custom_call.1} parent=1 // pred_check_branch
      %30 = sbr.rel (0) target = $region9
    $region8: #{tpu_custom_call.1} parent=1 // pred_region
      %32 = vsyncadd [#allocation6], 0
      %s34 = sshll.u32 %s1, 4
      %s35 = int_to_ptr.hbm [resolvable:$true] %s34
      %37 = dma.hbm_to_smem %s35, 16, [#allocation7], [#allocation6]
    $region9: #{tpu_custom_call.1} parent=1 // pred_fallthru
      _
    // Predicated region
    $region10: #{tpu_custom_call.1} parent=1 // pred_check
      _
    $region11: #{tpu_custom_call.1} parent=1 // pred_check_branch
      %39 = sbr.rel (0) target = $region13
    $region12: #{tpu_custom_call.1} parent=1 // pred_region
      %41 = vsyncadd [#allocation9], 0
      %s43 = sshll.u32 %s2, 4
      %s44 = int_to_ptr.hbm [resolvable:$true] %s43
      %46 = dma.hbm_to_smem %s44, 16, [#allocation8], [#allocation9]
    $region13: #{tpu_custom_call.1} parent=1 // pred_fallthru
      _
    // Predicated region
    $region14: #{tpu_custom_call.1} parent=1 // pred_check
      _
    $region15: #{tpu_custom_call.1} parent=1 // pred_check_branch
      %48 = sbr.rel (0) target = $region17
    $region16: #{tpu_custom_call.1} parent=1 // pred_region
      %50 = vsyncadd [#allocation11], 0
      %s52 = sshll.u32 %s3, 4
      %s53 = int_to_ptr.hbm [resolvable:$true] %s52
      %s54 = sshll.u32 [#allocation10], 4
      %s55 = int_to_ptr.vmem [resolvable:$true] %s54
      %57 = dma.hbm_to_vmem [thread:$0]  %s53, 128, %s55, [#allocation11]
    $region17: #{tpu_custom_call.1} parent=1 // pred_fallthru
      _
    // Predicated region
    $region18: #{tpu_custom_call.1} parent=1 // pred_check
      _
    $region19: #{tpu_custom_call.1} parent=1 // pred_check_branch
      %59 = sbr.rel (0) target = $region21
    $region20: #{tpu_custom_call.1} parent=1 // pred_region
      _
    $region21: #{tpu_custom_call.1} parent=1 // pred_fallthru
      _
    // Predicated region
    $region22: #{tpu_custom_call.1} parent=1 // pred_check
      _
    $region23: #{tpu_custom_call.1} parent=1 // pred_check_branch
      %61 = sbr.rel (0) target = $region25
    $region24: #{tpu_custom_call.1} parent=1 // pred_region
      %63 = vsyncadd [#allocation11], 0
      %s64 = sshll.u32 %s5, 4
      %s65 = int_to_ptr.hbm [resolvable:$true] %s64
      %s66 = sshll.u32 [#allocation12], 4
      %s67 = int_to_ptr.vmem [resolvable:$true] %s66
      %72 = dma.hbm_to_vmem [thread:$0]  %s65, 57344, %s67, [#allocation11], 896, 896, 56
    $region25: #{tpu_custom_call.1} parent=1 // pred_fallthru
      _
    // Predicated region
    $region26: #{tpu_custom_call.1} parent=1 // pred_check
      _
    $region27: #{tpu_custom_call.1} parent=1 // pred_check_branch
      %74 = sbr.rel (0) target = $region29
    $region28: #{tpu_custom_call.1} parent=1 // pred_region
      %76 = dma.done [#allocation4], 3072
    $region29: #{tpu_custom_call.1} parent=1 // pred_fallthru
      _
    // Predicated region
    $region30: #{tpu_custom_call.1} parent=1 // pred_check
      _
    $region31: #{tpu_custom_call.1} parent=1 // pred_check_branch
      %78 = sbr.rel (0) target = $region33
    $region32: #{tpu_custom_call.1} parent=1 // pred_region
      %80 = dma.done [#allocation6], 16
    $region33: #{tpu_custom_call.1} parent=1 // pred_fallthru
      _
    // Predicated region
    $region34: #{tpu_custom_call.1} parent=1 // pred_check
      _
    $region35: #{tpu_custom_call.1} parent=1 // pred_check_branch
      %82 = sbr.rel (0) target = $region37
    $region36: #{tpu_custom_call.1} parent=1 // pred_region
      %84 = dma.done [#allocation9], 16
    $region37: #{tpu_custom_call.1} parent=1 // pred_fallthru
      _
    // Predicated region
    $region38: #{tpu_custom_call.1} parent=1 // pred_check
      _
    $region39: #{tpu_custom_call.1} parent=1 // pred_check_branch
      %86 = sbr.rel (0) target = $region41
    $region40: #{tpu_custom_call.1} parent=1 // pred_region
      %88 = dma.done [#allocation11], 128
    $region41: #{tpu_custom_call.1} parent=1 // pred_fallthru
      _
    // Predicated region
    $region42: #{tpu_custom_call.1} parent=1 // pred_check
      _
    $region43: #{tpu_custom_call.1} parent=1 // pred_check_branch
      %90 = sbr.rel (0) target = $region45
    $region44: #{tpu_custom_call.1} parent=1 // pred_region
      %92 = dma.done [#allocation11], 57344
    $region45: #{tpu_custom_call.1} parent=1 // pred_fallthru
      _
    %93 = sfence
    %94 = vst [vmem:[#allocation2] sm:$0xff] 0.0
    %95 = vst [vmem:[#allocation2 + $0x8] sm:$0xff] 0.0
    %96 = vst [vmem:[#allocation2 + $0x10] sm:$0xff] 0.0
    %97 = vst [vmem:[#allocation2 + $0x18] sm:$0xff] 0.0
    %vm98 = vcmask 15360
    %99 = vst.msk [vmem:[#allocation2 + $0x20] sm:$0xff] %vm98, 0.0
    %100 = vst [vmem:[#allocation2 + $0x28] sm:$0xff] 0.0
    %101 = vst [vmem:[#allocation2 + $0x30] sm:$0xff] 0.0
    %102 = vst [vmem:[#allocation2 + $0x38] sm:$0xff] 0.0
    %103 = vst [vmem:[#allocation2 + $0x40] sm:$0xff] 0.0
    %104 = vst.msk [vmem:[#allocation2 + $0x48] sm:$0xff] %vm98, 0.0
    %105 = vst [vmem:[#allocation2 + $0x50] sm:$0x3] 0.0
    %106 = vst [vmem:[#allocation2 + $0x58] sm:$0x3] 0.0
    %107 = vst [vmem:[#allocation2 + $0x60] sm:$0x3] 0.0
    %108 = vst [vmem:[#allocation2 + $0x68] sm:$0x3] 0.0
    %vm109 = vcmask 9216
    %110 = vst.msk [vmem:[#allocation2 + $0x70] sm:$0x3] %vm109, 0.0
    %111 = vst [vmem:[#allocation2 + $0x78] sm:$0xff] 0.0
    %112 = vst [vmem:[#allocation2 + $0x80] sm:$0xff] 0.0
    %113 = vst [vmem:[#allocation2 + $0x88] sm:$0xff] 0.0
    %114 = vst [vmem:[#allocation2 + $0x90] sm:$0xff] 0.0
    %115 = vst.msk [vmem:[#allocation2 + $0x98] sm:$0xff] %vm98, 0.0
    %116 = vst [vmem:[#allocation2 + $0xa0] sm:$0xff] 0.0
    %117 = vst [vmem:[#allocation2 + $0xa8] sm:$0xff] 0.0
    %118 = vst [vmem:[#allocation2 + $0xb0] sm:$0xff] 0.0
    %119 = vst [vmem:[#allocation2 + $0xb8] sm:$0xff] 0.0
    %120 = vst.msk [vmem:[#allocation2 + $0xc0] sm:$0xff] %vm98, 0.0
    %121 = vst [vmem:[#allocation2 + $0xc8] sm:$0x3] 0.0
    %122 = vst [vmem:[#allocation2 + $0xd0] sm:$0x3] 0.0
    %123 = vst [vmem:[#allocation2 + $0xd8] sm:$0x3] 0.0
    %124 = vst [vmem:[#allocation2 + $0xe0] sm:$0x3] 0.0
    %125 = vst.msk [vmem:[#allocation2 + $0xe8] sm:$0x3] %vm109, 0.0
    %126 = vst [vmem:[#allocation2 + $0xf0] sm:$0xff] 0.0
    %127 = vst [vmem:[#allocation2 + $0xf8] sm:$0xff] 0.0
    %128 = vst [vmem:[#allocation2 + $0x100] sm:$0xff] 0.0
    %129 = vst [vmem:[#allocation2 + $0x108] sm:$0xff] 0.0
    %130 = vst.msk [vmem:[#allocation2 + $0x110] sm:$0xff] %vm98, 0.0
    %131 = vst [vmem:[#allocation2 + $0x118] sm:$0xff] 0.0
    %132 = vst [vmem:[#allocation2 + $0x120] sm:$0xff] 0.0
    %133 = vst [vmem:[#allocation2 + $0x128] sm:$0xff] 0.0
    %134 = vst [vmem:[#allocation2 + $0x130] sm:$0xff] 0.0
    %135 = vst.msk [vmem:[#allocation2 + $0x138] sm:$0xff] %vm98, 0.0
    %136 = vst [vmem:[#allocation2 + $0x140] sm:$0x3] 0.0
    %137 = vst [vmem:[#allocation2 + $0x148] sm:$0x3] 0.0
    %138 = vst [vmem:[#allocation2 + $0x150] sm:$0x3] 0.0
    %139 = vst [vmem:[#allocation2 + $0x158] sm:$0x3] 0.0
    %140 = vst.msk [vmem:[#allocation2 + $0x160] sm:$0x3] %vm109, 0.0
    %v141 = vld [vmem:[#allocation3] sm:$0xff]
    %v142 = vld [vmem:[#allocation3 + $0x8] sm:$0xff]
    %v143 = vld [vmem:[#allocation3 + $0x10] sm:$0xff]
    %v144 = vld [vmem:[#allocation3 + $0x18] sm:$0xff]
    %v145 = vld [vmem:[#allocation3 + $0x20] sm:$0xff]
    %v146 = vld [vmem:[#allocation3 + $0x28] sm:$0xff]
    %v147 = vld [vmem:[#allocation3 + $0x30] sm:$0xff]
    %v148 = vld [vmem:[#allocation3 + $0x38] sm:$0xff]
    %v149 = vld [vmem:[#allocation3 + $0x40] sm:$0xff]
    %v150 = vld [vmem:[#allocation3 + $0x48] sm:$0xff]
    %v151 = vld [vmem:[#allocation3 + $0x50] sm:$0xff]
    %v152 = vld [vmem:[#allocation3 + $0x58] sm:$0xff]
    %v153 = vld [vmem:[#allocation3 + $0x60] sm:$0xff]
    %v154 = vld [vmem:[#allocation3 + $0x68] sm:$0xff]
    %v155 = vld [vmem:[#allocation3 + $0x70] sm:$0xff]
    %v156 = vld [vmem:[#allocation3 + $0x78] sm:$0xff]
    %v157 = vld [vmem:[#allocation3 + $0x80] sm:$0xff]
    %v158 = vld [vmem:[#allocation3 + $0x88] sm:$0xff]
    %v159 = vld [vmem:[#allocation3 + $0x90] sm:$0xff]
    %v160 = vld [vmem:[#allocation3 + $0x98] sm:$0xff]
    %v161 = vld [vmem:[#allocation3 + $0xa0] sm:$0xff]
    %v162 = vld [vmem:[#allocation3 + $0xa8] sm:$0xff]
    %v163 = vld [vmem:[#allocation3 + $0xb0] sm:$0xff]
    %v164 = vld [vmem:[#allocation3 + $0xb8] sm:$0xff]
    %vm189 = vcmask 1040384
    %v190 = vrot.slane %v141, 7
    %v191 = vrot.slane %v142, 7
    %v192 = vrot.slane %v143, 7
    %v193 = vrot.slane %v144, 7
    %v194 = vrot.slane %v145, 7
    %v195 = vsel %vm189, %v190, %v194
    %v196 = vrot.slane %v146, 7
    %v197 = vsel %vm189, %v191, %v196
    %v198 = vrot.slane %v147, 7
    %v199 = vsel %vm189, %v192, %v198
    %v200 = vrot.slane %v148, 7
    %v201 = vsel %vm189, %v193, %v200
    %v202 = vrot.slane %v149, 7
    %v203 = vrot.slane %v150, 7
    %v204 = vrot.slane %v151, 7
    %v205 = vrot.slane %v152, 7
    %v206 = vrot.slane %v153, 7
    %v207 = vsel %vm189, %v202, %v206
    %v208 = vrot.slane %v154, 7
    %v209 = vsel %vm189, %v203, %v208
    %v210 = vrot.slane %v155, 7
    %v211 = vsel %vm189, %v204, %v210
    %v212 = vrot.slane %v156, 7
    %v213 = vsel %vm189, %v205, %v212
    %v214 = vrot.slane %v157, 7
    %v215 = vrot.slane %v158, 7
    %v216 = vrot.slane %v159, 7
    %v217 = vrot.slane %v160, 7
    %v218 = vrot.slane %v161, 7
    %v219 = vsel %vm189, %v214, %v218
    %v220 = vrot.slane %v162, 7
    %v221 = vsel %vm189, %v215, %v220
    %v222 = vrot.slane %v163, 7
    %v223 = vsel %vm189, %v216, %v222
    %v224 = vrot.slane %v164, 7
    %v225 = vsel %vm189, %v217, %v224
    %226 = vrot.lane.b32.xlu0 %v190, 1
    %v227 = vpop.permute.xlu0 %226
    %228 = vrot.lane.b32.xlu0 %v191, 1
    %v229 = vpop.permute.xlu0 %228
    %230 = vrot.lane.b32.xlu0 %v192, 1
    %v231 = vpop.permute.xlu0 %230
    %232 = vrot.lane.b32.xlu0 %v193, 1
    %v233 = vpop.permute.xlu0 %232
    %234 = vrot.lane.b32.xlu0 %v195, 1
    %v235 = vpop.permute.xlu0 %234
    %236 = vrot.lane.b32.xlu0 %v197, 1
    %v237 = vpop.permute.xlu0 %236
    %238 = vrot.lane.b32.xlu0 %v199, 1
    %v239 = vpop.permute.xlu0 %238
    %240 = vrot.lane.b32.xlu0 %v201, 1
    %v241 = vpop.permute.xlu0 %240
    %242 = vrot.lane.b32.xlu0 %v194, 1
    %v243 = vpop.permute.xlu0 %242
    %244 = vrot.lane.b32.xlu0 %v196, 1
    %v245 = vpop.permute.xlu0 %244
    %246 = vrot.lane.b32.xlu0 %v198, 1
    %v247 = vpop.permute.xlu0 %246
    %248 = vrot.lane.b32.xlu0 %v200, 1
    %v249 = vpop.permute.xlu0 %248
    %250 = vrot.lane.b32.xlu0 %v202, 1
    %v251 = vpop.permute.xlu0 %250
    %252 = vrot.lane.b32.xlu0 %v203, 1
    %v253 = vpop.permute.xlu0 %252
    %254 = vrot.lane.b32.xlu0 %v204, 1
    %v255 = vpop.permute.xlu0 %254
    %256 = vrot.lane.b32.xlu0 %v205, 1
    %v257 = vpop.permute.xlu0 %256
    %258 = vrot.lane.b32.xlu0 %v207, 1
    %v259 = vpop.permute.xlu0 %258
    %260 = vrot.lane.b32.xlu0 %v209, 1
    %v261 = vpop.permute.xlu0 %260
    %262 = vrot.lane.b32.xlu0 %v211, 1
    %v263 = vpop.permute.xlu0 %262
    %264 = vrot.lane.b32.xlu0 %v213, 1
    %v265 = vpop.permute.xlu0 %264
    %266 = vrot.lane.b32.xlu0 %v206, 1
    %v267 = vpop.permute.xlu0 %266
    %268 = vrot.lane.b32.xlu0 %v208, 1
    %v269 = vpop.permute.xlu0 %268
    %270 = vrot.lane.b32.xlu0 %v210, 1
    %v271 = vpop.permute.xlu0 %270
    %272 = vrot.lane.b32.xlu0 %v212, 1
    %v273 = vpop.permute.xlu0 %272
    %274 = vrot.lane.b32.xlu0 %v214, 1
    %v275 = vpop.permute.xlu0 %274
    %276 = vrot.lane.b32.xlu0 %v215, 1
    %v277 = vpop.permute.xlu0 %276
    %278 = vrot.lane.b32.xlu0 %v216, 1
    %v279 = vpop.permute.xlu0 %278
    %280 = vrot.lane.b32.xlu0 %v217, 1
    %v281 = vpop.permute.xlu0 %280
    %282 = vrot.lane.b32.xlu0 %v219, 1
    %v283 = vpop.permute.xlu0 %282
    %284 = vrot.lane.b32.xlu0 %v221, 1
    %v285 = vpop.permute.xlu0 %284
    %286 = vrot.lane.b32.xlu0 %v223, 1
    %v287 = vpop.permute.xlu0 %286
    %288 = vrot.lane.b32.xlu0 %v225, 1
    %v289 = vpop.permute.xlu0 %288
    %290 = vrot.lane.b32.xlu0 %v218, 1
    %v291 = vpop.permute.xlu0 %290
    %292 = vrot.lane.b32.xlu0 %v220, 1
    %v293 = vpop.permute.xlu0 %292
    %294 = vrot.lane.b32.xlu0 %v222, 1
    %v295 = vpop.permute.xlu0 %294
    %296 = vrot.lane.b32.xlu0 %v224, 1
    %v297 = vpop.permute.xlu0 %296
    %vm298 = vcmask 7168
    %v299 = vsel %vm298, %v227, %v229
    %v300 = vsel %vm298, %v229, %v231
    %v301 = vsel %vm298, %v231, %v233
    %v302 = vsel %vm298, %v235, %v237
    %v303 = vsel %vm298, %v237, %v239
    %v304 = vsel %vm298, %v239, %v241
    %v305 = vsel %vm298, %v243, %v245
    %v306 = vsel %vm298, %v245, %v247
    %v307 = vsel %vm298, %v247, %v249
    %v308 = vsel %vm298, %v251, %v253
    %v309 = vsel %vm298, %v253, %v255
    %v310 = vsel %vm298, %v255, %v257
    %v311 = vsel %vm298, %v259, %v261
    %v312 = vsel %vm298, %v261, %v263
    %v313 = vsel %vm298, %v263, %v265
    %v314 = vsel %vm298, %v267, %v269
    %v315 = vsel %vm298, %v269, %v271
    %v316 = vsel %vm298, %v271, %v273
    %v317 = vsel %vm298, %v275, %v277
    %v318 = vsel %vm298, %v277, %v279
    %v319 = vsel %vm298, %v279, %v281
    %v320 = vsel %vm298, %v283, %v285
    %v321 = vsel %vm298, %v285, %v287
    %v322 = vsel %vm298, %v287, %v289
    %v323 = vsel %vm298, %v291, %v293
    %v324 = vsel %vm298, %v293, %v295
    %v325 = vsel %vm298, %v295, %v297
    %vm371 = vcmask 1047561
    %372 = vst.msk [vmem:[#allocation2] sm:$0xfe] %vm371, %v227
    %373 = vst [vmem:[#allocation2 + $0x8] sm:$0xfe] %v299
    %374 = vst [vmem:[#allocation2 + $0x10] sm:$0xfe] %v300
    %375 = vst [vmem:[#allocation2 + $0x18] sm:$0xfe] %v301
    %vm376 = vcmask 7169
    %377 = vst.msk [vmem:[#allocation2 + $0x20] sm:$0xfe] %vm376, %v233
    %vm378 = vcmask 1047560
    %379 = vst.msk [vmem:[#allocation2 + $0x28] sm:$0xff] %vm378, %v235
    %380 = vst [vmem:[#allocation2 + $0x30] sm:$0xff] %v302
    %381 = vst [vmem:[#allocation2 + $0x38] sm:$0xff] %v303
    %382 = vst [vmem:[#allocation2 + $0x40] sm:$0xff] %v304
    %383 = vst.msk [vmem:[#allocation2 + $0x48] sm:$0xff] %vm298, %v241
    %vm384 = vcmask 1040392
    %385 = vst.msk [vmem:[#allocation2 + $0x50] sm:$0x1] %vm384, %v243
    %386 = vst [vmem:[#allocation2 + $0x58] sm:$0x1] %v305
    %387 = vst [vmem:[#allocation2 + $0x60] sm:$0x1] %v306
    %388 = vst [vmem:[#allocation2 + $0x68] sm:$0x1] %v307
    %vm389 = vcmask 0
    %390 = vst.msk [vmem:[#allocation2 + $0x70] sm:$0x1] %vm389, %v249
    %391 = vst.msk [vmem:[#allocation2 + $0x78] sm:$0xfe] %vm371, %v251
    %392 = vst [vmem:[#allocation2 + $0x80] sm:$0xfe] %v308
    %393 = vst [vmem:[#allocation2 + $0x88] sm:$0xfe] %v309
    %394 = vst [vmem:[#allocation2 + $0x90] sm:$0xfe] %v310
    %395 = vst.msk [vmem:[#allocation2 + $0x98] sm:$0xfe] %vm376, %v257
    %396 = vst.msk [vmem:[#allocation2 + $0xa0] sm:$0xff] %vm378, %v259
    %397 = vst [vmem:[#allocation2 + $0xa8] sm:$0xff] %v311
    %398 = vst [vmem:[#allocation2 + $0xb0] sm:$0xff] %v312
    %399 = vst [vmem:[#allocation2 + $0xb8] sm:$0xff] %v313
    %400 = vst.msk [vmem:[#allocation2 + $0xc0] sm:$0xff] %vm298, %v265
    %401 = vst.msk [vmem:[#allocation2 + $0xc8] sm:$0x1] %vm384, %v267
    %402 = vst [vmem:[#allocation2 + $0xd0] sm:$0x1] %v314
    %403 = vst [vmem:[#allocation2 + $0xd8] sm:$0x1] %v315
    %404 = vst [vmem:[#allocation2 + $0xe0] sm:$0x1] %v316
    %405 = vst.msk [vmem:[#allocation2 + $0xe8] sm:$0x1] %vm389, %v273
    %406 = vst.msk [vmem:[#allocation2 + $0xf0] sm:$0xfe] %vm371, %v275
    %407 = vst [vmem:[#allocation2 + $0xf8] sm:$0xfe] %v317
    %408 = vst [vmem:[#allocation2 + $0x100] sm:$0xfe] %v318
    %409 = vst [vmem:[#allocation2 + $0x108] sm:$0xfe] %v319
    %410 = vst.msk [vmem:[#allocation2 + $0x110] sm:$0xfe] %vm376, %v281
    %411 = vst.msk [vmem:[#allocation2 + $0x118] sm:$0xff] %vm378, %v283
    %412 = vst [vmem:[#allocation2 + $0x120] sm:$0xff] %v320
    %413 = vst [vmem:[#allocation2 + $0x128] sm:$0xff] %v321
    %414 = vst [vmem:[#allocation2 + $0x130] sm:$0xff] %v322
    %415 = vst.msk [vmem:[#allocation2 + $0x138] sm:$0xff] %vm298, %v289
    %416 = vst.msk [vmem:[#allocation2 + $0x140] sm:$0x1] %vm384, %v291
    %417 = vst [vmem:[#allocation2 + $0x148] sm:$0x1] %v323
    %418 = vst [vmem:[#allocation2 + $0x150] sm:$0x1] %v324
    %419 = vst [vmem:[#allocation2 + $0x158] sm:$0x1] %v325
    %420 = vst.msk [vmem:[#allocation2 + $0x160] sm:$0x1] %vm389, %v297
    %v421 = vld [vmem:[#allocation10] ss:$2 sm:$0xf]
    %s422 = scalar_lea.vmem [#allocation10], 1
    %v423 = vld [vmem:[%s422] ss:$2 sm:$0xf]
    %s424 = sld [smem:[#allocation8]]
    %v425 = vstv %s424
    %v426 = vadd.f32 %v425, 0.0
    %s427 = sld [smem:[#allocation8 + $0x1]]
    %v428 = vstv %s427
    %v429 = vadd.f32 %v428, 0.0
    %s430 = sld [smem:[#allocation8 + $0x2]]
    %v431 = vstv %s430
    %v432 = vadd.f32 %v431, 0.0
    %v433 = vld [vmem:[#allocation2] sm:$0xff]
    %v434 = vld [vmem:[#allocation2 + $0x8] sm:$0xff]
    %v435 = vld [vmem:[#allocation2 + $0x10] sm:$0xff]
    %v436 = vld [vmem:[#allocation2 + $0x18] sm:$0xff]
    %v437 = vld [vmem:[#allocation2 + $0x20] sm:$0xff]
    %v438 = vld [vmem:[#allocation2 + $0x28] sm:$0xff]
    %v439 = vld [vmem:[#allocation2 + $0x30] sm:$0xff]
    %v440 = vld [vmem:[#allocation2 + $0x38] sm:$0xff]
    %v441 = vld [vmem:[#allocation2 + $0x40] sm:$0xff]
    %v442 = vld [vmem:[#allocation2 + $0x48] sm:$0xff]
    %v443 = vld [vmem:[#allocation2 + $0x50] sm:$0x3]
    %v444 = vld [vmem:[#allocation2 + $0x58] sm:$0x3]
    %v445 = vld [vmem:[#allocation2 + $0x60] sm:$0x3]
    %v446 = vld [vmem:[#allocation2 + $0x68] sm:$0x3]
    %v447 = vld [vmem:[#allocation2 + $0x70] sm:$0x3]
    %v449 = vperm.slane %v421, 0
    %v450 = vperm.slane %v421, 1
    %v451 = vperm.slane %v421, 2
    %v452 = vperm.slane %v421, 3
    %v457 = vmul.f32 %v433, %v449
    %v458 = vmul.f32 %v434, %v450
    %v459 = vmul.f32 %v435, %v451
    %v460 = vmul.f32 %v436, %v452
    %v461 = vmul.f32 %v438, %v449
    %v462 = vmul.f32 %v439, %v450
    %v463 = vmul.f32 %v440, %v451
    %v464 = vmul.f32 %v441, %v452
    %v465 = vmul.f32 %v443, %v449
    %v466 = vmul.f32 %v444, %v450
    %v467 = vmul.f32 %v445, %v451
    %v468 = vmul.f32 %v446, %v452
    %v470 = vperm.slane %v423, 0
    %v471 = vperm.slane %v423, 1
    %v472 = vperm.slane %v423, 2
    %v473 = vperm.slane %v423, 3
    %474 = vrot.lane.b32.xlu0 %v470, 2
    %v475 = vpop.permute.xlu0 %474
    %476 = vrot.lane.b32.xlu0 %v471, 2
    %v477 = vpop.permute.xlu0 %476
    %478 = vrot.lane.b32.xlu0 %v472, 2
    %v479 = vpop.permute.xlu0 %478
    %480 = vrot.lane.b32.xlu0 %v473, 2
    %v481 = vpop.permute.xlu0 %480
    %v482 = vsel %vm98, %v475, %v477
    %v483 = vsel %vm98, %v477, %v479
    %v484 = vsel %vm98, %v479, %v481
    %v490 = vmul.f32 %v433, %v475
    %v491 = vmul.f32 %v434, %v482
    %v492 = vmul.f32 %v435, %v483
    %v493 = vmul.f32 %v436, %v484
    %v494 = vmul.f32 %v437, %v481
    %v495 = vmul.f32 %v438, %v475
    %v496 = vmul.f32 %v439, %v482
    %v497 = vmul.f32 %v440, %v483
    %v498 = vmul.f32 %v441, %v484
    %v499 = vmul.f32 %v442, %v481
    %v500 = vmul.f32 %v443, %v475
    %v501 = vmul.f32 %v444, %v482
    %v502 = vmul.f32 %v445, %v483
    %v503 = vmul.f32 %v446, %v484
    %v504 = vmul.f32 %v447, %v481
    %s505 = sld [smem:[#allocation7]]
    %v506 = vstv %s505
    %v507 = vmul.f32 %v506, %v457
    %v508 = vmul.f32 %v506, %v458
    %v509 = vmul.f32 %v506, %v459
    %v510 = vmul.f32 %v506, %v460
    %v511 = vmul.f32 %v506, %v461
    %v512 = vmul.f32 %v506, %v462
    %v513 = vmul.f32 %v506, %v463
    %v514 = vmul.f32 %v506, %v464
    %v515 = vadd.f32 %v426, %v507
    %v516 = vadd.f32 %v426, %v508
    %v517 = vadd.f32 %v426, %v509
    %v518 = vadd.f32 %v426, %v510
    %v519 = vadd.f32 %v426, %v511
    %v520 = vadd.f32 %v426, %v512
    %v521 = vadd.f32 %v426, %v513
    %v522 = vadd.f32 %v426, %v514
    %s523 = sld [smem:[#allocation7 + $0x1b]]
    %v524 = vstv %s523
    %v525 = vmul.f32 %v524, %v457
    %v526 = vmul.f32 %v524, %v458
    %v527 = vmul.f32 %v524, %v459
    %v528 = vmul.f32 %v524, %v460
    %v529 = vmul.f32 %v524, %v461
    %v530 = vmul.f32 %v524, %v462
    %v531 = vmul.f32 %v524, %v463
    %v532 = vmul.f32 %v524, %v464
    %v533 = vadd.f32 %v429, %v525
    %v534 = vadd.f32 %v429, %v526
    %v535 = vadd.f32 %v429, %v527
    %v536 = vadd.f32 %v429, %v528
    %v537 = vadd.f32 %v429, %v529
    %v538 = vadd.f32 %v429, %v530
    %v539 = vadd.f32 %v429, %v531
    %v540 = vadd.f32 %v429, %v532
    %s541 = sld [smem:[#allocation7 + $0x36]]
    %v542 = vstv %s541
    %v543 = vmul.f32 %v542, %v457
    %v544 = vmul.f32 %v542, %v458
    %v545 = vmul.f32 %v542, %v459
    %v546 = vmul.f32 %v542, %v460
    %v547 = vmul.f32 %v542, %v461
    %v548 = vmul.f32 %v542, %v462
    %v549 = vmul.f32 %v542, %v463
    %v550 = vmul.f32 %v542, %v464
    %v551 = vadd.f32 %v432, %v543
    %v552 = vadd.f32 %v432, %v544
    %v553 = vadd.f32 %v432, %v545
    %v554 = vadd.f32 %v432, %v546
    %v555 = vadd.f32 %v432, %v547
    %v556 = vadd.f32 %v432, %v548
    %v557 = vadd.f32 %v432, %v549
    %v558 = vadd.f32 %v432, %v550
    %s559 = sld [smem:[#allocation7 + $0x1]]
    %v560 = vstv %s559
    %v561 = vmul.f32 %v560, %v433
    %v562 = vmul.f32 %v560, %v434
    %v563 = vmul.f32 %v560, %v435
    %v564 = vmul.f32 %v560, %v436
    %v565 = vmul.f32 %v560, %v437
    %v566 = vmul.f32 %v560, %v438
    %v567 = vmul.f32 %v560, %v439
    %v568 = vmul.f32 %v560, %v440
    %v569 = vmul.f32 %v560, %v441
    %v570 = vmul.f32 %v560, %v442
    %581 = vrot.lane.b32.xlu0 %v561, 127
    %v582 = vpop.permute.xlu0 %581
    %583 = vrot.lane.b32.xlu0 %v562, 127
    %v584 = vpop.permute.xlu0 %583
    %585 = vrot.lane.b32.xlu0 %v563, 127
    %v586 = vpop.permute.xlu0 %585
    %587 = vrot.lane.b32.xlu0 %v564, 127
    %v588 = vpop.permute.xlu0 %587
    %589 = vrot.lane.b32.xlu0 %v565, 127
    %v590 = vpop.permute.xlu0 %589
    %591 = vrot.lane.b32.xlu0 %v566, 127
    %v592 = vpop.permute.xlu0 %591
    %593 = vrot.lane.b32.xlu0 %v567, 127
    %v594 = vpop.permute.xlu0 %593
    %595 = vrot.lane.b32.xlu0 %v568, 127
    %v596 = vpop.permute.xlu0 %595
    %597 = vrot.lane.b32.xlu0 %v569, 127
    %v598 = vpop.permute.xlu0 %597
    %599 = vrot.lane.b32.xlu0 %v570, 127
    %v600 = vpop.permute.xlu0 %599
    %vm601 = vcmask 1039360
    %v602 = vsel %vm601, %v582, %v584
    %v603 = vsel %vm601, %v584, %v586
    %v604 = vsel %vm601, %v586, %v588
    %v605 = vsel %vm601, %v588, %v590
    %v606 = vsel %vm601, %v592, %v594
    %v607 = vsel %vm601, %v594, %v596
    %v608 = vsel %vm601, %v596, %v598
    %v609 = vsel %vm601, %v598, %v600
    %v618 = vadd.f32 %v515, %v602
    %v619 = vadd.f32 %v516, %v603
    %v620 = vadd.f32 %v517, %v604
    %v621 = vadd.f32 %v518, %v605
    %v622 = vadd.f32 %v519, %v606
    %v623 = vadd.f32 %v520, %v607
    %v624 = vadd.f32 %v521, %v608
    %v625 = vadd.f32 %v522, %v609
    %s626 = sld [smem:[#allocation7 + $0x1c]]
    %v627 = vstv %s626
    %v628 = vmul.f32 %v627, %v433
    %v629 = vmul.f32 %v627, %v434
    %v630 = vmul.f32 %v627, %v435
    %v631 = vmul.f32 %v627, %v436
    %v632 = vmul.f32 %v627, %v437
    %v633 = vmul.f32 %v627, %v438
    %v634 = vmul.f32 %v627, %v439
    %v635 = vmul.f32 %v627, %v440
    %v636 = vmul.f32 %v627, %v441
    %v637 = vmul.f32 %v627, %v442
    %648 = vrot.lane.b32.xlu0 %v628, 127
    %v649 = vpop.permute.xlu0 %648
    %650 = vrot.lane.b32.xlu0 %v629, 127
    %v651 = vpop.permute.xlu0 %650
    %652 = vrot.lane.b32.xlu0 %v630, 127
    %v653 = vpop.permute.xlu0 %652
    %654 = vrot.lane.b32.xlu0 %v631, 127
    %v655 = vpop.permute.xlu0 %654
    %656 = vrot.lane.b32.xlu0 %v632, 127
    %v657 = vpop.permute.xlu0 %656
    %658 = vrot.lane.b32.xlu0 %v633, 127
    %v659 = vpop.permute.xlu0 %658
    %660 = vrot.lane.b32.xlu0 %v634, 127
    %v661 = vpop.permute.xlu0 %660
    %662 = vrot.lane.b32.xlu0 %v635, 127
    %v663 = vpop.permute.xlu0 %662
    %664 = vrot.lane.b32.xlu0 %v636, 127
    %v665 = vpop.permute.xlu0 %664
    %666 = vrot.lane.b32.xlu0 %v637, 127
    %v667 = vpop.permute.xlu0 %666
    %v668 = vsel %vm601, %v649, %v651
    %v669 = vsel %vm601, %v651, %v653
    %v670 = vsel %vm601, %v653, %v655
    %v671 = vsel %vm601, %v655, %v657
    %v672 = vsel %vm601, %v659, %v661
    %v673 = vsel %vm601, %v661, %v663
    %v674 = vsel %vm601, %v663, %v665
    %v675 = vsel %vm601, %v665, %v667
    %v684 = vadd.f32 %v533, %v668
    %v685 = vadd.f32 %v534, %v669
    %v686 = vadd.f32 %v535, %v670
    %v687 = vadd.f32 %v536, %v671
    %v688 = vadd.f32 %v537, %v672
    %v689 = vadd.f32 %v538, %v673
    %v690 = vadd.f32 %v539, %v674
    %v691 = vadd.f32 %v540, %v675
    %s692 = sld [smem:[#allocation7 + $0x37]]
    %v693 = vstv %s692
    %v694 = vmul.f32 %v693, %v433
    %v695 = vmul.f32 %v693, %v434
    %v696 = vmul.f32 %v693, %v435
    %v697 = vmul.f32 %v693, %v436
    %v698 = vmul.f32 %v693, %v437
    %v699 = vmul.f32 %v693, %v438
    %v700 = vmul.f32 %v693, %v439
    %v701 = vmul.f32 %v693, %v440
    %v702 = vmul.f32 %v693, %v441
    %v703 = vmul.f32 %v693, %v442
    %714 = vrot.lane.b32.xlu0 %v694, 127
    %v715 = vpop.permute.xlu0 %714
    %716 = vrot.lane.b32.xlu0 %v695, 127
    %v717 = vpop.permute.xlu0 %716
    %718 = vrot.lane.b32.xlu0 %v696, 127
    %v719 = vpop.permute.xlu0 %718
    %720 = vrot.lane.b32.xlu0 %v697, 127
    %v721 = vpop.permute.xlu0 %720
    %722 = vrot.lane.b32.xlu0 %v698, 127
    %v723 = vpop.permute.xlu0 %722
    %724 = vrot.lane.b32.xlu0 %v699, 127
    %v725 = vpop.permute.xlu0 %724
    %726 = vrot.lane.b32.xlu0 %v700, 127
    %v727 = vpop.permute.xlu0 %726
    %728 = vrot.lane.b32.xlu0 %v701, 127
    %v729 = vpop.permute.xlu0 %728
    %730 = vrot.lane.b32.xlu0 %v702, 127
    %v731 = vpop.permute.xlu0 %730
    %732 = vrot.lane.b32.xlu0 %v703, 127
    %v733 = vpop.permute.xlu0 %732
    %v734 = vsel %vm601, %v715, %v717
    %v735 = vsel %vm601, %v717, %v719
    %v736 = vsel %vm601, %v719, %v721
    %v737 = vsel %vm601, %v721, %v723
    %v738 = vsel %vm601, %v725, %v727
    %v739 = vsel %vm601, %v727, %v729
    %v740 = vsel %vm601, %v729, %v731
    %v741 = vsel %vm601, %v731, %v733
    %v750 = vadd.f32 %v551, %v734
    %v751 = vadd.f32 %v552, %v735
    %v752 = vadd.f32 %v553, %v736
    %v753 = vadd.f32 %v554, %v737
    %v754 = vadd.f32 %v555, %v738
    %v755 = vadd.f32 %v556, %v739
    %v756 = vadd.f32 %v557, %v740
    %v757 = vadd.f32 %v558, %v741
    %s758 = sld [smem:[#allocation7 + $0x2]]
    %v759 = vstv %s758
    %v760 = vmul.f32 %v759, %v490
    %v761 = vmul.f32 %v759, %v491
    %v762 = vmul.f32 %v759, %v492
    %v763 = vmul.f32 %v759, %v493
    %v764 = vmul.f32 %v759, %v494
    %v765 = vmul.f32 %v759, %v495
    %v766 = vmul.f32 %v759, %v496
    %v767 = vmul.f32 %v759, %v497
    %v768 = vmul.f32 %v759, %v498
    %v769 = vmul.f32 %v759, %v499
    %780 = vrot.lane.b32.xlu0 %v760, 126
    %v781 = vpop.permute.xlu0 %780
    %782 = vrot.lane.b32.xlu0 %v761, 126
    %v783 = vpop.permute.xlu0 %782
    %784 = vrot.lane.b32.xlu0 %v762, 126
    %v785 = vpop.permute.xlu0 %784
    %786 = vrot.lane.b32.xlu0 %v763, 126
    %v787 = vpop.permute.xlu0 %786
    %788 = vrot.lane.b32.xlu0 %v764, 126
    %v789 = vpop.permute.xlu0 %788
    %790 = vrot.lane.b32.xlu0 %v765, 126
    %v791 = vpop.permute.xlu0 %790
    %792 = vrot.lane.b32.xlu0 %v766, 126
    %v793 = vpop.permute.xlu0 %792
    %794 = vrot.lane.b32.xlu0 %v767, 126
    %v795 = vpop.permute.xlu0 %794
    %796 = vrot.lane.b32.xlu0 %v768, 126
    %v797 = vpop.permute.xlu0 %796
    %798 = vrot.lane.b32.xlu0 %v769, 126
    %v799 = vpop.permute.xlu0 %798
    %vm800 = vcmask 1031168
    %v801 = vsel %vm800, %v781, %v783
    %v802 = vsel %vm800, %v783, %v785
    %v803 = vsel %vm800, %v785, %v787
    %v804 = vsel %vm800, %v787, %v789
    %v805 = vsel %vm800, %v791, %v793
    %v806 = vsel %vm800, %v793, %v795
    %v807 = vsel %vm800, %v795, %v797
    %v808 = vsel %vm800, %v797, %v799
    %v817 = vadd.f32 %v618, %v801
    %v818 = vadd.f32 %v619, %v802
    %v819 = vadd.f32 %v620, %v803
    %v820 = vadd.f32 %v621, %v804
    %v821 = vadd.f32 %v622, %v805
    %v822 = vadd.f32 %v623, %v806
    %v823 = vadd.f32 %v624, %v807
    %v824 = vadd.f32 %v625, %v808
    %s825 = sld [smem:[#allocation7 + $0x1d]]
    %v826 = vstv %s825
    %v827 = vmul.f32 %v826, %v490
    %v828 = vmul.f32 %v826, %v491
    %v829 = vmul.f32 %v826, %v492
    %v830 = vmul.f32 %v826, %v493
    %v831 = vmul.f32 %v826, %v494
    %v832 = vmul.f32 %v826, %v495
    %v833 = vmul.f32 %v826, %v496
    %v834 = vmul.f32 %v826, %v497
    %v835 = vmul.f32 %v826, %v498
    %v836 = vmul.f32 %v826, %v499
    %847 = vrot.lane.b32.xlu0 %v827, 126
    %v848 = vpop.permute.xlu0 %847
    %849 = vrot.lane.b32.xlu0 %v828, 126
    %v850 = vpop.permute.xlu0 %849
    %851 = vrot.lane.b32.xlu0 %v829, 126
    %v852 = vpop.permute.xlu0 %851
    %853 = vrot.lane.b32.xlu0 %v830, 126
    %v854 = vpop.permute.xlu0 %853
    %855 = vrot.lane.b32.xlu0 %v831, 126
    %v856 = vpop.permute.xlu0 %855
    %857 = vrot.lane.b32.xlu0 %v832, 126
    %v858 = vpop.permute.xlu0 %857
    %859 = vrot.lane.b32.xlu0 %v833, 126
    %v860 = vpop.permute.xlu0 %859
    %861 = vrot.lane.b32.xlu0 %v834, 126
    %v862 = vpop.permute.xlu0 %861
    %863 = vrot.lane.b32.xlu0 %v835, 126
    %v864 = vpop.permute.xlu0 %863
    %865 = vrot.lane.b32.xlu0 %v836, 126
    %v866 = vpop.permute.xlu0 %865
    %v867 = vsel %vm800, %v848, %v850
    %v868 = vsel %vm800, %v850, %v852
    %v869 = vsel %vm800, %v852, %v854
    %v870 = vsel %vm800, %v854, %v856
    %v871 = vsel %vm800, %v858, %v860
    %v872 = vsel %vm800, %v860, %v862
    %v873 = vsel %vm800, %v862, %v864
    %v874 = vsel %vm800, %v864, %v866
    %v883 = vadd.f32 %v684, %v867
    %v884 = vadd.f32 %v685, %v868
    %v885 = vadd.f32 %v686, %v869
    %v886 = vadd.f32 %v687, %v870
    %v887 = vadd.f32 %v688, %v871
    %v888 = vadd.f32 %v689, %v872
    %v889 = vadd.f32 %v690, %v873
    %v890 = vadd.f32 %v691, %v874
    %s891 = sld [smem:[#allocation7 + $0x38]]
    %v892 = vstv %s891
    %v893 = vmul.f32 %v892, %v490
    %v894 = vmul.f32 %v892, %v491
    %v895 = vmul.f32 %v892, %v492
    %v896 = vmul.f32 %v892, %v493
    %v897 = vmul.f32 %v892, %v494
    %v898 = vmul.f32 %v892, %v495
    %v899 = vmul.f32 %v892, %v496
    %v900 = vmul.f32 %v892, %v497
    %v901 = vmul.f32 %v892, %v498
    %v902 = vmul.f32 %v892, %v499
    %913 = vrot.lane.b32.xlu0 %v893, 126
    %v914 = vpop.permute.xlu0 %913
    %915 = vrot.lane.b32.xlu0 %v894, 126
    %v916 = vpop.permute.xlu0 %915
    %917 = vrot.lane.b32.xlu0 %v895, 126
    %v918 = vpop.permute.xlu0 %917
    %919 = vrot.lane.b32.xlu0 %v896, 126
    %v920 = vpop.permute.xlu0 %919
    %921 = vrot.lane.b32.xlu0 %v897, 126
    %v922 = vpop.permute.xlu0 %921
    %923 = vrot.lane.b32.xlu0 %v898, 126
    %v924 = vpop.permute.xlu0 %923
    %925 = vrot.lane.b32.xlu0 %v899, 126
    %v926 = vpop.permute.xlu0 %925
    %927 = vrot.lane.b32.xlu0 %v900, 126
    %v928 = vpop.permute.xlu0 %927
    %929 = vrot.lane.b32.xlu0 %v901, 126
    %v930 = vpop.permute.xlu0 %929
    %931 = vrot.lane.b32.xlu0 %v902, 126
    %v932 = vpop.permute.xlu0 %931
    %v933 = vsel %vm800, %v914, %v916
    %v934 = vsel %vm800, %v916, %v918
    %v935 = vsel %vm800, %v918, %v920
    %v936 = vsel %vm800, %v920, %v922
    %v937 = vsel %vm800, %v924, %v926
    %v938 = vsel %vm800, %v926, %v928
    %v939 = vsel %vm800, %v928, %v930
    %v940 = vsel %vm800, %v930, %v932
    %v949 = vadd.f32 %v750, %v933
    %v950 = vadd.f32 %v751, %v934
    %v951 = vadd.f32 %v752, %v935
    %v952 = vadd.f32 %v753, %v936
    %v953 = vadd.f32 %v754, %v937
    %v954 = vadd.f32 %v755, %v938
    %v955 = vadd.f32 %v756, %v939
    %v956 = vadd.f32 %v757, %v940
    %s957 = sld [smem:[#allocation7 + $0x3]]
    %v958 = vstv %s957
    %v959 = vmul.f32 %v958, %v457
    %v960 = vmul.f32 %v958, %v458
    %v961 = vmul.f32 %v958, %v459
    %v962 = vmul.f32 %v958, %v460
    %v963 = vmul.f32 %v958, %v461
    %v964 = vmul.f32 %v958, %v462
    %v965 = vmul.f32 %v958, %v463
    %v966 = vmul.f32 %v958, %v464
    %v967 = vmul.f32 %v958, %v465
    %v968 = vmul.f32 %v958, %v466
    %v969 = vmul.f32 %v958, %v467
    %v970 = vmul.f32 %v958, %v468
    %vm983 = vcmask 1046528
    %v984 = vrot.slane %v959, 1
    %v985 = vrot.slane %v963, 1
    %v986 = vsel %vm983, %v984, %v985
    %v987 = vrot.slane %v960, 1
    %v988 = vrot.slane %v964, 1
    %v989 = vsel %vm983, %v987, %v988
    %v990 = vrot.slane %v961, 1
    %v991 = vrot.slane %v965, 1
    %v992 = vsel %vm983, %v990, %v991
    %v993 = vrot.slane %v962, 1
    %v994 = vrot.slane %v966, 1
    %v995 = vsel %vm983, %v993, %v994
    %v996 = vrot.slane %v967, 1
    %v997 = vsel %vm983, %v985, %v996
    %v998 = vrot.slane %v968, 1
    %v999 = vsel %vm983, %v988, %v998
    %v1000 = vrot.slane %v969, 1
    %v1001 = vsel %vm983, %v991, %v1000
    %v1002 = vrot.slane %v970, 1
    %v1003 = vsel %vm983, %v994, %v1002
    %v1012 = vadd.f32 %v817, %v986
    %v1013 = vadd.f32 %v818, %v989
    %v1014 = vadd.f32 %v819, %v992
    %v1015 = vadd.f32 %v820, %v995
    %v1016 = vadd.f32 %v821, %v997
    %v1017 = vadd.f32 %v822, %v999
    %v1018 = vadd.f32 %v823, %v1001
    %v1019 = vadd.f32 %v824, %v1003
    %s1020 = sld [smem:[#allocation7 + $0x1e]]
    %v1021 = vstv %s1020
    %v1022 = vmul.f32 %v1021, %v457
    %v1023 = vmul.f32 %v1021, %v458
    %v1024 = vmul.f32 %v1021, %v459
    %v1025 = vmul.f32 %v1021, %v460
    %v1026 = vmul.f32 %v1021, %v461
    %v1027 = vmul.f32 %v1021, %v462
    %v1028 = vmul.f32 %v1021, %v463
    %v1029 = vmul.f32 %v1021, %v464
    %v1030 = vmul.f32 %v1021, %v465
    %v1031 = vmul.f32 %v1021, %v466
    %v1032 = vmul.f32 %v1021, %v467
    %v1033 = vmul.f32 %v1021, %v468
    %v1046 = vrot.slane %v1022, 1
    %v1047 = vrot.slane %v1026, 1
    %v1048 = vsel %vm983, %v1046, %v1047
    %v1049 = vrot.slane %v1023, 1
    %v1050 = vrot.slane %v1027, 1
    %v1051 = vsel %vm983, %v1049, %v1050
    %v1052 = vrot.slane %v1024, 1
    %v1053 = vrot.slane %v1028, 1
    %v1054 = vsel %vm983, %v1052, %v1053
    %v1055 = vrot.slane %v1025, 1
    %v1056 = vrot.slane %v1029, 1
    %v1057 = vsel %vm983, %v1055, %v1056
    %v1058 = vrot.slane %v1030, 1
    %v1059 = vsel %vm983, %v1047, %v1058
    %v1060 = vrot.slane %v1031, 1
    %v1061 = vsel %vm983, %v1050, %v1060
    %v1062 = vrot.slane %v1032, 1
    %v1063 = vsel %vm983, %v1053, %v1062
    %v1064 = vrot.slane %v1033, 1
    %v1065 = vsel %vm983, %v1056, %v1064
    %v1074 = vadd.f32 %v883, %v1048
    %v1075 = vadd.f32 %v884, %v1051
    %v1076 = vadd.f32 %v885, %v1054
    %v1077 = vadd.f32 %v886, %v1057
    %v1078 = vadd.f32 %v887, %v1059
    %v1079 = vadd.f32 %v888, %v1061
    %v1080 = vadd.f32 %v889, %v1063
    %v1081 = vadd.f32 %v890, %v1065
    %s1082 = sld [smem:[#allocation7 + $0x39]]
    %v1083 = vstv %s1082
    %v1084 = vmul.f32 %v1083, %v457
    %v1085 = vmul.f32 %v1083, %v458
    %v1086 = vmul.f32 %v1083, %v459
    %v1087 = vmul.f32 %v1083, %v460
    %v1088 = vmul.f32 %v1083, %v461
    %v1089 = vmul.f32 %v1083, %v462
    %v1090 = vmul.f32 %v1083, %v463
    %v1091 = vmul.f32 %v1083, %v464
    %v1092 = vmul.f32 %v1083, %v465
    %v1093 = vmul.f32 %v1083, %v466
    %v1094 = vmul.f32 %v1083, %v467
    %v1095 = vmul.f32 %v1083, %v468
    %v1108 = vrot.slane %v1084, 1
    %v1109 = vrot.slane %v1088, 1
    %v1110 = vsel %vm983, %v1108, %v1109
    %v1111 = vrot.slane %v1085, 1
    %v1112 = vrot.slane %v1089, 1
    %v1113 = vsel %vm983, %v1111, %v1112
    %v1114 = vrot.slane %v1086, 1
    %v1115 = vrot.slane %v1090, 1
    %v1116 = vsel %vm983, %v1114, %v1115
    %v1117 = vrot.slane %v1087, 1
    %v1118 = vrot.slane %v1091, 1
    %v1119 = vsel %vm983, %v1117, %v1118
    %v1120 = vrot.slane %v1092, 1
    %v1121 = vsel %vm983, %v1109, %v1120
    %v1122 = vrot.slane %v1093, 1
    %v1123 = vsel %vm983, %v1112, %v1122
    %v1124 = vrot.slane %v1094, 1
    %v1125 = vsel %vm983, %v1115, %v1124
    %v1126 = vrot.slane %v1095, 1
    %v1127 = vsel %vm983, %v1118, %v1126
    %v1136 = vadd.f32 %v949, %v1110
    %v1137 = vadd.f32 %v950, %v1113
    %v1138 = vadd.f32 %v951, %v1116
    %v1139 = vadd.f32 %v952, %v1119
    %v1140 = vadd.f32 %v953, %v1121
    %v1141 = vadd.f32 %v954, %v1123
    %v1142 = vadd.f32 %v955, %v1125
    %v1143 = vadd.f32 %v956, %v1127
    %s1144 = sld [smem:[#allocation7 + $0x4]]
    %v1145 = vstv %s1144
    %v1146 = vmul.f32 %v1145, %v433
    %v1147 = vmul.f32 %v1145, %v434
    %v1148 = vmul.f32 %v1145, %v435
    %v1149 = vmul.f32 %v1145, %v436
    %v1150 = vmul.f32 %v1145, %v437
    %v1151 = vmul.f32 %v1145, %v438
    %v1152 = vmul.f32 %v1145, %v439
    %v1153 = vmul.f32 %v1145, %v440
    %v1154 = vmul.f32 %v1145, %v441
    %v1155 = vmul.f32 %v1145, %v442
    %v1156 = vmul.f32 %v1145, %v443
    %v1157 = vmul.f32 %v1145, %v444
    %v1158 = vmul.f32 %v1145, %v445
    %v1159 = vmul.f32 %v1145, %v446
    %v1160 = vmul.f32 %v1145, %v447
    %v1176 = vrot.slane %v1146, 1
    %v1177 = vrot.slane %v1151, 1
    %v1178 = vsel %vm983, %v1176, %v1177
    %v1179 = vrot.slane %v1147, 1
    %v1180 = vrot.slane %v1152, 1
    %v1181 = vsel %vm983, %v1179, %v1180
    %v1182 = vrot.slane %v1148, 1
    %v1183 = vrot.slane %v1153, 1
    %v1184 = vsel %vm983, %v1182, %v1183
    %v1185 = vrot.slane %v1149, 1
    %v1186 = vrot.slane %v1154, 1
    %v1187 = vsel %vm983, %v1185, %v1186
    %v1188 = vrot.slane %v1150, 1
    %v1189 = vrot.slane %v1155, 1
    %v1190 = vsel %vm983, %v1188, %v1189
    %v1191 = vrot.slane %v1156, 1
    %v1192 = vsel %vm983, %v1177, %v1191
    %v1193 = vrot.slane %v1157, 1
    %v1194 = vsel %vm983, %v1180, %v1193
    %v1195 = vrot.slane %v1158, 1
    %v1196 = vsel %vm983, %v1183, %v1195
    %v1197 = vrot.slane %v1159, 1
    %v1198 = vsel %vm983, %v1186, %v1197
    %v1199 = vrot.slane %v1160, 1
    %v1200 = vsel %vm983, %v1189, %v1199
    %1201 = vrot.lane.b32.xlu0 %v1178, 127
    %v1202 = vpop.permute.xlu0 %1201
    %1203 = vrot.lane.b32.xlu0 %v1181, 127
    %v1204 = vpop.permute.xlu0 %1203
    %1205 = vrot.lane.b32.xlu0 %v1184, 127
    %v1206 = vpop.permute.xlu0 %1205
    %1207 = vrot.lane.b32.xlu0 %v1187, 127
    %v1208 = vpop.permute.xlu0 %1207
    %1209 = vrot.lane.b32.xlu0 %v1190, 127
    %v1210 = vpop.permute.xlu0 %1209
    %1211 = vrot.lane.b32.xlu0 %v1192, 127
    %v1212 = vpop.permute.xlu0 %1211
    %1213 = vrot.lane.b32.xlu0 %v1194, 127
    %v1214 = vpop.permute.xlu0 %1213
    %1215 = vrot.lane.b32.xlu0 %v1196, 127
    %v1216 = vpop.permute.xlu0 %1215
    %1217 = vrot.lane.b32.xlu0 %v1198, 127
    %v1218 = vpop.permute.xlu0 %1217
    %1219 = vrot.lane.b32.xlu0 %v1200, 127
    %v1220 = vpop.permute.xlu0 %1219
    %v1221 = vsel %vm601, %v1202, %v1204
    %v1222 = vsel %vm601, %v1204, %v1206
    %v1223 = vsel %vm601, %v1206, %v1208
    %v1224 = vsel %vm601, %v1208, %v1210
    %v1225 = vsel %vm601, %v1212, %v1214
    %v1226 = vsel %vm601, %v1214, %v1216
    %v1227 = vsel %vm601, %v1216, %v1218
    %v1228 = vsel %vm601, %v1218, %v1220
    %v1237 = vadd.f32 %v1012, %v1221
    %v1238 = vadd.f32 %v1013, %v1222
    %v1239 = vadd.f32 %v1014, %v1223
    %v1240 = vadd.f32 %v1015, %v1224
    %v1241 = vadd.f32 %v1016, %v1225
    %v1242 = vadd.f32 %v1017, %v1226
    %v1243 = vadd.f32 %v1018, %v1227
    %v1244 = vadd.f32 %v1019, %v1228
    %s1245 = sld [smem:[#allocation7 + $0x1f]]
    %v1246 = vstv %s1245
    %v1247 = vmul.f32 %v1246, %v433
    %v1248 = vmul.f32 %v1246, %v434
    %v1249 = vmul.f32 %v1246, %v435
    %v1250 = vmul.f32 %v1246, %v436
    %v1251 = vmul.f32 %v1246, %v437
    %v1252 = vmul.f32 %v1246, %v438
    %v1253 = vmul.f32 %v1246, %v439
    %v1254 = vmul.f32 %v1246, %v440
    %v1255 = vmul.f32 %v1246, %v441
    %v1256 = vmul.f32 %v1246, %v442
    %v1257 = vmul.f32 %v1246, %v443
    %v1258 = vmul.f32 %v1246, %v444
    %v1259 = vmul.f32 %v1246, %v445
    %v1260 = vmul.f32 %v1246, %v446
    %v1261 = vmul.f32 %v1246, %v447
    %v1277 = vrot.slane %v1247, 1
    %v1278 = vrot.slane %v1252, 1
    %v1279 = vsel %vm983, %v1277, %v1278
    %v1280 = vrot.slane %v1248, 1
    %v1281 = vrot.slane %v1253, 1
    %v1282 = vsel %vm983, %v1280, %v1281
    %v1283 = vrot.slane %v1249, 1
    %v1284 = vrot.slane %v1254, 1
    %v1285 = vsel %vm983, %v1283, %v1284
    %v1286 = vrot.slane %v1250, 1
    %v1287 = vrot.slane %v1255, 1
    %v1288 = vsel %vm983, %v1286, %v1287
    %v1289 = vrot.slane %v1251, 1
    %v1290 = vrot.slane %v1256, 1
    %v1291 = vsel %vm983, %v1289, %v1290
    %v1292 = vrot.slane %v1257, 1
    %v1293 = vsel %vm983, %v1278, %v1292
    %v1294 = vrot.slane %v1258, 1
    %v1295 = vsel %vm983, %v1281, %v1294
    %v1296 = vrot.slane %v1259, 1
    %v1297 = vsel %vm983, %v1284, %v1296
    %v1298 = vrot.slane %v1260, 1
    %v1299 = vsel %vm983, %v1287, %v1298
    %v1300 = vrot.slane %v1261, 1
    %v1301 = vsel %vm983, %v1290, %v1300
    %1302 = vrot.lane.b32.xlu0 %v1279, 127
    %v1303 = vpop.permute.xlu0 %1302
    %1304 = vrot.lane.b32.xlu0 %v1282, 127
    %v1305 = vpop.permute.xlu0 %1304
    %1306 = vrot.lane.b32.xlu0 %v1285, 127
    %v1307 = vpop.permute.xlu0 %1306
    %1308 = vrot.lane.b32.xlu0 %v1288, 127
    %v1309 = vpop.permute.xlu0 %1308
    %1310 = vrot.lane.b32.xlu0 %v1291, 127
    %v1311 = vpop.permute.xlu0 %1310
    %1312 = vrot.lane.b32.xlu0 %v1293, 127
    %v1313 = vpop.permute.xlu0 %1312
    %1314 = vrot.lane.b32.xlu0 %v1295, 127
    %v1315 = vpop.permute.xlu0 %1314
    %1316 = vrot.lane.b32.xlu0 %v1297, 127
    %v1317 = vpop.permute.xlu0 %1316
    %1318 = vrot.lane.b32.xlu0 %v1299, 127
    %v1319 = vpop.permute.xlu0 %1318
    %1320 = vrot.lane.b32.xlu0 %v1301, 127
    %v1321 = vpop.permute.xlu0 %1320
    %v1322 = vsel %vm601, %v1303, %v1305
    %v1323 = vsel %vm601, %v1305, %v1307
    %v1324 = vsel %vm601, %v1307, %v1309
    %v1325 = vsel %vm601, %v1309, %v1311
    %v1326 = vsel %vm601, %v1313, %v1315
    %v1327 = vsel %vm601, %v1315, %v1317
    %v1328 = vsel %vm601, %v1317, %v1319
    %v1329 = vsel %vm601, %v1319, %v1321
    %v1338 = vadd.f32 %v1074, %v1322
    %v1339 = vadd.f32 %v1075, %v1323
    %v1340 = vadd.f32 %v1076, %v1324
    %v1341 = vadd.f32 %v1077, %v1325
    %v1342 = vadd.f32 %v1078, %v1326
    %v1343 = vadd.f32 %v1079, %v1327
    %v1344 = vadd.f32 %v1080, %v1328
    %v1345 = vadd.f32 %v1081, %v1329
    %s1346 = sld [smem:[#allocation7 + $0x3a]]
    %v1347 = vstv %s1346
    %v1348 = vmul.f32 %v1347, %v433
    %v1349 = vmul.f32 %v1347, %v434
    %v1350 = vmul.f32 %v1347, %v435
    %v1351 = vmul.f32 %v1347, %v436
    %v1352 = vmul.f32 %v1347, %v437
    %v1353 = vmul.f32 %v1347, %v438
    %v1354 = vmul.f32 %v1347, %v439
    %v1355 = vmul.f32 %v1347, %v440
    %v1356 = vmul.f32 %v1347, %v441
    %v1357 = vmul.f32 %v1347, %v442
    %v1358 = vmul.f32 %v1347, %v443
    %v1359 = vmul.f32 %v1347, %v444
    %v1360 = vmul.f32 %v1347, %v445
    %v1361 = vmul.f32 %v1347, %v446
    %v1362 = vmul.f32 %v1347, %v447
    %v1378 = vrot.slane %v1348, 1
    %v1379 = vrot.slane %v1353, 1
    %v1380 = vsel %vm983, %v1378, %v1379
    %v1381 = vrot.slane %v1349, 1
    %v1382 = vrot.slane %v1354, 1
    %v1383 = vsel %vm983, %v1381, %v1382
    %v1384 = vrot.slane %v1350, 1
    %v1385 = vrot.slane %v1355, 1
    %v1386 = vsel %vm983, %v1384, %v1385
    %v1387 = vrot.slane %v1351, 1
    %v1388 = vrot.slane %v1356, 1
    %v1389 = vsel %vm983, %v1387, %v1388
    %v1390 = vrot.slane %v1352, 1
    %v1391 = vrot.slane %v1357, 1
    %v1392 = vsel %vm983, %v1390, %v1391
    %v1393 = vrot.slane %v1358, 1
    %v1394 = vsel %vm983, %v1379, %v1393
    %v1395 = vrot.slane %v1359, 1
    %v1396 = vsel %vm983, %v1382, %v1395
    %v1397 = vrot.slane %v1360, 1
    %v1398 = vsel %vm983, %v1385, %v1397
    %v1399 = vrot.slane %v1361, 1
    %v1400 = vsel %vm983, %v1388, %v1399
    %v1401 = vrot.slane %v1362, 1
    %v1402 = vsel %vm983, %v1391, %v1401
    %1403 = vrot.lane.b32.xlu0 %v1380, 127
    %v1404 = vpop.permute.xlu0 %1403
    %1405 = vrot.lane.b32.xlu0 %v1383, 127
    %v1406 = vpop.permute.xlu0 %1405
    %1407 = vrot.lane.b32.xlu0 %v1386, 127
    %v1408 = vpop.permute.xlu0 %1407
    %1409 = vrot.lane.b32.xlu0 %v1389, 127
    %v1410 = vpop.permute.xlu0 %1409
    %1411 = vrot.lane.b32.xlu0 %v1392, 127
    %v1412 = vpop.permute.xlu0 %1411
    %1413 = vrot.lane.b32.xlu0 %v1394, 127
    %v1414 = vpop.permute.xlu0 %1413
    %1415 = vrot.lane.b32.xlu0 %v1396, 127
    %v1416 = vpop.permute.xlu0 %1415
    %1417 = vrot.lane.b32.xlu0 %v1398, 127
    %v1418 = vpop.permute.xlu0 %1417
    %1419 = vrot.lane.b32.xlu0 %v1400, 127
    %v1420 = vpop.permute.xlu0 %1419
    %1421 = vrot.lane.b32.xlu0 %v1402, 127
    %v1422 = vpop.permute.xlu0 %1421
    %v1423 = vsel %vm601, %v1404, %v1406
    %v1424 = vsel %vm601, %v1406, %v1408
    %v1425 = vsel %vm601, %v1408, %v1410
    %v1426 = vsel %vm601, %v1410, %v1412
    %v1427 = vsel %vm601, %v1414, %v1416
    %v1428 = vsel %vm601, %v1416, %v1418
    %v1429 = vsel %vm601, %v1418, %v1420
    %v1430 = vsel %vm601, %v1420, %v1422
    %v1439 = vadd.f32 %v1136, %v1423
    %v1440 = vadd.f32 %v1137, %v1424
    %v1441 = vadd.f32 %v1138, %v1425
    %v1442 = vadd.f32 %v1139, %v1426
    %v1443 = vadd.f32 %v1140, %v1427
    %v1444 = vadd.f32 %v1141, %v1428
    %v1445 = vadd.f32 %v1142, %v1429
    %v1446 = vadd.f32 %v1143, %v1430
    %s1447 = sld [smem:[#allocation7 + $0x5]]
    %v1448 = vstv %s1447
    %v1449 = vmul.f32 %v1448, %v490
    %v1450 = vmul.f32 %v1448, %v491
    %v1451 = vmul.f32 %v1448, %v492
    %v1452 = vmul.f32 %v1448, %v493
    %v1453 = vmul.f32 %v1448, %v494
    %v1454 = vmul.f32 %v1448, %v495
    %v1455 = vmul.f32 %v1448, %v496
    %v1456 = vmul.f32 %v1448, %v497
    %v1457 = vmul.f32 %v1448, %v498
    %v1458 = vmul.f32 %v1448, %v499
    %v1459 = vmul.f32 %v1448, %v500
    %v1460 = vmul.f32 %v1448, %v501
    %v1461 = vmul.f32 %v1448, %v502
    %v1462 = vmul.f32 %v1448, %v503
    %v1463 = vmul.f32 %v1448, %v504
    %v1479 = vrot.slane %v1449, 1
    %v1480 = vrot.slane %v1454, 1
    %v1481 = vsel %vm983, %v1479, %v1480
    %v1482 = vrot.slane %v1450, 1
    %v1483 = vrot.slane %v1455, 1
    %v1484 = vsel %vm983, %v1482, %v1483
    %v1485 = vrot.slane %v1451, 1
    %v1486 = vrot.slane %v1456, 1
    %v1487 = vsel %vm983, %v1485, %v1486
    %v1488 = vrot.slane %v1452, 1
    %v1489 = vrot.slane %v1457, 1
    %v1490 = vsel %vm983, %v1488, %v1489
    %v1491 = vrot.slane %v1453, 1
    %v1492 = vrot.slane %v1458, 1
    %v1493 = vsel %vm983, %v1491, %v1492
    %v1494 = vrot.slane %v1459, 1
    %v1495 = vsel %vm983, %v1480, %v1494
    %v1496 = vrot.slane %v1460, 1
    %v1497 = vsel %vm983, %v1483, %v1496
    %v1498 = vrot.slane %v1461, 1
    %v1499 = vsel %vm983, %v1486, %v1498
    %v1500 = vrot.slane %v1462, 1
    %v1501 = vsel %vm983, %v1489, %v1500
    %v1502 = vrot.slane %v1463, 1
    %v1503 = vsel %vm983, %v1492, %v1502
    %1504 = vrot.lane.b32.xlu0 %v1481, 126
    %v1505 = vpop.permute.xlu0 %1504
    %1506 = vrot.lane.b32.xlu0 %v1484, 126
    %v1507 = vpop.permute.xlu0 %1506
    %1508 = vrot.lane.b32.xlu0 %v1487, 126
    %v1509 = vpop.permute.xlu0 %1508
    %1510 = vrot.lane.b32.xlu0 %v1490, 126
    %v1511 = vpop.permute.xlu0 %1510
    %1512 = vrot.lane.b32.xlu0 %v1493, 126
    %v1513 = vpop.permute.xlu0 %1512
    %1514 = vrot.lane.b32.xlu0 %v1495, 126
    %v1515 = vpop.permute.xlu0 %1514
    %1516 = vrot.lane.b32.xlu0 %v1497, 126
    %v1517 = vpop.permute.xlu0 %1516
    %1518 = vrot.lane.b32.xlu0 %v1499, 126
    %v1519 = vpop.permute.xlu0 %1518
    %1520 = vrot.lane.b32.xlu0 %v1501, 126
    %v1521 = vpop.permute.xlu0 %1520
    %1522 = vrot.lane.b32.xlu0 %v1503, 126
    %v1523 = vpop.permute.xlu0 %1522
    %v1524 = vsel %vm800, %v1505, %v1507
    %v1525 = vsel %vm800, %v1507, %v1509
    %v1526 = vsel %vm800, %v1509, %v1511
    %v1527 = vsel %vm800, %v1511, %v1513
    %v1528 = vsel %vm800, %v1515, %v1517
    %v1529 = vsel %vm800, %v1517, %v1519
    %v1530 = vsel %vm800, %v1519, %v1521
    %v1531 = vsel %vm800, %v1521, %v1523
    %v1540 = vadd.f32 %v1237, %v1524
    %v1541 = vadd.f32 %v1238, %v1525
    %v1542 = vadd.f32 %v1239, %v1526
    %v1543 = vadd.f32 %v1240, %v1527
    %v1544 = vadd.f32 %v1241, %v1528
    %v1545 = vadd.f32 %v1242, %v1529
    %v1546 = vadd.f32 %v1243, %v1530
    %v1547 = vadd.f32 %v1244, %v1531
    %s1548 = sld [smem:[#allocation7 + $0x20]]
    %v1549 = vstv %s1548
    %v1550 = vmul.f32 %v1549, %v490
    %v1551 = vmul.f32 %v1549, %v491
    %v1552 = vmul.f32 %v1549, %v492
    %v1553 = vmul.f32 %v1549, %v493
    %v1554 = vmul.f32 %v1549, %v494
    %v1555 = vmul.f32 %v1549, %v495
    %v1556 = vmul.f32 %v1549, %v496
    %v1557 = vmul.f32 %v1549, %v497
    %v1558 = vmul.f32 %v1549, %v498
    %v1559 = vmul.f32 %v1549, %v499
    %v1560 = vmul.f32 %v1549, %v500
    %v1561 = vmul.f32 %v1549, %v501
    %v1562 = vmul.f32 %v1549, %v502
    %v1563 = vmul.f32 %v1549, %v503
    %v1564 = vmul.f32 %v1549, %v504
    %v1580 = vrot.slane %v1550, 1
    %v1581 = vrot.slane %v1555, 1
    %v1582 = vsel %vm983, %v1580, %v1581
    %v1583 = vrot.slane %v1551, 1
    %v1584 = vrot.slane %v1556, 1
    %v1585 = vsel %vm983, %v1583, %v1584
    %v1586 = vrot.slane %v1552, 1
    %v1587 = vrot.slane %v1557, 1
    %v1588 = vsel %vm983, %v1586, %v1587
    %v1589 = vrot.slane %v1553, 1
    %v1590 = vrot.slane %v1558, 1
    %v1591 = vsel %vm983, %v1589, %v1590
    %v1592 = vrot.slane %v1554, 1
    %v1593 = vrot.slane %v1559, 1
    %v1594 = vsel %vm983, %v1592, %v1593
    %v1595 = vrot.slane %v1560, 1
    %v1596 = vsel %vm983, %v1581, %v1595
    %v1597 = vrot.slane %v1561, 1
    %v1598 = vsel %vm983, %v1584, %v1597
    %v1599 = vrot.slane %v1562, 1
    %v1600 = vsel %vm983, %v1587, %v1599
    %v1601 = vrot.slane %v1563, 1
    %v1602 = vsel %vm983, %v1590, %v1601
    %v1603 = vrot.slane %v1564, 1
    %v1604 = vsel %vm983, %v1593, %v1603
    %1605 = vrot.lane.b32.xlu0 %v1582, 126
    %v1606 = vpop.permute.xlu0 %1605
    %1607 = vrot.lane.b32.xlu0 %v1585, 126
    %v1608 = vpop.permute.xlu0 %1607
    %1609 = vrot.lane.b32.xlu0 %v1588, 126
    %v1610 = vpop.permute.xlu0 %1609
    %1611 = vrot.lane.b32.xlu0 %v1591, 126
    %v1612 = vpop.permute.xlu0 %1611
    %1613 = vrot.lane.b32.xlu0 %v1594, 126
    %v1614 = vpop.permute.xlu0 %1613
    %1615 = vrot.lane.b32.xlu0 %v1596, 126
    %v1616 = vpop.permute.xlu0 %1615
    %1617 = vrot.lane.b32.xlu0 %v1598, 126
    %v1618 = vpop.permute.xlu0 %1617
    %1619 = vrot.lane.b32.xlu0 %v1600, 126
    %v1620 = vpop.permute.xlu0 %1619
    %1621 = vrot.lane.b32.xlu0 %v1602, 126
    %v1622 = vpop.permute.xlu0 %1621
    %1623 = vrot.lane.b32.xlu0 %v1604, 126
    %v1624 = vpop.permute.xlu0 %1623
    %v1625 = vsel %vm800, %v1606, %v1608
    %v1626 = vsel %vm800, %v1608, %v1610
    %v1627 = vsel %vm800, %v1610, %v1612
    %v1628 = vsel %vm800, %v1612, %v1614
    %v1629 = vsel %vm800, %v1616, %v1618
    %v1630 = vsel %vm800, %v1618, %v1620
    %v1631 = vsel %vm800, %v1620, %v1622
    %v1632 = vsel %vm800, %v1622, %v1624
    %v1641 = vadd.f32 %v1338, %v1625
    %v1642 = vadd.f32 %v1339, %v1626
    %v1643 = vadd.f32 %v1340, %v1627
    %v1644 = vadd.f32 %v1341, %v1628
    %v1645 = vadd.f32 %v1342, %v1629
    %v1646 = vadd.f32 %v1343, %v1630
    %v1647 = vadd.f32 %v1344, %v1631
    %v1648 = vadd.f32 %v1345, %v1632
    %s1649 = sld [smem:[#allocation7 + $0x3b]]
    %v1650 = vstv %s1649
    %v1651 = vmul.f32 %v1650, %v490
    %v1652 = vmul.f32 %v1650, %v491
    %v1653 = vmul.f32 %v1650, %v492
    %v1654 = vmul.f32 %v1650, %v493
    %v1655 = vmul.f32 %v1650, %v494
    %v1656 = vmul.f32 %v1650, %v495
    %v1657 = vmul.f32 %v1650, %v496
    %v1658 = vmul.f32 %v1650, %v497
    %v1659 = vmul.f32 %v1650, %v498
    %v1660 = vmul.f32 %v1650, %v499
    %v1661 = vmul.f32 %v1650, %v500
    %v1662 = vmul.f32 %v1650, %v501
    %v1663 = vmul.f32 %v1650, %v502
    %v1664 = vmul.f32 %v1650, %v503
    %v1665 = vmul.f32 %v1650, %v504
    %v1681 = vrot.slane %v1651, 1
    %v1682 = vrot.slane %v1656, 1
    %v1683 = vsel %vm983, %v1681, %v1682
    %v1684 = vrot.slane %v1652, 1
    %v1685 = vrot.slane %v1657, 1
    %v1686 = vsel %vm983, %v1684, %v1685
    %v1687 = vrot.slane %v1653, 1
    %v1688 = vrot.slane %v1658, 1
    %v1689 = vsel %vm983, %v1687, %v1688
    %v1690 = vrot.slane %v1654, 1
    %v1691 = vrot.slane %v1659, 1
    %v1692 = vsel %vm983, %v1690, %v1691
    %v1693 = vrot.slane %v1655, 1
    %v1694 = vrot.slane %v1660, 1
    %v1695 = vsel %vm983, %v1693, %v1694
    %v1696 = vrot.slane %v1661, 1
    %v1697 = vsel %vm983, %v1682, %v1696
    %v1698 = vrot.slane %v1662, 1
    %v1699 = vsel %vm983, %v1685, %v1698
    %v1700 = vrot.slane %v1663, 1
    %v1701 = vsel %vm983, %v1688, %v1700
    %v1702 = vrot.slane %v1664, 1
    %v1703 = vsel %vm983, %v1691, %v1702
    %v1704 = vrot.slane %v1665, 1
    %v1705 = vsel %vm983, %v1694, %v1704
    %1706 = vrot.lane.b32.xlu0 %v1683, 126
    %v1707 = vpop.permute.xlu0 %1706
    %1708 = vrot.lane.b32.xlu0 %v1686, 126
    %v1709 = vpop.permute.xlu0 %1708
    %1710 = vrot.lane.b32.xlu0 %v1689, 126
    %v1711 = vpop.permute.xlu0 %1710
    %1712 = vrot.lane.b32.xlu0 %v1692, 126
    %v1713 = vpop.permute.xlu0 %1712
    %1714 = vrot.lane.b32.xlu0 %v1695, 126
    %v1715 = vpop.permute.xlu0 %1714
    %1716 = vrot.lane.b32.xlu0 %v1697, 126
    %v1717 = vpop.permute.xlu0 %1716
    %1718 = vrot.lane.b32.xlu0 %v1699, 126
    %v1719 = vpop.permute.xlu0 %1718
    %1720 = vrot.lane.b32.xlu0 %v1701, 126
    %v1721 = vpop.permute.xlu0 %1720
    %1722 = vrot.lane.b32.xlu0 %v1703, 126
    %v1723 = vpop.permute.xlu0 %1722
    %1724 = vrot.lane.b32.xlu0 %v1705, 126
    %v1725 = vpop.permute.xlu0 %1724
    %v1726 = vsel %vm800, %v1707, %v1709
    %v1727 = vsel %vm800, %v1709, %v1711
    %v1728 = vsel %vm800, %v1711, %v1713
    %v1729 = vsel %vm800, %v1713, %v1715
    %v1730 = vsel %vm800, %v1717, %v1719
    %v1731 = vsel %vm800, %v1719, %v1721
    %v1732 = vsel %vm800, %v1721, %v1723
    %v1733 = vsel %vm800, %v1723, %v1725
    %v1742 = vadd.f32 %v1439, %v1726
    %v1743 = vadd.f32 %v1440, %v1727
    %v1744 = vadd.f32 %v1441, %v1728
    %v1745 = vadd.f32 %v1442, %v1729
    %v1746 = vadd.f32 %v1443, %v1730
    %v1747 = vadd.f32 %v1444, %v1731
    %v1748 = vadd.f32 %v1445, %v1732
    %v1749 = vadd.f32 %v1446, %v1733
    %s1750 = sld [smem:[#allocation7 + $0x6]]
    %v1751 = vstv %s1750
    %v1752 = vmul.f32 %v1751, %v457
    %v1753 = vmul.f32 %v1751, %v458
    %v1754 = vmul.f32 %v1751, %v459
    %v1755 = vmul.f32 %v1751, %v460
    %v1756 = vmul.f32 %v1751, %v461
    %v1757 = vmul.f32 %v1751, %v462
    %v1758 = vmul.f32 %v1751, %v463
    %v1759 = vmul.f32 %v1751, %v464
    %v1760 = vmul.f32 %v1751, %v465
    %v1761 = vmul.f32 %v1751, %v466
    %v1762 = vmul.f32 %v1751, %v467
    %v1763 = vmul.f32 %v1751, %v468
    %vm1776 = vcmask 1045504
    %v1777 = vrot.slane %v1752, 2
    %v1778 = vrot.slane %v1756, 2
    %v1779 = vsel %vm1776, %v1777, %v1778
    %v1780 = vrot.slane %v1753, 2
    %v1781 = vrot.slane %v1757, 2
    %v1782 = vsel %vm1776, %v1780, %v1781
    %v1783 = vrot.slane %v1754, 2
    %v1784 = vrot.slane %v1758, 2
    %v1785 = vsel %vm1776, %v1783, %v1784
    %v1786 = vrot.slane %v1755, 2
    %v1787 = vrot.slane %v1759, 2
    %v1788 = vsel %vm1776, %v1786, %v1787
    %v1789 = vrot.slane %v1760, 2
    %v1790 = vsel %vm1776, %v1778, %v1789
    %v1791 = vrot.slane %v1761, 2
    %v1792 = vsel %vm1776, %v1781, %v1791
    %v1793 = vrot.slane %v1762, 2
    %v1794 = vsel %vm1776, %v1784, %v1793
    %v1795 = vrot.slane %v1763, 2
    %v1796 = vsel %vm1776, %v1787, %v1795
    %v1805 = vadd.f32 %v1540, %v1779
    %v1806 = vadd.f32 %v1541, %v1782
    %v1807 = vadd.f32 %v1542, %v1785
    %v1808 = vadd.f32 %v1543, %v1788
    %v1809 = vadd.f32 %v1544, %v1790
    %v1810 = vadd.f32 %v1545, %v1792
    %v1811 = vadd.f32 %v1546, %v1794
    %v1812 = vadd.f32 %v1547, %v1796
    %s1813 = sld [smem:[#allocation7 + $0x21]]
    %v1814 = vstv %s1813
    %v1815 = vmul.f32 %v1814, %v457
    %v1816 = vmul.f32 %v1814, %v458
    %v1817 = vmul.f32 %v1814, %v459
    %v1818 = vmul.f32 %v1814, %v460
    %v1819 = vmul.f32 %v1814, %v461
    %v1820 = vmul.f32 %v1814, %v462
    %v1821 = vmul.f32 %v1814, %v463
    %v1822 = vmul.f32 %v1814, %v464
    %v1823 = vmul.f32 %v1814, %v465
    %v1824 = vmul.f32 %v1814, %v466
    %v1825 = vmul.f32 %v1814, %v467
    %v1826 = vmul.f32 %v1814, %v468
    %v1839 = vrot.slane %v1815, 2
    %v1840 = vrot.slane %v1819, 2
    %v1841 = vsel %vm1776, %v1839, %v1840
    %v1842 = vrot.slane %v1816, 2
    %v1843 = vrot.slane %v1820, 2
    %v1844 = vsel %vm1776, %v1842, %v1843
    %v1845 = vrot.slane %v1817, 2
    %v1846 = vrot.slane %v1821, 2
    %v1847 = vsel %vm1776, %v1845, %v1846
    %v1848 = vrot.slane %v1818, 2
    %v1849 = vrot.slane %v1822, 2
    %v1850 = vsel %vm1776, %v1848, %v1849
    %v1851 = vrot.slane %v1823, 2
    %v1852 = vsel %vm1776, %v1840, %v1851
    %v1853 = vrot.slane %v1824, 2
    %v1854 = vsel %vm1776, %v1843, %v1853
    %v1855 = vrot.slane %v1825, 2
    %v1856 = vsel %vm1776, %v1846, %v1855
    %v1857 = vrot.slane %v1826, 2
    %v1858 = vsel %vm1776, %v1849, %v1857
    %v1867 = vadd.f32 %v1641, %v1841
    %v1868 = vadd.f32 %v1642, %v1844
    %v1869 = vadd.f32 %v1643, %v1847
    %v1870 = vadd.f32 %v1644, %v1850
    %v1871 = vadd.f32 %v1645, %v1852
    %v1872 = vadd.f32 %v1646, %v1854
    %v1873 = vadd.f32 %v1647, %v1856
    %v1874 = vadd.f32 %v1648, %v1858
    %s1875 = sld [smem:[#allocation7 + $0x3c]]
    %v1876 = vstv %s1875
    %v1877 = vmul.f32 %v1876, %v457
    %v1878 = vmul.f32 %v1876, %v458
    %v1879 = vmul.f32 %v1876, %v459
    %v1880 = vmul.f32 %v1876, %v460
    %v1881 = vmul.f32 %v1876, %v461
    %v1882 = vmul.f32 %v1876, %v462
    %v1883 = vmul.f32 %v1876, %v463
    %v1884 = vmul.f32 %v1876, %v464
    %v1885 = vmul.f32 %v1876, %v465
    %v1886 = vmul.f32 %v1876, %v466
    %v1887 = vmul.f32 %v1876, %v467
    %v1888 = vmul.f32 %v1876, %v468
    %v1901 = vrot.slane %v1877, 2
    %v1902 = vrot.slane %v1881, 2
    %v1903 = vsel %vm1776, %v1901, %v1902
    %v1904 = vrot.slane %v1878, 2
    %v1905 = vrot.slane %v1882, 2
    %v1906 = vsel %vm1776, %v1904, %v1905
    %v1907 = vrot.slane %v1879, 2
    %v1908 = vrot.slane %v1883, 2
    %v1909 = vsel %vm1776, %v1907, %v1908
    %v1910 = vrot.slane %v1880, 2
    %v1911 = vrot.slane %v1884, 2
    %v1912 = vsel %vm1776, %v1910, %v1911
    %v1913 = vrot.slane %v1885, 2
    %v1914 = vsel %vm1776, %v1902, %v1913
    %v1915 = vrot.slane %v1886, 2
    %v1916 = vsel %vm1776, %v1905, %v1915
    %v1917 = vrot.slane %v1887, 2
    %v1918 = vsel %vm1776, %v1908, %v1917
    %v1919 = vrot.slane %v1888, 2
    %v1920 = vsel %vm1776, %v1911, %v1919
    %v1929 = vadd.f32 %v1742, %v1903
    %v1930 = vadd.f32 %v1743, %v1906
    %v1931 = vadd.f32 %v1744, %v1909
    %v1932 = vadd.f32 %v1745, %v1912
    %v1933 = vadd.f32 %v1746, %v1914
    %v1934 = vadd.f32 %v1747, %v1916
    %v1935 = vadd.f32 %v1748, %v1918
    %v1936 = vadd.f32 %v1749, %v1920
    %s1937 = sld [smem:[#allocation7 + $0x7]]
    %v1938 = vstv %s1937
    %v1939 = vmul.f32 %v1938, %v433
    %v1940 = vmul.f32 %v1938, %v434
    %v1941 = vmul.f32 %v1938, %v435
    %v1942 = vmul.f32 %v1938, %v436
    %v1943 = vmul.f32 %v1938, %v437
    %v1944 = vmul.f32 %v1938, %v438
    %v1945 = vmul.f32 %v1938, %v439
    %v1946 = vmul.f32 %v1938, %v440
    %v1947 = vmul.f32 %v1938, %v441
    %v1948 = vmul.f32 %v1938, %v442
    %v1949 = vmul.f32 %v1938, %v443
    %v1950 = vmul.f32 %v1938, %v444
    %v1951 = vmul.f32 %v1938, %v445
    %v1952 = vmul.f32 %v1938, %v446
    %v1953 = vmul.f32 %v1938, %v447
    %v1969 = vrot.slane %v1939, 2
    %v1970 = vrot.slane %v1944, 2
    %v1971 = vsel %vm1776, %v1969, %v1970
    %v1972 = vrot.slane %v1940, 2
    %v1973 = vrot.slane %v1945, 2
    %v1974 = vsel %vm1776, %v1972, %v1973
    %v1975 = vrot.slane %v1941, 2
    %v1976 = vrot.slane %v1946, 2
    %v1977 = vsel %vm1776, %v1975, %v1976
    %v1978 = vrot.slane %v1942, 2
    %v1979 = vrot.slane %v1947, 2
    %v1980 = vsel %vm1776, %v1978, %v1979
    %v1981 = vrot.slane %v1943, 2
    %v1982 = vrot.slane %v1948, 2
    %v1983 = vsel %vm1776, %v1981, %v1982
    %v1984 = vrot.slane %v1949, 2
    %v1985 = vsel %vm1776, %v1970, %v1984
    %v1986 = vrot.slane %v1950, 2
    %v1987 = vsel %vm1776, %v1973, %v1986
    %v1988 = vrot.slane %v1951, 2
    %v1989 = vsel %vm1776, %v1976, %v1988
    %v1990 = vrot.slane %v1952, 2
    %v1991 = vsel %vm1776, %v1979, %v1990
    %v1992 = vrot.slane %v1953, 2
    %v1993 = vsel %vm1776, %v1982, %v1992
    %1994 = vrot.lane.b32.xlu0 %v1971, 127
    %v1995 = vpop.permute.xlu0 %1994
    %1996 = vrot.lane.b32.xlu0 %v1974, 127
    %v1997 = vpop.permute.xlu0 %1996
    %1998 = vrot.lane.b32.xlu0 %v1977, 127
    %v1999 = vpop.permute.xlu0 %1998
    %2000 = vrot.lane.b32.xlu0 %v1980, 127
    %v2001 = vpop.permute.xlu0 %2000
    %2002 = vrot.lane.b32.xlu0 %v1983, 127
    %v2003 = vpop.permute.xlu0 %2002
    %2004 = vrot.lane.b32.xlu0 %v1985, 127
    %v2005 = vpop.permute.xlu0 %2004
    %2006 = vrot.lane.b32.xlu0 %v1987, 127
    %v2007 = vpop.permute.xlu0 %2006
    %2008 = vrot.lane.b32.xlu0 %v1989, 127
    %v2009 = vpop.permute.xlu0 %2008
    %2010 = vrot.lane.b32.xlu0 %v1991, 127
    %v2011 = vpop.permute.xlu0 %2010
    %2012 = vrot.lane.b32.xlu0 %v1993, 127
    %v2013 = vpop.permute.xlu0 %2012
    %v2014 = vsel %vm601, %v1995, %v1997
    %v2015 = vsel %vm601, %v1997, %v1999
    %v2016 = vsel %vm601, %v1999, %v2001
    %v2017 = vsel %vm601, %v2001, %v2003
    %v2018 = vsel %vm601, %v2005, %v2007
    %v2019 = vsel %vm601, %v2007, %v2009
    %v2020 = vsel %vm601, %v2009, %v2011
    %v2021 = vsel %vm601, %v2011, %v2013
    %v2030 = vadd.f32 %v1805, %v2014
    %v2031 = vadd.f32 %v1806, %v2015
    %v2032 = vadd.f32 %v1807, %v2016
    %v2033 = vadd.f32 %v1808, %v2017
    %v2034 = vadd.f32 %v1809, %v2018
    %v2035 = vadd.f32 %v1810, %v2019
    %v2036 = vadd.f32 %v1811, %v2020
    %v2037 = vadd.f32 %v1812, %v2021
    %s2038 = sld [smem:[#allocation7 + $0x22]]
    %v2039 = vstv %s2038
    %v2040 = vmul.f32 %v2039, %v433
    %v2041 = vmul.f32 %v2039, %v434
    %v2042 = vmul.f32 %v2039, %v435
    %v2043 = vmul.f32 %v2039, %v436
    %v2044 = vmul.f32 %v2039, %v437
    %v2045 = vmul.f32 %v2039, %v438
    %v2046 = vmul.f32 %v2039, %v439
    %v2047 = vmul.f32 %v2039, %v440
    %v2048 = vmul.f32 %v2039, %v441
    %v2049 = vmul.f32 %v2039, %v442
    %v2050 = vmul.f32 %v2039, %v443
    %v2051 = vmul.f32 %v2039, %v444
    %v2052 = vmul.f32 %v2039, %v445
    %v2053 = vmul.f32 %v2039, %v446
    %v2054 = vmul.f32 %v2039, %v447
    %v2070 = vrot.slane %v2040, 2
    %v2071 = vrot.slane %v2045, 2
    %v2072 = vsel %vm1776, %v2070, %v2071
    %v2073 = vrot.slane %v2041, 2
    %v2074 = vrot.slane %v2046, 2
    %v2075 = vsel %vm1776, %v2073, %v2074
    %v2076 = vrot.slane %v2042, 2
    %v2077 = vrot.slane %v2047, 2
    %v2078 = vsel %vm1776, %v2076, %v2077
    %v2079 = vrot.slane %v2043, 2
    %v2080 = vrot.slane %v2048, 2
    %v2081 = vsel %vm1776, %v2079, %v2080
    %v2082 = vrot.slane %v2044, 2
    %v2083 = vrot.slane %v2049, 2
    %v2084 = vsel %vm1776, %v2082, %v2083
    %v2085 = vrot.slane %v2050, 2
    %v2086 = vsel %vm1776, %v2071, %v2085
    %v2087 = vrot.slane %v2051, 2
    %v2088 = vsel %vm1776, %v2074, %v2087
    %v2089 = vrot.slane %v2052, 2
    %v2090 = vsel %vm1776, %v2077, %v2089
    %v2091 = vrot.slane %v2053, 2
    %v2092 = vsel %vm1776, %v2080, %v2091
    %v2093 = vrot.slane %v2054, 2
    %v2094 = vsel %vm1776, %v2083, %v2093
    %2095 = vrot.lane.b32.xlu0 %v2072, 127
    %v2096 = vpop.permute.xlu0 %2095
    %2097 = vrot.lane.b32.xlu0 %v2075, 127
    %v2098 = vpop.permute.xlu0 %2097
    %2099 = vrot.lane.b32.xlu0 %v2078, 127
    %v2100 = vpop.permute.xlu0 %2099
    %2101 = vrot.lane.b32.xlu0 %v2081, 127
    %v2102 = vpop.permute.xlu0 %2101
    %2103 = vrot.lane.b32.xlu0 %v2084, 127
    %v2104 = vpop.permute.xlu0 %2103
    %2105 = vrot.lane.b32.xlu0 %v2086, 127
    %v2106 = vpop.permute.xlu0 %2105
    %2107 = vrot.lane.b32.xlu0 %v2088, 127
    %v2108 = vpop.permute.xlu0 %2107
    %2109 = vrot.lane.b32.xlu0 %v2090, 127
    %v2110 = vpop.permute.xlu0 %2109
    %2111 = vrot.lane.b32.xlu0 %v2092, 127
    %v2112 = vpop.permute.xlu0 %2111
    %2113 = vrot.lane.b32.xlu0 %v2094, 127
    %v2114 = vpop.permute.xlu0 %2113
    %v2115 = vsel %vm601, %v2096, %v2098
    %v2116 = vsel %vm601, %v2098, %v2100
    %v2117 = vsel %vm601, %v2100, %v2102
    %v2118 = vsel %vm601, %v2102, %v2104
    %v2119 = vsel %vm601, %v2106, %v2108
    %v2120 = vsel %vm601, %v2108, %v2110
    %v2121 = vsel %vm601, %v2110, %v2112
    %v2122 = vsel %vm601, %v2112, %v2114
    %v2131 = vadd.f32 %v1867, %v2115
    %v2132 = vadd.f32 %v1868, %v2116
    %v2133 = vadd.f32 %v1869, %v2117
    %v2134 = vadd.f32 %v1870, %v2118
    %v2135 = vadd.f32 %v1871, %v2119
    %v2136 = vadd.f32 %v1872, %v2120
    %v2137 = vadd.f32 %v1873, %v2121
    %v2138 = vadd.f32 %v1874, %v2122
    %s2139 = sld [smem:[#allocation7 + $0x3d]]
    %v2140 = vstv %s2139
    %v2141 = vmul.f32 %v2140, %v433
    %v2142 = vmul.f32 %v2140, %v434
    %v2143 = vmul.f32 %v2140, %v435
    %v2144 = vmul.f32 %v2140, %v436
    %v2145 = vmul.f32 %v2140, %v437
    %v2146 = vmul.f32 %v2140, %v438
    %v2147 = vmul.f32 %v2140, %v439
    %v2148 = vmul.f32 %v2140, %v440
    %v2149 = vmul.f32 %v2140, %v441
    %v2150 = vmul.f32 %v2140, %v442
    %v2151 = vmul.f32 %v2140, %v443
    %v2152 = vmul.f32 %v2140, %v444
    %v2153 = vmul.f32 %v2140, %v445
    %v2154 = vmul.f32 %v2140, %v446
    %v2155 = vmul.f32 %v2140, %v447
    %v2171 = vrot.slane %v2141, 2
    %v2172 = vrot.slane %v2146, 2
    %v2173 = vsel %vm1776, %v2171, %v2172
    %v2174 = vrot.slane %v2142, 2
    %v2175 = vrot.slane %v2147, 2
    %v2176 = vsel %vm1776, %v2174, %v2175
    %v2177 = vrot.slane %v2143, 2
    %v2178 = vrot.slane %v2148, 2
    %v2179 = vsel %vm1776, %v2177, %v2178
    %v2180 = vrot.slane %v2144, 2
    %v2181 = vrot.slane %v2149, 2
    %v2182 = vsel %vm1776, %v2180, %v2181
    %v2183 = vrot.slane %v2145, 2
    %v2184 = vrot.slane %v2150, 2
    %v2185 = vsel %vm1776, %v2183, %v2184
    %v2186 = vrot.slane %v2151, 2
    %v2187 = vsel %vm1776, %v2172, %v2186
    %v2188 = vrot.slane %v2152, 2
    %v2189 = vsel %vm1776, %v2175, %v2188
    %v2190 = vrot.slane %v2153, 2
    %v2191 = vsel %vm1776, %v2178, %v2190
    %v2192 = vrot.slane %v2154, 2
    %v2193 = vsel %vm1776, %v2181, %v2192
    %v2194 = vrot.slane %v2155, 2
    %v2195 = vsel %vm1776, %v2184, %v2194
    %2196 = vrot.lane.b32.xlu0 %v2173, 127
    %v2197 = vpop.permute.xlu0 %2196
    %2198 = vrot.lane.b32.xlu0 %v2176, 127
    %v2199 = vpop.permute.xlu0 %2198
    %2200 = vrot.lane.b32.xlu0 %v2179, 127
    %v2201 = vpop.permute.xlu0 %2200
    %2202 = vrot.lane.b32.xlu0 %v2182, 127
    %v2203 = vpop.permute.xlu0 %2202
    %2204 = vrot.lane.b32.xlu0 %v2185, 127
    %v2205 = vpop.permute.xlu0 %2204
    %2206 = vrot.lane.b32.xlu0 %v2187, 127
    %v2207 = vpop.permute.xlu0 %2206
    %2208 = vrot.lane.b32.xlu0 %v2189, 127
    %v2209 = vpop.permute.xlu0 %2208
    %2210 = vrot.lane.b32.xlu0 %v2191, 127
    %v2211 = vpop.permute.xlu0 %2210
    %2212 = vrot.lane.b32.xlu0 %v2193, 127
    %v2213 = vpop.permute.xlu0 %2212
    %2214 = vrot.lane.b32.xlu0 %v2195, 127
    %v2215 = vpop.permute.xlu0 %2214
    %v2216 = vsel %vm601, %v2197, %v2199
    %v2217 = vsel %vm601, %v2199, %v2201
    %v2218 = vsel %vm601, %v2201, %v2203
    %v2219 = vsel %vm601, %v2203, %v2205
    %v2220 = vsel %vm601, %v2207, %v2209
    %v2221 = vsel %vm601, %v2209, %v2211
    %v2222 = vsel %vm601, %v2211, %v2213
    %v2223 = vsel %vm601, %v2213, %v2215
    %v2232 = vadd.f32 %v1929, %v2216
    %v2233 = vadd.f32 %v1930, %v2217
    %v2234 = vadd.f32 %v1931, %v2218
    %v2235 = vadd.f32 %v1932, %v2219
    %v2236 = vadd.f32 %v1933, %v2220
    %v2237 = vadd.f32 %v1934, %v2221
    %v2238 = vadd.f32 %v1935, %v2222
    %v2239 = vadd.f32 %v1936, %v2223
    %s2240 = sld [smem:[#allocation7 + $0x8]]
    %v2241 = vstv %s2240
    %v2242 = vmul.f32 %v2241, %v490
    %v2243 = vmul.f32 %v2241, %v491
    %v2244 = vmul.f32 %v2241, %v492
    %v2245 = vmul.f32 %v2241, %v493
    %v2246 = vmul.f32 %v2241, %v494
    %v2247 = vmul.f32 %v2241, %v495
    %v2248 = vmul.f32 %v2241, %v496
    %v2249 = vmul.f32 %v2241, %v497
    %v2250 = vmul.f32 %v2241, %v498
    %v2251 = vmul.f32 %v2241, %v499
    %v2252 = vmul.f32 %v2241, %v500
    %v2253 = vmul.f32 %v2241, %v501
    %v2254 = vmul.f32 %v2241, %v502
    %v2255 = vmul.f32 %v2241, %v503
    %v2256 = vmul.f32 %v2241, %v504
    %v2272 = vrot.slane %v2242, 2
    %v2273 = vrot.slane %v2247, 2
    %v2274 = vsel %vm1776, %v2272, %v2273
    %v2275 = vrot.slane %v2243, 2
    %v2276 = vrot.slane %v2248, 2
    %v2277 = vsel %vm1776, %v2275, %v2276
    %v2278 = vrot.slane %v2244, 2
    %v2279 = vrot.slane %v2249, 2
    %v2280 = vsel %vm1776, %v2278, %v2279
    %v2281 = vrot.slane %v2245, 2
    %v2282 = vrot.slane %v2250, 2
    %v2283 = vsel %vm1776, %v2281, %v2282
    %v2284 = vrot.slane %v2246, 2
    %v2285 = vrot.slane %v2251, 2
    %v2286 = vsel %vm1776, %v2284, %v2285
    %v2287 = vrot.slane %v2252, 2
    %v2288 = vsel %vm1776, %v2273, %v2287
    %v2289 = vrot.slane %v2253, 2
    %v2290 = vsel %vm1776, %v2276, %v2289
    %v2291 = vrot.slane %v2254, 2
    %v2292 = vsel %vm1776, %v2279, %v2291
    %v2293 = vrot.slane %v2255, 2
    %v2294 = vsel %vm1776, %v2282, %v2293
    %v2295 = vrot.slane %v2256, 2
    %v2296 = vsel %vm1776, %v2285, %v2295
    %2297 = vrot.lane.b32.xlu0 %v2274, 126
    %v2298 = vpop.permute.xlu0 %2297
    %2299 = vrot.lane.b32.xlu0 %v2277, 126
    %v2300 = vpop.permute.xlu0 %2299
    %2301 = vrot.lane.b32.xlu0 %v2280, 126
    %v2302 = vpop.permute.xlu0 %2301
    %2303 = vrot.lane.b32.xlu0 %v2283, 126
    %v2304 = vpop.permute.xlu0 %2303
    %2305 = vrot.lane.b32.xlu0 %v2286, 126
    %v2306 = vpop.permute.xlu0 %2305
    %2307 = vrot.lane.b32.xlu0 %v2288, 126
    %v2308 = vpop.permute.xlu0 %2307
    %2309 = vrot.lane.b32.xlu0 %v2290, 126
    %v2310 = vpop.permute.xlu0 %2309
    %2311 = vrot.lane.b32.xlu0 %v2292, 126
    %v2312 = vpop.permute.xlu0 %2311
    %2313 = vrot.lane.b32.xlu0 %v2294, 126
    %v2314 = vpop.permute.xlu0 %2313
    %2315 = vrot.lane.b32.xlu0 %v2296, 126
    %v2316 = vpop.permute.xlu0 %2315
    %v2317 = vsel %vm800, %v2298, %v2300
    %v2318 = vsel %vm800, %v2300, %v2302
    %v2319 = vsel %vm800, %v2302, %v2304
    %v2320 = vsel %vm800, %v2304, %v2306
    %v2321 = vsel %vm800, %v2308, %v2310
    %v2322 = vsel %vm800, %v2310, %v2312
    %v2323 = vsel %vm800, %v2312, %v2314
    %v2324 = vsel %vm800, %v2314, %v2316
    %v2333 = vadd.f32 %v2030, %v2317
    %v2334 = vadd.f32 %v2031, %v2318
    %v2335 = vadd.f32 %v2032, %v2319
    %v2336 = vadd.f32 %v2033, %v2320
    %v2337 = vadd.f32 %v2034, %v2321
    %v2338 = vadd.f32 %v2035, %v2322
    %v2339 = vadd.f32 %v2036, %v2323
    %v2340 = vadd.f32 %v2037, %v2324
    %s2341 = sld [smem:[#allocation7 + $0x23]]
    %v2342 = vstv %s2341
    %v2343 = vmul.f32 %v2342, %v490
    %v2344 = vmul.f32 %v2342, %v491
    %v2345 = vmul.f32 %v2342, %v492
    %v2346 = vmul.f32 %v2342, %v493
    %v2347 = vmul.f32 %v2342, %v494
    %v2348 = vmul.f32 %v2342, %v495
    %v2349 = vmul.f32 %v2342, %v496
    %v2350 = vmul.f32 %v2342, %v497
    %v2351 = vmul.f32 %v2342, %v498
    %v2352 = vmul.f32 %v2342, %v499
    %v2353 = vmul.f32 %v2342, %v500
    %v2354 = vmul.f32 %v2342, %v501
    %v2355 = vmul.f32 %v2342, %v502
    %v2356 = vmul.f32 %v2342, %v503
    %v2357 = vmul.f32 %v2342, %v504
    %v2373 = vrot.slane %v2343, 2
    %v2374 = vrot.slane %v2348, 2
    %v2375 = vsel %vm1776, %v2373, %v2374
    %v2376 = vrot.slane %v2344, 2
    %v2377 = vrot.slane %v2349, 2
    %v2378 = vsel %vm1776, %v2376, %v2377
    %v2379 = vrot.slane %v2345, 2
    %v2380 = vrot.slane %v2350, 2
    %v2381 = vsel %vm1776, %v2379, %v2380
    %v2382 = vrot.slane %v2346, 2
    %v2383 = vrot.slane %v2351, 2
    %v2384 = vsel %vm1776, %v2382, %v2383
    %v2385 = vrot.slane %v2347, 2
    %v2386 = vrot.slane %v2352, 2
    %v2387 = vsel %vm1776, %v2385, %v2386
    %v2388 = vrot.slane %v2353, 2
    %v2389 = vsel %vm1776, %v2374, %v2388
    %v2390 = vrot.slane %v2354, 2
    %v2391 = vsel %vm1776, %v2377, %v2390
    %v2392 = vrot.slane %v2355, 2
    %v2393 = vsel %vm1776, %v2380, %v2392
    %v2394 = vrot.slane %v2356, 2
    %v2395 = vsel %vm1776, %v2383, %v2394
    %v2396 = vrot.slane %v2357, 2
    %v2397 = vsel %vm1776, %v2386, %v2396
    %2398 = vrot.lane.b32.xlu0 %v2375, 126
    %v2399 = vpop.permute.xlu0 %2398
    %2400 = vrot.lane.b32.xlu0 %v2378, 126
    %v2401 = vpop.permute.xlu0 %2400
    %2402 = vrot.lane.b32.xlu0 %v2381, 126
    %v2403 = vpop.permute.xlu0 %2402
    %2404 = vrot.lane.b32.xlu0 %v2384, 126
    %v2405 = vpop.permute.xlu0 %2404
    %2406 = vrot.lane.b32.xlu0 %v2387, 126
    %v2407 = vpop.permute.xlu0 %2406
    %2408 = vrot.lane.b32.xlu0 %v2389, 126
    %v2409 = vpop.permute.xlu0 %2408
    %2410 = vrot.lane.b32.xlu0 %v2391, 126
    %v2411 = vpop.permute.xlu0 %2410
    %2412 = vrot.lane.b32.xlu0 %v2393, 126
    %v2413 = vpop.permute.xlu0 %2412
    %2414 = vrot.lane.b32.xlu0 %v2395, 126
    %v2415 = vpop.permute.xlu0 %2414
    %2416 = vrot.lane.b32.xlu0 %v2397, 126
    %v2417 = vpop.permute.xlu0 %2416
    %v2418 = vsel %vm800, %v2399, %v2401
    %v2419 = vsel %vm800, %v2401, %v2403
    %v2420 = vsel %vm800, %v2403, %v2405
    %v2421 = vsel %vm800, %v2405, %v2407
    %v2422 = vsel %vm800, %v2409, %v2411
    %v2423 = vsel %vm800, %v2411, %v2413
    %v2424 = vsel %vm800, %v2413, %v2415
    %v2425 = vsel %vm800, %v2415, %v2417
    %v2434 = vadd.f32 %v2131, %v2418
    %v2435 = vadd.f32 %v2132, %v2419
    %v2436 = vadd.f32 %v2133, %v2420
    %v2437 = vadd.f32 %v2134, %v2421
    %v2438 = vadd.f32 %v2135, %v2422
    %v2439 = vadd.f32 %v2136, %v2423
    %v2440 = vadd.f32 %v2137, %v2424
    %v2441 = vadd.f32 %v2138, %v2425
    %s2442 = sld [smem:[#allocation7 + $0x3e]]
    %v2443 = vstv %s2442
    %v2444 = vmul.f32 %v2443, %v490
    %v2445 = vmul.f32 %v2443, %v491
    %v2446 = vmul.f32 %v2443, %v492
    %v2447 = vmul.f32 %v2443, %v493
    %v2448 = vmul.f32 %v2443, %v494
    %v2449 = vmul.f32 %v2443, %v495
    %v2450 = vmul.f32 %v2443, %v496
    %v2451 = vmul.f32 %v2443, %v497
    %v2452 = vmul.f32 %v2443, %v498
    %v2453 = vmul.f32 %v2443, %v499
    %v2454 = vmul.f32 %v2443, %v500
    %v2455 = vmul.f32 %v2443, %v501
    %v2456 = vmul.f32 %v2443, %v502
    %v2457 = vmul.f32 %v2443, %v503
    %v2458 = vmul.f32 %v2443, %v504
    %v2474 = vrot.slane %v2444, 2
    %v2475 = vrot.slane %v2449, 2
    %v2476 = vsel %vm1776, %v2474, %v2475
    %v2477 = vrot.slane %v2445, 2
    %v2478 = vrot.slane %v2450, 2
    %v2479 = vsel %vm1776, %v2477, %v2478
    %v2480 = vrot.slane %v2446, 2
    %v2481 = vrot.slane %v2451, 2
    %v2482 = vsel %vm1776, %v2480, %v2481
    %v2483 = vrot.slane %v2447, 2
    %v2484 = vrot.slane %v2452, 2
    %v2485 = vsel %vm1776, %v2483, %v2484
    %v2486 = vrot.slane %v2448, 2
    %v2487 = vrot.slane %v2453, 2
    %v2488 = vsel %vm1776, %v2486, %v2487
    %v2489 = vrot.slane %v2454, 2
    %v2490 = vsel %vm1776, %v2475, %v2489
    %v2491 = vrot.slane %v2455, 2
    %v2492 = vsel %vm1776, %v2478, %v2491
    %v2493 = vrot.slane %v2456, 2
    %v2494 = vsel %vm1776, %v2481, %v2493
    %v2495 = vrot.slane %v2457, 2
    %v2496 = vsel %vm1776, %v2484, %v2495
    %v2497 = vrot.slane %v2458, 2
    %v2498 = vsel %vm1776, %v2487, %v2497
    %2499 = vrot.lane.b32.xlu0 %v2476, 126
    %v2500 = vpop.permute.xlu0 %2499
    %2501 = vrot.lane.b32.xlu0 %v2479, 126
    %v2502 = vpop.permute.xlu0 %2501
    %2503 = vrot.lane.b32.xlu0 %v2482, 126
    %v2504 = vpop.permute.xlu0 %2503
    %2505 = vrot.lane.b32.xlu0 %v2485, 126
    %v2506 = vpop.permute.xlu0 %2505
    %2507 = vrot.lane.b32.xlu0 %v2488, 126
    %v2508 = vpop.permute.xlu0 %2507
    %2509 = vrot.lane.b32.xlu0 %v2490, 126
    %v2510 = vpop.permute.xlu0 %2509
    %2511 = vrot.lane.b32.xlu0 %v2492, 126
    %v2512 = vpop.permute.xlu0 %2511
    %2513 = vrot.lane.b32.xlu0 %v2494, 126
    %v2514 = vpop.permute.xlu0 %2513
    %2515 = vrot.lane.b32.xlu0 %v2496, 126
    %v2516 = vpop.permute.xlu0 %2515
    %2517 = vrot.lane.b32.xlu0 %v2498, 126
    %v2518 = vpop.permute.xlu0 %2517
    %v2519 = vsel %vm800, %v2500, %v2502
    %v2520 = vsel %vm800, %v2502, %v2504
    %v2521 = vsel %vm800, %v2504, %v2506
    %v2522 = vsel %vm800, %v2506, %v2508
    %v2523 = vsel %vm800, %v2510, %v2512
    %v2524 = vsel %vm800, %v2512, %v2514
    %v2525 = vsel %vm800, %v2514, %v2516
    %v2526 = vsel %vm800, %v2516, %v2518
    %v2535 = vadd.f32 %v2232, %v2519
    %v2536 = vadd.f32 %v2233, %v2520
    %v2537 = vadd.f32 %v2234, %v2521
    %v2538 = vadd.f32 %v2235, %v2522
    %v2539 = vadd.f32 %v2236, %v2523
    %v2540 = vadd.f32 %v2237, %v2524
    %v2541 = vadd.f32 %v2238, %v2525
    %v2542 = vadd.f32 %v2239, %v2526
    %s2543 = scalar_lea.vmem [#allocation2], 120
    %v2544 = vld [vmem:[%s2543] sm:$0xff]
    %v2545 = vld [vmem:[%s2543 + $0x8] sm:$0xff]
    %v2546 = vld [vmem:[%s2543 + $0x10] sm:$0xff]
    %v2547 = vld [vmem:[%s2543 + $0x18] sm:$0xff]
    %v2548 = vld [vmem:[%s2543 + $0x20] sm:$0xff]
    %v2549 = vld [vmem:[%s2543 + $0x28] sm:$0xff]
    %v2550 = vld [vmem:[%s2543 + $0x30] sm:$0xff]
    %v2551 = vld [vmem:[%s2543 + $0x38] sm:$0xff]
    %v2552 = vld [vmem:[%s2543 + $0x40] sm:$0xff]
    %v2553 = vld [vmem:[%s2543 + $0x48] sm:$0xff]
    %v2554 = vld [vmem:[%s2543 + $0x50] sm:$0x3]
    %v2555 = vld [vmem:[%s2543 + $0x58] sm:$0x3]
    %v2556 = vld [vmem:[%s2543 + $0x60] sm:$0x3]
    %v2557 = vld [vmem:[%s2543 + $0x68] sm:$0x3]
    %v2558 = vld [vmem:[%s2543 + $0x70] sm:$0x3]
    %v2559 = vmul.f32 %v2544, %v449
    %v2560 = vmul.f32 %v2545, %v450
    %v2561 = vmul.f32 %v2546, %v451
    %v2562 = vmul.f32 %v2547, %v452
    %v2563 = vmul.f32 %v2549, %v449
    %v2564 = vmul.f32 %v2550, %v450
    %v2565 = vmul.f32 %v2551, %v451
    %v2566 = vmul.f32 %v2552, %v452
    %v2567 = vmul.f32 %v2554, %v449
    %v2568 = vmul.f32 %v2555, %v450
    %v2569 = vmul.f32 %v2556, %v451
    %v2570 = vmul.f32 %v2557, %v452
    %v2571 = vmul.f32 %v2544, %v475
    %v2572 = vmul.f32 %v2545, %v482
    %v2573 = vmul.f32 %v2546, %v483
    %v2574 = vmul.f32 %v2547, %v484
    %v2575 = vmul.f32 %v2548, %v481
    %v2576 = vmul.f32 %v2549, %v475
    %v2577 = vmul.f32 %v2550, %v482
    %v2578 = vmul.f32 %v2551, %v483
    %v2579 = vmul.f32 %v2552, %v484
    %v2580 = vmul.f32 %v2553, %v481
    %v2581 = vmul.f32 %v2554, %v475
    %v2582 = vmul.f32 %v2555, %v482
    %v2583 = vmul.f32 %v2556, %v483
    %v2584 = vmul.f32 %v2557, %v484
    %v2585 = vmul.f32 %v2558, %v481
    %s2586 = sld [smem:[#allocation7 + $0x9]]
    %v2587 = vstv %s2586
    %v2588 = vmul.f32 %v2587, %v2559
    %v2589 = vmul.f32 %v2587, %v2560
    %v2590 = vmul.f32 %v2587, %v2561
    %v2591 = vmul.f32 %v2587, %v2562
    %v2592 = vmul.f32 %v2587, %v2563
    %v2593 = vmul.f32 %v2587, %v2564
    %v2594 = vmul.f32 %v2587, %v2565
    %v2595 = vmul.f32 %v2587, %v2566
    %v2596 = vadd.f32 %v2333, %v2588
    %v2597 = vadd.f32 %v2334, %v2589
    %v2598 = vadd.f32 %v2335, %v2590
    %v2599 = vadd.f32 %v2336, %v2591
    %v2600 = vadd.f32 %v2337, %v2592
    %v2601 = vadd.f32 %v2338, %v2593
    %v2602 = vadd.f32 %v2339, %v2594
    %v2603 = vadd.f32 %v2340, %v2595
    %s2604 = sld [smem:[#allocation7 + $0x24]]
    %v2605 = vstv %s2604
    %v2606 = vmul.f32 %v2605, %v2559
    %v2607 = vmul.f32 %v2605, %v2560
    %v2608 = vmul.f32 %v2605, %v2561
    %v2609 = vmul.f32 %v2605, %v2562
    %v2610 = vmul.f32 %v2605, %v2563
    %v2611 = vmul.f32 %v2605, %v2564
    %v2612 = vmul.f32 %v2605, %v2565
    %v2613 = vmul.f32 %v2605, %v2566
    %v2614 = vadd.f32 %v2434, %v2606
    %v2615 = vadd.f32 %v2435, %v2607
    %v2616 = vadd.f32 %v2436, %v2608
    %v2617 = vadd.f32 %v2437, %v2609
    %v2618 = vadd.f32 %v2438, %v2610
    %v2619 = vadd.f32 %v2439, %v2611
    %v2620 = vadd.f32 %v2440, %v2612
    %v2621 = vadd.f32 %v2441, %v2613
    %s2622 = sld [smem:[#allocation7 + $0x3f]]
    %v2623 = vstv %s2622
    %v2624 = vmul.f32 %v2623, %v2559
    %v2625 = vmul.f32 %v2623, %v2560
    %v2626 = vmul.f32 %v2623, %v2561
    %v2627 = vmul.f32 %v2623, %v2562
    %v2628 = vmul.f32 %v2623, %v2563
    %v2629 = vmul.f32 %v2623, %v2564
    %v2630 = vmul.f32 %v2623, %v2565
    %v2631 = vmul.f32 %v2623, %v2566
    %v2632 = vadd.f32 %v2535, %v2624
    %v2633 = vadd.f32 %v2536, %v2625
    %v2634 = vadd.f32 %v2537, %v2626
    %v2635 = vadd.f32 %v2538, %v2627
    %v2636 = vadd.f32 %v2539, %v2628
    %v2637 = vadd.f32 %v2540, %v2629
    %v2638 = vadd.f32 %v2541, %v2630
    %v2639 = vadd.f32 %v2542, %v2631
    %s2640 = sld [smem:[#allocation7 + $0xa]]
    %v2641 = vstv %s2640
    %v2642 = vmul.f32 %v2641, %v2544
    %v2643 = vmul.f32 %v2641, %v2545
    %v2644 = vmul.f32 %v2641, %v2546
    %v2645 = vmul.f32 %v2641, %v2547
    %v2646 = vmul.f32 %v2641, %v2548
    %v2647 = vmul.f32 %v2641, %v2549
    %v2648 = vmul.f32 %v2641, %v2550
    %v2649 = vmul.f32 %v2641, %v2551
    %v2650 = vmul.f32 %v2641, %v2552
    %v2651 = vmul.f32 %v2641, %v2553
    %2662 = vrot.lane.b32.xlu0 %v2642, 127
    %v2663 = vpop.permute.xlu0 %2662
    %2664 = vrot.lane.b32.xlu0 %v2643, 127
    %v2665 = vpop.permute.xlu0 %2664
    %2666 = vrot.lane.b32.xlu0 %v2644, 127
    %v2667 = vpop.permute.xlu0 %2666
    %2668 = vrot.lane.b32.xlu0 %v2645, 127
    %v2669 = vpop.permute.xlu0 %2668
    %2670 = vrot.lane.b32.xlu0 %v2646, 127
    %v2671 = vpop.permute.xlu0 %2670
    %2672 = vrot.lane.b32.xlu0 %v2647, 127
    %v2673 = vpop.permute.xlu0 %2672
    %2674 = vrot.lane.b32.xlu0 %v2648, 127
    %v2675 = vpop.permute.xlu0 %2674
    %2676 = vrot.lane.b32.xlu0 %v2649, 127
    %v2677 = vpop.permute.xlu0 %2676
    %2678 = vrot.lane.b32.xlu0 %v2650, 127
    %v2679 = vpop.permute.xlu0 %2678
    %2680 = vrot.lane.b32.xlu0 %v2651, 127
    %v2681 = vpop.permute.xlu0 %2680
    %v2682 = vsel %vm601, %v2663, %v2665
    %v2683 = vsel %vm601, %v2665, %v2667
    %v2684 = vsel %vm601, %v2667, %v2669
    %v2685 = vsel %vm601, %v2669, %v2671
    %v2686 = vsel %vm601, %v2673, %v2675
    %v2687 = vsel %vm601, %v2675, %v2677
    %v2688 = vsel %vm601, %v2677, %v2679
    %v2689 = vsel %vm601, %v2679, %v2681
    %v2698 = vadd.f32 %v2596, %v2682
    %v2699 = vadd.f32 %v2597, %v2683
    %v2700 = vadd.f32 %v2598, %v2684
    %v2701 = vadd.f32 %v2599, %v2685
    %v2702 = vadd.f32 %v2600, %v2686
    %v2703 = vadd.f32 %v2601, %v2687
    %v2704 = vadd.f32 %v2602, %v2688
    %v2705 = vadd.f32 %v2603, %v2689
    %s2706 = sld [smem:[#allocation7 + $0x25]]
    %v2707 = vstv %s2706
    %v2708 = vmul.f32 %v2707, %v2544
    %v2709 = vmul.f32 %v2707, %v2545
    %v2710 = vmul.f32 %v2707, %v2546
    %v2711 = vmul.f32 %v2707, %v2547
    %v2712 = vmul.f32 %v2707, %v2548
    %v2713 = vmul.f32 %v2707, %v2549
    %v2714 = vmul.f32 %v2707, %v2550
    %v2715 = vmul.f32 %v2707, %v2551
    %v2716 = vmul.f32 %v2707, %v2552
    %v2717 = vmul.f32 %v2707, %v2553
    %2728 = vrot.lane.b32.xlu0 %v2708, 127
    %v2729 = vpop.permute.xlu0 %2728
    %2730 = vrot.lane.b32.xlu0 %v2709, 127
    %v2731 = vpop.permute.xlu0 %2730
    %2732 = vrot.lane.b32.xlu0 %v2710, 127
    %v2733 = vpop.permute.xlu0 %2732
    %2734 = vrot.lane.b32.xlu0 %v2711, 127
    %v2735 = vpop.permute.xlu0 %2734
    %2736 = vrot.lane.b32.xlu0 %v2712, 127
    %v2737 = vpop.permute.xlu0 %2736
    %2738 = vrot.lane.b32.xlu0 %v2713, 127
    %v2739 = vpop.permute.xlu0 %2738
    %2740 = vrot.lane.b32.xlu0 %v2714, 127
    %v2741 = vpop.permute.xlu0 %2740
    %2742 = vrot.lane.b32.xlu0 %v2715, 127
    %v2743 = vpop.permute.xlu0 %2742
    %2744 = vrot.lane.b32.xlu0 %v2716, 127
    %v2745 = vpop.permute.xlu0 %2744
    %2746 = vrot.lane.b32.xlu0 %v2717, 127
    %v2747 = vpop.permute.xlu0 %2746
    %v2748 = vsel %vm601, %v2729, %v2731
    %v2749 = vsel %vm601, %v2731, %v2733
    %v2750 = vsel %vm601, %v2733, %v2735
    %v2751 = vsel %vm601, %v2735, %v2737
    %v2752 = vsel %vm601, %v2739, %v2741
    %v2753 = vsel %vm601, %v2741, %v2743
    %v2754 = vsel %vm601, %v2743, %v2745
    %v2755 = vsel %vm601, %v2745, %v2747
    %v2764 = vadd.f32 %v2614, %v2748
    %v2765 = vadd.f32 %v2615, %v2749
    %v2766 = vadd.f32 %v2616, %v2750
    %v2767 = vadd.f32 %v2617, %v2751
    %v2768 = vadd.f32 %v2618, %v2752
    %v2769 = vadd.f32 %v2619, %v2753
    %v2770 = vadd.f32 %v2620, %v2754
    %v2771 = vadd.f32 %v2621, %v2755
    %s2772 = sld [smem:[#allocation7 + $0x40]]
    %v2773 = vstv %s2772
    %v2774 = vmul.f32 %v2773, %v2544
    %v2775 = vmul.f32 %v2773, %v2545
    %v2776 = vmul.f32 %v2773, %v2546
    %v2777 = vmul.f32 %v2773, %v2547
    %v2778 = vmul.f32 %v2773, %v2548
    %v2779 = vmul.f32 %v2773, %v2549
    %v2780 = vmul.f32 %v2773, %v2550
    %v2781 = vmul.f32 %v2773, %v2551
    %v2782 = vmul.f32 %v2773, %v2552
    %v2783 = vmul.f32 %v2773, %v2553
    %2794 = vrot.lane.b32.xlu0 %v2774, 127
    %v2795 = vpop.permute.xlu0 %2794
    %2796 = vrot.lane.b32.xlu0 %v2775, 127
    %v2797 = vpop.permute.xlu0 %2796
    %2798 = vrot.lane.b32.xlu0 %v2776, 127
    %v2799 = vpop.permute.xlu0 %2798
    %2800 = vrot.lane.b32.xlu0 %v2777, 127
    %v2801 = vpop.permute.xlu0 %2800
    %2802 = vrot.lane.b32.xlu0 %v2778, 127
    %v2803 = vpop.permute.xlu0 %2802
    %2804 = vrot.lane.b32.xlu0 %v2779, 127
    %v2805 = vpop.permute.xlu0 %2804
    %2806 = vrot.lane.b32.xlu0 %v2780, 127
    %v2807 = vpop.permute.xlu0 %2806
    %2808 = vrot.lane.b32.xlu0 %v2781, 127
    %v2809 = vpop.permute.xlu0 %2808
    %2810 = vrot.lane.b32.xlu0 %v2782, 127
    %v2811 = vpop.permute.xlu0 %2810
    %2812 = vrot.lane.b32.xlu0 %v2783, 127
    %v2813 = vpop.permute.xlu0 %2812
    %v2814 = vsel %vm601, %v2795, %v2797
    %v2815 = vsel %vm601, %v2797, %v2799
    %v2816 = vsel %vm601, %v2799, %v2801
    %v2817 = vsel %vm601, %v2801, %v2803
    %v2818 = vsel %vm601, %v2805, %v2807
    %v2819 = vsel %vm601, %v2807, %v2809
    %v2820 = vsel %vm601, %v2809, %v2811
    %v2821 = vsel %vm601, %v2811, %v2813
    %v2830 = vadd.f32 %v2632, %v2814
    %v2831 = vadd.f32 %v2633, %v2815
    %v2832 = vadd.f32 %v2634, %v2816
    %v2833 = vadd.f32 %v2635, %v2817
    %v2834 = vadd.f32 %v2636, %v2818
    %v2835 = vadd.f32 %v2637, %v2819
    %v2836 = vadd.f32 %v2638, %v2820
    %v2837 = vadd.f32 %v2639, %v2821
    %s2838 = sld [smem:[#allocation7 + $0xb]]
    %v2839 = vstv %s2838
    %v2840 = vmul.f32 %v2839, %v2571
    %v2841 = vmul.f32 %v2839, %v2572
    %v2842 = vmul.f32 %v2839, %v2573
    %v2843 = vmul.f32 %v2839, %v2574
    %v2844 = vmul.f32 %v2839, %v2575
    %v2845 = vmul.f32 %v2839, %v2576
    %v2846 = vmul.f32 %v2839, %v2577
    %v2847 = vmul.f32 %v2839, %v2578
    %v2848 = vmul.f32 %v2839, %v2579
    %v2849 = vmul.f32 %v2839, %v2580
    %2860 = vrot.lane.b32.xlu0 %v2840, 126
    %v2861 = vpop.permute.xlu0 %2860
    %2862 = vrot.lane.b32.xlu0 %v2841, 126
    %v2863 = vpop.permute.xlu0 %2862
    %2864 = vrot.lane.b32.xlu0 %v2842, 126
    %v2865 = vpop.permute.xlu0 %2864
    %2866 = vrot.lane.b32.xlu0 %v2843, 126
    %v2867 = vpop.permute.xlu0 %2866
    %2868 = vrot.lane.b32.xlu0 %v2844, 126
    %v2869 = vpop.permute.xlu0 %2868
    %2870 = vrot.lane.b32.xlu0 %v2845, 126
    %v2871 = vpop.permute.xlu0 %2870
    %2872 = vrot.lane.b32.xlu0 %v2846, 126
    %v2873 = vpop.permute.xlu0 %2872
    %2874 = vrot.lane.b32.xlu0 %v2847, 126
    %v2875 = vpop.permute.xlu0 %2874
    %2876 = vrot.lane.b32.xlu0 %v2848, 126
    %v2877 = vpop.permute.xlu0 %2876
    %2878 = vrot.lane.b32.xlu0 %v2849, 126
    %v2879 = vpop.permute.xlu0 %2878
    %v2880 = vsel %vm800, %v2861, %v2863
    %v2881 = vsel %vm800, %v2863, %v2865
    %v2882 = vsel %vm800, %v2865, %v2867
    %v2883 = vsel %vm800, %v2867, %v2869
    %v2884 = vsel %vm800, %v2871, %v2873
    %v2885 = vsel %vm800, %v2873, %v2875
    %v2886 = vsel %vm800, %v2875, %v2877
    %v2887 = vsel %vm800, %v2877, %v2879
    %v2896 = vadd.f32 %v2698, %v2880
    %v2897 = vadd.f32 %v2699, %v2881
    %v2898 = vadd.f32 %v2700, %v2882
    %v2899 = vadd.f32 %v2701, %v2883
    %v2900 = vadd.f32 %v2702, %v2884
    %v2901 = vadd.f32 %v2703, %v2885
    %v2902 = vadd.f32 %v2704, %v2886
    %v2903 = vadd.f32 %v2705, %v2887
    %s2904 = sld [smem:[#allocation7 + $0x26]]
    %v2905 = vstv %s2904
    %v2906 = vmul.f32 %v2905, %v2571
    %v2907 = vmul.f32 %v2905, %v2572
    %v2908 = vmul.f32 %v2905, %v2573
    %v2909 = vmul.f32 %v2905, %v2574
    %v2910 = vmul.f32 %v2905, %v2575
    %v2911 = vmul.f32 %v2905, %v2576
    %v2912 = vmul.f32 %v2905, %v2577
    %v2913 = vmul.f32 %v2905, %v2578
    %v2914 = vmul.f32 %v2905, %v2579
    %v2915 = vmul.f32 %v2905, %v2580
    %2926 = vrot.lane.b32.xlu0 %v2906, 126
    %v2927 = vpop.permute.xlu0 %2926
    %2928 = vrot.lane.b32.xlu0 %v2907, 126
    %v2929 = vpop.permute.xlu0 %2928
    %2930 = vrot.lane.b32.xlu0 %v2908, 126
    %v2931 = vpop.permute.xlu0 %2930
    %2932 = vrot.lane.b32.xlu0 %v2909, 126
    %v2933 = vpop.permute.xlu0 %2932
    %2934 = vrot.lane.b32.xlu0 %v2910, 126
    %v2935 = vpop.permute.xlu0 %2934
    %2936 = vrot.lane.b32.xlu0 %v2911, 126
    %v2937 = vpop.permute.xlu0 %2936
    %2938 = vrot.lane.b32.xlu0 %v2912, 126
    %v2939 = vpop.permute.xlu0 %2938
    %2940 = vrot.lane.b32.xlu0 %v2913, 126
    %v2941 = vpop.permute.xlu0 %2940
    %2942 = vrot.lane.b32.xlu0 %v2914, 126
    %v2943 = vpop.permute.xlu0 %2942
    %2944 = vrot.lane.b32.xlu0 %v2915, 126
    %v2945 = vpop.permute.xlu0 %2944
    %v2946 = vsel %vm800, %v2927, %v2929
    %v2947 = vsel %vm800, %v2929, %v2931
    %v2948 = vsel %vm800, %v2931, %v2933
    %v2949 = vsel %vm800, %v2933, %v2935
    %v2950 = vsel %vm800, %v2937, %v2939
    %v2951 = vsel %vm800, %v2939, %v2941
    %v2952 = vsel %vm800, %v2941, %v2943
    %v2953 = vsel %vm800, %v2943, %v2945
    %v2962 = vadd.f32 %v2764, %v2946
    %v2963 = vadd.f32 %v2765, %v2947
    %v2964 = vadd.f32 %v2766, %v2948
    %v2965 = vadd.f32 %v2767, %v2949
    %v2966 = vadd.f32 %v2768, %v2950
    %v2967 = vadd.f32 %v2769, %v2951
    %v2968 = vadd.f32 %v2770, %v2952
    %v2969 = vadd.f32 %v2771, %v2953
    %s2970 = sld [smem:[#allocation7 + $0x41]]
    %v2971 = vstv %s2970
    %v2972 = vmul.f32 %v2971, %v2571
    %v2973 = vmul.f32 %v2971, %v2572
    %v2974 = vmul.f32 %v2971, %v2573
    %v2975 = vmul.f32 %v2971, %v2574
    %v2976 = vmul.f32 %v2971, %v2575
    %v2977 = vmul.f32 %v2971, %v2576
    %v2978 = vmul.f32 %v2971, %v2577
    %v2979 = vmul.f32 %v2971, %v2578
    %v2980 = vmul.f32 %v2971, %v2579
    %v2981 = vmul.f32 %v2971, %v2580
    %2992 = vrot.lane.b32.xlu0 %v2972, 126
    %v2993 = vpop.permute.xlu0 %2992
    %2994 = vrot.lane.b32.xlu0 %v2973, 126
    %v2995 = vpop.permute.xlu0 %2994
    %2996 = vrot.lane.b32.xlu0 %v2974, 126
    %v2997 = vpop.permute.xlu0 %2996
    %2998 = vrot.lane.b32.xlu0 %v2975, 126
    %v2999 = vpop.permute.xlu0 %2998
    %3000 = vrot.lane.b32.xlu0 %v2976, 126
    %v3001 = vpop.permute.xlu0 %3000
    %3002 = vrot.lane.b32.xlu0 %v2977, 126
    %v3003 = vpop.permute.xlu0 %3002
    %3004 = vrot.lane.b32.xlu0 %v2978, 126
    %v3005 = vpop.permute.xlu0 %3004
    %3006 = vrot.lane.b32.xlu0 %v2979, 126
    %v3007 = vpop.permute.xlu0 %3006
    %3008 = vrot.lane.b32.xlu0 %v2980, 126
    %v3009 = vpop.permute.xlu0 %3008
    %3010 = vrot.lane.b32.xlu0 %v2981, 126
    %v3011 = vpop.permute.xlu0 %3010
    %v3012 = vsel %vm800, %v2993, %v2995
    %v3013 = vsel %vm800, %v2995, %v2997
    %v3014 = vsel %vm800, %v2997, %v2999
    %v3015 = vsel %vm800, %v2999, %v3001
    %v3016 = vsel %vm800, %v3003, %v3005
    %v3017 = vsel %vm800, %v3005, %v3007
    %v3018 = vsel %vm800, %v3007, %v3009
    %v3019 = vsel %vm800, %v3009, %v3011
    %v3028 = vadd.f32 %v2830, %v3012
    %v3029 = vadd.f32 %v2831, %v3013
    %v3030 = vadd.f32 %v2832, %v3014
    %v3031 = vadd.f32 %v2833, %v3015
    %v3032 = vadd.f32 %v2834, %v3016
    %v3033 = vadd.f32 %v2835, %v3017
    %v3034 = vadd.f32 %v2836, %v3018
    %v3035 = vadd.f32 %v2837, %v3019
    %s3036 = sld [smem:[#allocation7 + $0xc]]
    %v3037 = vstv %s3036
    %v3038 = vmul.f32 %v3037, %v2559
    %v3039 = vmul.f32 %v3037, %v2560
    %v3040 = vmul.f32 %v3037, %v2561
    %v3041 = vmul.f32 %v3037, %v2562
    %v3042 = vmul.f32 %v3037, %v2563
    %v3043 = vmul.f32 %v3037, %v2564
    %v3044 = vmul.f32 %v3037, %v2565
    %v3045 = vmul.f32 %v3037, %v2566
    %v3046 = vmul.f32 %v3037, %v2567
    %v3047 = vmul.f32 %v3037, %v2568
    %v3048 = vmul.f32 %v3037, %v2569
    %v3049 = vmul.f32 %v3037, %v2570
    %v3062 = vrot.slane %v3038, 1
    %v3063 = vrot.slane %v3042, 1
    %v3064 = vsel %vm983, %v3062, %v3063
    %v3065 = vrot.slane %v3039, 1
    %v3066 = vrot.slane %v3043, 1
    %v3067 = vsel %vm983, %v3065, %v3066
    %v3068 = vrot.slane %v3040, 1
    %v3069 = vrot.slane %v3044, 1
    %v3070 = vsel %vm983, %v3068, %v3069
    %v3071 = vrot.slane %v3041, 1
    %v3072 = vrot.slane %v3045, 1
    %v3073 = vsel %vm983, %v3071, %v3072
    %v3074 = vrot.slane %v3046, 1
    %v3075 = vsel %vm983, %v3063, %v3074
    %v3076 = vrot.slane %v3047, 1
    %v3077 = vsel %vm983, %v3066, %v3076
    %v3078 = vrot.slane %v3048, 1
    %v3079 = vsel %vm983, %v3069, %v3078
    %v3080 = vrot.slane %v3049, 1
    %v3081 = vsel %vm983, %v3072, %v3080
    %v3090 = vadd.f32 %v2896, %v3064
    %v3091 = vadd.f32 %v2897, %v3067
    %v3092 = vadd.f32 %v2898, %v3070
    %v3093 = vadd.f32 %v2899, %v3073
    %v3094 = vadd.f32 %v2900, %v3075
    %v3095 = vadd.f32 %v2901, %v3077
    %v3096 = vadd.f32 %v2902, %v3079
    %v3097 = vadd.f32 %v2903, %v3081
    %s3098 = sld [smem:[#allocation7 + $0x27]]
    %v3099 = vstv %s3098
    %v3100 = vmul.f32 %v3099, %v2559
    %v3101 = vmul.f32 %v3099, %v2560
    %v3102 = vmul.f32 %v3099, %v2561
    %v3103 = vmul.f32 %v3099, %v2562
    %v3104 = vmul.f32 %v3099, %v2563
    %v3105 = vmul.f32 %v3099, %v2564
    %v3106 = vmul.f32 %v3099, %v2565
    %v3107 = vmul.f32 %v3099, %v2566
    %v3108 = vmul.f32 %v3099, %v2567
    %v3109 = vmul.f32 %v3099, %v2568
    %v3110 = vmul.f32 %v3099, %v2569
    %v3111 = vmul.f32 %v3099, %v2570
    %v3124 = vrot.slane %v3100, 1
    %v3125 = vrot.slane %v3104, 1
    %v3126 = vsel %vm983, %v3124, %v3125
    %v3127 = vrot.slane %v3101, 1
    %v3128 = vrot.slane %v3105, 1
    %v3129 = vsel %vm983, %v3127, %v3128
    %v3130 = vrot.slane %v3102, 1
    %v3131 = vrot.slane %v3106, 1
    %v3132 = vsel %vm983, %v3130, %v3131
    %v3133 = vrot.slane %v3103, 1
    %v3134 = vrot.slane %v3107, 1
    %v3135 = vsel %vm983, %v3133, %v3134
    %v3136 = vrot.slane %v3108, 1
    %v3137 = vsel %vm983, %v3125, %v3136
    %v3138 = vrot.slane %v3109, 1
    %v3139 = vsel %vm983, %v3128, %v3138
    %v3140 = vrot.slane %v3110, 1
    %v3141 = vsel %vm983, %v3131, %v3140
    %v3142 = vrot.slane %v3111, 1
    %v3143 = vsel %vm983, %v3134, %v3142
    %v3152 = vadd.f32 %v2962, %v3126
    %v3153 = vadd.f32 %v2963, %v3129
    %v3154 = vadd.f32 %v2964, %v3132
    %v3155 = vadd.f32 %v2965, %v3135
    %v3156 = vadd.f32 %v2966, %v3137
    %v3157 = vadd.f32 %v2967, %v3139
    %v3158 = vadd.f32 %v2968, %v3141
    %v3159 = vadd.f32 %v2969, %v3143
    %s3160 = sld [smem:[#allocation7 + $0x42]]
    %v3161 = vstv %s3160
    %v3162 = vmul.f32 %v3161, %v2559
    %v3163 = vmul.f32 %v3161, %v2560
    %v3164 = vmul.f32 %v3161, %v2561
    %v3165 = vmul.f32 %v3161, %v2562
    %v3166 = vmul.f32 %v3161, %v2563
    %v3167 = vmul.f32 %v3161, %v2564
    %v3168 = vmul.f32 %v3161, %v2565
    %v3169 = vmul.f32 %v3161, %v2566
    %v3170 = vmul.f32 %v3161, %v2567
    %v3171 = vmul.f32 %v3161, %v2568
    %v3172 = vmul.f32 %v3161, %v2569
    %v3173 = vmul.f32 %v3161, %v2570
    %v3186 = vrot.slane %v3162, 1
    %v3187 = vrot.slane %v3166, 1
    %v3188 = vsel %vm983, %v3186, %v3187
    %v3189 = vrot.slane %v3163, 1
    %v3190 = vrot.slane %v3167, 1
    %v3191 = vsel %vm983, %v3189, %v3190
    %v3192 = vrot.slane %v3164, 1
    %v3193 = vrot.slane %v3168, 1
    %v3194 = vsel %vm983, %v3192, %v3193
    %v3195 = vrot.slane %v3165, 1
    %v3196 = vrot.slane %v3169, 1
    %v3197 = vsel %vm983, %v3195, %v3196
    %v3198 = vrot.slane %v3170, 1
    %v3199 = vsel %vm983, %v3187, %v3198
    %v3200 = vrot.slane %v3171, 1
    %v3201 = vsel %vm983, %v3190, %v3200
    %v3202 = vrot.slane %v3172, 1
    %v3203 = vsel %vm983, %v3193, %v3202
    %v3204 = vrot.slane %v3173, 1
    %v3205 = vsel %vm983, %v3196, %v3204
    %v3214 = vadd.f32 %v3028, %v3188
    %v3215 = vadd.f32 %v3029, %v3191
    %v3216 = vadd.f32 %v3030, %v3194
    %v3217 = vadd.f32 %v3031, %v3197
    %v3218 = vadd.f32 %v3032, %v3199
    %v3219 = vadd.f32 %v3033, %v3201
    %v3220 = vadd.f32 %v3034, %v3203
    %v3221 = vadd.f32 %v3035, %v3205
    %s3222 = sld [smem:[#allocation7 + $0xd]]
    %v3223 = vstv %s3222
    %v3224 = vmul.f32 %v3223, %v2544
    %v3225 = vmul.f32 %v3223, %v2545
    %v3226 = vmul.f32 %v3223, %v2546
    %v3227 = vmul.f32 %v3223, %v2547
    %v3228 = vmul.f32 %v3223, %v2548
    %v3229 = vmul.f32 %v3223, %v2549
    %v3230 = vmul.f32 %v3223, %v2550
    %v3231 = vmul.f32 %v3223, %v2551
    %v3232 = vmul.f32 %v3223, %v2552
    %v3233 = vmul.f32 %v3223, %v2553
    %v3234 = vmul.f32 %v3223, %v2554
    %v3235 = vmul.f32 %v3223, %v2555
    %v3236 = vmul.f32 %v3223, %v2556
    %v3237 = vmul.f32 %v3223, %v2557
    %v3238 = vmul.f32 %v3223, %v2558
    %v3254 = vrot.slane %v3224, 1
    %v3255 = vrot.slane %v3229, 1
    %v3256 = vsel %vm983, %v3254, %v3255
    %v3257 = vrot.slane %v3225, 1
    %v3258 = vrot.slane %v3230, 1
    %v3259 = vsel %vm983, %v3257, %v3258
    %v3260 = vrot.slane %v3226, 1
    %v3261 = vrot.slane %v3231, 1
    %v3262 = vsel %vm983, %v3260, %v3261
    %v3263 = vrot.slane %v3227, 1
    %v3264 = vrot.slane %v3232, 1
    %v3265 = vsel %vm983, %v3263, %v3264
    %v3266 = vrot.slane %v3228, 1
    %v3267 = vrot.slane %v3233, 1
    %v3268 = vsel %vm983, %v3266, %v3267
    %v3269 = vrot.slane %v3234, 1
    %v3270 = vsel %vm983, %v3255, %v3269
    %v3271 = vrot.slane %v3235, 1
    %v3272 = vsel %vm983, %v3258, %v3271
    %v3273 = vrot.slane %v3236, 1
    %v3274 = vsel %vm983, %v3261, %v3273
    %v3275 = vrot.slane %v3237, 1
    %v3276 = vsel %vm983, %v3264, %v3275
    %v3277 = vrot.slane %v3238, 1
    %v3278 = vsel %vm983, %v3267, %v3277
    %3279 = vrot.lane.b32.xlu0 %v3256, 127
    %v3280 = vpop.permute.xlu0 %3279
    %3281 = vrot.lane.b32.xlu0 %v3259, 127
    %v3282 = vpop.permute.xlu0 %3281
    %3283 = vrot.lane.b32.xlu0 %v3262, 127
    %v3284 = vpop.permute.xlu0 %3283
    %3285 = vrot.lane.b32.xlu0 %v3265, 127
    %v3286 = vpop.permute.xlu0 %3285
    %3287 = vrot.lane.b32.xlu0 %v3268, 127
    %v3288 = vpop.permute.xlu0 %3287
    %3289 = vrot.lane.b32.xlu0 %v3270, 127
    %v3290 = vpop.permute.xlu0 %3289
    %3291 = vrot.lane.b32.xlu0 %v3272, 127
    %v3292 = vpop.permute.xlu0 %3291
    %3293 = vrot.lane.b32.xlu0 %v3274, 127
    %v3294 = vpop.permute.xlu0 %3293
    %3295 = vrot.lane.b32.xlu0 %v3276, 127
    %v3296 = vpop.permute.xlu0 %3295
    %3297 = vrot.lane.b32.xlu0 %v3278, 127
    %v3298 = vpop.permute.xlu0 %3297
    %v3299 = vsel %vm601, %v3280, %v3282
    %v3300 = vsel %vm601, %v3282, %v3284
    %v3301 = vsel %vm601, %v3284, %v3286
    %v3302 = vsel %vm601, %v3286, %v3288
    %v3303 = vsel %vm601, %v3290, %v3292
    %v3304 = vsel %vm601, %v3292, %v3294
    %v3305 = vsel %vm601, %v3294, %v3296
    %v3306 = vsel %vm601, %v3296, %v3298
    %v3315 = vadd.f32 %v3090, %v3299
    %v3316 = vadd.f32 %v3091, %v3300
    %v3317 = vadd.f32 %v3092, %v3301
    %v3318 = vadd.f32 %v3093, %v3302
    %v3319 = vadd.f32 %v3094, %v3303
    %v3320 = vadd.f32 %v3095, %v3304
    %v3321 = vadd.f32 %v3096, %v3305
    %v3322 = vadd.f32 %v3097, %v3306
    %s3323 = sld [smem:[#allocation7 + $0x28]]
    %v3324 = vstv %s3323
    %v3325 = vmul.f32 %v3324, %v2544
    %v3326 = vmul.f32 %v3324, %v2545
    %v3327 = vmul.f32 %v3324, %v2546
    %v3328 = vmul.f32 %v3324, %v2547
    %v3329 = vmul.f32 %v3324, %v2548
    %v3330 = vmul.f32 %v3324, %v2549
    %v3331 = vmul.f32 %v3324, %v2550
    %v3332 = vmul.f32 %v3324, %v2551
    %v3333 = vmul.f32 %v3324, %v2552
    %v3334 = vmul.f32 %v3324, %v2553
    %v3335 = vmul.f32 %v3324, %v2554
    %v3336 = vmul.f32 %v3324, %v2555
    %v3337 = vmul.f32 %v3324, %v2556
    %v3338 = vmul.f32 %v3324, %v2557
    %v3339 = vmul.f32 %v3324, %v2558
    %v3355 = vrot.slane %v3325, 1
    %v3356 = vrot.slane %v3330, 1
    %v3357 = vsel %vm983, %v3355, %v3356
    %v3358 = vrot.slane %v3326, 1
    %v3359 = vrot.slane %v3331, 1
    %v3360 = vsel %vm983, %v3358, %v3359
    %v3361 = vrot.slane %v3327, 1
    %v3362 = vrot.slane %v3332, 1
    %v3363 = vsel %vm983, %v3361, %v3362
    %v3364 = vrot.slane %v3328, 1
    %v3365 = vrot.slane %v3333, 1
    %v3366 = vsel %vm983, %v3364, %v3365
    %v3367 = vrot.slane %v3329, 1
    %v3368 = vrot.slane %v3334, 1
    %v3369 = vsel %vm983, %v3367, %v3368
    %v3370 = vrot.slane %v3335, 1
    %v3371 = vsel %vm983, %v3356, %v3370
    %v3372 = vrot.slane %v3336, 1
    %v3373 = vsel %vm983, %v3359, %v3372
    %v3374 = vrot.slane %v3337, 1
    %v3375 = vsel %vm983, %v3362, %v3374
    %v3376 = vrot.slane %v3338, 1
    %v3377 = vsel %vm983, %v3365, %v3376
    %v3378 = vrot.slane %v3339, 1
    %v3379 = vsel %vm983, %v3368, %v3378
    %3380 = vrot.lane.b32.xlu0 %v3357, 127
    %v3381 = vpop.permute.xlu0 %3380
    %3382 = vrot.lane.b32.xlu0 %v3360, 127
    %v3383 = vpop.permute.xlu0 %3382
    %3384 = vrot.lane.b32.xlu0 %v3363, 127
    %v3385 = vpop.permute.xlu0 %3384
    %3386 = vrot.lane.b32.xlu0 %v3366, 127
    %v3387 = vpop.permute.xlu0 %3386
    %3388 = vrot.lane.b32.xlu0 %v3369, 127
    %v3389 = vpop.permute.xlu0 %3388
    %3390 = vrot.lane.b32.xlu0 %v3371, 127
    %v3391 = vpop.permute.xlu0 %3390
    %3392 = vrot.lane.b32.xlu0 %v3373, 127
    %v3393 = vpop.permute.xlu0 %3392
    %3394 = vrot.lane.b32.xlu0 %v3375, 127
    %v3395 = vpop.permute.xlu0 %3394
    %3396 = vrot.lane.b32.xlu0 %v3377, 127
    %v3397 = vpop.permute.xlu0 %3396
    %3398 = vrot.lane.b32.xlu0 %v3379, 127
    %v3399 = vpop.permute.xlu0 %3398
    %v3400 = vsel %vm601, %v3381, %v3383
    %v3401 = vsel %vm601, %v3383, %v3385
    %v3402 = vsel %vm601, %v3385, %v3387
    %v3403 = vsel %vm601, %v3387, %v3389
    %v3404 = vsel %vm601, %v3391, %v3393
    %v3405 = vsel %vm601, %v3393, %v3395
    %v3406 = vsel %vm601, %v3395, %v3397
    %v3407 = vsel %vm601, %v3397, %v3399
    %v3416 = vadd.f32 %v3152, %v3400
    %v3417 = vadd.f32 %v3153, %v3401
    %v3418 = vadd.f32 %v3154, %v3402
    %v3419 = vadd.f32 %v3155, %v3403
    %v3420 = vadd.f32 %v3156, %v3404
    %v3421 = vadd.f32 %v3157, %v3405
    %v3422 = vadd.f32 %v3158, %v3406
    %v3423 = vadd.f32 %v3159, %v3407
    %s3424 = sld [smem:[#allocation7 + $0x43]]
    %v3425 = vstv %s3424
    %v3426 = vmul.f32 %v3425, %v2544
    %v3427 = vmul.f32 %v3425, %v2545
    %v3428 = vmul.f32 %v3425, %v2546
    %v3429 = vmul.f32 %v3425, %v2547
    %v3430 = vmul.f32 %v3425, %v2548
    %v3431 = vmul.f32 %v3425, %v2549
    %v3432 = vmul.f32 %v3425, %v2550
    %v3433 = vmul.f32 %v3425, %v2551
    %v3434 = vmul.f32 %v3425, %v2552
    %v3435 = vmul.f32 %v3425, %v2553
    %v3436 = vmul.f32 %v3425, %v2554
    %v3437 = vmul.f32 %v3425, %v2555
    %v3438 = vmul.f32 %v3425, %v2556
    %v3439 = vmul.f32 %v3425, %v2557
    %v3440 = vmul.f32 %v3425, %v2558
    %v3456 = vrot.slane %v3426, 1
    %v3457 = vrot.slane %v3431, 1
    %v3458 = vsel %vm983, %v3456, %v3457
    %v3459 = vrot.slane %v3427, 1
    %v3460 = vrot.slane %v3432, 1
    %v3461 = vsel %vm983, %v3459, %v3460
    %v3462 = vrot.slane %v3428, 1
    %v3463 = vrot.slane %v3433, 1
    %v3464 = vsel %vm983, %v3462, %v3463
    %v3465 = vrot.slane %v3429, 1
    %v3466 = vrot.slane %v3434, 1
    %v3467 = vsel %vm983, %v3465, %v3466
    %v3468 = vrot.slane %v3430, 1
    %v3469 = vrot.slane %v3435, 1
    %v3470 = vsel %vm983, %v3468, %v3469
    %v3471 = vrot.slane %v3436, 1
    %v3472 = vsel %vm983, %v3457, %v3471
    %v3473 = vrot.slane %v3437, 1
    %v3474 = vsel %vm983, %v3460, %v3473
    %v3475 = vrot.slane %v3438, 1
    %v3476 = vsel %vm983, %v3463, %v3475
    %v3477 = vrot.slane %v3439, 1
    %v3478 = vsel %vm983, %v3466, %v3477
    %v3479 = vrot.slane %v3440, 1
    %v3480 = vsel %vm983, %v3469, %v3479
    %3481 = vrot.lane.b32.xlu0 %v3458, 127
    %v3482 = vpop.permute.xlu0 %3481
    %3483 = vrot.lane.b32.xlu0 %v3461, 127
    %v3484 = vpop.permute.xlu0 %3483
    %3485 = vrot.lane.b32.xlu0 %v3464, 127
    %v3486 = vpop.permute.xlu0 %3485
    %3487 = vrot.lane.b32.xlu0 %v3467, 127
    %v3488 = vpop.permute.xlu0 %3487
    %3489 = vrot.lane.b32.xlu0 %v3470, 127
    %v3490 = vpop.permute.xlu0 %3489
    %3491 = vrot.lane.b32.xlu0 %v3472, 127
    %v3492 = vpop.permute.xlu0 %3491
    %3493 = vrot.lane.b32.xlu0 %v3474, 127
    %v3494 = vpop.permute.xlu0 %3493
    %3495 = vrot.lane.b32.xlu0 %v3476, 127
    %v3496 = vpop.permute.xlu0 %3495
    %3497 = vrot.lane.b32.xlu0 %v3478, 127
    %v3498 = vpop.permute.xlu0 %3497
    %3499 = vrot.lane.b32.xlu0 %v3480, 127
    %v3500 = vpop.permute.xlu0 %3499
    %v3501 = vsel %vm601, %v3482, %v3484
    %v3502 = vsel %vm601, %v3484, %v3486
    %v3503 = vsel %vm601, %v3486, %v3488
    %v3504 = vsel %vm601, %v3488, %v3490
    %v3505 = vsel %vm601, %v3492, %v3494
    %v3506 = vsel %vm601, %v3494, %v3496
    %v3507 = vsel %vm601, %v3496, %v3498
    %v3508 = vsel %vm601, %v3498, %v3500
    %v3517 = vadd.f32 %v3214, %v3501
    %v3518 = vadd.f32 %v3215, %v3502
    %v3519 = vadd.f32 %v3216, %v3503
    %v3520 = vadd.f32 %v3217, %v3504
    %v3521 = vadd.f32 %v3218, %v3505
    %v3522 = vadd.f32 %v3219, %v3506
    %v3523 = vadd.f32 %v3220, %v3507
    %v3524 = vadd.f32 %v3221, %v3508
    %s3525 = sld [smem:[#allocation7 + $0xe]]
    %v3526 = vstv %s3525
    %v3527 = vmul.f32 %v3526, %v2571
    %v3528 = vmul.f32 %v3526, %v2572
    %v3529 = vmul.f32 %v3526, %v2573
    %v3530 = vmul.f32 %v3526, %v2574
    %v3531 = vmul.f32 %v3526, %v2575
    %v3532 = vmul.f32 %v3526, %v2576
    %v3533 = vmul.f32 %v3526, %v2577
    %v3534 = vmul.f32 %v3526, %v2578
    %v3535 = vmul.f32 %v3526, %v2579
    %v3536 = vmul.f32 %v3526, %v2580
    %v3537 = vmul.f32 %v3526, %v2581
    %v3538 = vmul.f32 %v3526, %v2582
    %v3539 = vmul.f32 %v3526, %v2583
    %v3540 = vmul.f32 %v3526, %v2584
    %v3541 = vmul.f32 %v3526, %v2585
    %v3557 = vrot.slane %v3527, 1
    %v3558 = vrot.slane %v3532, 1
    %v3559 = vsel %vm983, %v3557, %v3558
    %v3560 = vrot.slane %v3528, 1
    %v3561 = vrot.slane %v3533, 1
    %v3562 = vsel %vm983, %v3560, %v3561
    %v3563 = vrot.slane %v3529, 1
    %v3564 = vrot.slane %v3534, 1
    %v3565 = vsel %vm983, %v3563, %v3564
    %v3566 = vrot.slane %v3530, 1
    %v3567 = vrot.slane %v3535, 1
    %v3568 = vsel %vm983, %v3566, %v3567
    %v3569 = vrot.slane %v3531, 1
    %v3570 = vrot.slane %v3536, 1
    %v3571 = vsel %vm983, %v3569, %v3570
    %v3572 = vrot.slane %v3537, 1
    %v3573 = vsel %vm983, %v3558, %v3572
    %v3574 = vrot.slane %v3538, 1
    %v3575 = vsel %vm983, %v3561, %v3574
    %v3576 = vrot.slane %v3539, 1
    %v3577 = vsel %vm983, %v3564, %v3576
    %v3578 = vrot.slane %v3540, 1
    %v3579 = vsel %vm983, %v3567, %v3578
    %v3580 = vrot.slane %v3541, 1
    %v3581 = vsel %vm983, %v3570, %v3580
    %3582 = vrot.lane.b32.xlu0 %v3559, 126
    %v3583 = vpop.permute.xlu0 %3582
    %3584 = vrot.lane.b32.xlu0 %v3562, 126
    %v3585 = vpop.permute.xlu0 %3584
    %3586 = vrot.lane.b32.xlu0 %v3565, 126
    %v3587 = vpop.permute.xlu0 %3586
    %3588 = vrot.lane.b32.xlu0 %v3568, 126
    %v3589 = vpop.permute.xlu0 %3588
    %3590 = vrot.lane.b32.xlu0 %v3571, 126
    %v3591 = vpop.permute.xlu0 %3590
    %3592 = vrot.lane.b32.xlu0 %v3573, 126
    %v3593 = vpop.permute.xlu0 %3592
    %3594 = vrot.lane.b32.xlu0 %v3575, 126
    %v3595 = vpop.permute.xlu0 %3594
    %3596 = vrot.lane.b32.xlu0 %v3577, 126
    %v3597 = vpop.permute.xlu0 %3596
    %3598 = vrot.lane.b32.xlu0 %v3579, 126
    %v3599 = vpop.permute.xlu0 %3598
    %3600 = vrot.lane.b32.xlu0 %v3581, 126
    %v3601 = vpop.permute.xlu0 %3600
    %v3602 = vsel %vm800, %v3583, %v3585
    %v3603 = vsel %vm800, %v3585, %v3587
    %v3604 = vsel %vm800, %v3587, %v3589
    %v3605 = vsel %vm800, %v3589, %v3591
    %v3606 = vsel %vm800, %v3593, %v3595
    %v3607 = vsel %vm800, %v3595, %v3597
    %v3608 = vsel %vm800, %v3597, %v3599
    %v3609 = vsel %vm800, %v3599, %v3601
    %v3618 = vadd.f32 %v3315, %v3602
    %v3619 = vadd.f32 %v3316, %v3603
    %v3620 = vadd.f32 %v3317, %v3604
    %v3621 = vadd.f32 %v3318, %v3605
    %v3622 = vadd.f32 %v3319, %v3606
    %v3623 = vadd.f32 %v3320, %v3607
    %v3624 = vadd.f32 %v3321, %v3608
    %v3625 = vadd.f32 %v3322, %v3609
    %s3626 = sld [smem:[#allocation7 + $0x29]]
    %v3627 = vstv %s3626
    %v3628 = vmul.f32 %v3627, %v2571
    %v3629 = vmul.f32 %v3627, %v2572
    %v3630 = vmul.f32 %v3627, %v2573
    %v3631 = vmul.f32 %v3627, %v2574
    %v3632 = vmul.f32 %v3627, %v2575
    %v3633 = vmul.f32 %v3627, %v2576
    %v3634 = vmul.f32 %v3627, %v2577
    %v3635 = vmul.f32 %v3627, %v2578
    %v3636 = vmul.f32 %v3627, %v2579
    %v3637 = vmul.f32 %v3627, %v2580
    %v3638 = vmul.f32 %v3627, %v2581
    %v3639 = vmul.f32 %v3627, %v2582
    %v3640 = vmul.f32 %v3627, %v2583
    %v3641 = vmul.f32 %v3627, %v2584
    %v3642 = vmul.f32 %v3627, %v2585
    %v3658 = vrot.slane %v3628, 1
    %v3659 = vrot.slane %v3633, 1
    %v3660 = vsel %vm983, %v3658, %v3659
    %v3661 = vrot.slane %v3629, 1
    %v3662 = vrot.slane %v3634, 1
    %v3663 = vsel %vm983, %v3661, %v3662
    %v3664 = vrot.slane %v3630, 1
    %v3665 = vrot.slane %v3635, 1
    %v3666 = vsel %vm983, %v3664, %v3665
    %v3667 = vrot.slane %v3631, 1
    %v3668 = vrot.slane %v3636, 1
    %v3669 = vsel %vm983, %v3667, %v3668
    %v3670 = vrot.slane %v3632, 1
    %v3671 = vrot.slane %v3637, 1
    %v3672 = vsel %vm983, %v3670, %v3671
    %v3673 = vrot.slane %v3638, 1
    %v3674 = vsel %vm983, %v3659, %v3673
    %v3675 = vrot.slane %v3639, 1
    %v3676 = vsel %vm983, %v3662, %v3675
    %v3677 = vrot.slane %v3640, 1
    %v3678 = vsel %vm983, %v3665, %v3677
    %v3679 = vrot.slane %v3641, 1
    %v3680 = vsel %vm983, %v3668, %v3679
    %v3681 = vrot.slane %v3642, 1
    %v3682 = vsel %vm983, %v3671, %v3681
    %3683 = vrot.lane.b32.xlu0 %v3660, 126
    %v3684 = vpop.permute.xlu0 %3683
    %3685 = vrot.lane.b32.xlu0 %v3663, 126
    %v3686 = vpop.permute.xlu0 %3685
    %3687 = vrot.lane.b32.xlu0 %v3666, 126
    %v3688 = vpop.permute.xlu0 %3687
    %3689 = vrot.lane.b32.xlu0 %v3669, 126
    %v3690 = vpop.permute.xlu0 %3689
    %3691 = vrot.lane.b32.xlu0 %v3672, 126
    %v3692 = vpop.permute.xlu0 %3691
    %3693 = vrot.lane.b32.xlu0 %v3674, 126
    %v3694 = vpop.permute.xlu0 %3693
    %3695 = vrot.lane.b32.xlu0 %v3676, 126
    %v3696 = vpop.permute.xlu0 %3695
    %3697 = vrot.lane.b32.xlu0 %v3678, 126
    %v3698 = vpop.permute.xlu0 %3697
    %3699 = vrot.lane.b32.xlu0 %v3680, 126
    %v3700 = vpop.permute.xlu0 %3699
    %3701 = vrot.lane.b32.xlu0 %v3682, 126
    %v3702 = vpop.permute.xlu0 %3701
    %v3703 = vsel %vm800, %v3684, %v3686
    %v3704 = vsel %vm800, %v3686, %v3688
    %v3705 = vsel %vm800, %v3688, %v3690
    %v3706 = vsel %vm800, %v3690, %v3692
    %v3707 = vsel %vm800, %v3694, %v3696
    %v3708 = vsel %vm800, %v3696, %v3698
    %v3709 = vsel %vm800, %v3698, %v3700
    %v3710 = vsel %vm800, %v3700, %v3702
    %v3719 = vadd.f32 %v3416, %v3703
    %v3720 = vadd.f32 %v3417, %v3704
    %v3721 = vadd.f32 %v3418, %v3705
    %v3722 = vadd.f32 %v3419, %v3706
    %v3723 = vadd.f32 %v3420, %v3707
    %v3724 = vadd.f32 %v3421, %v3708
    %v3725 = vadd.f32 %v3422, %v3709
    %v3726 = vadd.f32 %v3423, %v3710
    %s3727 = sld [smem:[#allocation7 + $0x44]]
    %v3728 = vstv %s3727
    %v3729 = vmul.f32 %v3728, %v2571
    %v3730 = vmul.f32 %v3728, %v2572
    %v3731 = vmul.f32 %v3728, %v2573
    %v3732 = vmul.f32 %v3728, %v2574
    %v3733 = vmul.f32 %v3728, %v2575
    %v3734 = vmul.f32 %v3728, %v2576
    %v3735 = vmul.f32 %v3728, %v2577
    %v3736 = vmul.f32 %v3728, %v2578
    %v3737 = vmul.f32 %v3728, %v2579
    %v3738 = vmul.f32 %v3728, %v2580
    %v3739 = vmul.f32 %v3728, %v2581
    %v3740 = vmul.f32 %v3728, %v2582
    %v3741 = vmul.f32 %v3728, %v2583
    %v3742 = vmul.f32 %v3728, %v2584
    %v3743 = vmul.f32 %v3728, %v2585
    %v3759 = vrot.slane %v3729, 1
    %v3760 = vrot.slane %v3734, 1
    %v3761 = vsel %vm983, %v3759, %v3760
    %v3762 = vrot.slane %v3730, 1
    %v3763 = vrot.slane %v3735, 1
    %v3764 = vsel %vm983, %v3762, %v3763
    %v3765 = vrot.slane %v3731, 1
    %v3766 = vrot.slane %v3736, 1
    %v3767 = vsel %vm983, %v3765, %v3766
    %v3768 = vrot.slane %v3732, 1
    %v3769 = vrot.slane %v3737, 1
    %v3770 = vsel %vm983, %v3768, %v3769
    %v3771 = vrot.slane %v3733, 1
    %v3772 = vrot.slane %v3738, 1
    %v3773 = vsel %vm983, %v3771, %v3772
    %v3774 = vrot.slane %v3739, 1
    %v3775 = vsel %vm983, %v3760, %v3774
    %v3776 = vrot.slane %v3740, 1
    %v3777 = vsel %vm983, %v3763, %v3776
    %v3778 = vrot.slane %v3741, 1
    %v3779 = vsel %vm983, %v3766, %v3778
    %v3780 = vrot.slane %v3742, 1
    %v3781 = vsel %vm983, %v3769, %v3780
    %v3782 = vrot.slane %v3743, 1
    %v3783 = vsel %vm983, %v3772, %v3782
    %3784 = vrot.lane.b32.xlu0 %v3761, 126
    %v3785 = vpop.permute.xlu0 %3784
    %3786 = vrot.lane.b32.xlu0 %v3764, 126
    %v3787 = vpop.permute.xlu0 %3786
    %3788 = vrot.lane.b32.xlu0 %v3767, 126
    %v3789 = vpop.permute.xlu0 %3788
    %3790 = vrot.lane.b32.xlu0 %v3770, 126
    %v3791 = vpop.permute.xlu0 %3790
    %3792 = vrot.lane.b32.xlu0 %v3773, 126
    %v3793 = vpop.permute.xlu0 %3792
    %3794 = vrot.lane.b32.xlu0 %v3775, 126
    %v3795 = vpop.permute.xlu0 %3794
    %3796 = vrot.lane.b32.xlu0 %v3777, 126
    %v3797 = vpop.permute.xlu0 %3796
    %3798 = vrot.lane.b32.xlu0 %v3779, 126
    %v3799 = vpop.permute.xlu0 %3798
    %3800 = vrot.lane.b32.xlu0 %v3781, 126
    %v3801 = vpop.permute.xlu0 %3800
    %3802 = vrot.lane.b32.xlu0 %v3783, 126
    %v3803 = vpop.permute.xlu0 %3802
    %v3804 = vsel %vm800, %v3785, %v3787
    %v3805 = vsel %vm800, %v3787, %v3789
    %v3806 = vsel %vm800, %v3789, %v3791
    %v3807 = vsel %vm800, %v3791, %v3793
    %v3808 = vsel %vm800, %v3795, %v3797
    %v3809 = vsel %vm800, %v3797, %v3799
    %v3810 = vsel %vm800, %v3799, %v3801
    %v3811 = vsel %vm800, %v3801, %v3803
    %v3820 = vadd.f32 %v3517, %v3804
    %v3821 = vadd.f32 %v3518, %v3805
    %v3822 = vadd.f32 %v3519, %v3806
    %v3823 = vadd.f32 %v3520, %v3807
    %v3824 = vadd.f32 %v3521, %v3808
    %v3825 = vadd.f32 %v3522, %v3809
    %v3826 = vadd.f32 %v3523, %v3810
    %v3827 = vadd.f32 %v3524, %v3811
    %s3828 = sld [smem:[#allocation7 + $0xf]]
    %v3829 = vstv %s3828
    %v3830 = vmul.f32 %v3829, %v2559
    %v3831 = vmul.f32 %v3829, %v2560
    %v3832 = vmul.f32 %v3829, %v2561
    %v3833 = vmul.f32 %v3829, %v2562
    %v3834 = vmul.f32 %v3829, %v2563
    %v3835 = vmul.f32 %v3829, %v2564
    %v3836 = vmul.f32 %v3829, %v2565
    %v3837 = vmul.f32 %v3829, %v2566
    %v3838 = vmul.f32 %v3829, %v2567
    %v3839 = vmul.f32 %v3829, %v2568
    %v3840 = vmul.f32 %v3829, %v2569
    %v3841 = vmul.f32 %v3829, %v2570
    %v3854 = vrot.slane %v3830, 2
    %v3855 = vrot.slane %v3834, 2
    %v3856 = vsel %vm1776, %v3854, %v3855
    %v3857 = vrot.slane %v3831, 2
    %v3858 = vrot.slane %v3835, 2
    %v3859 = vsel %vm1776, %v3857, %v3858
    %v3860 = vrot.slane %v3832, 2
    %v3861 = vrot.slane %v3836, 2
    %v3862 = vsel %vm1776, %v3860, %v3861
    %v3863 = vrot.slane %v3833, 2
    %v3864 = vrot.slane %v3837, 2
    %v3865 = vsel %vm1776, %v3863, %v3864
    %v3866 = vrot.slane %v3838, 2
    %v3867 = vsel %vm1776, %v3855, %v3866
    %v3868 = vrot.slane %v3839, 2
    %v3869 = vsel %vm1776, %v3858, %v3868
    %v3870 = vrot.slane %v3840, 2
    %v3871 = vsel %vm1776, %v3861, %v3870
    %v3872 = vrot.slane %v3841, 2
    %v3873 = vsel %vm1776, %v3864, %v3872
    %v3882 = vadd.f32 %v3618, %v3856
    %v3883 = vadd.f32 %v3619, %v3859
    %v3884 = vadd.f32 %v3620, %v3862
    %v3885 = vadd.f32 %v3621, %v3865
    %v3886 = vadd.f32 %v3622, %v3867
    %v3887 = vadd.f32 %v3623, %v3869
    %v3888 = vadd.f32 %v3624, %v3871
    %v3889 = vadd.f32 %v3625, %v3873
    %s3890 = sld [smem:[#allocation7 + $0x2a]]
    %v3891 = vstv %s3890
    %v3892 = vmul.f32 %v3891, %v2559
    %v3893 = vmul.f32 %v3891, %v2560
    %v3894 = vmul.f32 %v3891, %v2561
    %v3895 = vmul.f32 %v3891, %v2562
    %v3896 = vmul.f32 %v3891, %v2563
    %v3897 = vmul.f32 %v3891, %v2564
    %v3898 = vmul.f32 %v3891, %v2565
    %v3899 = vmul.f32 %v3891, %v2566
    %v3900 = vmul.f32 %v3891, %v2567
    %v3901 = vmul.f32 %v3891, %v2568
    %v3902 = vmul.f32 %v3891, %v2569
    %v3903 = vmul.f32 %v3891, %v2570
    %v3916 = vrot.slane %v3892, 2
    %v3917 = vrot.slane %v3896, 2
    %v3918 = vsel %vm1776, %v3916, %v3917
    %v3919 = vrot.slane %v3893, 2
    %v3920 = vrot.slane %v3897, 2
    %v3921 = vsel %vm1776, %v3919, %v3920
    %v3922 = vrot.slane %v3894, 2
    %v3923 = vrot.slane %v3898, 2
    %v3924 = vsel %vm1776, %v3922, %v3923
    %v3925 = vrot.slane %v3895, 2
    %v3926 = vrot.slane %v3899, 2
    %v3927 = vsel %vm1776, %v3925, %v3926
    %v3928 = vrot.slane %v3900, 2
    %v3929 = vsel %vm1776, %v3917, %v3928
    %v3930 = vrot.slane %v3901, 2
    %v3931 = vsel %vm1776, %v3920, %v3930
    %v3932 = vrot.slane %v3902, 2
    %v3933 = vsel %vm1776, %v3923, %v3932
    %v3934 = vrot.slane %v3903, 2
    %v3935 = vsel %vm1776, %v3926, %v3934
    %v3944 = vadd.f32 %v3719, %v3918
    %v3945 = vadd.f32 %v3720, %v3921
    %v3946 = vadd.f32 %v3721, %v3924
    %v3947 = vadd.f32 %v3722, %v3927
    %v3948 = vadd.f32 %v3723, %v3929
    %v3949 = vadd.f32 %v3724, %v3931
    %v3950 = vadd.f32 %v3725, %v3933
    %v3951 = vadd.f32 %v3726, %v3935
    %s3952 = sld [smem:[#allocation7 + $0x45]]
    %v3953 = vstv %s3952
    %v3954 = vmul.f32 %v3953, %v2559
    %v3955 = vmul.f32 %v3953, %v2560
    %v3956 = vmul.f32 %v3953, %v2561
    %v3957 = vmul.f32 %v3953, %v2562
    %v3958 = vmul.f32 %v3953, %v2563
    %v3959 = vmul.f32 %v3953, %v2564
    %v3960 = vmul.f32 %v3953, %v2565
    %v3961 = vmul.f32 %v3953, %v2566
    %v3962 = vmul.f32 %v3953, %v2567
    %v3963 = vmul.f32 %v3953, %v2568
    %v3964 = vmul.f32 %v3953, %v2569
    %v3965 = vmul.f32 %v3953, %v2570
    %v3978 = vrot.slane %v3954, 2
    %v3979 = vrot.slane %v3958, 2
    %v3980 = vsel %vm1776, %v3978, %v3979
    %v3981 = vrot.slane %v3955, 2
    %v3982 = vrot.slane %v3959, 2
    %v3983 = vsel %vm1776, %v3981, %v3982
    %v3984 = vrot.slane %v3956, 2
    %v3985 = vrot.slane %v3960, 2
    %v3986 = vsel %vm1776, %v3984, %v3985
    %v3987 = vrot.slane %v3957, 2
    %v3988 = vrot.slane %v3961, 2
    %v3989 = vsel %vm1776, %v3987, %v3988
    %v3990 = vrot.slane %v3962, 2
    %v3991 = vsel %vm1776, %v3979, %v3990
    %v3992 = vrot.slane %v3963, 2
    %v3993 = vsel %vm1776, %v3982, %v3992
    %v3994 = vrot.slane %v3964, 2
    %v3995 = vsel %vm1776, %v3985, %v3994
    %v3996 = vrot.slane %v3965, 2
    %v3997 = vsel %vm1776, %v3988, %v3996
    %v4006 = vadd.f32 %v3820, %v3980
    %v4007 = vadd.f32 %v3821, %v3983
    %v4008 = vadd.f32 %v3822, %v3986
    %v4009 = vadd.f32 %v3823, %v3989
    %v4010 = vadd.f32 %v3824, %v3991
    %v4011 = vadd.f32 %v3825, %v3993
    %v4012 = vadd.f32 %v3826, %v3995
    %v4013 = vadd.f32 %v3827, %v3997
    %s4014 = sld [smem:[#allocation7 + $0x10]]
    %v4015 = vstv %s4014
    %v4016 = vmul.f32 %v4015, %v2544
    %v4017 = vmul.f32 %v4015, %v2545
    %v4018 = vmul.f32 %v4015, %v2546
    %v4019 = vmul.f32 %v4015, %v2547
    %v4020 = vmul.f32 %v4015, %v2548
    %v4021 = vmul.f32 %v4015, %v2549
    %v4022 = vmul.f32 %v4015, %v2550
    %v4023 = vmul.f32 %v4015, %v2551
    %v4024 = vmul.f32 %v4015, %v2552
    %v4025 = vmul.f32 %v4015, %v2553
    %v4026 = vmul.f32 %v4015, %v2554
    %v4027 = vmul.f32 %v4015, %v2555
    %v4028 = vmul.f32 %v4015, %v2556
    %v4029 = vmul.f32 %v4015, %v2557
    %v4030 = vmul.f32 %v4015, %v2558
    %v4046 = vrot.slane %v4016, 2
    %v4047 = vrot.slane %v4021, 2
    %v4048 = vsel %vm1776, %v4046, %v4047
    %v4049 = vrot.slane %v4017, 2
    %v4050 = vrot.slane %v4022, 2
    %v4051 = vsel %vm1776, %v4049, %v4050
    %v4052 = vrot.slane %v4018, 2
    %v4053 = vrot.slane %v4023, 2
    %v4054 = vsel %vm1776, %v4052, %v4053
    %v4055 = vrot.slane %v4019, 2
    %v4056 = vrot.slane %v4024, 2
    %v4057 = vsel %vm1776, %v4055, %v4056
    %v4058 = vrot.slane %v4020, 2
    %v4059 = vrot.slane %v4025, 2
    %v4060 = vsel %vm1776, %v4058, %v4059
    %v4061 = vrot.slane %v4026, 2
    %v4062 = vsel %vm1776, %v4047, %v4061
    %v4063 = vrot.slane %v4027, 2
    %v4064 = vsel %vm1776, %v4050, %v4063
    %v4065 = vrot.slane %v4028, 2
    %v4066 = vsel %vm1776, %v4053, %v4065
    %v4067 = vrot.slane %v4029, 2
    %v4068 = vsel %vm1776, %v4056, %v4067
    %v4069 = vrot.slane %v4030, 2
    %v4070 = vsel %vm1776, %v4059, %v4069
    %4071 = vrot.lane.b32.xlu0 %v4048, 127
    %v4072 = vpop.permute.xlu0 %4071
    %4073 = vrot.lane.b32.xlu0 %v4051, 127
    %v4074 = vpop.permute.xlu0 %4073
    %4075 = vrot.lane.b32.xlu0 %v4054, 127
    %v4076 = vpop.permute.xlu0 %4075
    %4077 = vrot.lane.b32.xlu0 %v4057, 127
    %v4078 = vpop.permute.xlu0 %4077
    %4079 = vrot.lane.b32.xlu0 %v4060, 127
    %v4080 = vpop.permute.xlu0 %4079
    %4081 = vrot.lane.b32.xlu0 %v4062, 127
    %v4082 = vpop.permute.xlu0 %4081
    %4083 = vrot.lane.b32.xlu0 %v4064, 127
    %v4084 = vpop.permute.xlu0 %4083
    %4085 = vrot.lane.b32.xlu0 %v4066, 127
    %v4086 = vpop.permute.xlu0 %4085
    %4087 = vrot.lane.b32.xlu0 %v4068, 127
    %v4088 = vpop.permute.xlu0 %4087
    %4089 = vrot.lane.b32.xlu0 %v4070, 127
    %v4090 = vpop.permute.xlu0 %4089
    %v4091 = vsel %vm601, %v4072, %v4074
    %v4092 = vsel %vm601, %v4074, %v4076
    %v4093 = vsel %vm601, %v4076, %v4078
    %v4094 = vsel %vm601, %v4078, %v4080
    %v4095 = vsel %vm601, %v4082, %v4084
    %v4096 = vsel %vm601, %v4084, %v4086
    %v4097 = vsel %vm601, %v4086, %v4088
    %v4098 = vsel %vm601, %v4088, %v4090
    %v4107 = vadd.f32 %v3882, %v4091
    %v4108 = vadd.f32 %v3883, %v4092
    %v4109 = vadd.f32 %v3884, %v4093
    %v4110 = vadd.f32 %v3885, %v4094
    %v4111 = vadd.f32 %v3886, %v4095
    %v4112 = vadd.f32 %v3887, %v4096
    %v4113 = vadd.f32 %v3888, %v4097
    %v4114 = vadd.f32 %v3889, %v4098
    %s4115 = sld [smem:[#allocation7 + $0x2b]]
    %v4116 = vstv %s4115
    %v4117 = vmul.f32 %v4116, %v2544
    %v4118 = vmul.f32 %v4116, %v2545
    %v4119 = vmul.f32 %v4116, %v2546
    %v4120 = vmul.f32 %v4116, %v2547
    %v4121 = vmul.f32 %v4116, %v2548
    %v4122 = vmul.f32 %v4116, %v2549
    %v4123 = vmul.f32 %v4116, %v2550
    %v4124 = vmul.f32 %v4116, %v2551
    %v4125 = vmul.f32 %v4116, %v2552
    %v4126 = vmul.f32 %v4116, %v2553
    %v4127 = vmul.f32 %v4116, %v2554
    %v4128 = vmul.f32 %v4116, %v2555
    %v4129 = vmul.f32 %v4116, %v2556
    %v4130 = vmul.f32 %v4116, %v2557
    %v4131 = vmul.f32 %v4116, %v2558
    %v4147 = vrot.slane %v4117, 2
    %v4148 = vrot.slane %v4122, 2
    %v4149 = vsel %vm1776, %v4147, %v4148
    %v4150 = vrot.slane %v4118, 2
    %v4151 = vrot.slane %v4123, 2
    %v4152 = vsel %vm1776, %v4150, %v4151
    %v4153 = vrot.slane %v4119, 2
    %v4154 = vrot.slane %v4124, 2
    %v4155 = vsel %vm1776, %v4153, %v4154
    %v4156 = vrot.slane %v4120, 2
    %v4157 = vrot.slane %v4125, 2
    %v4158 = vsel %vm1776, %v4156, %v4157
    %v4159 = vrot.slane %v4121, 2
    %v4160 = vrot.slane %v4126, 2
    %v4161 = vsel %vm1776, %v4159, %v4160
    %v4162 = vrot.slane %v4127, 2
    %v4163 = vsel %vm1776, %v4148, %v4162
    %v4164 = vrot.slane %v4128, 2
    %v4165 = vsel %vm1776, %v4151, %v4164
    %v4166 = vrot.slane %v4129, 2
    %v4167 = vsel %vm1776, %v4154, %v4166
    %v4168 = vrot.slane %v4130, 2
    %v4169 = vsel %vm1776, %v4157, %v4168
    %v4170 = vrot.slane %v4131, 2
    %v4171 = vsel %vm1776, %v4160, %v4170
    %4172 = vrot.lane.b32.xlu0 %v4149, 127
    %v4173 = vpop.permute.xlu0 %4172
    %4174 = vrot.lane.b32.xlu0 %v4152, 127
    %v4175 = vpop.permute.xlu0 %4174
    %4176 = vrot.lane.b32.xlu0 %v4155, 127
    %v4177 = vpop.permute.xlu0 %4176
    %4178 = vrot.lane.b32.xlu0 %v4158, 127
    %v4179 = vpop.permute.xlu0 %4178
    %4180 = vrot.lane.b32.xlu0 %v4161, 127
    %v4181 = vpop.permute.xlu0 %4180
    %4182 = vrot.lane.b32.xlu0 %v4163, 127
    %v4183 = vpop.permute.xlu0 %4182
    %4184 = vrot.lane.b32.xlu0 %v4165, 127
    %v4185 = vpop.permute.xlu0 %4184
    %4186 = vrot.lane.b32.xlu0 %v4167, 127
    %v4187 = vpop.permute.xlu0 %4186
    %4188 = vrot.lane.b32.xlu0 %v4169, 127
    %v4189 = vpop.permute.xlu0 %4188
    %4190 = vrot.lane.b32.xlu0 %v4171, 127
    %v4191 = vpop.permute.xlu0 %4190
    %v4192 = vsel %vm601, %v4173, %v4175
    %v4193 = vsel %vm601, %v4175, %v4177
    %v4194 = vsel %vm601, %v4177, %v4179
    %v4195 = vsel %vm601, %v4179, %v4181
    %v4196 = vsel %vm601, %v4183, %v4185
    %v4197 = vsel %vm601, %v4185, %v4187
    %v4198 = vsel %vm601, %v4187, %v4189
    %v4199 = vsel %vm601, %v4189, %v4191
    %v4208 = vadd.f32 %v3944, %v4192
    %v4209 = vadd.f32 %v3945, %v4193
    %v4210 = vadd.f32 %v3946, %v4194
    %v4211 = vadd.f32 %v3947, %v4195
    %v4212 = vadd.f32 %v3948, %v4196
    %v4213 = vadd.f32 %v3949, %v4197
    %v4214 = vadd.f32 %v3950, %v4198
    %v4215 = vadd.f32 %v3951, %v4199
    %s4216 = sld [smem:[#allocation7 + $0x46]]
    %v4217 = vstv %s4216
    %v4218 = vmul.f32 %v4217, %v2544
    %v4219 = vmul.f32 %v4217, %v2545
    %v4220 = vmul.f32 %v4217, %v2546
    %v4221 = vmul.f32 %v4217, %v2547
    %v4222 = vmul.f32 %v4217, %v2548
    %v4223 = vmul.f32 %v4217, %v2549
    %v4224 = vmul.f32 %v4217, %v2550
    %v4225 = vmul.f32 %v4217, %v2551
    %v4226 = vmul.f32 %v4217, %v2552
    %v4227 = vmul.f32 %v4217, %v2553
    %v4228 = vmul.f32 %v4217, %v2554
    %v4229 = vmul.f32 %v4217, %v2555
    %v4230 = vmul.f32 %v4217, %v2556
    %v4231 = vmul.f32 %v4217, %v2557
    %v4232 = vmul.f32 %v4217, %v2558
    %v4248 = vrot.slane %v4218, 2
    %v4249 = vrot.slane %v4223, 2
    %v4250 = vsel %vm1776, %v4248, %v4249
    %v4251 = vrot.slane %v4219, 2
    %v4252 = vrot.slane %v4224, 2
    %v4253 = vsel %vm1776, %v4251, %v4252
    %v4254 = vrot.slane %v4220, 2
    %v4255 = vrot.slane %v4225, 2
    %v4256 = vsel %vm1776, %v4254, %v4255
    %v4257 = vrot.slane %v4221, 2
    %v4258 = vrot.slane %v4226, 2
    %v4259 = vsel %vm1776, %v4257, %v4258
    %v4260 = vrot.slane %v4222, 2
    %v4261 = vrot.slane %v4227, 2
    %v4262 = vsel %vm1776, %v4260, %v4261
    %v4263 = vrot.slane %v4228, 2
    %v4264 = vsel %vm1776, %v4249, %v4263
    %v4265 = vrot.slane %v4229, 2
    %v4266 = vsel %vm1776, %v4252, %v4265
    %v4267 = vrot.slane %v4230, 2
    %v4268 = vsel %vm1776, %v4255, %v4267
    %v4269 = vrot.slane %v4231, 2
    %v4270 = vsel %vm1776, %v4258, %v4269
    %v4271 = vrot.slane %v4232, 2
    %v4272 = vsel %vm1776, %v4261, %v4271
    %4273 = vrot.lane.b32.xlu0 %v4250, 127
    %v4274 = vpop.permute.xlu0 %4273
    %4275 = vrot.lane.b32.xlu0 %v4253, 127
    %v4276 = vpop.permute.xlu0 %4275
    %4277 = vrot.lane.b32.xlu0 %v4256, 127
    %v4278 = vpop.permute.xlu0 %4277
    %4279 = vrot.lane.b32.xlu0 %v4259, 127
    %v4280 = vpop.permute.xlu0 %4279
    %4281 = vrot.lane.b32.xlu0 %v4262, 127
    %v4282 = vpop.permute.xlu0 %4281
    %4283 = vrot.lane.b32.xlu0 %v4264, 127
    %v4284 = vpop.permute.xlu0 %4283
    %4285 = vrot.lane.b32.xlu0 %v4266, 127
    %v4286 = vpop.permute.xlu0 %4285
    %4287 = vrot.lane.b32.xlu0 %v4268, 127
    %v4288 = vpop.permute.xlu0 %4287
    %4289 = vrot.lane.b32.xlu0 %v4270, 127
    %v4290 = vpop.permute.xlu0 %4289
    %4291 = vrot.lane.b32.xlu0 %v4272, 127
    %v4292 = vpop.permute.xlu0 %4291
    %v4293 = vsel %vm601, %v4274, %v4276
    %v4294 = vsel %vm601, %v4276, %v4278
    %v4295 = vsel %vm601, %v4278, %v4280
    %v4296 = vsel %vm601, %v4280, %v4282
    %v4297 = vsel %vm601, %v4284, %v4286
    %v4298 = vsel %vm601, %v4286, %v4288
    %v4299 = vsel %vm601, %v4288, %v4290
    %v4300 = vsel %vm601, %v4290, %v4292
    %v4309 = vadd.f32 %v4006, %v4293
    %v4310 = vadd.f32 %v4007, %v4294
    %v4311 = vadd.f32 %v4008, %v4295
    %v4312 = vadd.f32 %v4009, %v4296
    %v4313 = vadd.f32 %v4010, %v4297
    %v4314 = vadd.f32 %v4011, %v4298
    %v4315 = vadd.f32 %v4012, %v4299
    %v4316 = vadd.f32 %v4013, %v4300
    %s4317 = sld [smem:[#allocation7 + $0x11]]
    %v4318 = vstv %s4317
    %v4319 = vmul.f32 %v4318, %v2571
    %v4320 = vmul.f32 %v4318, %v2572
    %v4321 = vmul.f32 %v4318, %v2573
    %v4322 = vmul.f32 %v4318, %v2574
    %v4323 = vmul.f32 %v4318, %v2575
    %v4324 = vmul.f32 %v4318, %v2576
    %v4325 = vmul.f32 %v4318, %v2577
    %v4326 = vmul.f32 %v4318, %v2578
    %v4327 = vmul.f32 %v4318, %v2579
    %v4328 = vmul.f32 %v4318, %v2580
    %v4329 = vmul.f32 %v4318, %v2581
    %v4330 = vmul.f32 %v4318, %v2582
    %v4331 = vmul.f32 %v4318, %v2583
    %v4332 = vmul.f32 %v4318, %v2584
    %v4333 = vmul.f32 %v4318, %v2585
    %v4349 = vrot.slane %v4319, 2
    %v4350 = vrot.slane %v4324, 2
    %v4351 = vsel %vm1776, %v4349, %v4350
    %v4352 = vrot.slane %v4320, 2
    %v4353 = vrot.slane %v4325, 2
    %v4354 = vsel %vm1776, %v4352, %v4353
    %v4355 = vrot.slane %v4321, 2
    %v4356 = vrot.slane %v4326, 2
    %v4357 = vsel %vm1776, %v4355, %v4356
    %v4358 = vrot.slane %v4322, 2
    %v4359 = vrot.slane %v4327, 2
    %v4360 = vsel %vm1776, %v4358, %v4359
    %v4361 = vrot.slane %v4323, 2
    %v4362 = vrot.slane %v4328, 2
    %v4363 = vsel %vm1776, %v4361, %v4362
    %v4364 = vrot.slane %v4329, 2
    %v4365 = vsel %vm1776, %v4350, %v4364
    %v4366 = vrot.slane %v4330, 2
    %v4367 = vsel %vm1776, %v4353, %v4366
    %v4368 = vrot.slane %v4331, 2
    %v4369 = vsel %vm1776, %v4356, %v4368
    %v4370 = vrot.slane %v4332, 2
    %v4371 = vsel %vm1776, %v4359, %v4370
    %v4372 = vrot.slane %v4333, 2
    %v4373 = vsel %vm1776, %v4362, %v4372
    %4374 = vrot.lane.b32.xlu0 %v4351, 126
    %v4375 = vpop.permute.xlu0 %4374
    %4376 = vrot.lane.b32.xlu0 %v4354, 126
    %v4377 = vpop.permute.xlu0 %4376
    %4378 = vrot.lane.b32.xlu0 %v4357, 126
    %v4379 = vpop.permute.xlu0 %4378
    %4380 = vrot.lane.b32.xlu0 %v4360, 126
    %v4381 = vpop.permute.xlu0 %4380
    %4382 = vrot.lane.b32.xlu0 %v4363, 126
    %v4383 = vpop.permute.xlu0 %4382
    %4384 = vrot.lane.b32.xlu0 %v4365, 126
    %v4385 = vpop.permute.xlu0 %4384
    %4386 = vrot.lane.b32.xlu0 %v4367, 126
    %v4387 = vpop.permute.xlu0 %4386
    %4388 = vrot.lane.b32.xlu0 %v4369, 126
    %v4389 = vpop.permute.xlu0 %4388
    %4390 = vrot.lane.b32.xlu0 %v4371, 126
    %v4391 = vpop.permute.xlu0 %4390
    %4392 = vrot.lane.b32.xlu0 %v4373, 126
    %v4393 = vpop.permute.xlu0 %4392
    %v4394 = vsel %vm800, %v4375, %v4377
    %v4395 = vsel %vm800, %v4377, %v4379
    %v4396 = vsel %vm800, %v4379, %v4381
    %v4397 = vsel %vm800, %v4381, %v4383
    %v4398 = vsel %vm800, %v4385, %v4387
    %v4399 = vsel %vm800, %v4387, %v4389
    %v4400 = vsel %vm800, %v4389, %v4391
    %v4401 = vsel %vm800, %v4391, %v4393
    %v4410 = vadd.f32 %v4107, %v4394
    %v4411 = vadd.f32 %v4108, %v4395
    %v4412 = vadd.f32 %v4109, %v4396
    %v4413 = vadd.f32 %v4110, %v4397
    %v4414 = vadd.f32 %v4111, %v4398
    %v4415 = vadd.f32 %v4112, %v4399
    %v4416 = vadd.f32 %v4113, %v4400
    %v4417 = vadd.f32 %v4114, %v4401
    %s4418 = sld [smem:[#allocation7 + $0x2c]]
    %v4419 = vstv %s4418
    %v4420 = vmul.f32 %v4419, %v2571
    %v4421 = vmul.f32 %v4419, %v2572
    %v4422 = vmul.f32 %v4419, %v2573
    %v4423 = vmul.f32 %v4419, %v2574
    %v4424 = vmul.f32 %v4419, %v2575
    %v4425 = vmul.f32 %v4419, %v2576
    %v4426 = vmul.f32 %v4419, %v2577
    %v4427 = vmul.f32 %v4419, %v2578
    %v4428 = vmul.f32 %v4419, %v2579
    %v4429 = vmul.f32 %v4419, %v2580
    %v4430 = vmul.f32 %v4419, %v2581
    %v4431 = vmul.f32 %v4419, %v2582
    %v4432 = vmul.f32 %v4419, %v2583
    %v4433 = vmul.f32 %v4419, %v2584
    %v4434 = vmul.f32 %v4419, %v2585
    %v4450 = vrot.slane %v4420, 2
    %v4451 = vrot.slane %v4425, 2
    %v4452 = vsel %vm1776, %v4450, %v4451
    %v4453 = vrot.slane %v4421, 2
    %v4454 = vrot.slane %v4426, 2
    %v4455 = vsel %vm1776, %v4453, %v4454
    %v4456 = vrot.slane %v4422, 2
    %v4457 = vrot.slane %v4427, 2
    %v4458 = vsel %vm1776, %v4456, %v4457
    %v4459 = vrot.slane %v4423, 2
    %v4460 = vrot.slane %v4428, 2
    %v4461 = vsel %vm1776, %v4459, %v4460
    %v4462 = vrot.slane %v4424, 2
    %v4463 = vrot.slane %v4429, 2
    %v4464 = vsel %vm1776, %v4462, %v4463
    %v4465 = vrot.slane %v4430, 2
    %v4466 = vsel %vm1776, %v4451, %v4465
    %v4467 = vrot.slane %v4431, 2
    %v4468 = vsel %vm1776, %v4454, %v4467
    %v4469 = vrot.slane %v4432, 2
    %v4470 = vsel %vm1776, %v4457, %v4469
    %v4471 = vrot.slane %v4433, 2
    %v4472 = vsel %vm1776, %v4460, %v4471
    %v4473 = vrot.slane %v4434, 2
    %v4474 = vsel %vm1776, %v4463, %v4473
    %4475 = vrot.lane.b32.xlu0 %v4452, 126
    %v4476 = vpop.permute.xlu0 %4475
    %4477 = vrot.lane.b32.xlu0 %v4455, 126
    %v4478 = vpop.permute.xlu0 %4477
    %4479 = vrot.lane.b32.xlu0 %v4458, 126
    %v4480 = vpop.permute.xlu0 %4479
    %4481 = vrot.lane.b32.xlu0 %v4461, 126
    %v4482 = vpop.permute.xlu0 %4481
    %4483 = vrot.lane.b32.xlu0 %v4464, 126
    %v4484 = vpop.permute.xlu0 %4483
    %4485 = vrot.lane.b32.xlu0 %v4466, 126
    %v4486 = vpop.permute.xlu0 %4485
    %4487 = vrot.lane.b32.xlu0 %v4468, 126
    %v4488 = vpop.permute.xlu0 %4487
    %4489 = vrot.lane.b32.xlu0 %v4470, 126
    %v4490 = vpop.permute.xlu0 %4489
    %4491 = vrot.lane.b32.xlu0 %v4472, 126
    %v4492 = vpop.permute.xlu0 %4491
    %4493 = vrot.lane.b32.xlu0 %v4474, 126
    %v4494 = vpop.permute.xlu0 %4493
    %v4495 = vsel %vm800, %v4476, %v4478
    %v4496 = vsel %vm800, %v4478, %v4480
    %v4497 = vsel %vm800, %v4480, %v4482
    %v4498 = vsel %vm800, %v4482, %v4484
    %v4499 = vsel %vm800, %v4486, %v4488
    %v4500 = vsel %vm800, %v4488, %v4490
    %v4501 = vsel %vm800, %v4490, %v4492
    %v4502 = vsel %vm800, %v4492, %v4494
    %v4511 = vadd.f32 %v4208, %v4495
    %v4512 = vadd.f32 %v4209, %v4496
    %v4513 = vadd.f32 %v4210, %v4497
    %v4514 = vadd.f32 %v4211, %v4498
    %v4515 = vadd.f32 %v4212, %v4499
    %v4516 = vadd.f32 %v4213, %v4500
    %v4517 = vadd.f32 %v4214, %v4501
    %v4518 = vadd.f32 %v4215, %v4502
    %s4519 = sld [smem:[#allocation7 + $0x47]]
    %v4520 = vstv %s4519
    %v4521 = vmul.f32 %v4520, %v2571
    %v4522 = vmul.f32 %v4520, %v2572
    %v4523 = vmul.f32 %v4520, %v2573
    %v4524 = vmul.f32 %v4520, %v2574
    %v4525 = vmul.f32 %v4520, %v2575
    %v4526 = vmul.f32 %v4520, %v2576
    %v4527 = vmul.f32 %v4520, %v2577
    %v4528 = vmul.f32 %v4520, %v2578
    %v4529 = vmul.f32 %v4520, %v2579
    %v4530 = vmul.f32 %v4520, %v2580
    %v4531 = vmul.f32 %v4520, %v2581
    %v4532 = vmul.f32 %v4520, %v2582
    %v4533 = vmul.f32 %v4520, %v2583
    %v4534 = vmul.f32 %v4520, %v2584
    %v4535 = vmul.f32 %v4520, %v2585
    %v4551 = vrot.slane %v4521, 2
    %v4552 = vrot.slane %v4526, 2
    %v4553 = vsel %vm1776, %v4551, %v4552
    %v4554 = vrot.slane %v4522, 2
    %v4555 = vrot.slane %v4527, 2
    %v4556 = vsel %vm1776, %v4554, %v4555
    %v4557 = vrot.slane %v4523, 2
    %v4558 = vrot.slane %v4528, 2
    %v4559 = vsel %vm1776, %v4557, %v4558
    %v4560 = vrot.slane %v4524, 2
    %v4561 = vrot.slane %v4529, 2
    %v4562 = vsel %vm1776, %v4560, %v4561
    %v4563 = vrot.slane %v4525, 2
    %v4564 = vrot.slane %v4530, 2
    %v4565 = vsel %vm1776, %v4563, %v4564
    %v4566 = vrot.slane %v4531, 2
    %v4567 = vsel %vm1776, %v4552, %v4566
    %v4568 = vrot.slane %v4532, 2
    %v4569 = vsel %vm1776, %v4555, %v4568
    %v4570 = vrot.slane %v4533, 2
    %v4571 = vsel %vm1776, %v4558, %v4570
    %v4572 = vrot.slane %v4534, 2
    %v4573 = vsel %vm1776, %v4561, %v4572
    %v4574 = vrot.slane %v4535, 2
    %v4575 = vsel %vm1776, %v4564, %v4574
    %4576 = vrot.lane.b32.xlu0 %v4553, 126
    %v4577 = vpop.permute.xlu0 %4576
    %4578 = vrot.lane.b32.xlu0 %v4556, 126
    %v4579 = vpop.permute.xlu0 %4578
    %4580 = vrot.lane.b32.xlu0 %v4559, 126
    %v4581 = vpop.permute.xlu0 %4580
    %4582 = vrot.lane.b32.xlu0 %v4562, 126
    %v4583 = vpop.permute.xlu0 %4582
    %4584 = vrot.lane.b32.xlu0 %v4565, 126
    %v4585 = vpop.permute.xlu0 %4584
    %4586 = vrot.lane.b32.xlu0 %v4567, 126
    %v4587 = vpop.permute.xlu0 %4586
    %4588 = vrot.lane.b32.xlu0 %v4569, 126
    %v4589 = vpop.permute.xlu0 %4588
    %4590 = vrot.lane.b32.xlu0 %v4571, 126
    %v4591 = vpop.permute.xlu0 %4590
    %4592 = vrot.lane.b32.xlu0 %v4573, 126
    %v4593 = vpop.permute.xlu0 %4592
    %4594 = vrot.lane.b32.xlu0 %v4575, 126
    %v4595 = vpop.permute.xlu0 %4594
    %v4596 = vsel %vm800, %v4577, %v4579
    %v4597 = vsel %vm800, %v4579, %v4581
    %v4598 = vsel %vm800, %v4581, %v4583
    %v4599 = vsel %vm800, %v4583, %v4585
    %v4600 = vsel %vm800, %v4587, %v4589
    %v4601 = vsel %vm800, %v4589, %v4591
    %v4602 = vsel %vm800, %v4591, %v4593
    %v4603 = vsel %vm800, %v4593, %v4595
    %v4612 = vadd.f32 %v4309, %v4596
    %v4613 = vadd.f32 %v4310, %v4597
    %v4614 = vadd.f32 %v4311, %v4598
    %v4615 = vadd.f32 %v4312, %v4599
    %v4616 = vadd.f32 %v4313, %v4600
    %v4617 = vadd.f32 %v4314, %v4601
    %v4618 = vadd.f32 %v4315, %v4602
    %v4619 = vadd.f32 %v4316, %v4603
    %s4620 = scalar_lea.vmem [#allocation2], 240
    %v4621 = vld [vmem:[%s4620] sm:$0xff]
    %v4622 = vld [vmem:[%s4620 + $0x8] sm:$0xff]
    %v4623 = vld [vmem:[%s4620 + $0x10] sm:$0xff]
    %v4624 = vld [vmem:[%s4620 + $0x18] sm:$0xff]
    %v4625 = vld [vmem:[%s4620 + $0x20] sm:$0xff]
    %v4626 = vld [vmem:[%s4620 + $0x28] sm:$0xff]
    %v4627 = vld [vmem:[%s4620 + $0x30] sm:$0xff]
    %v4628 = vld [vmem:[%s4620 + $0x38] sm:$0xff]
    %v4629 = vld [vmem:[%s4620 + $0x40] sm:$0xff]
    %v4630 = vld [vmem:[%s4620 + $0x48] sm:$0xff]
    %v4631 = vld [vmem:[%s4620 + $0x50] sm:$0x3]
    %v4632 = vld [vmem:[%s4620 + $0x58] sm:$0x3]
    %v4633 = vld [vmem:[%s4620 + $0x60] sm:$0x3]
    %v4634 = vld [vmem:[%s4620 + $0x68] sm:$0x3]
    %v4635 = vld [vmem:[%s4620 + $0x70] sm:$0x3]
    %v4636 = vmul.f32 %v4621, %v449
    %v4637 = vmul.f32 %v4622, %v450
    %v4638 = vmul.f32 %v4623, %v451
    %v4639 = vmul.f32 %v4624, %v452
    %v4640 = vmul.f32 %v4626, %v449
    %v4641 = vmul.f32 %v4627, %v450
    %v4642 = vmul.f32 %v4628, %v451
    %v4643 = vmul.f32 %v4629, %v452
    %v4644 = vmul.f32 %v4631, %v449
    %v4645 = vmul.f32 %v4632, %v450
    %v4646 = vmul.f32 %v4633, %v451
    %v4647 = vmul.f32 %v4634, %v452
    %v4648 = vmul.f32 %v4621, %v475
    %v4649 = vmul.f32 %v4622, %v482
    %v4650 = vmul.f32 %v4623, %v483
    %v4651 = vmul.f32 %v4624, %v484
    %v4652 = vmul.f32 %v4625, %v481
    %v4653 = vmul.f32 %v4626, %v475
    %v4654 = vmul.f32 %v4627, %v482
    %v4655 = vmul.f32 %v4628, %v483
    %v4656 = vmul.f32 %v4629, %v484
    %v4657 = vmul.f32 %v4630, %v481
    %v4658 = vmul.f32 %v4631, %v475
    %v4659 = vmul.f32 %v4632, %v482
    %v4660 = vmul.f32 %v4633, %v483
    %v4661 = vmul.f32 %v4634, %v484
    %v4662 = vmul.f32 %v4635, %v481
    %s4663 = sld [smem:[#allocation7 + $0x12]]
    %v4664 = vstv %s4663
    %v4665 = vmul.f32 %v4664, %v4636
    %v4666 = vmul.f32 %v4664, %v4637
    %v4667 = vmul.f32 %v4664, %v4638
    %v4668 = vmul.f32 %v4664, %v4639
    %v4669 = vmul.f32 %v4664, %v4640
    %v4670 = vmul.f32 %v4664, %v4641
    %v4671 = vmul.f32 %v4664, %v4642
    %v4672 = vmul.f32 %v4664, %v4643
    %v4673 = vadd.f32 %v4410, %v4665
    %v4674 = vadd.f32 %v4411, %v4666
    %v4675 = vadd.f32 %v4412, %v4667
    %v4676 = vadd.f32 %v4413, %v4668
    %v4677 = vadd.f32 %v4414, %v4669
    %v4678 = vadd.f32 %v4415, %v4670
    %v4679 = vadd.f32 %v4416, %v4671
    %v4680 = vadd.f32 %v4417, %v4672
    %s4681 = sld [smem:[#allocation7 + $0x2d]]
    %v4682 = vstv %s4681
    %v4683 = vmul.f32 %v4682, %v4636
    %v4684 = vmul.f32 %v4682, %v4637
    %v4685 = vmul.f32 %v4682, %v4638
    %v4686 = vmul.f32 %v4682, %v4639
    %v4687 = vmul.f32 %v4682, %v4640
    %v4688 = vmul.f32 %v4682, %v4641
    %v4689 = vmul.f32 %v4682, %v4642
    %v4690 = vmul.f32 %v4682, %v4643
    %v4691 = vadd.f32 %v4511, %v4683
    %v4692 = vadd.f32 %v4512, %v4684
    %v4693 = vadd.f32 %v4513, %v4685
    %v4694 = vadd.f32 %v4514, %v4686
    %v4695 = vadd.f32 %v4515, %v4687
    %v4696 = vadd.f32 %v4516, %v4688
    %v4697 = vadd.f32 %v4517, %v4689
    %v4698 = vadd.f32 %v4518, %v4690
    %s4699 = sld [smem:[#allocation7 + $0x48]]
    %v4700 = vstv %s4699
    %v4701 = vmul.f32 %v4700, %v4636
    %v4702 = vmul.f32 %v4700, %v4637
    %v4703 = vmul.f32 %v4700, %v4638
    %v4704 = vmul.f32 %v4700, %v4639
    %v4705 = vmul.f32 %v4700, %v4640
    %v4706 = vmul.f32 %v4700, %v4641
    %v4707 = vmul.f32 %v4700, %v4642
    %v4708 = vmul.f32 %v4700, %v4643
    %v4709 = vadd.f32 %v4612, %v4701
    %v4710 = vadd.f32 %v4613, %v4702
    %v4711 = vadd.f32 %v4614, %v4703
    %v4712 = vadd.f32 %v4615, %v4704
    %v4713 = vadd.f32 %v4616, %v4705
    %v4714 = vadd.f32 %v4617, %v4706
    %v4715 = vadd.f32 %v4618, %v4707
    %v4716 = vadd.f32 %v4619, %v4708
    %s4717 = sld [smem:[#allocation7 + $0x13]]
    %v4718 = vstv %s4717
    %v4719 = vmul.f32 %v4718, %v4621
    %v4720 = vmul.f32 %v4718, %v4622
    %v4721 = vmul.f32 %v4718, %v4623
    %v4722 = vmul.f32 %v4718, %v4624
    %v4723 = vmul.f32 %v4718, %v4625
    %v4724 = vmul.f32 %v4718, %v4626
    %v4725 = vmul.f32 %v4718, %v4627
    %v4726 = vmul.f32 %v4718, %v4628
    %v4727 = vmul.f32 %v4718, %v4629
    %v4728 = vmul.f32 %v4718, %v4630
    %4739 = vrot.lane.b32.xlu0 %v4719, 127
    %v4740 = vpop.permute.xlu0 %4739
    %4741 = vrot.lane.b32.xlu0 %v4720, 127
    %v4742 = vpop.permute.xlu0 %4741
    %4743 = vrot.lane.b32.xlu0 %v4721, 127
    %v4744 = vpop.permute.xlu0 %4743
    %4745 = vrot.lane.b32.xlu0 %v4722, 127
    %v4746 = vpop.permute.xlu0 %4745
    %4747 = vrot.lane.b32.xlu0 %v4723, 127
    %v4748 = vpop.permute.xlu0 %4747
    %4749 = vrot.lane.b32.xlu0 %v4724, 127
    %v4750 = vpop.permute.xlu0 %4749
    %4751 = vrot.lane.b32.xlu0 %v4725, 127
    %v4752 = vpop.permute.xlu0 %4751
    %4753 = vrot.lane.b32.xlu0 %v4726, 127
    %v4754 = vpop.permute.xlu0 %4753
    %4755 = vrot.lane.b32.xlu0 %v4727, 127
    %v4756 = vpop.permute.xlu0 %4755
    %4757 = vrot.lane.b32.xlu0 %v4728, 127
    %v4758 = vpop.permute.xlu0 %4757
    %v4759 = vsel %vm601, %v4740, %v4742
    %v4760 = vsel %vm601, %v4742, %v4744
    %v4761 = vsel %vm601, %v4744, %v4746
    %v4762 = vsel %vm601, %v4746, %v4748
    %v4763 = vsel %vm601, %v4750, %v4752
    %v4764 = vsel %vm601, %v4752, %v4754
    %v4765 = vsel %vm601, %v4754, %v4756
    %v4766 = vsel %vm601, %v4756, %v4758
    %v4775 = vadd.f32 %v4673, %v4759
    %v4776 = vadd.f32 %v4674, %v4760
    %v4777 = vadd.f32 %v4675, %v4761
    %v4778 = vadd.f32 %v4676, %v4762
    %v4779 = vadd.f32 %v4677, %v4763
    %v4780 = vadd.f32 %v4678, %v4764
    %v4781 = vadd.f32 %v4679, %v4765
    %v4782 = vadd.f32 %v4680, %v4766
    %s4783 = sld [smem:[#allocation7 + $0x2e]]
    %v4784 = vstv %s4783
    %v4785 = vmul.f32 %v4784, %v4621
    %v4786 = vmul.f32 %v4784, %v4622
    %v4787 = vmul.f32 %v4784, %v4623
    %v4788 = vmul.f32 %v4784, %v4624
    %v4789 = vmul.f32 %v4784, %v4625
    %v4790 = vmul.f32 %v4784, %v4626
    %v4791 = vmul.f32 %v4784, %v4627
    %v4792 = vmul.f32 %v4784, %v4628
    %v4793 = vmul.f32 %v4784, %v4629
    %v4794 = vmul.f32 %v4784, %v4630
    %4805 = vrot.lane.b32.xlu0 %v4785, 127
    %v4806 = vpop.permute.xlu0 %4805
    %4807 = vrot.lane.b32.xlu0 %v4786, 127
    %v4808 = vpop.permute.xlu0 %4807
    %4809 = vrot.lane.b32.xlu0 %v4787, 127
    %v4810 = vpop.permute.xlu0 %4809
    %4811 = vrot.lane.b32.xlu0 %v4788, 127
    %v4812 = vpop.permute.xlu0 %4811
    %4813 = vrot.lane.b32.xlu0 %v4789, 127
    %v4814 = vpop.permute.xlu0 %4813
    %4815 = vrot.lane.b32.xlu0 %v4790, 127
    %v4816 = vpop.permute.xlu0 %4815
    %4817 = vrot.lane.b32.xlu0 %v4791, 127
    %v4818 = vpop.permute.xlu0 %4817
    %4819 = vrot.lane.b32.xlu0 %v4792, 127
    %v4820 = vpop.permute.xlu0 %4819
    %4821 = vrot.lane.b32.xlu0 %v4793, 127
    %v4822 = vpop.permute.xlu0 %4821
    %4823 = vrot.lane.b32.xlu0 %v4794, 127
    %v4824 = vpop.permute.xlu0 %4823
    %v4825 = vsel %vm601, %v4806, %v4808
    %v4826 = vsel %vm601, %v4808, %v4810
    %v4827 = vsel %vm601, %v4810, %v4812
    %v4828 = vsel %vm601, %v4812, %v4814
    %v4829 = vsel %vm601, %v4816, %v4818
    %v4830 = vsel %vm601, %v4818, %v4820
    %v4831 = vsel %vm601, %v4820, %v4822
    %v4832 = vsel %vm601, %v4822, %v4824
    %v4841 = vadd.f32 %v4691, %v4825
    %v4842 = vadd.f32 %v4692, %v4826
    %v4843 = vadd.f32 %v4693, %v4827
    %v4844 = vadd.f32 %v4694, %v4828
    %v4845 = vadd.f32 %v4695, %v4829
    %v4846 = vadd.f32 %v4696, %v4830
    %v4847 = vadd.f32 %v4697, %v4831
    %v4848 = vadd.f32 %v4698, %v4832
    %s4849 = sld [smem:[#allocation7 + $0x49]]
    %v4850 = vstv %s4849
    %v4851 = vmul.f32 %v4850, %v4621
    %v4852 = vmul.f32 %v4850, %v4622
    %v4853 = vmul.f32 %v4850, %v4623
    %v4854 = vmul.f32 %v4850, %v4624
    %v4855 = vmul.f32 %v4850, %v4625
    %v4856 = vmul.f32 %v4850, %v4626
    %v4857 = vmul.f32 %v4850, %v4627
    %v4858 = vmul.f32 %v4850, %v4628
    %v4859 = vmul.f32 %v4850, %v4629
    %v4860 = vmul.f32 %v4850, %v4630
    %4871 = vrot.lane.b32.xlu0 %v4851, 127
    %v4872 = vpop.permute.xlu0 %4871
    %4873 = vrot.lane.b32.xlu0 %v4852, 127
    %v4874 = vpop.permute.xlu0 %4873
    %4875 = vrot.lane.b32.xlu0 %v4853, 127
    %v4876 = vpop.permute.xlu0 %4875
    %4877 = vrot.lane.b32.xlu0 %v4854, 127
    %v4878 = vpop.permute.xlu0 %4877
    %4879 = vrot.lane.b32.xlu0 %v4855, 127
    %v4880 = vpop.permute.xlu0 %4879
    %4881 = vrot.lane.b32.xlu0 %v4856, 127
    %v4882 = vpop.permute.xlu0 %4881
    %4883 = vrot.lane.b32.xlu0 %v4857, 127
    %v4884 = vpop.permute.xlu0 %4883
    %4885 = vrot.lane.b32.xlu0 %v4858, 127
    %v4886 = vpop.permute.xlu0 %4885
    %4887 = vrot.lane.b32.xlu0 %v4859, 127
    %v4888 = vpop.permute.xlu0 %4887
    %4889 = vrot.lane.b32.xlu0 %v4860, 127
    %v4890 = vpop.permute.xlu0 %4889
    %v4891 = vsel %vm601, %v4872, %v4874
    %v4892 = vsel %vm601, %v4874, %v4876
    %v4893 = vsel %vm601, %v4876, %v4878
    %v4894 = vsel %vm601, %v4878, %v4880
    %v4895 = vsel %vm601, %v4882, %v4884
    %v4896 = vsel %vm601, %v4884, %v4886
    %v4897 = vsel %vm601, %v4886, %v4888
    %v4898 = vsel %vm601, %v4888, %v4890
    %v4907 = vadd.f32 %v4709, %v4891
    %v4908 = vadd.f32 %v4710, %v4892
    %v4909 = vadd.f32 %v4711, %v4893
    %v4910 = vadd.f32 %v4712, %v4894
    %v4911 = vadd.f32 %v4713, %v4895
    %v4912 = vadd.f32 %v4714, %v4896
    %v4913 = vadd.f32 %v4715, %v4897
    %v4914 = vadd.f32 %v4716, %v4898
    %s4915 = sld [smem:[#allocation7 + $0x14]]
    %v4916 = vstv %s4915
    %v4917 = vmul.f32 %v4916, %v4648
    %v4918 = vmul.f32 %v4916, %v4649
    %v4919 = vmul.f32 %v4916, %v4650
    %v4920 = vmul.f32 %v4916, %v4651
    %v4921 = vmul.f32 %v4916, %v4652
    %v4922 = vmul.f32 %v4916, %v4653
    %v4923 = vmul.f32 %v4916, %v4654
    %v4924 = vmul.f32 %v4916, %v4655
    %v4925 = vmul.f32 %v4916, %v4656
    %v4926 = vmul.f32 %v4916, %v4657
    %4937 = vrot.lane.b32.xlu0 %v4917, 126
    %v4938 = vpop.permute.xlu0 %4937
    %4939 = vrot.lane.b32.xlu0 %v4918, 126
    %v4940 = vpop.permute.xlu0 %4939
    %4941 = vrot.lane.b32.xlu0 %v4919, 126
    %v4942 = vpop.permute.xlu0 %4941
    %4943 = vrot.lane.b32.xlu0 %v4920, 126
    %v4944 = vpop.permute.xlu0 %4943
    %4945 = vrot.lane.b32.xlu0 %v4921, 126
    %v4946 = vpop.permute.xlu0 %4945
    %4947 = vrot.lane.b32.xlu0 %v4922, 126
    %v4948 = vpop.permute.xlu0 %4947
    %4949 = vrot.lane.b32.xlu0 %v4923, 126
    %v4950 = vpop.permute.xlu0 %4949
    %4951 = vrot.lane.b32.xlu0 %v4924, 126
    %v4952 = vpop.permute.xlu0 %4951
    %4953 = vrot.lane.b32.xlu0 %v4925, 126
    %v4954 = vpop.permute.xlu0 %4953
    %4955 = vrot.lane.b32.xlu0 %v4926, 126
    %v4956 = vpop.permute.xlu0 %4955
    %v4957 = vsel %vm800, %v4938, %v4940
    %v4958 = vsel %vm800, %v4940, %v4942
    %v4959 = vsel %vm800, %v4942, %v4944
    %v4960 = vsel %vm800, %v4944, %v4946
    %v4961 = vsel %vm800, %v4948, %v4950
    %v4962 = vsel %vm800, %v4950, %v4952
    %v4963 = vsel %vm800, %v4952, %v4954
    %v4964 = vsel %vm800, %v4954, %v4956
    %v4973 = vadd.f32 %v4775, %v4957
    %v4974 = vadd.f32 %v4776, %v4958
    %v4975 = vadd.f32 %v4777, %v4959
    %v4976 = vadd.f32 %v4778, %v4960
    %v4977 = vadd.f32 %v4779, %v4961
    %v4978 = vadd.f32 %v4780, %v4962
    %v4979 = vadd.f32 %v4781, %v4963
    %v4980 = vadd.f32 %v4782, %v4964
    %s4981 = sld [smem:[#allocation7 + $0x2f]]
    %v4982 = vstv %s4981
    %v4983 = vmul.f32 %v4982, %v4648
    %v4984 = vmul.f32 %v4982, %v4649
    %v4985 = vmul.f32 %v4982, %v4650
    %v4986 = vmul.f32 %v4982, %v4651
    %v4987 = vmul.f32 %v4982, %v4652
    %v4988 = vmul.f32 %v4982, %v4653
    %v4989 = vmul.f32 %v4982, %v4654
    %v4990 = vmul.f32 %v4982, %v4655
    %v4991 = vmul.f32 %v4982, %v4656
    %v4992 = vmul.f32 %v4982, %v4657
    %5003 = vrot.lane.b32.xlu0 %v4983, 126
    %v5004 = vpop.permute.xlu0 %5003
    %5005 = vrot.lane.b32.xlu0 %v4984, 126
    %v5006 = vpop.permute.xlu0 %5005
    %5007 = vrot.lane.b32.xlu0 %v4985, 126
    %v5008 = vpop.permute.xlu0 %5007
    %5009 = vrot.lane.b32.xlu0 %v4986, 126
    %v5010 = vpop.permute.xlu0 %5009
    %5011 = vrot.lane.b32.xlu0 %v4987, 126
    %v5012 = vpop.permute.xlu0 %5011
    %5013 = vrot.lane.b32.xlu0 %v4988, 126
    %v5014 = vpop.permute.xlu0 %5013
    %5015 = vrot.lane.b32.xlu0 %v4989, 126
    %v5016 = vpop.permute.xlu0 %5015
    %5017 = vrot.lane.b32.xlu0 %v4990, 126
    %v5018 = vpop.permute.xlu0 %5017
    %5019 = vrot.lane.b32.xlu0 %v4991, 126
    %v5020 = vpop.permute.xlu0 %5019
    %5021 = vrot.lane.b32.xlu0 %v4992, 126
    %v5022 = vpop.permute.xlu0 %5021
    %v5023 = vsel %vm800, %v5004, %v5006
    %v5024 = vsel %vm800, %v5006, %v5008
    %v5025 = vsel %vm800, %v5008, %v5010
    %v5026 = vsel %vm800, %v5010, %v5012
    %v5027 = vsel %vm800, %v5014, %v5016
    %v5028 = vsel %vm800, %v5016, %v5018
    %v5029 = vsel %vm800, %v5018, %v5020
    %v5030 = vsel %vm800, %v5020, %v5022
    %v5039 = vadd.f32 %v4841, %v5023
    %v5040 = vadd.f32 %v4842, %v5024
    %v5041 = vadd.f32 %v4843, %v5025
    %v5042 = vadd.f32 %v4844, %v5026
    %v5043 = vadd.f32 %v4845, %v5027
    %v5044 = vadd.f32 %v4846, %v5028
    %v5045 = vadd.f32 %v4847, %v5029
    %v5046 = vadd.f32 %v4848, %v5030
    %s5047 = sld [smem:[#allocation7 + $0x4a]]
    %v5048 = vstv %s5047
    %v5049 = vmul.f32 %v5048, %v4648
    %v5050 = vmul.f32 %v5048, %v4649
    %v5051 = vmul.f32 %v5048, %v4650
    %v5052 = vmul.f32 %v5048, %v4651
    %v5053 = vmul.f32 %v5048, %v4652
    %v5054 = vmul.f32 %v5048, %v4653
    %v5055 = vmul.f32 %v5048, %v4654
    %v5056 = vmul.f32 %v5048, %v4655
    %v5057 = vmul.f32 %v5048, %v4656
    %v5058 = vmul.f32 %v5048, %v4657
    %5069 = vrot.lane.b32.xlu0 %v5049, 126
    %v5070 = vpop.permute.xlu0 %5069
    %5071 = vrot.lane.b32.xlu0 %v5050, 126
    %v5072 = vpop.permute.xlu0 %5071
    %5073 = vrot.lane.b32.xlu0 %v5051, 126
    %v5074 = vpop.permute.xlu0 %5073
    %5075 = vrot.lane.b32.xlu0 %v5052, 126
    %v5076 = vpop.permute.xlu0 %5075
    %5077 = vrot.lane.b32.xlu0 %v5053, 126
    %v5078 = vpop.permute.xlu0 %5077
    %5079 = vrot.lane.b32.xlu0 %v5054, 126
    %v5080 = vpop.permute.xlu0 %5079
    %5081 = vrot.lane.b32.xlu0 %v5055, 126
    %v5082 = vpop.permute.xlu0 %5081
    %5083 = vrot.lane.b32.xlu0 %v5056, 126
    %v5084 = vpop.permute.xlu0 %5083
    %5085 = vrot.lane.b32.xlu0 %v5057, 126
    %v5086 = vpop.permute.xlu0 %5085
    %5087 = vrot.lane.b32.xlu0 %v5058, 126
    %v5088 = vpop.permute.xlu0 %5087
    %v5089 = vsel %vm800, %v5070, %v5072
    %v5090 = vsel %vm800, %v5072, %v5074
    %v5091 = vsel %vm800, %v5074, %v5076
    %v5092 = vsel %vm800, %v5076, %v5078
    %v5093 = vsel %vm800, %v5080, %v5082
    %v5094 = vsel %vm800, %v5082, %v5084
    %v5095 = vsel %vm800, %v5084, %v5086
    %v5096 = vsel %vm800, %v5086, %v5088
    %v5105 = vadd.f32 %v4907, %v5089
    %v5106 = vadd.f32 %v4908, %v5090
    %v5107 = vadd.f32 %v4909, %v5091
    %v5108 = vadd.f32 %v4910, %v5092
    %v5109 = vadd.f32 %v4911, %v5093
    %v5110 = vadd.f32 %v4912, %v5094
    %v5111 = vadd.f32 %v4913, %v5095
    %v5112 = vadd.f32 %v4914, %v5096
    %s5113 = sld [smem:[#allocation7 + $0x15]]
    %v5114 = vstv %s5113
    %v5115 = vmul.f32 %v5114, %v4636
    %v5116 = vmul.f32 %v5114, %v4637
    %v5117 = vmul.f32 %v5114, %v4638
    %v5118 = vmul.f32 %v5114, %v4639
    %v5119 = vmul.f32 %v5114, %v4640
    %v5120 = vmul.f32 %v5114, %v4641
    %v5121 = vmul.f32 %v5114, %v4642
    %v5122 = vmul.f32 %v5114, %v4643
    %v5123 = vmul.f32 %v5114, %v4644
    %v5124 = vmul.f32 %v5114, %v4645
    %v5125 = vmul.f32 %v5114, %v4646
    %v5126 = vmul.f32 %v5114, %v4647
    %v5139 = vrot.slane %v5115, 1
    %v5140 = vrot.slane %v5119, 1
    %v5141 = vsel %vm983, %v5139, %v5140
    %v5142 = vrot.slane %v5116, 1
    %v5143 = vrot.slane %v5120, 1
    %v5144 = vsel %vm983, %v5142, %v5143
    %v5145 = vrot.slane %v5117, 1
    %v5146 = vrot.slane %v5121, 1
    %v5147 = vsel %vm983, %v5145, %v5146
    %v5148 = vrot.slane %v5118, 1
    %v5149 = vrot.slane %v5122, 1
    %v5150 = vsel %vm983, %v5148, %v5149
    %v5151 = vrot.slane %v5123, 1
    %v5152 = vsel %vm983, %v5140, %v5151
    %v5153 = vrot.slane %v5124, 1
    %v5154 = vsel %vm983, %v5143, %v5153
    %v5155 = vrot.slane %v5125, 1
    %v5156 = vsel %vm983, %v5146, %v5155
    %v5157 = vrot.slane %v5126, 1
    %v5158 = vsel %vm983, %v5149, %v5157
    %v5167 = vadd.f32 %v4973, %v5141
    %v5168 = vadd.f32 %v4974, %v5144
    %v5169 = vadd.f32 %v4975, %v5147
    %v5170 = vadd.f32 %v4976, %v5150
    %v5171 = vadd.f32 %v4977, %v5152
    %v5172 = vadd.f32 %v4978, %v5154
    %v5173 = vadd.f32 %v4979, %v5156
    %v5174 = vadd.f32 %v4980, %v5158
    %s5175 = sld [smem:[#allocation7 + $0x30]]
    %v5176 = vstv %s5175
    %v5177 = vmul.f32 %v5176, %v4636
    %v5178 = vmul.f32 %v5176, %v4637
    %v5179 = vmul.f32 %v5176, %v4638
    %v5180 = vmul.f32 %v5176, %v4639
    %v5181 = vmul.f32 %v5176, %v4640
    %v5182 = vmul.f32 %v5176, %v4641
    %v5183 = vmul.f32 %v5176, %v4642
    %v5184 = vmul.f32 %v5176, %v4643
    %v5185 = vmul.f32 %v5176, %v4644
    %v5186 = vmul.f32 %v5176, %v4645
    %v5187 = vmul.f32 %v5176, %v4646
    %v5188 = vmul.f32 %v5176, %v4647
    %v5201 = vrot.slane %v5177, 1
    %v5202 = vrot.slane %v5181, 1
    %v5203 = vsel %vm983, %v5201, %v5202
    %v5204 = vrot.slane %v5178, 1
    %v5205 = vrot.slane %v5182, 1
    %v5206 = vsel %vm983, %v5204, %v5205
    %v5207 = vrot.slane %v5179, 1
    %v5208 = vrot.slane %v5183, 1
    %v5209 = vsel %vm983, %v5207, %v5208
    %v5210 = vrot.slane %v5180, 1
    %v5211 = vrot.slane %v5184, 1
    %v5212 = vsel %vm983, %v5210, %v5211
    %v5213 = vrot.slane %v5185, 1
    %v5214 = vsel %vm983, %v5202, %v5213
    %v5215 = vrot.slane %v5186, 1
    %v5216 = vsel %vm983, %v5205, %v5215
    %v5217 = vrot.slane %v5187, 1
    %v5218 = vsel %vm983, %v5208, %v5217
    %v5219 = vrot.slane %v5188, 1
    %v5220 = vsel %vm983, %v5211, %v5219
    %v5229 = vadd.f32 %v5039, %v5203
    %v5230 = vadd.f32 %v5040, %v5206
    %v5231 = vadd.f32 %v5041, %v5209
    %v5232 = vadd.f32 %v5042, %v5212
    %v5233 = vadd.f32 %v5043, %v5214
    %v5234 = vadd.f32 %v5044, %v5216
    %v5235 = vadd.f32 %v5045, %v5218
    %v5236 = vadd.f32 %v5046, %v5220
    %s5237 = sld [smem:[#allocation7 + $0x4b]]
    %v5238 = vstv %s5237
    %v5239 = vmul.f32 %v5238, %v4636
    %v5240 = vmul.f32 %v5238, %v4637
    %v5241 = vmul.f32 %v5238, %v4638
    %v5242 = vmul.f32 %v5238, %v4639
    %v5243 = vmul.f32 %v5238, %v4640
    %v5244 = vmul.f32 %v5238, %v4641
    %v5245 = vmul.f32 %v5238, %v4642
    %v5246 = vmul.f32 %v5238, %v4643
    %v5247 = vmul.f32 %v5238, %v4644
    %v5248 = vmul.f32 %v5238, %v4645
    %v5249 = vmul.f32 %v5238, %v4646
    %v5250 = vmul.f32 %v5238, %v4647
    %v5263 = vrot.slane %v5239, 1
    %v5264 = vrot.slane %v5243, 1
    %v5265 = vsel %vm983, %v5263, %v5264
    %v5266 = vrot.slane %v5240, 1
    %v5267 = vrot.slane %v5244, 1
    %v5268 = vsel %vm983, %v5266, %v5267
    %v5269 = vrot.slane %v5241, 1
    %v5270 = vrot.slane %v5245, 1
    %v5271 = vsel %vm983, %v5269, %v5270
    %v5272 = vrot.slane %v5242, 1
    %v5273 = vrot.slane %v5246, 1
    %v5274 = vsel %vm983, %v5272, %v5273
    %v5275 = vrot.slane %v5247, 1
    %v5276 = vsel %vm983, %v5264, %v5275
    %v5277 = vrot.slane %v5248, 1
    %v5278 = vsel %vm983, %v5267, %v5277
    %v5279 = vrot.slane %v5249, 1
    %v5280 = vsel %vm983, %v5270, %v5279
    %v5281 = vrot.slane %v5250, 1
    %v5282 = vsel %vm983, %v5273, %v5281
    %v5291 = vadd.f32 %v5105, %v5265
    %v5292 = vadd.f32 %v5106, %v5268
    %v5293 = vadd.f32 %v5107, %v5271
    %v5294 = vadd.f32 %v5108, %v5274
    %v5295 = vadd.f32 %v5109, %v5276
    %v5296 = vadd.f32 %v5110, %v5278
    %v5297 = vadd.f32 %v5111, %v5280
    %v5298 = vadd.f32 %v5112, %v5282
    %s5299 = sld [smem:[#allocation7 + $0x16]]
    %v5300 = vstv %s5299
    %v5301 = vmul.f32 %v5300, %v4621
    %v5302 = vmul.f32 %v5300, %v4622
    %v5303 = vmul.f32 %v5300, %v4623
    %v5304 = vmul.f32 %v5300, %v4624
    %v5305 = vmul.f32 %v5300, %v4625
    %v5306 = vmul.f32 %v5300, %v4626
    %v5307 = vmul.f32 %v5300, %v4627
    %v5308 = vmul.f32 %v5300, %v4628
    %v5309 = vmul.f32 %v5300, %v4629
    %v5310 = vmul.f32 %v5300, %v4630
    %v5311 = vmul.f32 %v5300, %v4631
    %v5312 = vmul.f32 %v5300, %v4632
    %v5313 = vmul.f32 %v5300, %v4633
    %v5314 = vmul.f32 %v5300, %v4634
    %v5315 = vmul.f32 %v5300, %v4635
    %v5331 = vrot.slane %v5301, 1
    %v5332 = vrot.slane %v5306, 1
    %v5333 = vsel %vm983, %v5331, %v5332
    %v5334 = vrot.slane %v5302, 1
    %v5335 = vrot.slane %v5307, 1
    %v5336 = vsel %vm983, %v5334, %v5335
    %v5337 = vrot.slane %v5303, 1
    %v5338 = vrot.slane %v5308, 1
    %v5339 = vsel %vm983, %v5337, %v5338
    %v5340 = vrot.slane %v5304, 1
    %v5341 = vrot.slane %v5309, 1
    %v5342 = vsel %vm983, %v5340, %v5341
    %v5343 = vrot.slane %v5305, 1
    %v5344 = vrot.slane %v5310, 1
    %v5345 = vsel %vm983, %v5343, %v5344
    %v5346 = vrot.slane %v5311, 1
    %v5347 = vsel %vm983, %v5332, %v5346
    %v5348 = vrot.slane %v5312, 1
    %v5349 = vsel %vm983, %v5335, %v5348
    %v5350 = vrot.slane %v5313, 1
    %v5351 = vsel %vm983, %v5338, %v5350
    %v5352 = vrot.slane %v5314, 1
    %v5353 = vsel %vm983, %v5341, %v5352
    %v5354 = vrot.slane %v5315, 1
    %v5355 = vsel %vm983, %v5344, %v5354
    %5356 = vrot.lane.b32.xlu0 %v5333, 127
    %v5357 = vpop.permute.xlu0 %5356
    %5358 = vrot.lane.b32.xlu0 %v5336, 127
    %v5359 = vpop.permute.xlu0 %5358
    %5360 = vrot.lane.b32.xlu0 %v5339, 127
    %v5361 = vpop.permute.xlu0 %5360
    %5362 = vrot.lane.b32.xlu0 %v5342, 127
    %v5363 = vpop.permute.xlu0 %5362
    %5364 = vrot.lane.b32.xlu0 %v5345, 127
    %v5365 = vpop.permute.xlu0 %5364
    %5366 = vrot.lane.b32.xlu0 %v5347, 127
    %v5367 = vpop.permute.xlu0 %5366
    %5368 = vrot.lane.b32.xlu0 %v5349, 127
    %v5369 = vpop.permute.xlu0 %5368
    %5370 = vrot.lane.b32.xlu0 %v5351, 127
    %v5371 = vpop.permute.xlu0 %5370
    %5372 = vrot.lane.b32.xlu0 %v5353, 127
    %v5373 = vpop.permute.xlu0 %5372
    %5374 = vrot.lane.b32.xlu0 %v5355, 127
    %v5375 = vpop.permute.xlu0 %5374
    %v5376 = vsel %vm601, %v5357, %v5359
    %v5377 = vsel %vm601, %v5359, %v5361
    %v5378 = vsel %vm601, %v5361, %v5363
    %v5379 = vsel %vm601, %v5363, %v5365
    %v5380 = vsel %vm601, %v5367, %v5369
    %v5381 = vsel %vm601, %v5369, %v5371
    %v5382 = vsel %vm601, %v5371, %v5373
    %v5383 = vsel %vm601, %v5373, %v5375
    %v5392 = vadd.f32 %v5167, %v5376
    %v5393 = vadd.f32 %v5168, %v5377
    %v5394 = vadd.f32 %v5169, %v5378
    %v5395 = vadd.f32 %v5170, %v5379
    %v5396 = vadd.f32 %v5171, %v5380
    %v5397 = vadd.f32 %v5172, %v5381
    %v5398 = vadd.f32 %v5173, %v5382
    %v5399 = vadd.f32 %v5174, %v5383
    %s5400 = sld [smem:[#allocation7 + $0x31]]
    %v5401 = vstv %s5400
    %v5402 = vmul.f32 %v5401, %v4621
    %v5403 = vmul.f32 %v5401, %v4622
    %v5404 = vmul.f32 %v5401, %v4623
    %v5405 = vmul.f32 %v5401, %v4624
    %v5406 = vmul.f32 %v5401, %v4625
    %v5407 = vmul.f32 %v5401, %v4626
    %v5408 = vmul.f32 %v5401, %v4627
    %v5409 = vmul.f32 %v5401, %v4628
    %v5410 = vmul.f32 %v5401, %v4629
    %v5411 = vmul.f32 %v5401, %v4630
    %v5412 = vmul.f32 %v5401, %v4631
    %v5413 = vmul.f32 %v5401, %v4632
    %v5414 = vmul.f32 %v5401, %v4633
    %v5415 = vmul.f32 %v5401, %v4634
    %v5416 = vmul.f32 %v5401, %v4635
    %v5432 = vrot.slane %v5402, 1
    %v5433 = vrot.slane %v5407, 1
    %v5434 = vsel %vm983, %v5432, %v5433
    %v5435 = vrot.slane %v5403, 1
    %v5436 = vrot.slane %v5408, 1
    %v5437 = vsel %vm983, %v5435, %v5436
    %v5438 = vrot.slane %v5404, 1
    %v5439 = vrot.slane %v5409, 1
    %v5440 = vsel %vm983, %v5438, %v5439
    %v5441 = vrot.slane %v5405, 1
    %v5442 = vrot.slane %v5410, 1
    %v5443 = vsel %vm983, %v5441, %v5442
    %v5444 = vrot.slane %v5406, 1
    %v5445 = vrot.slane %v5411, 1
    %v5446 = vsel %vm983, %v5444, %v5445
    %v5447 = vrot.slane %v5412, 1
    %v5448 = vsel %vm983, %v5433, %v5447
    %v5449 = vrot.slane %v5413, 1
    %v5450 = vsel %vm983, %v5436, %v5449
    %v5451 = vrot.slane %v5414, 1
    %v5452 = vsel %vm983, %v5439, %v5451
    %v5453 = vrot.slane %v5415, 1
    %v5454 = vsel %vm983, %v5442, %v5453
    %v5455 = vrot.slane %v5416, 1
    %v5456 = vsel %vm983, %v5445, %v5455
    %5457 = vrot.lane.b32.xlu0 %v5434, 127
    %v5458 = vpop.permute.xlu0 %5457
    %5459 = vrot.lane.b32.xlu0 %v5437, 127
    %v5460 = vpop.permute.xlu0 %5459
    %5461 = vrot.lane.b32.xlu0 %v5440, 127
    %v5462 = vpop.permute.xlu0 %5461
    %5463 = vrot.lane.b32.xlu0 %v5443, 127
    %v5464 = vpop.permute.xlu0 %5463
    %5465 = vrot.lane.b32.xlu0 %v5446, 127
    %v5466 = vpop.permute.xlu0 %5465
    %5467 = vrot.lane.b32.xlu0 %v5448, 127
    %v5468 = vpop.permute.xlu0 %5467
    %5469 = vrot.lane.b32.xlu0 %v5450, 127
    %v5470 = vpop.permute.xlu0 %5469
    %5471 = vrot.lane.b32.xlu0 %v5452, 127
    %v5472 = vpop.permute.xlu0 %5471
    %5473 = vrot.lane.b32.xlu0 %v5454, 127
    %v5474 = vpop.permute.xlu0 %5473
    %5475 = vrot.lane.b32.xlu0 %v5456, 127
    %v5476 = vpop.permute.xlu0 %5475
    %v5477 = vsel %vm601, %v5458, %v5460
    %v5478 = vsel %vm601, %v5460, %v5462
    %v5479 = vsel %vm601, %v5462, %v5464
    %v5480 = vsel %vm601, %v5464, %v5466
    %v5481 = vsel %vm601, %v5468, %v5470
    %v5482 = vsel %vm601, %v5470, %v5472
    %v5483 = vsel %vm601, %v5472, %v5474
    %v5484 = vsel %vm601, %v5474, %v5476
    %v5493 = vadd.f32 %v5229, %v5477
    %v5494 = vadd.f32 %v5230, %v5478
    %v5495 = vadd.f32 %v5231, %v5479
    %v5496 = vadd.f32 %v5232, %v5480
    %v5497 = vadd.f32 %v5233, %v5481
    %v5498 = vadd.f32 %v5234, %v5482
    %v5499 = vadd.f32 %v5235, %v5483
    %v5500 = vadd.f32 %v5236, %v5484
    %s5501 = sld [smem:[#allocation7 + $0x4c]]
    %v5502 = vstv %s5501
    %v5503 = vmul.f32 %v5502, %v4621
    %v5504 = vmul.f32 %v5502, %v4622
    %v5505 = vmul.f32 %v5502, %v4623
    %v5506 = vmul.f32 %v5502, %v4624
    %v5507 = vmul.f32 %v5502, %v4625
    %v5508 = vmul.f32 %v5502, %v4626
    %v5509 = vmul.f32 %v5502, %v4627
    %v5510 = vmul.f32 %v5502, %v4628
    %v5511 = vmul.f32 %v5502, %v4629
    %v5512 = vmul.f32 %v5502, %v4630
    %v5513 = vmul.f32 %v5502, %v4631
    %v5514 = vmul.f32 %v5502, %v4632
    %v5515 = vmul.f32 %v5502, %v4633
    %v5516 = vmul.f32 %v5502, %v4634
    %v5517 = vmul.f32 %v5502, %v4635
    %v5533 = vrot.slane %v5503, 1
    %v5534 = vrot.slane %v5508, 1
    %v5535 = vsel %vm983, %v5533, %v5534
    %v5536 = vrot.slane %v5504, 1
    %v5537 = vrot.slane %v5509, 1
    %v5538 = vsel %vm983, %v5536, %v5537
    %v5539 = vrot.slane %v5505, 1
    %v5540 = vrot.slane %v5510, 1
    %v5541 = vsel %vm983, %v5539, %v5540
    %v5542 = vrot.slane %v5506, 1
    %v5543 = vrot.slane %v5511, 1
    %v5544 = vsel %vm983, %v5542, %v5543
    %v5545 = vrot.slane %v5507, 1
    %v5546 = vrot.slane %v5512, 1
    %v5547 = vsel %vm983, %v5545, %v5546
    %v5548 = vrot.slane %v5513, 1
    %v5549 = vsel %vm983, %v5534, %v5548
    %v5550 = vrot.slane %v5514, 1
    %v5551 = vsel %vm983, %v5537, %v5550
    %v5552 = vrot.slane %v5515, 1
    %v5553 = vsel %vm983, %v5540, %v5552
    %v5554 = vrot.slane %v5516, 1
    %v5555 = vsel %vm983, %v5543, %v5554
    %v5556 = vrot.slane %v5517, 1
    %v5557 = vsel %vm983, %v5546, %v5556
    %5558 = vrot.lane.b32.xlu0 %v5535, 127
    %v5559 = vpop.permute.xlu0 %5558
    %5560 = vrot.lane.b32.xlu0 %v5538, 127
    %v5561 = vpop.permute.xlu0 %5560
    %5562 = vrot.lane.b32.xlu0 %v5541, 127
    %v5563 = vpop.permute.xlu0 %5562
    %5564 = vrot.lane.b32.xlu0 %v5544, 127
    %v5565 = vpop.permute.xlu0 %5564
    %5566 = vrot.lane.b32.xlu0 %v5547, 127
    %v5567 = vpop.permute.xlu0 %5566
    %5568 = vrot.lane.b32.xlu0 %v5549, 127
    %v5569 = vpop.permute.xlu0 %5568
    %5570 = vrot.lane.b32.xlu0 %v5551, 127
    %v5571 = vpop.permute.xlu0 %5570
    %5572 = vrot.lane.b32.xlu0 %v5553, 127
    %v5573 = vpop.permute.xlu0 %5572
    %5574 = vrot.lane.b32.xlu0 %v5555, 127
    %v5575 = vpop.permute.xlu0 %5574
    %5576 = vrot.lane.b32.xlu0 %v5557, 127
    %v5577 = vpop.permute.xlu0 %5576
    %v5578 = vsel %vm601, %v5559, %v5561
    %v5579 = vsel %vm601, %v5561, %v5563
    %v5580 = vsel %vm601, %v5563, %v5565
    %v5581 = vsel %vm601, %v5565, %v5567
    %v5582 = vsel %vm601, %v5569, %v5571
    %v5583 = vsel %vm601, %v5571, %v5573
    %v5584 = vsel %vm601, %v5573, %v5575
    %v5585 = vsel %vm601, %v5575, %v5577
    %v5594 = vadd.f32 %v5291, %v5578
    %v5595 = vadd.f32 %v5292, %v5579
    %v5596 = vadd.f32 %v5293, %v5580
    %v5597 = vadd.f32 %v5294, %v5581
    %v5598 = vadd.f32 %v5295, %v5582
    %v5599 = vadd.f32 %v5296, %v5583
    %v5600 = vadd.f32 %v5297, %v5584
    %v5601 = vadd.f32 %v5298, %v5585
    %s5602 = sld [smem:[#allocation7 + $0x17]]
    %v5603 = vstv %s5602
    %v5604 = vmul.f32 %v5603, %v4648
    %v5605 = vmul.f32 %v5603, %v4649
    %v5606 = vmul.f32 %v5603, %v4650
    %v5607 = vmul.f32 %v5603, %v4651
    %v5608 = vmul.f32 %v5603, %v4652
    %v5609 = vmul.f32 %v5603, %v4653
    %v5610 = vmul.f32 %v5603, %v4654
    %v5611 = vmul.f32 %v5603, %v4655
    %v5612 = vmul.f32 %v5603, %v4656
    %v5613 = vmul.f32 %v5603, %v4657
    %v5614 = vmul.f32 %v5603, %v4658
    %v5615 = vmul.f32 %v5603, %v4659
    %v5616 = vmul.f32 %v5603, %v4660
    %v5617 = vmul.f32 %v5603, %v4661
    %v5618 = vmul.f32 %v5603, %v4662
    %v5634 = vrot.slane %v5604, 1
    %v5635 = vrot.slane %v5609, 1
    %v5636 = vsel %vm983, %v5634, %v5635
    %v5637 = vrot.slane %v5605, 1
    %v5638 = vrot.slane %v5610, 1
    %v5639 = vsel %vm983, %v5637, %v5638
    %v5640 = vrot.slane %v5606, 1
    %v5641 = vrot.slane %v5611, 1
    %v5642 = vsel %vm983, %v5640, %v5641
    %v5643 = vrot.slane %v5607, 1
    %v5644 = vrot.slane %v5612, 1
    %v5645 = vsel %vm983, %v5643, %v5644
    %v5646 = vrot.slane %v5608, 1
    %v5647 = vrot.slane %v5613, 1
    %v5648 = vsel %vm983, %v5646, %v5647
    %v5649 = vrot.slane %v5614, 1
    %v5650 = vsel %vm983, %v5635, %v5649
    %v5651 = vrot.slane %v5615, 1
    %v5652 = vsel %vm983, %v5638, %v5651
    %v5653 = vrot.slane %v5616, 1
    %v5654 = vsel %vm983, %v5641, %v5653
    %v5655 = vrot.slane %v5617, 1
    %v5656 = vsel %vm983, %v5644, %v5655
    %v5657 = vrot.slane %v5618, 1
    %v5658 = vsel %vm983, %v5647, %v5657
    %5659 = vrot.lane.b32.xlu0 %v5636, 126
    %v5660 = vpop.permute.xlu0 %5659
    %5661 = vrot.lane.b32.xlu0 %v5639, 126
    %v5662 = vpop.permute.xlu0 %5661
    %5663 = vrot.lane.b32.xlu0 %v5642, 126
    %v5664 = vpop.permute.xlu0 %5663
    %5665 = vrot.lane.b32.xlu0 %v5645, 126
    %v5666 = vpop.permute.xlu0 %5665
    %5667 = vrot.lane.b32.xlu0 %v5648, 126
    %v5668 = vpop.permute.xlu0 %5667
    %5669 = vrot.lane.b32.xlu0 %v5650, 126
    %v5670 = vpop.permute.xlu0 %5669
    %5671 = vrot.lane.b32.xlu0 %v5652, 126
    %v5672 = vpop.permute.xlu0 %5671
    %5673 = vrot.lane.b32.xlu0 %v5654, 126
    %v5674 = vpop.permute.xlu0 %5673
    %5675 = vrot.lane.b32.xlu0 %v5656, 126
    %v5676 = vpop.permute.xlu0 %5675
    %5677 = vrot.lane.b32.xlu0 %v5658, 126
    %v5678 = vpop.permute.xlu0 %5677
    %v5679 = vsel %vm800, %v5660, %v5662
    %v5680 = vsel %vm800, %v5662, %v5664
    %v5681 = vsel %vm800, %v5664, %v5666
    %v5682 = vsel %vm800, %v5666, %v5668
    %v5683 = vsel %vm800, %v5670, %v5672
    %v5684 = vsel %vm800, %v5672, %v5674
    %v5685 = vsel %vm800, %v5674, %v5676
    %v5686 = vsel %vm800, %v5676, %v5678
    %v5695 = vadd.f32 %v5392, %v5679
    %v5696 = vadd.f32 %v5393, %v5680
    %v5697 = vadd.f32 %v5394, %v5681
    %v5698 = vadd.f32 %v5395, %v5682
    %v5699 = vadd.f32 %v5396, %v5683
    %v5700 = vadd.f32 %v5397, %v5684
    %v5701 = vadd.f32 %v5398, %v5685
    %v5702 = vadd.f32 %v5399, %v5686
    %s5703 = sld [smem:[#allocation7 + $0x32]]
    %v5704 = vstv %s5703
    %v5705 = vmul.f32 %v5704, %v4648
    %v5706 = vmul.f32 %v5704, %v4649
    %v5707 = vmul.f32 %v5704, %v4650
    %v5708 = vmul.f32 %v5704, %v4651
    %v5709 = vmul.f32 %v5704, %v4652
    %v5710 = vmul.f32 %v5704, %v4653
    %v5711 = vmul.f32 %v5704, %v4654
    %v5712 = vmul.f32 %v5704, %v4655
    %v5713 = vmul.f32 %v5704, %v4656
    %v5714 = vmul.f32 %v5704, %v4657
    %v5715 = vmul.f32 %v5704, %v4658
    %v5716 = vmul.f32 %v5704, %v4659
    %v5717 = vmul.f32 %v5704, %v4660
    %v5718 = vmul.f32 %v5704, %v4661
    %v5719 = vmul.f32 %v5704, %v4662
    %v5735 = vrot.slane %v5705, 1
    %v5736 = vrot.slane %v5710, 1
    %v5737 = vsel %vm983, %v5735, %v5736
    %v5738 = vrot.slane %v5706, 1
    %v5739 = vrot.slane %v5711, 1
    %v5740 = vsel %vm983, %v5738, %v5739
    %v5741 = vrot.slane %v5707, 1
    %v5742 = vrot.slane %v5712, 1
    %v5743 = vsel %vm983, %v5741, %v5742
    %v5744 = vrot.slane %v5708, 1
    %v5745 = vrot.slane %v5713, 1
    %v5746 = vsel %vm983, %v5744, %v5745
    %v5747 = vrot.slane %v5709, 1
    %v5748 = vrot.slane %v5714, 1
    %v5749 = vsel %vm983, %v5747, %v5748
    %v5750 = vrot.slane %v5715, 1
    %v5751 = vsel %vm983, %v5736, %v5750
    %v5752 = vrot.slane %v5716, 1
    %v5753 = vsel %vm983, %v5739, %v5752
    %v5754 = vrot.slane %v5717, 1
    %v5755 = vsel %vm983, %v5742, %v5754
    %v5756 = vrot.slane %v5718, 1
    %v5757 = vsel %vm983, %v5745, %v5756
    %v5758 = vrot.slane %v5719, 1
    %v5759 = vsel %vm983, %v5748, %v5758
    %5760 = vrot.lane.b32.xlu0 %v5737, 126
    %v5761 = vpop.permute.xlu0 %5760
    %5762 = vrot.lane.b32.xlu0 %v5740, 126
    %v5763 = vpop.permute.xlu0 %5762
    %5764 = vrot.lane.b32.xlu0 %v5743, 126
    %v5765 = vpop.permute.xlu0 %5764
    %5766 = vrot.lane.b32.xlu0 %v5746, 126
    %v5767 = vpop.permute.xlu0 %5766
    %5768 = vrot.lane.b32.xlu0 %v5749, 126
    %v5769 = vpop.permute.xlu0 %5768
    %5770 = vrot.lane.b32.xlu0 %v5751, 126
    %v5771 = vpop.permute.xlu0 %5770
    %5772 = vrot.lane.b32.xlu0 %v5753, 126
    %v5773 = vpop.permute.xlu0 %5772
    %5774 = vrot.lane.b32.xlu0 %v5755, 126
    %v5775 = vpop.permute.xlu0 %5774
    %5776 = vrot.lane.b32.xlu0 %v5757, 126
    %v5777 = vpop.permute.xlu0 %5776
    %5778 = vrot.lane.b32.xlu0 %v5759, 126
    %v5779 = vpop.permute.xlu0 %5778
    %v5780 = vsel %vm800, %v5761, %v5763
    %v5781 = vsel %vm800, %v5763, %v5765
    %v5782 = vsel %vm800, %v5765, %v5767
    %v5783 = vsel %vm800, %v5767, %v5769
    %v5784 = vsel %vm800, %v5771, %v5773
    %v5785 = vsel %vm800, %v5773, %v5775
    %v5786 = vsel %vm800, %v5775, %v5777
    %v5787 = vsel %vm800, %v5777, %v5779
    %v5796 = vadd.f32 %v5493, %v5780
    %v5797 = vadd.f32 %v5494, %v5781
    %v5798 = vadd.f32 %v5495, %v5782
    %v5799 = vadd.f32 %v5496, %v5783
    %v5800 = vadd.f32 %v5497, %v5784
    %v5801 = vadd.f32 %v5498, %v5785
    %v5802 = vadd.f32 %v5499, %v5786
    %v5803 = vadd.f32 %v5500, %v5787
    %s5804 = sld [smem:[#allocation7 + $0x4d]]
    %v5805 = vstv %s5804
    %v5806 = vmul.f32 %v5805, %v4648
    %v5807 = vmul.f32 %v5805, %v4649
    %v5808 = vmul.f32 %v5805, %v4650
    %v5809 = vmul.f32 %v5805, %v4651
    %v5810 = vmul.f32 %v5805, %v4652
    %v5811 = vmul.f32 %v5805, %v4653
    %v5812 = vmul.f32 %v5805, %v4654
    %v5813 = vmul.f32 %v5805, %v4655
    %v5814 = vmul.f32 %v5805, %v4656
    %v5815 = vmul.f32 %v5805, %v4657
    %v5816 = vmul.f32 %v5805, %v4658
    %v5817 = vmul.f32 %v5805, %v4659
    %v5818 = vmul.f32 %v5805, %v4660
    %v5819 = vmul.f32 %v5805, %v4661
    %v5820 = vmul.f32 %v5805, %v4662
    %v5836 = vrot.slane %v5806, 1
    %v5837 = vrot.slane %v5811, 1
    %v5838 = vsel %vm983, %v5836, %v5837
    %v5839 = vrot.slane %v5807, 1
    %v5840 = vrot.slane %v5812, 1
    %v5841 = vsel %vm983, %v5839, %v5840
    %v5842 = vrot.slane %v5808, 1
    %v5843 = vrot.slane %v5813, 1
    %v5844 = vsel %vm983, %v5842, %v5843
    %v5845 = vrot.slane %v5809, 1
    %v5846 = vrot.slane %v5814, 1
    %v5847 = vsel %vm983, %v5845, %v5846
    %v5848 = vrot.slane %v5810, 1
    %v5849 = vrot.slane %v5815, 1
    %v5850 = vsel %vm983, %v5848, %v5849
    %v5851 = vrot.slane %v5816, 1
    %v5852 = vsel %vm983, %v5837, %v5851
    %v5853 = vrot.slane %v5817, 1
    %v5854 = vsel %vm983, %v5840, %v5853
    %v5855 = vrot.slane %v5818, 1
    %v5856 = vsel %vm983, %v5843, %v5855
    %v5857 = vrot.slane %v5819, 1
    %v5858 = vsel %vm983, %v5846, %v5857
    %v5859 = vrot.slane %v5820, 1
    %v5860 = vsel %vm983, %v5849, %v5859
    %5861 = vrot.lane.b32.xlu0 %v5838, 126
    %v5862 = vpop.permute.xlu0 %5861
    %5863 = vrot.lane.b32.xlu0 %v5841, 126
    %v5864 = vpop.permute.xlu0 %5863
    %5865 = vrot.lane.b32.xlu0 %v5844, 126
    %v5866 = vpop.permute.xlu0 %5865
    %5867 = vrot.lane.b32.xlu0 %v5847, 126
    %v5868 = vpop.permute.xlu0 %5867
    %5869 = vrot.lane.b32.xlu0 %v5850, 126
    %v5870 = vpop.permute.xlu0 %5869
    %5871 = vrot.lane.b32.xlu0 %v5852, 126
    %v5872 = vpop.permute.xlu0 %5871
    %5873 = vrot.lane.b32.xlu0 %v5854, 126
    %v5874 = vpop.permute.xlu0 %5873
    %5875 = vrot.lane.b32.xlu0 %v5856, 126
    %v5876 = vpop.permute.xlu0 %5875
    %5877 = vrot.lane.b32.xlu0 %v5858, 126
    %v5878 = vpop.permute.xlu0 %5877
    %5879 = vrot.lane.b32.xlu0 %v5860, 126
    %v5880 = vpop.permute.xlu0 %5879
    %v5881 = vsel %vm800, %v5862, %v5864
    %v5882 = vsel %vm800, %v5864, %v5866
    %v5883 = vsel %vm800, %v5866, %v5868
    %v5884 = vsel %vm800, %v5868, %v5870
    %v5885 = vsel %vm800, %v5872, %v5874
    %v5886 = vsel %vm800, %v5874, %v5876
    %v5887 = vsel %vm800, %v5876, %v5878
    %v5888 = vsel %vm800, %v5878, %v5880
    %v5897 = vadd.f32 %v5594, %v5881
    %v5898 = vadd.f32 %v5595, %v5882
    %v5899 = vadd.f32 %v5596, %v5883
    %v5900 = vadd.f32 %v5597, %v5884
    %v5901 = vadd.f32 %v5598, %v5885
    %v5902 = vadd.f32 %v5599, %v5886
    %v5903 = vadd.f32 %v5600, %v5887
    %v5904 = vadd.f32 %v5601, %v5888
    %s5905 = sld [smem:[#allocation7 + $0x18]]
    %v5906 = vstv %s5905
    %v5907 = vmul.f32 %v5906, %v4636
    %v5908 = vmul.f32 %v5906, %v4637
    %v5909 = vmul.f32 %v5906, %v4638
    %v5910 = vmul.f32 %v5906, %v4639
    %v5911 = vmul.f32 %v5906, %v4640
    %v5912 = vmul.f32 %v5906, %v4641
    %v5913 = vmul.f32 %v5906, %v4642
    %v5914 = vmul.f32 %v5906, %v4643
    %v5915 = vmul.f32 %v5906, %v4644
    %v5916 = vmul.f32 %v5906, %v4645
    %v5917 = vmul.f32 %v5906, %v4646
    %v5918 = vmul.f32 %v5906, %v4647
    %v5931 = vrot.slane %v5907, 2
    %v5932 = vrot.slane %v5911, 2
    %v5933 = vsel %vm1776, %v5931, %v5932
    %v5934 = vrot.slane %v5908, 2
    %v5935 = vrot.slane %v5912, 2
    %v5936 = vsel %vm1776, %v5934, %v5935
    %v5937 = vrot.slane %v5909, 2
    %v5938 = vrot.slane %v5913, 2
    %v5939 = vsel %vm1776, %v5937, %v5938
    %v5940 = vrot.slane %v5910, 2
    %v5941 = vrot.slane %v5914, 2
    %v5942 = vsel %vm1776, %v5940, %v5941
    %v5943 = vrot.slane %v5915, 2
    %v5944 = vsel %vm1776, %v5932, %v5943
    %v5945 = vrot.slane %v5916, 2
    %v5946 = vsel %vm1776, %v5935, %v5945
    %v5947 = vrot.slane %v5917, 2
    %v5948 = vsel %vm1776, %v5938, %v5947
    %v5949 = vrot.slane %v5918, 2
    %v5950 = vsel %vm1776, %v5941, %v5949
    %v5959 = vadd.f32 %v5695, %v5933
    %v5960 = vadd.f32 %v5696, %v5936
    %v5961 = vadd.f32 %v5697, %v5939
    %v5962 = vadd.f32 %v5698, %v5942
    %v5963 = vadd.f32 %v5699, %v5944
    %v5964 = vadd.f32 %v5700, %v5946
    %v5965 = vadd.f32 %v5701, %v5948
    %v5966 = vadd.f32 %v5702, %v5950
    %s5967 = sld [smem:[#allocation7 + $0x33]]
    %v5968 = vstv %s5967
    %v5969 = vmul.f32 %v5968, %v4636
    %v5970 = vmul.f32 %v5968, %v4637
    %v5971 = vmul.f32 %v5968, %v4638
    %v5972 = vmul.f32 %v5968, %v4639
    %v5973 = vmul.f32 %v5968, %v4640
    %v5974 = vmul.f32 %v5968, %v4641
    %v5975 = vmul.f32 %v5968, %v4642
    %v5976 = vmul.f32 %v5968, %v4643
    %v5977 = vmul.f32 %v5968, %v4644
    %v5978 = vmul.f32 %v5968, %v4645
    %v5979 = vmul.f32 %v5968, %v4646
    %v5980 = vmul.f32 %v5968, %v4647
    %v5993 = vrot.slane %v5969, 2
    %v5994 = vrot.slane %v5973, 2
    %v5995 = vsel %vm1776, %v5993, %v5994
    %v5996 = vrot.slane %v5970, 2
    %v5997 = vrot.slane %v5974, 2
    %v5998 = vsel %vm1776, %v5996, %v5997
    %v5999 = vrot.slane %v5971, 2
    %v6000 = vrot.slane %v5975, 2
    %v6001 = vsel %vm1776, %v5999, %v6000
    %v6002 = vrot.slane %v5972, 2
    %v6003 = vrot.slane %v5976, 2
    %v6004 = vsel %vm1776, %v6002, %v6003
    %v6005 = vrot.slane %v5977, 2
    %v6006 = vsel %vm1776, %v5994, %v6005
    %v6007 = vrot.slane %v5978, 2
    %v6008 = vsel %vm1776, %v5997, %v6007
    %v6009 = vrot.slane %v5979, 2
    %v6010 = vsel %vm1776, %v6000, %v6009
    %v6011 = vrot.slane %v5980, 2
    %v6012 = vsel %vm1776, %v6003, %v6011
    %v6021 = vadd.f32 %v5796, %v5995
    %v6022 = vadd.f32 %v5797, %v5998
    %v6023 = vadd.f32 %v5798, %v6001
    %v6024 = vadd.f32 %v5799, %v6004
    %v6025 = vadd.f32 %v5800, %v6006
    %v6026 = vadd.f32 %v5801, %v6008
    %v6027 = vadd.f32 %v5802, %v6010
    %v6028 = vadd.f32 %v5803, %v6012
    %s6029 = sld [smem:[#allocation7 + $0x4e]]
    %v6030 = vstv %s6029
    %v6031 = vmul.f32 %v6030, %v4636
    %v6032 = vmul.f32 %v6030, %v4637
    %v6033 = vmul.f32 %v6030, %v4638
    %v6034 = vmul.f32 %v6030, %v4639
    %v6035 = vmul.f32 %v6030, %v4640
    %v6036 = vmul.f32 %v6030, %v4641
    %v6037 = vmul.f32 %v6030, %v4642
    %v6038 = vmul.f32 %v6030, %v4643
    %v6039 = vmul.f32 %v6030, %v4644
    %v6040 = vmul.f32 %v6030, %v4645
    %v6041 = vmul.f32 %v6030, %v4646
    %v6042 = vmul.f32 %v6030, %v4647
    %v6055 = vrot.slane %v6031, 2
    %v6056 = vrot.slane %v6035, 2
    %v6057 = vsel %vm1776, %v6055, %v6056
    %v6058 = vrot.slane %v6032, 2
    %v6059 = vrot.slane %v6036, 2
    %v6060 = vsel %vm1776, %v6058, %v6059
    %v6061 = vrot.slane %v6033, 2
    %v6062 = vrot.slane %v6037, 2
    %v6063 = vsel %vm1776, %v6061, %v6062
    %v6064 = vrot.slane %v6034, 2
    %v6065 = vrot.slane %v6038, 2
    %v6066 = vsel %vm1776, %v6064, %v6065
    %v6067 = vrot.slane %v6039, 2
    %v6068 = vsel %vm1776, %v6056, %v6067
    %v6069 = vrot.slane %v6040, 2
    %v6070 = vsel %vm1776, %v6059, %v6069
    %v6071 = vrot.slane %v6041, 2
    %v6072 = vsel %vm1776, %v6062, %v6071
    %v6073 = vrot.slane %v6042, 2
    %v6074 = vsel %vm1776, %v6065, %v6073
    %v6083 = vadd.f32 %v5897, %v6057
    %v6084 = vadd.f32 %v5898, %v6060
    %v6085 = vadd.f32 %v5899, %v6063
    %v6086 = vadd.f32 %v5900, %v6066
    %v6087 = vadd.f32 %v5901, %v6068
    %v6088 = vadd.f32 %v5902, %v6070
    %v6089 = vadd.f32 %v5903, %v6072
    %v6090 = vadd.f32 %v5904, %v6074
    %s6091 = sld [smem:[#allocation7 + $0x19]]
    %v6092 = vstv %s6091
    %v6093 = vmul.f32 %v6092, %v4621
    %v6094 = vmul.f32 %v6092, %v4622
    %v6095 = vmul.f32 %v6092, %v4623
    %v6096 = vmul.f32 %v6092, %v4624
    %v6097 = vmul.f32 %v6092, %v4625
    %v6098 = vmul.f32 %v6092, %v4626
    %v6099 = vmul.f32 %v6092, %v4627
    %v6100 = vmul.f32 %v6092, %v4628
    %v6101 = vmul.f32 %v6092, %v4629
    %v6102 = vmul.f32 %v6092, %v4630
    %v6103 = vmul.f32 %v6092, %v4631
    %v6104 = vmul.f32 %v6092, %v4632
    %v6105 = vmul.f32 %v6092, %v4633
    %v6106 = vmul.f32 %v6092, %v4634
    %v6107 = vmul.f32 %v6092, %v4635
    %v6123 = vrot.slane %v6093, 2
    %v6124 = vrot.slane %v6098, 2
    %v6125 = vsel %vm1776, %v6123, %v6124
    %v6126 = vrot.slane %v6094, 2
    %v6127 = vrot.slane %v6099, 2
    %v6128 = vsel %vm1776, %v6126, %v6127
    %v6129 = vrot.slane %v6095, 2
    %v6130 = vrot.slane %v6100, 2
    %v6131 = vsel %vm1776, %v6129, %v6130
    %v6132 = vrot.slane %v6096, 2
    %v6133 = vrot.slane %v6101, 2
    %v6134 = vsel %vm1776, %v6132, %v6133
    %v6135 = vrot.slane %v6097, 2
    %v6136 = vrot.slane %v6102, 2
    %v6137 = vsel %vm1776, %v6135, %v6136
    %v6138 = vrot.slane %v6103, 2
    %v6139 = vsel %vm1776, %v6124, %v6138
    %v6140 = vrot.slane %v6104, 2
    %v6141 = vsel %vm1776, %v6127, %v6140
    %v6142 = vrot.slane %v6105, 2
    %v6143 = vsel %vm1776, %v6130, %v6142
    %v6144 = vrot.slane %v6106, 2
    %v6145 = vsel %vm1776, %v6133, %v6144
    %v6146 = vrot.slane %v6107, 2
    %v6147 = vsel %vm1776, %v6136, %v6146
    %6148 = vrot.lane.b32.xlu0 %v6125, 127
    %v6149 = vpop.permute.xlu0 %6148
    %6150 = vrot.lane.b32.xlu0 %v6128, 127
    %v6151 = vpop.permute.xlu0 %6150
    %6152 = vrot.lane.b32.xlu0 %v6131, 127
    %v6153 = vpop.permute.xlu0 %6152
    %6154 = vrot.lane.b32.xlu0 %v6134, 127
    %v6155 = vpop.permute.xlu0 %6154
    %6156 = vrot.lane.b32.xlu0 %v6137, 127
    %v6157 = vpop.permute.xlu0 %6156
    %6158 = vrot.lane.b32.xlu0 %v6139, 127
    %v6159 = vpop.permute.xlu0 %6158
    %6160 = vrot.lane.b32.xlu0 %v6141, 127
    %v6161 = vpop.permute.xlu0 %6160
    %6162 = vrot.lane.b32.xlu0 %v6143, 127
    %v6163 = vpop.permute.xlu0 %6162
    %6164 = vrot.lane.b32.xlu0 %v6145, 127
    %v6165 = vpop.permute.xlu0 %6164
    %6166 = vrot.lane.b32.xlu0 %v6147, 127
    %v6167 = vpop.permute.xlu0 %6166
    %v6168 = vsel %vm601, %v6149, %v6151
    %v6169 = vsel %vm601, %v6151, %v6153
    %v6170 = vsel %vm601, %v6153, %v6155
    %v6171 = vsel %vm601, %v6155, %v6157
    %v6172 = vsel %vm601, %v6159, %v6161
    %v6173 = vsel %vm601, %v6161, %v6163
    %v6174 = vsel %vm601, %v6163, %v6165
    %v6175 = vsel %vm601, %v6165, %v6167
    %v6184 = vadd.f32 %v5959, %v6168
    %v6185 = vadd.f32 %v5960, %v6169
    %v6186 = vadd.f32 %v5961, %v6170
    %v6187 = vadd.f32 %v5962, %v6171
    %v6188 = vadd.f32 %v5963, %v6172
    %v6189 = vadd.f32 %v5964, %v6173
    %v6190 = vadd.f32 %v5965, %v6174
    %v6191 = vadd.f32 %v5966, %v6175
    %s6192 = sld [smem:[#allocation7 + $0x34]]
    %v6193 = vstv %s6192
    %v6194 = vmul.f32 %v6193, %v4621
    %v6195 = vmul.f32 %v6193, %v4622
    %v6196 = vmul.f32 %v6193, %v4623
    %v6197 = vmul.f32 %v6193, %v4624
    %v6198 = vmul.f32 %v6193, %v4625
    %v6199 = vmul.f32 %v6193, %v4626
    %v6200 = vmul.f32 %v6193, %v4627
    %v6201 = vmul.f32 %v6193, %v4628
    %v6202 = vmul.f32 %v6193, %v4629
    %v6203 = vmul.f32 %v6193, %v4630
    %v6204 = vmul.f32 %v6193, %v4631
    %v6205 = vmul.f32 %v6193, %v4632
    %v6206 = vmul.f32 %v6193, %v4633
    %v6207 = vmul.f32 %v6193, %v4634
    %v6208 = vmul.f32 %v6193, %v4635
    %v6224 = vrot.slane %v6194, 2
    %v6225 = vrot.slane %v6199, 2
    %v6226 = vsel %vm1776, %v6224, %v6225
    %v6227 = vrot.slane %v6195, 2
    %v6228 = vrot.slane %v6200, 2
    %v6229 = vsel %vm1776, %v6227, %v6228
    %v6230 = vrot.slane %v6196, 2
    %v6231 = vrot.slane %v6201, 2
    %v6232 = vsel %vm1776, %v6230, %v6231
    %v6233 = vrot.slane %v6197, 2
    %v6234 = vrot.slane %v6202, 2
    %v6235 = vsel %vm1776, %v6233, %v6234
    %v6236 = vrot.slane %v6198, 2
    %v6237 = vrot.slane %v6203, 2
    %v6238 = vsel %vm1776, %v6236, %v6237
    %v6239 = vrot.slane %v6204, 2
    %v6240 = vsel %vm1776, %v6225, %v6239
    %v6241 = vrot.slane %v6205, 2
    %v6242 = vsel %vm1776, %v6228, %v6241
    %v6243 = vrot.slane %v6206, 2
    %v6244 = vsel %vm1776, %v6231, %v6243
    %v6245 = vrot.slane %v6207, 2
    %v6246 = vsel %vm1776, %v6234, %v6245
    %v6247 = vrot.slane %v6208, 2
    %v6248 = vsel %vm1776, %v6237, %v6247
    %6249 = vrot.lane.b32.xlu0 %v6226, 127
    %v6250 = vpop.permute.xlu0 %6249
    %6251 = vrot.lane.b32.xlu0 %v6229, 127
    %v6252 = vpop.permute.xlu0 %6251
    %6253 = vrot.lane.b32.xlu0 %v6232, 127
    %v6254 = vpop.permute.xlu0 %6253
    %6255 = vrot.lane.b32.xlu0 %v6235, 127
    %v6256 = vpop.permute.xlu0 %6255
    %6257 = vrot.lane.b32.xlu0 %v6238, 127
    %v6258 = vpop.permute.xlu0 %6257
    %6259 = vrot.lane.b32.xlu0 %v6240, 127
    %v6260 = vpop.permute.xlu0 %6259
    %6261 = vrot.lane.b32.xlu0 %v6242, 127
    %v6262 = vpop.permute.xlu0 %6261
    %6263 = vrot.lane.b32.xlu0 %v6244, 127
    %v6264 = vpop.permute.xlu0 %6263
    %6265 = vrot.lane.b32.xlu0 %v6246, 127
    %v6266 = vpop.permute.xlu0 %6265
    %6267 = vrot.lane.b32.xlu0 %v6248, 127
    %v6268 = vpop.permute.xlu0 %6267
    %v6269 = vsel %vm601, %v6250, %v6252
    %v6270 = vsel %vm601, %v6252, %v6254
    %v6271 = vsel %vm601, %v6254, %v6256
    %v6272 = vsel %vm601, %v6256, %v6258
    %v6273 = vsel %vm601, %v6260, %v6262
    %v6274 = vsel %vm601, %v6262, %v6264
    %v6275 = vsel %vm601, %v6264, %v6266
    %v6276 = vsel %vm601, %v6266, %v6268
    %v6285 = vadd.f32 %v6021, %v6269
    %v6286 = vadd.f32 %v6022, %v6270
    %v6287 = vadd.f32 %v6023, %v6271
    %v6288 = vadd.f32 %v6024, %v6272
    %v6289 = vadd.f32 %v6025, %v6273
    %v6290 = vadd.f32 %v6026, %v6274
    %v6291 = vadd.f32 %v6027, %v6275
    %v6292 = vadd.f32 %v6028, %v6276
    %s6293 = sld [smem:[#allocation7 + $0x4f]]
    %v6294 = vstv %s6293
    %v6295 = vmul.f32 %v6294, %v4621
    %v6296 = vmul.f32 %v6294, %v4622
    %v6297 = vmul.f32 %v6294, %v4623
    %v6298 = vmul.f32 %v6294, %v4624
    %v6299 = vmul.f32 %v6294, %v4625
    %v6300 = vmul.f32 %v6294, %v4626
    %v6301 = vmul.f32 %v6294, %v4627
    %v6302 = vmul.f32 %v6294, %v4628
    %v6303 = vmul.f32 %v6294, %v4629
    %v6304 = vmul.f32 %v6294, %v4630
    %v6305 = vmul.f32 %v6294, %v4631
    %v6306 = vmul.f32 %v6294, %v4632
    %v6307 = vmul.f32 %v6294, %v4633
    %v6308 = vmul.f32 %v6294, %v4634
    %v6309 = vmul.f32 %v6294, %v4635
    %v6325 = vrot.slane %v6295, 2
    %v6326 = vrot.slane %v6300, 2
    %v6327 = vsel %vm1776, %v6325, %v6326
    %v6328 = vrot.slane %v6296, 2
    %v6329 = vrot.slane %v6301, 2
    %v6330 = vsel %vm1776, %v6328, %v6329
    %v6331 = vrot.slane %v6297, 2
    %v6332 = vrot.slane %v6302, 2
    %v6333 = vsel %vm1776, %v6331, %v6332
    %v6334 = vrot.slane %v6298, 2
    %v6335 = vrot.slane %v6303, 2
    %v6336 = vsel %vm1776, %v6334, %v6335
    %v6337 = vrot.slane %v6299, 2
    %v6338 = vrot.slane %v6304, 2
    %v6339 = vsel %vm1776, %v6337, %v6338
    %v6340 = vrot.slane %v6305, 2
    %v6341 = vsel %vm1776, %v6326, %v6340
    %v6342 = vrot.slane %v6306, 2
    %v6343 = vsel %vm1776, %v6329, %v6342
    %v6344 = vrot.slane %v6307, 2
    %v6345 = vsel %vm1776, %v6332, %v6344
    %v6346 = vrot.slane %v6308, 2
    %v6347 = vsel %vm1776, %v6335, %v6346
    %v6348 = vrot.slane %v6309, 2
    %v6349 = vsel %vm1776, %v6338, %v6348
    %6350 = vrot.lane.b32.xlu0 %v6327, 127
    %v6351 = vpop.permute.xlu0 %6350
    %6352 = vrot.lane.b32.xlu0 %v6330, 127
    %v6353 = vpop.permute.xlu0 %6352
    %6354 = vrot.lane.b32.xlu0 %v6333, 127
    %v6355 = vpop.permute.xlu0 %6354
    %6356 = vrot.lane.b32.xlu0 %v6336, 127
    %v6357 = vpop.permute.xlu0 %6356
    %6358 = vrot.lane.b32.xlu0 %v6339, 127
    %v6359 = vpop.permute.xlu0 %6358
    %6360 = vrot.lane.b32.xlu0 %v6341, 127
    %v6361 = vpop.permute.xlu0 %6360
    %6362 = vrot.lane.b32.xlu0 %v6343, 127
    %v6363 = vpop.permute.xlu0 %6362
    %6364 = vrot.lane.b32.xlu0 %v6345, 127
    %v6365 = vpop.permute.xlu0 %6364
    %6366 = vrot.lane.b32.xlu0 %v6347, 127
    %v6367 = vpop.permute.xlu0 %6366
    %6368 = vrot.lane.b32.xlu0 %v6349, 127
    %v6369 = vpop.permute.xlu0 %6368
    %v6370 = vsel %vm601, %v6351, %v6353
    %v6371 = vsel %vm601, %v6353, %v6355
    %v6372 = vsel %vm601, %v6355, %v6357
    %v6373 = vsel %vm601, %v6357, %v6359
    %v6374 = vsel %vm601, %v6361, %v6363
    %v6375 = vsel %vm601, %v6363, %v6365
    %v6376 = vsel %vm601, %v6365, %v6367
    %v6377 = vsel %vm601, %v6367, %v6369
    %v6386 = vadd.f32 %v6083, %v6370
    %v6387 = vadd.f32 %v6084, %v6371
    %v6388 = vadd.f32 %v6085, %v6372
    %v6389 = vadd.f32 %v6086, %v6373
    %v6390 = vadd.f32 %v6087, %v6374
    %v6391 = vadd.f32 %v6088, %v6375
    %v6392 = vadd.f32 %v6089, %v6376
    %v6393 = vadd.f32 %v6090, %v6377
    %s6394 = sld [smem:[#allocation7 + $0x1a]]
    %v6395 = vstv %s6394
    %v6396 = vmul.f32 %v6395, %v4648
    %v6397 = vmul.f32 %v6395, %v4649
    %v6398 = vmul.f32 %v6395, %v4650
    %v6399 = vmul.f32 %v6395, %v4651
    %v6400 = vmul.f32 %v6395, %v4652
    %v6401 = vmul.f32 %v6395, %v4653
    %v6402 = vmul.f32 %v6395, %v4654
    %v6403 = vmul.f32 %v6395, %v4655
    %v6404 = vmul.f32 %v6395, %v4656
    %v6405 = vmul.f32 %v6395, %v4657
    %v6406 = vmul.f32 %v6395, %v4658
    %v6407 = vmul.f32 %v6395, %v4659
    %v6408 = vmul.f32 %v6395, %v4660
    %v6409 = vmul.f32 %v6395, %v4661
    %v6410 = vmul.f32 %v6395, %v4662
    %v6426 = vrot.slane %v6396, 2
    %v6427 = vrot.slane %v6401, 2
    %v6428 = vsel %vm1776, %v6426, %v6427
    %v6429 = vrot.slane %v6397, 2
    %v6430 = vrot.slane %v6402, 2
    %v6431 = vsel %vm1776, %v6429, %v6430
    %v6432 = vrot.slane %v6398, 2
    %v6433 = vrot.slane %v6403, 2
    %v6434 = vsel %vm1776, %v6432, %v6433
    %v6435 = vrot.slane %v6399, 2
    %v6436 = vrot.slane %v6404, 2
    %v6437 = vsel %vm1776, %v6435, %v6436
    %v6438 = vrot.slane %v6400, 2
    %v6439 = vrot.slane %v6405, 2
    %v6440 = vsel %vm1776, %v6438, %v6439
    %v6441 = vrot.slane %v6406, 2
    %v6442 = vsel %vm1776, %v6427, %v6441
    %v6443 = vrot.slane %v6407, 2
    %v6444 = vsel %vm1776, %v6430, %v6443
    %v6445 = vrot.slane %v6408, 2
    %v6446 = vsel %vm1776, %v6433, %v6445
    %v6447 = vrot.slane %v6409, 2
    %v6448 = vsel %vm1776, %v6436, %v6447
    %v6449 = vrot.slane %v6410, 2
    %v6450 = vsel %vm1776, %v6439, %v6449
    %6451 = vrot.lane.b32.xlu0 %v6428, 126
    %v6452 = vpop.permute.xlu0 %6451
    %6453 = vrot.lane.b32.xlu0 %v6431, 126
    %v6454 = vpop.permute.xlu0 %6453
    %6455 = vrot.lane.b32.xlu0 %v6434, 126
    %v6456 = vpop.permute.xlu0 %6455
    %6457 = vrot.lane.b32.xlu0 %v6437, 126
    %v6458 = vpop.permute.xlu0 %6457
    %6459 = vrot.lane.b32.xlu0 %v6440, 126
    %v6460 = vpop.permute.xlu0 %6459
    %6461 = vrot.lane.b32.xlu0 %v6442, 126
    %v6462 = vpop.permute.xlu0 %6461
    %6463 = vrot.lane.b32.xlu0 %v6444, 126
    %v6464 = vpop.permute.xlu0 %6463
    %6465 = vrot.lane.b32.xlu0 %v6446, 126
    %v6466 = vpop.permute.xlu0 %6465
    %6467 = vrot.lane.b32.xlu0 %v6448, 126
    %v6468 = vpop.permute.xlu0 %6467
    %6469 = vrot.lane.b32.xlu0 %v6450, 126
    %v6470 = vpop.permute.xlu0 %6469
    %v6471 = vsel %vm800, %v6452, %v6454
    %v6472 = vsel %vm800, %v6454, %v6456
    %v6473 = vsel %vm800, %v6456, %v6458
    %v6474 = vsel %vm800, %v6458, %v6460
    %v6475 = vsel %vm800, %v6462, %v6464
    %v6476 = vsel %vm800, %v6464, %v6466
    %v6477 = vsel %vm800, %v6466, %v6468
    %v6478 = vsel %vm800, %v6468, %v6470
    %v6487 = vadd.f32 %v6184, %v6471
    %v6488 = vadd.f32 %v6185, %v6472
    %v6489 = vadd.f32 %v6186, %v6473
    %v6490 = vadd.f32 %v6187, %v6474
    %v6491 = vadd.f32 %v6188, %v6475
    %v6492 = vadd.f32 %v6189, %v6476
    %v6493 = vadd.f32 %v6190, %v6477
    %v6494 = vadd.f32 %v6191, %v6478
    %s6495 = sld [smem:[#allocation7 + $0x35]]
    %v6496 = vstv %s6495
    %v6497 = vmul.f32 %v6496, %v4648
    %v6498 = vmul.f32 %v6496, %v4649
    %v6499 = vmul.f32 %v6496, %v4650
    %v6500 = vmul.f32 %v6496, %v4651
    %v6501 = vmul.f32 %v6496, %v4652
    %v6502 = vmul.f32 %v6496, %v4653
    %v6503 = vmul.f32 %v6496, %v4654
    %v6504 = vmul.f32 %v6496, %v4655
    %v6505 = vmul.f32 %v6496, %v4656
    %v6506 = vmul.f32 %v6496, %v4657
    %v6507 = vmul.f32 %v6496, %v4658
    %v6508 = vmul.f32 %v6496, %v4659
    %v6509 = vmul.f32 %v6496, %v4660
    %v6510 = vmul.f32 %v6496, %v4661
    %v6511 = vmul.f32 %v6496, %v4662
    %v6527 = vrot.slane %v6497, 2
    %v6528 = vrot.slane %v6502, 2
    %v6529 = vsel %vm1776, %v6527, %v6528
    %v6530 = vrot.slane %v6498, 2
    %v6531 = vrot.slane %v6503, 2
    %v6532 = vsel %vm1776, %v6530, %v6531
    %v6533 = vrot.slane %v6499, 2
    %v6534 = vrot.slane %v6504, 2
    %v6535 = vsel %vm1776, %v6533, %v6534
    %v6536 = vrot.slane %v6500, 2
    %v6537 = vrot.slane %v6505, 2
    %v6538 = vsel %vm1776, %v6536, %v6537
    %v6539 = vrot.slane %v6501, 2
    %v6540 = vrot.slane %v6506, 2
    %v6541 = vsel %vm1776, %v6539, %v6540
    %v6542 = vrot.slane %v6507, 2
    %v6543 = vsel %vm1776, %v6528, %v6542
    %v6544 = vrot.slane %v6508, 2
    %v6545 = vsel %vm1776, %v6531, %v6544
    %v6546 = vrot.slane %v6509, 2
    %v6547 = vsel %vm1776, %v6534, %v6546
    %v6548 = vrot.slane %v6510, 2
    %v6549 = vsel %vm1776, %v6537, %v6548
    %v6550 = vrot.slane %v6511, 2
    %v6551 = vsel %vm1776, %v6540, %v6550
    %6552 = vrot.lane.b32.xlu0 %v6529, 126
    %v6553 = vpop.permute.xlu0 %6552
    %6554 = vrot.lane.b32.xlu0 %v6532, 126
    %v6555 = vpop.permute.xlu0 %6554
    %6556 = vrot.lane.b32.xlu0 %v6535, 126
    %v6557 = vpop.permute.xlu0 %6556
    %6558 = vrot.lane.b32.xlu0 %v6538, 126
    %v6559 = vpop.permute.xlu0 %6558
    %6560 = vrot.lane.b32.xlu0 %v6541, 126
    %v6561 = vpop.permute.xlu0 %6560
    %6562 = vrot.lane.b32.xlu0 %v6543, 126
    %v6563 = vpop.permute.xlu0 %6562
    %6564 = vrot.lane.b32.xlu0 %v6545, 126
    %v6565 = vpop.permute.xlu0 %6564
    %6566 = vrot.lane.b32.xlu0 %v6547, 126
    %v6567 = vpop.permute.xlu0 %6566
    %6568 = vrot.lane.b32.xlu0 %v6549, 126
    %v6569 = vpop.permute.xlu0 %6568
    %6570 = vrot.lane.b32.xlu0 %v6551, 126
    %v6571 = vpop.permute.xlu0 %6570
    %v6572 = vsel %vm800, %v6553, %v6555
    %v6573 = vsel %vm800, %v6555, %v6557
    %v6574 = vsel %vm800, %v6557, %v6559
    %v6575 = vsel %vm800, %v6559, %v6561
    %v6576 = vsel %vm800, %v6563, %v6565
    %v6577 = vsel %vm800, %v6565, %v6567
    %v6578 = vsel %vm800, %v6567, %v6569
    %v6579 = vsel %vm800, %v6569, %v6571
    %v6588 = vadd.f32 %v6285, %v6572
    %v6589 = vadd.f32 %v6286, %v6573
    %v6590 = vadd.f32 %v6287, %v6574
    %v6591 = vadd.f32 %v6288, %v6575
    %v6592 = vadd.f32 %v6289, %v6576
    %v6593 = vadd.f32 %v6290, %v6577
    %v6594 = vadd.f32 %v6291, %v6578
    %v6595 = vadd.f32 %v6292, %v6579
    %s6596 = sld [smem:[#allocation7 + $0x50]]
    %v6597 = vstv %s6596
    %v6598 = vmul.f32 %v6597, %v4648
    %v6599 = vmul.f32 %v6597, %v4649
    %v6600 = vmul.f32 %v6597, %v4650
    %v6601 = vmul.f32 %v6597, %v4651
    %v6602 = vmul.f32 %v6597, %v4652
    %v6603 = vmul.f32 %v6597, %v4653
    %v6604 = vmul.f32 %v6597, %v4654
    %v6605 = vmul.f32 %v6597, %v4655
    %v6606 = vmul.f32 %v6597, %v4656
    %v6607 = vmul.f32 %v6597, %v4657
    %v6608 = vmul.f32 %v6597, %v4658
    %v6609 = vmul.f32 %v6597, %v4659
    %v6610 = vmul.f32 %v6597, %v4660
    %v6611 = vmul.f32 %v6597, %v4661
    %v6612 = vmul.f32 %v6597, %v4662
    %v6628 = vrot.slane %v6598, 2
    %v6629 = vrot.slane %v6603, 2
    %v6630 = vsel %vm1776, %v6628, %v6629
    %v6631 = vrot.slane %v6599, 2
    %v6632 = vrot.slane %v6604, 2
    %v6633 = vsel %vm1776, %v6631, %v6632
    %v6634 = vrot.slane %v6600, 2
    %v6635 = vrot.slane %v6605, 2
    %v6636 = vsel %vm1776, %v6634, %v6635
    %v6637 = vrot.slane %v6601, 2
    %v6638 = vrot.slane %v6606, 2
    %v6639 = vsel %vm1776, %v6637, %v6638
    %v6640 = vrot.slane %v6602, 2
    %v6641 = vrot.slane %v6607, 2
    %v6642 = vsel %vm1776, %v6640, %v6641
    %v6643 = vrot.slane %v6608, 2
    %v6644 = vsel %vm1776, %v6629, %v6643
    %v6645 = vrot.slane %v6609, 2
    %v6646 = vsel %vm1776, %v6632, %v6645
    %v6647 = vrot.slane %v6610, 2
    %v6648 = vsel %vm1776, %v6635, %v6647
    %v6649 = vrot.slane %v6611, 2
    %v6650 = vsel %vm1776, %v6638, %v6649
    %v6651 = vrot.slane %v6612, 2
    %v6652 = vsel %vm1776, %v6641, %v6651
    %6653 = vrot.lane.b32.xlu0 %v6630, 126
    %v6654 = vpop.permute.xlu0 %6653
    %6655 = vrot.lane.b32.xlu0 %v6633, 126
    %v6656 = vpop.permute.xlu0 %6655
    %6657 = vrot.lane.b32.xlu0 %v6636, 126
    %v6658 = vpop.permute.xlu0 %6657
    %6659 = vrot.lane.b32.xlu0 %v6639, 126
    %v6660 = vpop.permute.xlu0 %6659
    %6661 = vrot.lane.b32.xlu0 %v6642, 126
    %v6662 = vpop.permute.xlu0 %6661
    %6663 = vrot.lane.b32.xlu0 %v6644, 126
    %v6664 = vpop.permute.xlu0 %6663
    %6665 = vrot.lane.b32.xlu0 %v6646, 126
    %v6666 = vpop.permute.xlu0 %6665
    %6667 = vrot.lane.b32.xlu0 %v6648, 126
    %v6668 = vpop.permute.xlu0 %6667
    %6669 = vrot.lane.b32.xlu0 %v6650, 126
    %v6670 = vpop.permute.xlu0 %6669
    %6671 = vrot.lane.b32.xlu0 %v6652, 126
    %v6672 = vpop.permute.xlu0 %6671
    %v6673 = vsel %vm800, %v6654, %v6656
    %v6674 = vsel %vm800, %v6656, %v6658
    %v6675 = vsel %vm800, %v6658, %v6660
    %v6676 = vsel %vm800, %v6660, %v6662
    %v6677 = vsel %vm800, %v6664, %v6666
    %v6678 = vsel %vm800, %v6666, %v6668
    %v6679 = vsel %vm800, %v6668, %v6670
    %v6680 = vsel %vm800, %v6670, %v6672
    %v6689 = vadd.f32 %v6386, %v6673
    %v6690 = vadd.f32 %v6387, %v6674
    %v6691 = vadd.f32 %v6388, %v6675
    %v6692 = vadd.f32 %v6389, %v6676
    %v6693 = vadd.f32 %v6390, %v6677
    %v6694 = vadd.f32 %v6391, %v6678
    %v6695 = vadd.f32 %v6392, %v6679
    %v6696 = vadd.f32 %v6393, %v6680
    %v6697 = vmax.f32 %v6487, 0.0
    %v6698 = vmax.f32 %v6488, 0.0
    %v6699 = vmax.f32 %v6489, 0.0
    %v6700 = vmax.f32 %v6490, 0.0
    %v6701 = vmax.f32 %v6491, 0.0
    %v6702 = vmax.f32 %v6492, 0.0
    %v6703 = vmax.f32 %v6493, 0.0
    %v6704 = vmax.f32 %v6494, 0.0
    %v6705 = vmul.f32 %v6697, 0.2989
    %v6706 = vmul.f32 %v6698, 0.2989
    %v6707 = vmul.f32 %v6699, 0.2989
    %v6708 = vmul.f32 %v6700, 0.2989
    %v6709 = vmul.f32 %v6701, 0.2989
    %v6710 = vmul.f32 %v6702, 0.2989
    %v6711 = vmul.f32 %v6703, 0.2989
    %v6712 = vmul.f32 %v6704, 0.2989
    %v6713 = vmax.f32 %v6588, 0.0
    %v6714 = vmax.f32 %v6589, 0.0
    %v6715 = vmax.f32 %v6590, 0.0
    %v6716 = vmax.f32 %v6591, 0.0
    %v6717 = vmax.f32 %v6592, 0.0
    %v6718 = vmax.f32 %v6593, 0.0
    %v6719 = vmax.f32 %v6594, 0.0
    %v6720 = vmax.f32 %v6595, 0.0
    %v6721 = vmul.f32 %v6713, 0.587
    %v6722 = vmul.f32 %v6714, 0.587
    %v6723 = vmul.f32 %v6715, 0.587
    %v6724 = vmul.f32 %v6716, 0.587
    %v6725 = vmul.f32 %v6717, 0.587
    %v6726 = vmul.f32 %v6718, 0.587
    %v6727 = vmul.f32 %v6719, 0.587
    %v6728 = vmul.f32 %v6720, 0.587
    %v6729 = vadd.f32 %v6705, %v6721
    %v6730 = vadd.f32 %v6706, %v6722
    %v6731 = vadd.f32 %v6707, %v6723
    %v6732 = vadd.f32 %v6708, %v6724
    %v6733 = vadd.f32 %v6709, %v6725
    %v6734 = vadd.f32 %v6710, %v6726
    %v6735 = vadd.f32 %v6711, %v6727
    %v6736 = vadd.f32 %v6712, %v6728
    %v6737 = vmax.f32 %v6689, 0.0
    %v6738 = vmax.f32 %v6690, 0.0
    %v6739 = vmax.f32 %v6691, 0.0
    %v6740 = vmax.f32 %v6692, 0.0
    %v6741 = vmax.f32 %v6693, 0.0
    %v6742 = vmax.f32 %v6694, 0.0
    %v6743 = vmax.f32 %v6695, 0.0
    %v6744 = vmax.f32 %v6696, 0.0
    %v6745 = vmul.f32 %v6737, 0.114
    %v6746 = vmul.f32 %v6738, 0.114
    %v6747 = vmul.f32 %v6739, 0.114
    %v6748 = vmul.f32 %v6740, 0.114
    %v6749 = vmul.f32 %v6741, 0.114
    %v6750 = vmul.f32 %v6742, 0.114
    %v6751 = vmul.f32 %v6743, 0.114
    %v6752 = vmul.f32 %v6744, 0.114
    %v6753 = vadd.f32 %v6729, %v6745
    %v6754 = vadd.f32 %v6730, %v6746
    %v6755 = vadd.f32 %v6731, %v6747
    %v6756 = vadd.f32 %v6732, %v6748
    %v6757 = vadd.f32 %v6733, %v6749
    %v6758 = vadd.f32 %v6734, %v6750
    %v6759 = vadd.f32 %v6735, %v6751
    %v6760 = vadd.f32 %v6736, %v6752
    %v6761 = vld [vmem:[%s4] sm:$0xff]
    %v6762 = vld [vmem:[%s4 + $0x8] sm:$0xff]
    %v6763 = vld [vmem:[%s4 + $0x10] sm:$0xff]
    %v6764 = vld [vmem:[%s4 + $0x18] sm:$0xf]
    %vm6765 = vcmask 130048
    %v6767 = vsel %vm6765, %v6761, 0
    %v6770 = vsel %vm6765, %v6762, 0
    %v6773 = vsel %vm6765, %v6763, 0
    %v6776 = vsel %vm6765, %v6764, 0
    %6778 = vmatpush.msra.mxu0 0.0
    %6779 = vmatpush.msra.mxu0 0.0
    %6780 = vmatpush.msra.mxu0 0.0
    %6781 = vmatpush.msra.mxu0 0.0
    %6782 = vmatpush.msra.mxu0 0.0
    %6783 = vmatpush.msra.mxu0 0.0
    %6784 = vmatpush.msra.mxu0 0.0
    %6785 = vmatpush.msra.mxu0 0.0
    %6786 = vmatpush.msra.mxu0 0.0
    %6787 = vmatpush.msra.mxu0 0.0
    %6788 = vmatpush.msra.mxu0 0.0
    %6789 = vmatpush.msra.mxu0 0.0
    %6790 = vmatpush.msra.mxu0 0.0
    %6791 = vmatpush.msra.mxu0 0.0
    %6792 = vmatpush.msra.mxu0 %v6757
    %6793 = vmatpush.msra.mxu0 %v6753
    %6794 = vmatmul.f32.gmra.mxu0 %v6767
    %v6795 = vpop.f32.mrf.mxu0
    %v6796 = vadd.f32 0.0, %v6795
    %6797 = vmatmul.f32.gmra.mxu0 %v6770
    %v6798 = vpop.f32.mrf.mxu0
    %v6799 = vadd.f32 0.0, %v6798
    %6800 = vmatmul.f32.gmra.mxu0 %v6773
    %v6801 = vpop.f32.mrf.mxu0
    %v6802 = vadd.f32 0.0, %v6801
    %6803 = vmatmul.f32.gmra.mxu0 %v6776
    %v6804 = vpop.f32.mrf.mxu0
    %v6805 = vadd.f32 0.0, %v6804
    %6806 = vdwg.mxu0
    %6807 = vmatpush.msra.mxu0 0.0
    %6808 = vmatpush.msra.mxu0 0.0
    %6809 = vmatpush.msra.mxu0 0.0
    %6810 = vmatpush.msra.mxu0 0.0
    %6811 = vmatpush.msra.mxu0 0.0
    %6812 = vmatpush.msra.mxu0 0.0
    %6813 = vmatpush.msra.mxu0 0.0
    %6814 = vmatpush.msra.mxu0 0.0
    %6815 = vmatpush.msra.mxu0 0.0
    %6816 = vmatpush.msra.mxu0 0.0
    %6817 = vmatpush.msra.mxu0 0.0
    %6818 = vmatpush.msra.mxu0 0.0
    %6819 = vmatpush.msra.mxu0 0.0
    %6820 = vmatpush.msra.mxu0 0.0
    %6821 = vmatpush.msra.mxu0 %v6758
    %6822 = vmatpush.msra.mxu0 %v6754
    %6823 = vmatmul.f32.gmra.mxu0 %v6767
    %v6824 = vpop.f32.mrf.mxu0
    %v6825 = vadd.f32 0.0, %v6824
    %6826 = vmatmul.f32.gmra.mxu0 %v6770
    %v6827 = vpop.f32.mrf.mxu0
    %v6828 = vadd.f32 0.0, %v6827
    %6829 = vmatmul.f32.gmra.mxu0 %v6773
    %v6830 = vpop.f32.mrf.mxu0
    %v6831 = vadd.f32 0.0, %v6830
    %6832 = vmatmul.f32.gmra.mxu0 %v6776
    %v6833 = vpop.f32.mrf.mxu0
    %v6834 = vadd.f32 0.0, %v6833
    %6835 = vdwg.mxu0
    %6836 = vmatpush.msra.mxu0 0.0
    %6837 = vmatpush.msra.mxu0 0.0
    %6838 = vmatpush.msra.mxu0 0.0
    %6839 = vmatpush.msra.mxu0 0.0
    %6840 = vmatpush.msra.mxu0 0.0
    %6841 = vmatpush.msra.mxu0 0.0
    %6842 = vmatpush.msra.mxu0 0.0
    %6843 = vmatpush.msra.mxu0 0.0
    %6844 = vmatpush.msra.mxu0 0.0
    %6845 = vmatpush.msra.mxu0 0.0
    %6846 = vmatpush.msra.mxu0 0.0
    %6847 = vmatpush.msra.mxu0 0.0
    %6848 = vmatpush.msra.mxu0 0.0
    %6849 = vmatpush.msra.mxu0 0.0
    %6850 = vmatpush.msra.mxu0 %v6759
    %6851 = vmatpush.msra.mxu0 %v6755
    %6852 = vmatmul.f32.gmra.mxu0 %v6767
    %v6853 = vpop.f32.mrf.mxu0
    %v6854 = vadd.f32 0.0, %v6853
    %6855 = vmatmul.f32.gmra.mxu0 %v6770
    %v6856 = vpop.f32.mrf.mxu0
    %v6857 = vadd.f32 0.0, %v6856
    %6858 = vmatmul.f32.gmra.mxu0 %v6773
    %v6859 = vpop.f32.mrf.mxu0
    %v6860 = vadd.f32 0.0, %v6859
    %6861 = vmatmul.f32.gmra.mxu0 %v6776
    %v6862 = vpop.f32.mrf.mxu0
    %v6863 = vadd.f32 0.0, %v6862
    %6864 = vdwg.mxu0
    %6865 = vmatpush.msra.mxu0 0.0
    %6866 = vmatpush.msra.mxu0 0.0
    %6867 = vmatpush.msra.mxu0 0.0
    %6868 = vmatpush.msra.mxu0 0.0
    %6869 = vmatpush.msra.mxu0 0.0
    %6870 = vmatpush.msra.mxu0 0.0
    %6871 = vmatpush.msra.mxu0 0.0
    %6872 = vmatpush.msra.mxu0 0.0
    %6873 = vmatpush.msra.mxu0 0.0
    %6874 = vmatpush.msra.mxu0 0.0
    %6875 = vmatpush.msra.mxu0 0.0
    %6876 = vmatpush.msra.mxu0 0.0
    %6877 = vmatpush.msra.mxu0 0.0
    %6878 = vmatpush.msra.mxu0 0.0
    %6879 = vmatpush.msra.mxu0 %v6760
    %6880 = vmatpush.msra.mxu0 %v6756
    %6881 = vmatmul.f32.gmra.mxu0 %v6767
    %v6882 = vpop.f32.mrf.mxu0
    %v6883 = vadd.f32 0.0, %v6882
    %6884 = vmatmul.f32.gmra.mxu0 %v6770
    %v6885 = vpop.f32.mrf.mxu0
    %v6886 = vadd.f32 0.0, %v6885
    %6887 = vmatmul.f32.gmra.mxu0 %v6773
    %v6888 = vpop.f32.mrf.mxu0
    %v6889 = vadd.f32 0.0, %v6888
    %6890 = vmatmul.f32.gmra.mxu0 %v6776
    %v6891 = vpop.f32.mrf.mxu0
    %v6892 = vadd.f32 0.0, %v6891
    %6893 = vdwg.mxu0
    %v6894 = vld [vmem:[#allocation12] sm:$0xff]
    %v6895 = vld [vmem:[#allocation12 + $0x8] sm:$0xff]
    %v6896 = vld [vmem:[#allocation12 + $0x10] sm:$0xff]
    %v6897 = vld [vmem:[#allocation12 + $0x18] sm:$0xff]
    %v6898 = vld [vmem:[#allocation12 + $0x20] sm:$0xff]
    %v6899 = vld [vmem:[#allocation12 + $0x28] sm:$0xff]
    %v6900 = vld [vmem:[#allocation12 + $0x30] sm:$0xff]
    %v6901 = vld [vmem:[#allocation12 + $0x38] sm:$0xff]
    %v6902 = vld [vmem:[#allocation12 + $0x40] sm:$0xff]
    %v6903 = vld [vmem:[#allocation12 + $0x48] sm:$0xff]
    %v6904 = vld [vmem:[#allocation12 + $0x50] sm:$0xff]
    %v6905 = vld [vmem:[#allocation12 + $0x58] sm:$0xff]
    %v6906 = vld [vmem:[#allocation12 + $0x60] sm:$0xff]
    %v6907 = vld [vmem:[#allocation12 + $0x68] sm:$0xff]
    %v6908 = vld [vmem:[#allocation12 + $0x70] sm:$0xff]
    %v6909 = vld [vmem:[#allocation12 + $0x78] sm:$0xff]
    %v6910 = vld [vmem:[#allocation12 + $0x80] sm:$0xff]
    %v6911 = vld [vmem:[#allocation12 + $0x88] sm:$0xff]
    %v6912 = vld [vmem:[#allocation12 + $0x90] sm:$0xff]
    %v6913 = vld [vmem:[#allocation12 + $0x98] sm:$0xff]
    %v6914 = vld [vmem:[#allocation12 + $0xa0] sm:$0xff]
    %v6915 = vld [vmem:[#allocation12 + $0xa8] sm:$0xff]
    %v6916 = vld [vmem:[#allocation12 + $0xb0] sm:$0xff]
    %v6917 = vld [vmem:[#allocation12 + $0xb8] sm:$0xff]
    %v6918 = vld [vmem:[#allocation12 + $0xc0] sm:$0xff]
    %v6919 = vld [vmem:[#allocation12 + $0xc8] sm:$0xff]
    %v6920 = vld [vmem:[#allocation12 + $0xd0] sm:$0xff]
    %v6921 = vld [vmem:[#allocation12 + $0xd8] sm:$0xff]
    %v6922 = vld [vmem:[#allocation12 + $0xe0] sm:$0xff]
    %v6923 = vld [vmem:[#allocation12 + $0xe8] sm:$0xff]
    %v6924 = vld [vmem:[#allocation12 + $0xf0] sm:$0xff]
    %v6925 = vld [vmem:[#allocation12 + $0xf8] sm:$0xff]
    %v6926 = vld [vmem:[#allocation12 + $0x100] sm:$0xff]
    %v6927 = vld [vmem:[#allocation12 + $0x108] sm:$0xff]
    %v6928 = vld [vmem:[#allocation12 + $0x110] sm:$0xff]
    %v6929 = vld [vmem:[#allocation12 + $0x118] sm:$0xff]
    %v6930 = vld [vmem:[#allocation12 + $0x120] sm:$0xff]
    %v6931 = vld [vmem:[#allocation12 + $0x128] sm:$0xff]
    %v6932 = vld [vmem:[#allocation12 + $0x130] sm:$0xff]
    %v6933 = vld [vmem:[#allocation12 + $0x138] sm:$0xff]
    %v6934 = vld [vmem:[#allocation12 + $0x140] sm:$0xff]
    %v6935 = vld [vmem:[#allocation12 + $0x148] sm:$0xff]
    %v6936 = vld [vmem:[#allocation12 + $0x150] sm:$0xff]
    %v6937 = vld [vmem:[#allocation12 + $0x158] sm:$0xff]
    %v6938 = vld [vmem:[#allocation12 + $0x160] sm:$0xff]
    %v6939 = vld [vmem:[#allocation12 + $0x168] sm:$0xff]
    %v6940 = vld [vmem:[#allocation12 + $0x170] sm:$0xff]
    %v6941 = vld [vmem:[#allocation12 + $0x178] sm:$0xff]
    %v6942 = vld [vmem:[#allocation12 + $0x180] sm:$0xff]
    %v6943 = vld [vmem:[#allocation12 + $0x188] sm:$0xff]
    %v6944 = vld [vmem:[#allocation12 + $0x190] sm:$0xff]
    %v6945 = vld [vmem:[#allocation12 + $0x198] sm:$0xff]
    %v6946 = vld [vmem:[#allocation12 + $0x1a0] sm:$0xff]
    %v6947 = vld [vmem:[#allocation12 + $0x1a8] sm:$0xff]
    %v6948 = vld [vmem:[#allocation12 + $0x1b0] sm:$0xff]
    %v6949 = vld [vmem:[#allocation12 + $0x1b8] sm:$0xff]
    %v6950 = vld [vmem:[#allocation12 + $0x1c0] sm:$0xff]
    %v6951 = vld [vmem:[#allocation12 + $0x1c8] sm:$0xff]
    %v6952 = vld [vmem:[#allocation12 + $0x1d0] sm:$0xff]
    %v6953 = vld [vmem:[#allocation12 + $0x1d8] sm:$0xff]
    %v6954 = vld [vmem:[#allocation12 + $0x1e0] sm:$0xff]
    %v6955 = vld [vmem:[#allocation12 + $0x1e8] sm:$0xff]
    %v6956 = vld [vmem:[#allocation12 + $0x1f0] sm:$0xff]
    %v6957 = vld [vmem:[#allocation12 + $0x1f8] sm:$0xff]
    %v6958 = vld [vmem:[#allocation12 + $0x200] sm:$0xff]
    %v6959 = vld [vmem:[#allocation12 + $0x208] sm:$0xff]
    %v6960 = vld [vmem:[#allocation12 + $0x210] sm:$0xff]
    %v6961 = vld [vmem:[#allocation12 + $0x218] sm:$0xff]
    %v6962 = vld [vmem:[#allocation12 + $0x220] sm:$0xff]
    %v6963 = vld [vmem:[#allocation12 + $0x228] sm:$0xff]
    %v6964 = vld [vmem:[#allocation12 + $0x230] sm:$0xff]
    %v6965 = vld [vmem:[#allocation12 + $0x238] sm:$0xff]
    %v6966 = vld [vmem:[#allocation12 + $0x240] sm:$0xff]
    %v6967 = vld [vmem:[#allocation12 + $0x248] sm:$0xff]
    %v6968 = vld [vmem:[#allocation12 + $0x250] sm:$0xff]
    %v6969 = vld [vmem:[#allocation12 + $0x258] sm:$0xff]
    %v6970 = vld [vmem:[#allocation12 + $0x260] sm:$0xff]
    %v6971 = vld [vmem:[#allocation12 + $0x268] sm:$0xff]
    %v6972 = vld [vmem:[#allocation12 + $0x270] sm:$0xff]
    %v6973 = vld [vmem:[#allocation12 + $0x278] sm:$0xff]
    %v6974 = vld [vmem:[#allocation12 + $0x280] sm:$0xff]
    %v6975 = vld [vmem:[#allocation12 + $0x288] sm:$0xff]
    %v6976 = vld [vmem:[#allocation12 + $0x290] sm:$0xff]
    %v6977 = vld [vmem:[#allocation12 + $0x298] sm:$0xff]
    %v6978 = vld [vmem:[#allocation12 + $0x2a0] sm:$0xff]
    %v6979 = vld [vmem:[#allocation12 + $0x2a8] sm:$0xff]
    %v6980 = vld [vmem:[#allocation12 + $0x2b0] sm:$0xff]
    %v6981 = vld [vmem:[#allocation12 + $0x2b8] sm:$0xff]
    %v6982 = vld [vmem:[#allocation12 + $0x2c0] sm:$0xff]
    %v6983 = vld [vmem:[#allocation12 + $0x2c8] sm:$0xff]
    %v6984 = vld [vmem:[#allocation12 + $0x2d0] sm:$0xff]
    %v6985 = vld [vmem:[#allocation12 + $0x2d8] sm:$0xff]
    %v6986 = vld [vmem:[#allocation12 + $0x2e0] sm:$0xff]
    %v6987 = vld [vmem:[#allocation12 + $0x2e8] sm:$0xff]
    %v6988 = vld [vmem:[#allocation12 + $0x2f0] sm:$0xff]
    %v6989 = vld [vmem:[#allocation12 + $0x2f8] sm:$0xff]
    %v6990 = vld [vmem:[#allocation12 + $0x300] sm:$0xff]
    %v6991 = vld [vmem:[#allocation12 + $0x308] sm:$0xff]
    %v6992 = vld [vmem:[#allocation12 + $0x310] sm:$0xff]
    %v6993 = vld [vmem:[#allocation12 + $0x318] sm:$0xff]
    %v6994 = vld [vmem:[#allocation12 + $0x320] sm:$0xff]
    %v6995 = vld [vmem:[#allocation12 + $0x328] sm:$0xff]
    %v6996 = vld [vmem:[#allocation12 + $0x330] sm:$0xff]
    %v6997 = vld [vmem:[#allocation12 + $0x338] sm:$0xff]
    %v6998 = vld [vmem:[#allocation12 + $0x340] sm:$0xff]
    %v6999 = vld [vmem:[#allocation12 + $0x348] sm:$0xff]
    %v7000 = vld [vmem:[#allocation12 + $0x350] sm:$0xff]
    %v7001 = vld [vmem:[#allocation12 + $0x358] sm:$0xff]
    %v7002 = vld [vmem:[#allocation12 + $0x360] sm:$0xff]
    %v7003 = vld [vmem:[#allocation12 + $0x368] sm:$0xff]
    %v7004 = vld [vmem:[#allocation12 + $0x370] sm:$0xff]
    %v7005 = vld [vmem:[#allocation12 + $0x378] sm:$0xff]
    %v7006 = vld [vmem:[#allocation12 + $0x380] sm:$0xff]
    %v7007 = vld [vmem:[#allocation12 + $0x388] sm:$0xff]
    %v7008 = vld [vmem:[#allocation12 + $0x390] sm:$0xff]
    %v7009 = vld [vmem:[#allocation12 + $0x398] sm:$0xff]
    %v7010 = vld [vmem:[#allocation12 + $0x3a0] sm:$0xff]
    %v7011 = vld [vmem:[#allocation12 + $0x3a8] sm:$0xff]
    %v7012 = vld [vmem:[#allocation12 + $0x3b0] sm:$0xff]
    %v7013 = vld [vmem:[#allocation12 + $0x3b8] sm:$0xff]
    %v7014 = vld [vmem:[#allocation12 + $0x3c0] sm:$0xff]
    %v7015 = vld [vmem:[#allocation12 + $0x3c8] sm:$0xff]
    %v7016 = vld [vmem:[#allocation12 + $0x3d0] sm:$0xff]
    %v7017 = vld [vmem:[#allocation12 + $0x3d8] sm:$0xff]
    %v7018 = vld [vmem:[#allocation12 + $0x3e0] sm:$0xff]
    %v7019 = vld [vmem:[#allocation12 + $0x3e8] sm:$0xff]
    %v7020 = vld [vmem:[#allocation12 + $0x3f0] sm:$0xff]
    %v7021 = vld [vmem:[#allocation12 + $0x3f8] sm:$0xff]
    %v7022 = vld [vmem:[#allocation12 + $0x400] sm:$0xff]
    %v7023 = vld [vmem:[#allocation12 + $0x408] sm:$0xff]
    %v7024 = vld [vmem:[#allocation12 + $0x410] sm:$0xff]
    %v7025 = vld [vmem:[#allocation12 + $0x418] sm:$0xff]
    %v7026 = vld [vmem:[#allocation12 + $0x420] sm:$0xff]
    %v7027 = vld [vmem:[#allocation12 + $0x428] sm:$0xff]
    %v7028 = vld [vmem:[#allocation12 + $0x430] sm:$0xff]
    %v7029 = vld [vmem:[#allocation12 + $0x438] sm:$0xff]
    %v7030 = vld [vmem:[#allocation12 + $0x440] sm:$0xff]
    %v7031 = vld [vmem:[#allocation12 + $0x448] sm:$0xff]
    %v7032 = vld [vmem:[#allocation12 + $0x450] sm:$0xff]
    %v7033 = vld [vmem:[#allocation12 + $0x458] sm:$0xff]
    %v7034 = vld [vmem:[#allocation12 + $0x460] sm:$0xff]
    %v7035 = vld [vmem:[#allocation12 + $0x468] sm:$0xff]
    %v7036 = vld [vmem:[#allocation12 + $0x470] sm:$0xff]
    %v7037 = vld [vmem:[#allocation12 + $0x478] sm:$0xff]
    %v7038 = vld [vmem:[#allocation12 + $0x480] sm:$0xff]
    %v7039 = vld [vmem:[#allocation12 + $0x488] sm:$0xff]
    %v7040 = vld [vmem:[#allocation12 + $0x490] sm:$0xff]
    %v7041 = vld [vmem:[#allocation12 + $0x498] sm:$0xff]
    %v7042 = vld [vmem:[#allocation12 + $0x4a0] sm:$0xff]
    %v7043 = vld [vmem:[#allocation12 + $0x4a8] sm:$0xff]
    %v7044 = vld [vmem:[#allocation12 + $0x4b0] sm:$0xff]
    %v7045 = vld [vmem:[#allocation12 + $0x4b8] sm:$0xff]
    %v7046 = vld [vmem:[#allocation12 + $0x4c0] sm:$0xff]
    %v7047 = vld [vmem:[#allocation12 + $0x4c8] sm:$0xff]
    %v7048 = vld [vmem:[#allocation12 + $0x4d0] sm:$0xff]
    %v7049 = vld [vmem:[#allocation12 + $0x4d8] sm:$0xff]
    %v7050 = vld [vmem:[#allocation12 + $0x4e0] sm:$0xff]
    %v7051 = vld [vmem:[#allocation12 + $0x4e8] sm:$0xff]
    %v7052 = vld [vmem:[#allocation12 + $0x4f0] sm:$0xff]
    %v7053 = vld [vmem:[#allocation12 + $0x4f8] sm:$0xff]
    %v7054 = vld [vmem:[#allocation12 + $0x500] sm:$0xff]
    %v7055 = vld [vmem:[#allocation12 + $0x508] sm:$0xff]
    %v7056 = vld [vmem:[#allocation12 + $0x510] sm:$0xff]
    %v7057 = vld [vmem:[#allocation12 + $0x518] sm:$0xff]
    %v7058 = vld [vmem:[#allocation12 + $0x520] sm:$0xff]
    %v7059 = vld [vmem:[#allocation12 + $0x528] sm:$0xff]
    %v7060 = vld [vmem:[#allocation12 + $0x530] sm:$0xff]
    %v7061 = vld [vmem:[#allocation12 + $0x538] sm:$0xff]
    %v7062 = vld [vmem:[#allocation12 + $0x540] sm:$0xff]
    %v7063 = vld [vmem:[#allocation12 + $0x548] sm:$0xff]
    %v7064 = vld [vmem:[#allocation12 + $0x550] sm:$0xff]
    %v7065 = vld [vmem:[#allocation12 + $0x558] sm:$0xff]
    %v7066 = vld [vmem:[#allocation12 + $0x560] sm:$0xff]
    %v7067 = vld [vmem:[#allocation12 + $0x568] sm:$0xff]
    %v7068 = vld [vmem:[#allocation12 + $0x570] sm:$0xff]
    %v7069 = vld [vmem:[#allocation12 + $0x578] sm:$0xff]
    %v7070 = vld [vmem:[#allocation12 + $0x580] sm:$0xff]
    %v7071 = vld [vmem:[#allocation12 + $0x588] sm:$0xff]
    %v7072 = vld [vmem:[#allocation12 + $0x590] sm:$0xff]
    %v7073 = vld [vmem:[#allocation12 + $0x598] sm:$0xff]
    %v7074 = vld [vmem:[#allocation12 + $0x5a0] sm:$0xff]
    %v7075 = vld [vmem:[#allocation12 + $0x5a8] sm:$0xff]
    %v7076 = vld [vmem:[#allocation12 + $0x5b0] sm:$0xff]
    %v7077 = vld [vmem:[#allocation12 + $0x5b8] sm:$0xff]
    %v7078 = vld [vmem:[#allocation12 + $0x5c0] sm:$0xff]
    %v7079 = vld [vmem:[#allocation12 + $0x5c8] sm:$0xff]
    %v7080 = vld [vmem:[#allocation12 + $0x5d0] sm:$0xff]
    %v7081 = vld [vmem:[#allocation12 + $0x5d8] sm:$0xff]
    %v7082 = vld [vmem:[#allocation12 + $0x5e0] sm:$0xff]
    %v7083 = vld [vmem:[#allocation12 + $0x5e8] sm:$0xff]
    %v7084 = vld [vmem:[#allocation12 + $0x5f0] sm:$0xff]
    %v7085 = vld [vmem:[#allocation12 + $0x5f8] sm:$0xff]
    %v7086 = vld [vmem:[#allocation12 + $0x600] sm:$0xff]
    %v7087 = vld [vmem:[#allocation12 + $0x608] sm:$0xff]
    %v7088 = vld [vmem:[#allocation12 + $0x610] sm:$0xff]
    %v7089 = vld [vmem:[#allocation12 + $0x618] sm:$0xff]
    %v7090 = vld [vmem:[#allocation12 + $0x620] sm:$0xff]
    %v7091 = vld [vmem:[#allocation12 + $0x628] sm:$0xff]
    %v7092 = vld [vmem:[#allocation12 + $0x630] sm:$0xff]
    %v7093 = vld [vmem:[#allocation12 + $0x638] sm:$0xff]
    %v7094 = vld [vmem:[#allocation12 + $0x640] sm:$0xff]
    %v7095 = vld [vmem:[#allocation12 + $0x648] sm:$0xff]
    %v7096 = vld [vmem:[#allocation12 + $0x650] sm:$0xff]
    %v7097 = vld [vmem:[#allocation12 + $0x658] sm:$0xff]
    %v7098 = vld [vmem:[#allocation12 + $0x660] sm:$0xff]
    %v7099 = vld [vmem:[#allocation12 + $0x668] sm:$0xff]
    %v7100 = vld [vmem:[#allocation12 + $0x670] sm:$0xff]
    %v7101 = vld [vmem:[#allocation12 + $0x678] sm:$0xff]
    %v7102 = vld [vmem:[#allocation12 + $0x680] sm:$0xff]
    %v7103 = vld [vmem:[#allocation12 + $0x688] sm:$0xff]
    %v7104 = vld [vmem:[#allocation12 + $0x690] sm:$0xff]
    %v7105 = vld [vmem:[#allocation12 + $0x698] sm:$0xff]
    %v7106 = vld [vmem:[#allocation12 + $0x6a0] sm:$0xff]
    %v7107 = vld [vmem:[#allocation12 + $0x6a8] sm:$0xff]
    %v7108 = vld [vmem:[#allocation12 + $0x6b0] sm:$0xff]
    %v7109 = vld [vmem:[#allocation12 + $0x6b8] sm:$0xff]
    %v7110 = vld [vmem:[#allocation12 + $0x6c0] sm:$0xff]
    %v7111 = vld [vmem:[#allocation12 + $0x6c8] sm:$0xff]
    %v7112 = vld [vmem:[#allocation12 + $0x6d0] sm:$0xff]
    %v7113 = vld [vmem:[#allocation12 + $0x6d8] sm:$0xff]
    %v7114 = vld [vmem:[#allocation12 + $0x6e0] sm:$0xff]
    %v7115 = vld [vmem:[#allocation12 + $0x6e8] sm:$0xff]
    %v7116 = vld [vmem:[#allocation12 + $0x6f0] sm:$0xff]
    %v7117 = vld [vmem:[#allocation12 + $0x6f8] sm:$0xff]
    %v7118 = vld [vmem:[#allocation12 + $0x700] sm:$0xff]
    %v7119 = vld [vmem:[#allocation12 + $0x708] sm:$0xff]
    %v7120 = vld [vmem:[#allocation12 + $0x710] sm:$0xff]
    %v7121 = vld [vmem:[#allocation12 + $0x718] sm:$0xff]
    %v7122 = vld [vmem:[#allocation12 + $0x720] sm:$0xff]
    %v7123 = vld [vmem:[#allocation12 + $0x728] sm:$0xff]
    %v7124 = vld [vmem:[#allocation12 + $0x730] sm:$0xff]
    %v7125 = vld [vmem:[#allocation12 + $0x738] sm:$0xff]
    %v7126 = vld [vmem:[#allocation12 + $0x740] sm:$0xff]
    %v7127 = vld [vmem:[#allocation12 + $0x748] sm:$0xff]
    %v7128 = vld [vmem:[#allocation12 + $0x750] sm:$0xff]
    %v7129 = vld [vmem:[#allocation12 + $0x758] sm:$0xff]
    %v7130 = vld [vmem:[#allocation12 + $0x760] sm:$0xff]
    %v7131 = vld [vmem:[#allocation12 + $0x768] sm:$0xff]
    %v7132 = vld [vmem:[#allocation12 + $0x770] sm:$0xff]
    %v7133 = vld [vmem:[#allocation12 + $0x778] sm:$0xff]
    %v7134 = vld [vmem:[#allocation12 + $0x780] sm:$0xff]
    %v7135 = vld [vmem:[#allocation12 + $0x788] sm:$0xff]
    %v7136 = vld [vmem:[#allocation12 + $0x790] sm:$0xff]
    %v7137 = vld [vmem:[#allocation12 + $0x798] sm:$0xff]
    %v7138 = vld [vmem:[#allocation12 + $0x7a0] sm:$0xff]
    %v7139 = vld [vmem:[#allocation12 + $0x7a8] sm:$0xff]
    %v7140 = vld [vmem:[#allocation12 + $0x7b0] sm:$0xff]
    %v7141 = vld [vmem:[#allocation12 + $0x7b8] sm:$0xff]
    %v7142 = vld [vmem:[#allocation12 + $0x7c0] sm:$0xff]
    %v7143 = vld [vmem:[#allocation12 + $0x7c8] sm:$0xff]
    %v7144 = vld [vmem:[#allocation12 + $0x7d0] sm:$0xff]
    %v7145 = vld [vmem:[#allocation12 + $0x7d8] sm:$0xff]
    %v7146 = vld [vmem:[#allocation12 + $0x7e0] sm:$0xff]
    %v7147 = vld [vmem:[#allocation12 + $0x7e8] sm:$0xff]
    %v7148 = vld [vmem:[#allocation12 + $0x7f0] sm:$0xff]
    %v7149 = vld [vmem:[#allocation12 + $0x7f8] sm:$0xff]
    %v7150 = vld [vmem:[#allocation12 + $0x800] sm:$0xff]
    %v7151 = vld [vmem:[#allocation12 + $0x808] sm:$0xff]
    %v7152 = vld [vmem:[#allocation12 + $0x810] sm:$0xff]
    %v7153 = vld [vmem:[#allocation12 + $0x818] sm:$0xff]
    %v7154 = vld [vmem:[#allocation12 + $0x820] sm:$0xff]
    %v7155 = vld [vmem:[#allocation12 + $0x828] sm:$0xff]
    %v7156 = vld [vmem:[#allocation12 + $0x830] sm:$0xff]
    %v7157 = vld [vmem:[#allocation12 + $0x838] sm:$0xff]
    %v7158 = vld [vmem:[#allocation12 + $0x840] sm:$0xff]
    %v7159 = vld [vmem:[#allocation12 + $0x848] sm:$0xff]
    %v7160 = vld [vmem:[#allocation12 + $0x850] sm:$0xff]
    %v7161 = vld [vmem:[#allocation12 + $0x858] sm:$0xff]
    %v7162 = vld [vmem:[#allocation12 + $0x860] sm:$0xff]
    %v7163 = vld [vmem:[#allocation12 + $0x868] sm:$0xff]
    %v7164 = vld [vmem:[#allocation12 + $0x870] sm:$0xff]
    %v7165 = vld [vmem:[#allocation12 + $0x878] sm:$0xff]
    %v7166 = vld [vmem:[#allocation12 + $0x880] sm:$0xff]
    %v7167 = vld [vmem:[#allocation12 + $0x888] sm:$0xff]
    %v7168 = vld [vmem:[#allocation12 + $0x890] sm:$0xff]
    %v7169 = vld [vmem:[#allocation12 + $0x898] sm:$0xff]
    %v7170 = vld [vmem:[#allocation12 + $0x8a0] sm:$0xff]
    %v7171 = vld [vmem:[#allocation12 + $0x8a8] sm:$0xff]
    %v7172 = vld [vmem:[#allocation12 + $0x8b0] sm:$0xff]
    %v7173 = vld [vmem:[#allocation12 + $0x8b8] sm:$0xff]
    %v7174 = vld [vmem:[#allocation12 + $0x8c0] sm:$0xff]
    %v7175 = vld [vmem:[#allocation12 + $0x8c8] sm:$0xff]
    %v7176 = vld [vmem:[#allocation12 + $0x8d0] sm:$0xff]
    %v7177 = vld [vmem:[#allocation12 + $0x8d8] sm:$0xff]
    %v7178 = vld [vmem:[#allocation12 + $0x8e0] sm:$0xff]
    %v7179 = vld [vmem:[#allocation12 + $0x8e8] sm:$0xff]
    %v7180 = vld [vmem:[#allocation12 + $0x8f0] sm:$0xff]
    %v7181 = vld [vmem:[#allocation12 + $0x8f8] sm:$0xff]
    %v7182 = vld [vmem:[#allocation12 + $0x900] sm:$0xff]
    %v7183 = vld [vmem:[#allocation12 + $0x908] sm:$0xff]
    %v7184 = vld [vmem:[#allocation12 + $0x910] sm:$0xff]
    %v7185 = vld [vmem:[#allocation12 + $0x918] sm:$0xff]
    %v7186 = vld [vmem:[#allocation12 + $0x920] sm:$0xff]
    %v7187 = vld [vmem:[#allocation12 + $0x928] sm:$0xff]
    %v7188 = vld [vmem:[#allocation12 + $0x930] sm:$0xff]
    %v7189 = vld [vmem:[#allocation12 + $0x938] sm:$0xff]
    %v7190 = vld [vmem:[#allocation12 + $0x940] sm:$0xff]
    %v7191 = vld [vmem:[#allocation12 + $0x948] sm:$0xff]
    %v7192 = vld [vmem:[#allocation12 + $0x950] sm:$0xff]
    %v7193 = vld [vmem:[#allocation12 + $0x958] sm:$0xff]
    %v7194 = vld [vmem:[#allocation12 + $0x960] sm:$0xff]
    %v7195 = vld [vmem:[#allocation12 + $0x968] sm:$0xff]
    %v7196 = vld [vmem:[#allocation12 + $0x970] sm:$0xff]
    %v7197 = vld [vmem:[#allocation12 + $0x978] sm:$0xff]
    %v7198 = vld [vmem:[#allocation12 + $0x980] sm:$0xff]
    %v7199 = vld [vmem:[#allocation12 + $0x988] sm:$0xff]
    %v7200 = vld [vmem:[#allocation12 + $0x990] sm:$0xff]
    %v7201 = vld [vmem:[#allocation12 + $0x998] sm:$0xff]
    %v7202 = vld [vmem:[#allocation12 + $0x9a0] sm:$0xff]
    %v7203 = vld [vmem:[#allocation12 + $0x9a8] sm:$0xff]
    %v7204 = vld [vmem:[#allocation12 + $0x9b0] sm:$0xff]
    %v7205 = vld [vmem:[#allocation12 + $0x9b8] sm:$0xff]
    %v7206 = vld [vmem:[#allocation12 + $0x9c0] sm:$0xff]
    %v7207 = vld [vmem:[#allocation12 + $0x9c8] sm:$0xff]
    %v7208 = vld [vmem:[#allocation12 + $0x9d0] sm:$0xff]
    %v7209 = vld [vmem:[#allocation12 + $0x9d8] sm:$0xff]
    %v7210 = vld [vmem:[#allocation12 + $0x9e0] sm:$0xff]
    %v7211 = vld [vmem:[#allocation12 + $0x9e8] sm:$0xff]
    %v7212 = vld [vmem:[#allocation12 + $0x9f0] sm:$0xff]
    %v7213 = vld [vmem:[#allocation12 + $0x9f8] sm:$0xff]
    %v7214 = vld [vmem:[#allocation12 + $0xa00] sm:$0xff]
    %v7215 = vld [vmem:[#allocation12 + $0xa08] sm:$0xff]
    %v7216 = vld [vmem:[#allocation12 + $0xa10] sm:$0xff]
    %v7217 = vld [vmem:[#allocation12 + $0xa18] sm:$0xff]
    %v7218 = vld [vmem:[#allocation12 + $0xa20] sm:$0xff]
    %v7219 = vld [vmem:[#allocation12 + $0xa28] sm:$0xff]
    %v7220 = vld [vmem:[#allocation12 + $0xa30] sm:$0xff]
    %v7221 = vld [vmem:[#allocation12 + $0xa38] sm:$0xff]
    %v7222 = vld [vmem:[#allocation12 + $0xa40] sm:$0xff]
    %v7223 = vld [vmem:[#allocation12 + $0xa48] sm:$0xff]
    %v7224 = vld [vmem:[#allocation12 + $0xa50] sm:$0xff]
    %v7225 = vld [vmem:[#allocation12 + $0xa58] sm:$0xff]
    %v7226 = vld [vmem:[#allocation12 + $0xa60] sm:$0xff]
    %v7227 = vld [vmem:[#allocation12 + $0xa68] sm:$0xff]
    %v7228 = vld [vmem:[#allocation12 + $0xa70] sm:$0xff]
    %v7229 = vld [vmem:[#allocation12 + $0xa78] sm:$0xff]
    %v7230 = vld [vmem:[#allocation12 + $0xa80] sm:$0xff]
    %v7231 = vld [vmem:[#allocation12 + $0xa88] sm:$0xff]
    %v7232 = vld [vmem:[#allocation12 + $0xa90] sm:$0xff]
    %v7233 = vld [vmem:[#allocation12 + $0xa98] sm:$0xff]
    %v7234 = vld [vmem:[#allocation12 + $0xaa0] sm:$0xff]
    %v7235 = vld [vmem:[#allocation12 + $0xaa8] sm:$0xff]
    %v7236 = vld [vmem:[#allocation12 + $0xab0] sm:$0xff]
    %v7237 = vld [vmem:[#allocation12 + $0xab8] sm:$0xff]
    %v7238 = vld [vmem:[#allocation12 + $0xac0] sm:$0xff]
    %v7239 = vld [vmem:[#allocation12 + $0xac8] sm:$0xff]
    %v7240 = vld [vmem:[#allocation12 + $0xad0] sm:$0xff]
    %v7241 = vld [vmem:[#allocation12 + $0xad8] sm:$0xff]
    %v7242 = vld [vmem:[#allocation12 + $0xae0] sm:$0xff]
    %v7243 = vld [vmem:[#allocation12 + $0xae8] sm:$0xff]
    %v7244 = vld [vmem:[#allocation12 + $0xaf0] sm:$0xff]
    %v7245 = vld [vmem:[#allocation12 + $0xaf8] sm:$0xff]
    %v7246 = vld [vmem:[#allocation12 + $0xb00] sm:$0xff]
    %v7247 = vld [vmem:[#allocation12 + $0xb08] sm:$0xff]
    %v7248 = vld [vmem:[#allocation12 + $0xb10] sm:$0xff]
    %v7249 = vld [vmem:[#allocation12 + $0xb18] sm:$0xff]
    %v7250 = vld [vmem:[#allocation12 + $0xb20] sm:$0xff]
    %v7251 = vld [vmem:[#allocation12 + $0xb28] sm:$0xff]
    %v7252 = vld [vmem:[#allocation12 + $0xb30] sm:$0xff]
    %v7253 = vld [vmem:[#allocation12 + $0xb38] sm:$0xff]
    %v7254 = vld [vmem:[#allocation12 + $0xb40] sm:$0xff]
    %v7255 = vld [vmem:[#allocation12 + $0xb48] sm:$0xff]
    %v7256 = vld [vmem:[#allocation12 + $0xb50] sm:$0xff]
    %v7257 = vld [vmem:[#allocation12 + $0xb58] sm:$0xff]
    %v7258 = vld [vmem:[#allocation12 + $0xb60] sm:$0xff]
    %v7259 = vld [vmem:[#allocation12 + $0xb68] sm:$0xff]
    %v7260 = vld [vmem:[#allocation12 + $0xb70] sm:$0xff]
    %v7261 = vld [vmem:[#allocation12 + $0xb78] sm:$0xff]
    %v7262 = vld [vmem:[#allocation12 + $0xb80] sm:$0xff]
    %v7263 = vld [vmem:[#allocation12 + $0xb88] sm:$0xff]
    %v7264 = vld [vmem:[#allocation12 + $0xb90] sm:$0xff]
    %v7265 = vld [vmem:[#allocation12 + $0xb98] sm:$0xff]
    %v7266 = vld [vmem:[#allocation12 + $0xba0] sm:$0xff]
    %v7267 = vld [vmem:[#allocation12 + $0xba8] sm:$0xff]
    %v7268 = vld [vmem:[#allocation12 + $0xbb0] sm:$0xff]
    %v7269 = vld [vmem:[#allocation12 + $0xbb8] sm:$0xff]
    %v7270 = vld [vmem:[#allocation12 + $0xbc0] sm:$0xff]
    %v7271 = vld [vmem:[#allocation12 + $0xbc8] sm:$0xff]
    %v7272 = vld [vmem:[#allocation12 + $0xbd0] sm:$0xff]
    %v7273 = vld [vmem:[#allocation12 + $0xbd8] sm:$0xff]
    %v7274 = vld [vmem:[#allocation12 + $0xbe0] sm:$0xff]
    %v7275 = vld [vmem:[#allocation12 + $0xbe8] sm:$0xff]
    %v7276 = vld [vmem:[#allocation12 + $0xbf0] sm:$0xff]
    %v7277 = vld [vmem:[#allocation12 + $0xbf8] sm:$0xff]
    %v7278 = vld [vmem:[#allocation12 + $0xc00] sm:$0xff]
    %v7279 = vld [vmem:[#allocation12 + $0xc08] sm:$0xff]
    %v7280 = vld [vmem:[#allocation12 + $0xc10] sm:$0xff]
    %v7281 = vld [vmem:[#allocation12 + $0xc18] sm:$0xff]
    %v7282 = vld [vmem:[#allocation12 + $0xc20] sm:$0xff]
    %v7283 = vld [vmem:[#allocation12 + $0xc28] sm:$0xff]
    %v7284 = vld [vmem:[#allocation12 + $0xc30] sm:$0xff]
    %v7285 = vld [vmem:[#allocation12 + $0xc38] sm:$0xff]
    %v7286 = vld [vmem:[#allocation12 + $0xc40] sm:$0xff]
    %v7287 = vld [vmem:[#allocation12 + $0xc48] sm:$0xff]
    %v7288 = vld [vmem:[#allocation12 + $0xc50] sm:$0xff]
    %v7289 = vld [vmem:[#allocation12 + $0xc58] sm:$0xff]
    %v7290 = vld [vmem:[#allocation12 + $0xc60] sm:$0xff]
    %v7291 = vld [vmem:[#allocation12 + $0xc68] sm:$0xff]
    %v7292 = vld [vmem:[#allocation12 + $0xc70] sm:$0xff]
    %v7293 = vld [vmem:[#allocation12 + $0xc78] sm:$0xff]
    %v7294 = vld [vmem:[#allocation12 + $0xc80] sm:$0xff]
    %v7295 = vld [vmem:[#allocation12 + $0xc88] sm:$0xff]
    %v7296 = vld [vmem:[#allocation12 + $0xc90] sm:$0xff]
    %v7297 = vld [vmem:[#allocation12 + $0xc98] sm:$0xff]
    %v7298 = vld [vmem:[#allocation12 + $0xca0] sm:$0xff]
    %v7299 = vld [vmem:[#allocation12 + $0xca8] sm:$0xff]
    %v7300 = vld [vmem:[#allocation12 + $0xcb0] sm:$0xff]
    %v7301 = vld [vmem:[#allocation12 + $0xcb8] sm:$0xff]
    %v7302 = vld [vmem:[#allocation12 + $0xcc0] sm:$0xff]
    %v7303 = vld [vmem:[#allocation12 + $0xcc8] sm:$0xff]
    %v7304 = vld [vmem:[#allocation12 + $0xcd0] sm:$0xff]
    %v7305 = vld [vmem:[#allocation12 + $0xcd8] sm:$0xff]
    %v7306 = vld [vmem:[#allocation12 + $0xce0] sm:$0xff]
    %v7307 = vld [vmem:[#allocation12 + $0xce8] sm:$0xff]
    %v7308 = vld [vmem:[#allocation12 + $0xcf0] sm:$0xff]
    %v7309 = vld [vmem:[#allocation12 + $0xcf8] sm:$0xff]
    %v7310 = vld [vmem:[#allocation12 + $0xd00] sm:$0xff]
    %v7311 = vld [vmem:[#allocation12 + $0xd08] sm:$0xff]
    %v7312 = vld [vmem:[#allocation12 + $0xd10] sm:$0xff]
    %v7313 = vld [vmem:[#allocation12 + $0xd18] sm:$0xff]
    %v7314 = vld [vmem:[#allocation12 + $0xd20] sm:$0xff]
    %v7315 = vld [vmem:[#allocation12 + $0xd28] sm:$0xff]
    %v7316 = vld [vmem:[#allocation12 + $0xd30] sm:$0xff]
    %v7317 = vld [vmem:[#allocation12 + $0xd38] sm:$0xff]
    %v7318 = vld [vmem:[#allocation12 + $0xd40] sm:$0xff]
    %v7319 = vld [vmem:[#allocation12 + $0xd48] sm:$0xff]
    %v7320 = vld [vmem:[#allocation12 + $0xd50] sm:$0xff]
    %v7321 = vld [vmem:[#allocation12 + $0xd58] sm:$0xff]
    %v7322 = vld [vmem:[#allocation12 + $0xd60] sm:$0xff]
    %v7323 = vld [vmem:[#allocation12 + $0xd68] sm:$0xff]
    %v7324 = vld [vmem:[#allocation12 + $0xd70] sm:$0xff]
    %v7325 = vld [vmem:[#allocation12 + $0xd78] sm:$0xff]
    %v7326 = vld [vmem:[#allocation12 + $0xd80] sm:$0xff]
    %v7327 = vld [vmem:[#allocation12 + $0xd88] sm:$0xff]
    %v7328 = vld [vmem:[#allocation12 + $0xd90] sm:$0xff]
    %v7329 = vld [vmem:[#allocation12 + $0xd98] sm:$0xff]
    %v7330 = vld [vmem:[#allocation12 + $0xda0] sm:$0xff]
    %v7331 = vld [vmem:[#allocation12 + $0xda8] sm:$0xff]
    %v7332 = vld [vmem:[#allocation12 + $0xdb0] sm:$0xff]
    %v7333 = vld [vmem:[#allocation12 + $0xdb8] sm:$0xff]
    %v7334 = vld [vmem:[#allocation12 + $0xdc0] sm:$0xff]
    %v7335 = vld [vmem:[#allocation12 + $0xdc8] sm:$0xff]
    %v7336 = vld [vmem:[#allocation12 + $0xdd0] sm:$0xff]
    %v7337 = vld [vmem:[#allocation12 + $0xdd8] sm:$0xff]
    %v7338 = vld [vmem:[#allocation12 + $0xde0] sm:$0xff]
    %v7339 = vld [vmem:[#allocation12 + $0xde8] sm:$0xff]
    %v7340 = vld [vmem:[#allocation12 + $0xdf0] sm:$0xff]
    %v7341 = vld [vmem:[#allocation12 + $0xdf8] sm:$0xff]
    %7342 = vmatpush.msra.mxu0 %v6999
    %7343 = vmatpush.msra.mxu0 %v6992
    %7344 = vmatpush.msra.mxu0 %v6985
    %7345 = vmatpush.msra.mxu0 %v6978
    %7346 = vmatpush.msra.mxu0 %v6971
    %7347 = vmatpush.msra.mxu0 %v6964
    %7348 = vmatpush.msra.mxu0 %v6957
    %7349 = vmatpush.msra.mxu0 %v6950
    %7350 = vmatpush.msra.mxu0 %v6943
    %7351 = vmatpush.msra.mxu0 %v6936
    %7352 = vmatpush.msra.mxu0 %v6929
    %7353 = vmatpush.msra.mxu0 %v6922
    %7354 = vmatpush.msra.mxu0 %v6915
    %7355 = vmatpush.msra.mxu0 %v6908
    %7356 = vmatpush.msra.mxu0 %v6901
    %7357 = vmatpush.msra.mxu0 %v6894
    %7358 = vmatmul.f32.gmra.mxu0 %v6796
    %v7359 = vpop.f32.mrf.mxu0
    %v7360 = vadd.f32 0.0, %v7359
    %7361 = vmatmul.f32.gmra.mxu0 %v6799
    %v7362 = vpop.f32.mrf.mxu0
    %v7363 = vadd.f32 0.0, %v7362
    %7364 = vmatmul.f32.gmra.mxu0 %v6802
    %v7365 = vpop.f32.mrf.mxu0
    %v7366 = vadd.f32 0.0, %v7365
    %7367 = vmatmul.f32.gmra.mxu0 %v6805
    %v7368 = vpop.f32.mrf.mxu0
    %v7369 = vadd.f32 0.0, %v7368
    %7370 = vdwg.mxu0
    %7371 = vmatpush.msra.mxu0 %v7111
    %7372 = vmatpush.msra.mxu0 %v7104
    %7373 = vmatpush.msra.mxu0 %v7097
    %7374 = vmatpush.msra.mxu0 %v7090
    %7375 = vmatpush.msra.mxu0 %v7083
    %7376 = vmatpush.msra.mxu0 %v7076
    %7377 = vmatpush.msra.mxu0 %v7069
    %7378 = vmatpush.msra.mxu0 %v7062
    %7379 = vmatpush.msra.mxu0 %v7055
    %7380 = vmatpush.msra.mxu0 %v7048
    %7381 = vmatpush.msra.mxu0 %v7041
    %7382 = vmatpush.msra.mxu0 %v7034
    %7383 = vmatpush.msra.mxu0 %v7027
    %7384 = vmatpush.msra.mxu0 %v7020
    %7385 = vmatpush.msra.mxu0 %v7013
    %7386 = vmatpush.msra.mxu0 %v7006
    %7387 = vmatmul.f32.gmra.mxu0 %v6825
    %v7388 = vpop.f32.mrf.mxu0
    %v7389 = vadd.f32 %v7360, %v7388
    %7390 = vmatmul.f32.gmra.mxu0 %v6828
    %v7391 = vpop.f32.mrf.mxu0
    %v7392 = vadd.f32 %v7363, %v7391
    %7393 = vmatmul.f32.gmra.mxu0 %v6831
    %v7394 = vpop.f32.mrf.mxu0
    %v7395 = vadd.f32 %v7366, %v7394
    %7396 = vmatmul.f32.gmra.mxu0 %v6834
    %v7397 = vpop.f32.mrf.mxu0
    %v7398 = vadd.f32 %v7369, %v7397
    %7399 = vdwg.mxu0
    %7400 = vmatpush.msra.mxu0 %v7223
    %7401 = vmatpush.msra.mxu0 %v7216
    %7402 = vmatpush.msra.mxu0 %v7209
    %7403 = vmatpush.msra.mxu0 %v7202
    %7404 = vmatpush.msra.mxu0 %v7195
    %7405 = vmatpush.msra.mxu0 %v7188
    %7406 = vmatpush.msra.mxu0 %v7181
    %7407 = vmatpush.msra.mxu0 %v7174
    %7408 = vmatpush.msra.mxu0 %v7167
    %7409 = vmatpush.msra.mxu0 %v7160
    %7410 = vmatpush.msra.mxu0 %v7153
    %7411 = vmatpush.msra.mxu0 %v7146
    %7412 = vmatpush.msra.mxu0 %v7139
    %7413 = vmatpush.msra.mxu0 %v7132
    %7414 = vmatpush.msra.mxu0 %v7125
    %7415 = vmatpush.msra.mxu0 %v7118
    %7416 = vmatmul.f32.gmra.mxu0 %v6854
    %v7417 = vpop.f32.mrf.mxu0
    %v7418 = vadd.f32 %v7389, %v7417
    %7419 = vmatmul.f32.gmra.mxu0 %v6857
    %v7420 = vpop.f32.mrf.mxu0
    %v7421 = vadd.f32 %v7392, %v7420
    %7422 = vmatmul.f32.gmra.mxu0 %v6860
    %v7423 = vpop.f32.mrf.mxu0
    %v7424 = vadd.f32 %v7395, %v7423
    %7425 = vmatmul.f32.gmra.mxu0 %v6863
    %v7426 = vpop.f32.mrf.mxu0
    %v7427 = vadd.f32 %v7398, %v7426
    %7428 = vdwg.mxu0
    %7429 = vmatpush.msra.mxu0 %v7335
    %7430 = vmatpush.msra.mxu0 %v7328
    %7431 = vmatpush.msra.mxu0 %v7321
    %7432 = vmatpush.msra.mxu0 %v7314
    %7433 = vmatpush.msra.mxu0 %v7307
    %7434 = vmatpush.msra.mxu0 %v7300
    %7435 = vmatpush.msra.mxu0 %v7293
    %7436 = vmatpush.msra.mxu0 %v7286
    %7437 = vmatpush.msra.mxu0 %v7279
    %7438 = vmatpush.msra.mxu0 %v7272
    %7439 = vmatpush.msra.mxu0 %v7265
    %7440 = vmatpush.msra.mxu0 %v7258
    %7441 = vmatpush.msra.mxu0 %v7251
    %7442 = vmatpush.msra.mxu0 %v7244
    %7443 = vmatpush.msra.mxu0 %v7237
    %7444 = vmatpush.msra.mxu0 %v7230
    %7445 = vmatmul.f32.gmra.mxu0 %v6883
    %v7446 = vpop.f32.mrf.mxu0
    %v7447 = vadd.f32 %v7418, %v7446
    %7448 = vmatmul.f32.gmra.mxu0 %v6886
    %v7449 = vpop.f32.mrf.mxu0
    %v7450 = vadd.f32 %v7421, %v7449
    %7451 = vmatmul.f32.gmra.mxu0 %v6889
    %v7452 = vpop.f32.mrf.mxu0
    %v7453 = vadd.f32 %v7424, %v7452
    %7454 = vmatmul.f32.gmra.mxu0 %v6892
    %v7455 = vpop.f32.mrf.mxu0
    %v7456 = vadd.f32 %v7427, %v7455
    %7457 = vdwg.mxu0
    %7458 = vmatpush.msra.mxu0 %v7000
    %7459 = vmatpush.msra.mxu0 %v6993
    %7460 = vmatpush.msra.mxu0 %v6986
    %7461 = vmatpush.msra.mxu0 %v6979
    %7462 = vmatpush.msra.mxu0 %v6972
    %7463 = vmatpush.msra.mxu0 %v6965
    %7464 = vmatpush.msra.mxu0 %v6958
    %7465 = vmatpush.msra.mxu0 %v6951
    %7466 = vmatpush.msra.mxu0 %v6944
    %7467 = vmatpush.msra.mxu0 %v6937
    %7468 = vmatpush.msra.mxu0 %v6930
    %7469 = vmatpush.msra.mxu0 %v6923
    %7470 = vmatpush.msra.mxu0 %v6916
    %7471 = vmatpush.msra.mxu0 %v6909
    %7472 = vmatpush.msra.mxu0 %v6902
    %7473 = vmatpush.msra.mxu0 %v6895
    %7474 = vmatmul.f32.gmra.mxu0 %v6796
    %v7475 = vpop.f32.mrf.mxu0
    %v7476 = vadd.f32 0.0, %v7475
    %7477 = vmatmul.f32.gmra.mxu0 %v6799
    %v7478 = vpop.f32.mrf.mxu0
    %v7479 = vadd.f32 0.0, %v7478
    %7480 = vmatmul.f32.gmra.mxu0 %v6802
    %v7481 = vpop.f32.mrf.mxu0
    %v7482 = vadd.f32 0.0, %v7481
    %7483 = vmatmul.f32.gmra.mxu0 %v6805
    %v7484 = vpop.f32.mrf.mxu0
    %v7485 = vadd.f32 0.0, %v7484
    %7486 = vdwg.mxu0
    %7487 = vmatpush.msra.mxu0 %v7112
    %7488 = vmatpush.msra.mxu0 %v7105
    %7489 = vmatpush.msra.mxu0 %v7098
    %7490 = vmatpush.msra.mxu0 %v7091
    %7491 = vmatpush.msra.mxu0 %v7084
    %7492 = vmatpush.msra.mxu0 %v7077
    %7493 = vmatpush.msra.mxu0 %v7070
    %7494 = vmatpush.msra.mxu0 %v7063
    %7495 = vmatpush.msra.mxu0 %v7056
    %7496 = vmatpush.msra.mxu0 %v7049
    %7497 = vmatpush.msra.mxu0 %v7042
    %7498 = vmatpush.msra.mxu0 %v7035
    %7499 = vmatpush.msra.mxu0 %v7028
    %7500 = vmatpush.msra.mxu0 %v7021
    %7501 = vmatpush.msra.mxu0 %v7014
    %7502 = vmatpush.msra.mxu0 %v7007
    %7503 = vmatmul.f32.gmra.mxu0 %v6825
    %v7504 = vpop.f32.mrf.mxu0
    %v7505 = vadd.f32 %v7476, %v7504
    %7506 = vmatmul.f32.gmra.mxu0 %v6828
    %v7507 = vpop.f32.mrf.mxu0
    %v7508 = vadd.f32 %v7479, %v7507
    %7509 = vmatmul.f32.gmra.mxu0 %v6831
    %v7510 = vpop.f32.mrf.mxu0
    %v7511 = vadd.f32 %v7482, %v7510
    %7512 = vmatmul.f32.gmra.mxu0 %v6834
    %v7513 = vpop.f32.mrf.mxu0
    %v7514 = vadd.f32 %v7485, %v7513
    %7515 = vdwg.mxu0
    %7516 = vmatpush.msra.mxu0 %v7224
    %7517 = vmatpush.msra.mxu0 %v7217
    %7518 = vmatpush.msra.mxu0 %v7210
    %7519 = vmatpush.msra.mxu0 %v7203
    %7520 = vmatpush.msra.mxu0 %v7196
    %7521 = vmatpush.msra.mxu0 %v7189
    %7522 = vmatpush.msra.mxu0 %v7182
    %7523 = vmatpush.msra.mxu0 %v7175
    %7524 = vmatpush.msra.mxu0 %v7168
    %7525 = vmatpush.msra.mxu0 %v7161
    %7526 = vmatpush.msra.mxu0 %v7154
    %7527 = vmatpush.msra.mxu0 %v7147
    %7528 = vmatpush.msra.mxu0 %v7140
    %7529 = vmatpush.msra.mxu0 %v7133
    %7530 = vmatpush.msra.mxu0 %v7126
    %7531 = vmatpush.msra.mxu0 %v7119
    %7532 = vmatmul.f32.gmra.mxu0 %v6854
    %v7533 = vpop.f32.mrf.mxu0
    %v7534 = vadd.f32 %v7505, %v7533
    %7535 = vmatmul.f32.gmra.mxu0 %v6857
    %v7536 = vpop.f32.mrf.mxu0
    %v7537 = vadd.f32 %v7508, %v7536
    %7538 = vmatmul.f32.gmra.mxu0 %v6860
    %v7539 = vpop.f32.mrf.mxu0
    %v7540 = vadd.f32 %v7511, %v7539
    %7541 = vmatmul.f32.gmra.mxu0 %v6863
    %v7542 = vpop.f32.mrf.mxu0
    %v7543 = vadd.f32 %v7514, %v7542
    %7544 = vdwg.mxu0
    %7545 = vmatpush.msra.mxu0 %v7336
    %7546 = vmatpush.msra.mxu0 %v7329
    %7547 = vmatpush.msra.mxu0 %v7322
    %7548 = vmatpush.msra.mxu0 %v7315
    %7549 = vmatpush.msra.mxu0 %v7308
    %7550 = vmatpush.msra.mxu0 %v7301
    %7551 = vmatpush.msra.mxu0 %v7294
    %7552 = vmatpush.msra.mxu0 %v7287
    %7553 = vmatpush.msra.mxu0 %v7280
    %7554 = vmatpush.msra.mxu0 %v7273
    %7555 = vmatpush.msra.mxu0 %v7266
    %7556 = vmatpush.msra.mxu0 %v7259
    %7557 = vmatpush.msra.mxu0 %v7252
    %7558 = vmatpush.msra.mxu0 %v7245
    %7559 = vmatpush.msra.mxu0 %v7238
    %7560 = vmatpush.msra.mxu0 %v7231
    %7561 = vmatmul.f32.gmra.mxu0 %v6883
    %v7562 = vpop.f32.mrf.mxu0
    %v7563 = vadd.f32 %v7534, %v7562
    %7564 = vmatmul.f32.gmra.mxu0 %v6886
    %v7565 = vpop.f32.mrf.mxu0
    %v7566 = vadd.f32 %v7537, %v7565
    %7567 = vmatmul.f32.gmra.mxu0 %v6889
    %v7568 = vpop.f32.mrf.mxu0
    %v7569 = vadd.f32 %v7540, %v7568
    %7570 = vmatmul.f32.gmra.mxu0 %v6892
    %v7571 = vpop.f32.mrf.mxu0
    %v7572 = vadd.f32 %v7543, %v7571
    %7573 = vdwg.mxu0
    %7574 = vmatpush.msra.mxu0 %v7001
    %7575 = vmatpush.msra.mxu0 %v6994
    %7576 = vmatpush.msra.mxu0 %v6987
    %7577 = vmatpush.msra.mxu0 %v6980
    %7578 = vmatpush.msra.mxu0 %v6973
    %7579 = vmatpush.msra.mxu0 %v6966
    %7580 = vmatpush.msra.mxu0 %v6959
    %7581 = vmatpush.msra.mxu0 %v6952
    %7582 = vmatpush.msra.mxu0 %v6945
    %7583 = vmatpush.msra.mxu0 %v6938
    %7584 = vmatpush.msra.mxu0 %v6931
    %7585 = vmatpush.msra.mxu0 %v6924
    %7586 = vmatpush.msra.mxu0 %v6917
    %7587 = vmatpush.msra.mxu0 %v6910
    %7588 = vmatpush.msra.mxu0 %v6903
    %7589 = vmatpush.msra.mxu0 %v6896
    %7590 = vmatmul.f32.gmra.mxu0 %v6796
    %v7591 = vpop.f32.mrf.mxu0
    %v7592 = vadd.f32 0.0, %v7591
    %7593 = vmatmul.f32.gmra.mxu0 %v6799
    %v7594 = vpop.f32.mrf.mxu0
    %v7595 = vadd.f32 0.0, %v7594
    %7596 = vmatmul.f32.gmra.mxu0 %v6802
    %v7597 = vpop.f32.mrf.mxu0
    %v7598 = vadd.f32 0.0, %v7597
    %7599 = vmatmul.f32.gmra.mxu0 %v6805
    %v7600 = vpop.f32.mrf.mxu0
    %v7601 = vadd.f32 0.0, %v7600
    %7602 = vdwg.mxu0
    %7603 = vmatpush.msra.mxu0 %v7113
    %7604 = vmatpush.msra.mxu0 %v7106
    %7605 = vmatpush.msra.mxu0 %v7099
    %7606 = vmatpush.msra.mxu0 %v7092
    %7607 = vmatpush.msra.mxu0 %v7085
    %7608 = vmatpush.msra.mxu0 %v7078
    %7609 = vmatpush.msra.mxu0 %v7071
    %7610 = vmatpush.msra.mxu0 %v7064
    %7611 = vmatpush.msra.mxu0 %v7057
    %7612 = vmatpush.msra.mxu0 %v7050
    %7613 = vmatpush.msra.mxu0 %v7043
    %7614 = vmatpush.msra.mxu0 %v7036
    %7615 = vmatpush.msra.mxu0 %v7029
    %7616 = vmatpush.msra.mxu0 %v7022
    %7617 = vmatpush.msra.mxu0 %v7015
    %7618 = vmatpush.msra.mxu0 %v7008
    %7619 = vmatmul.f32.gmra.mxu0 %v6825
    %v7620 = vpop.f32.mrf.mxu0
    %v7621 = vadd.f32 %v7592, %v7620
    %7622 = vmatmul.f32.gmra.mxu0 %v6828
    %v7623 = vpop.f32.mrf.mxu0
    %v7624 = vadd.f32 %v7595, %v7623
    %7625 = vmatmul.f32.gmra.mxu0 %v6831
    %v7626 = vpop.f32.mrf.mxu0
    %v7627 = vadd.f32 %v7598, %v7626
    %7628 = vmatmul.f32.gmra.mxu0 %v6834
    %v7629 = vpop.f32.mrf.mxu0
    %v7630 = vadd.f32 %v7601, %v7629
    %7631 = vdwg.mxu0
    %7632 = vmatpush.msra.mxu0 %v7225
    %7633 = vmatpush.msra.mxu0 %v7218
    %7634 = vmatpush.msra.mxu0 %v7211
    %7635 = vmatpush.msra.mxu0 %v7204
    %7636 = vmatpush.msra.mxu0 %v7197
    %7637 = vmatpush.msra.mxu0 %v7190
    %7638 = vmatpush.msra.mxu0 %v7183
    %7639 = vmatpush.msra.mxu0 %v7176
    %7640 = vmatpush.msra.mxu0 %v7169
    %7641 = vmatpush.msra.mxu0 %v7162
    %7642 = vmatpush.msra.mxu0 %v7155
    %7643 = vmatpush.msra.mxu0 %v7148
    %7644 = vmatpush.msra.mxu0 %v7141
    %7645 = vmatpush.msra.mxu0 %v7134
    %7646 = vmatpush.msra.mxu0 %v7127
    %7647 = vmatpush.msra.mxu0 %v7120
    %7648 = vmatmul.f32.gmra.mxu0 %v6854
    %v7649 = vpop.f32.mrf.mxu0
    %v7650 = vadd.f32 %v7621, %v7649
    %7651 = vmatmul.f32.gmra.mxu0 %v6857
    %v7652 = vpop.f32.mrf.mxu0
    %v7653 = vadd.f32 %v7624, %v7652
    %7654 = vmatmul.f32.gmra.mxu0 %v6860
    %v7655 = vpop.f32.mrf.mxu0
    %v7656 = vadd.f32 %v7627, %v7655
    %7657 = vmatmul.f32.gmra.mxu0 %v6863
    %v7658 = vpop.f32.mrf.mxu0
    %v7659 = vadd.f32 %v7630, %v7658
    %7660 = vdwg.mxu0
    %7661 = vmatpush.msra.mxu0 %v7337
    %7662 = vmatpush.msra.mxu0 %v7330
    %7663 = vmatpush.msra.mxu0 %v7323
    %7664 = vmatpush.msra.mxu0 %v7316
    %7665 = vmatpush.msra.mxu0 %v7309
    %7666 = vmatpush.msra.mxu0 %v7302
    %7667 = vmatpush.msra.mxu0 %v7295
    %7668 = vmatpush.msra.mxu0 %v7288
    %7669 = vmatpush.msra.mxu0 %v7281
    %7670 = vmatpush.msra.mxu0 %v7274
    %7671 = vmatpush.msra.mxu0 %v7267
    %7672 = vmatpush.msra.mxu0 %v7260
    %7673 = vmatpush.msra.mxu0 %v7253
    %7674 = vmatpush.msra.mxu0 %v7246
    %7675 = vmatpush.msra.mxu0 %v7239
    %7676 = vmatpush.msra.mxu0 %v7232
    %7677 = vmatmul.f32.gmra.mxu0 %v6883
    %v7678 = vpop.f32.mrf.mxu0
    %v7679 = vadd.f32 %v7650, %v7678
    %7680 = vmatmul.f32.gmra.mxu0 %v6886
    %v7681 = vpop.f32.mrf.mxu0
    %v7682 = vadd.f32 %v7653, %v7681
    %7683 = vmatmul.f32.gmra.mxu0 %v6889
    %v7684 = vpop.f32.mrf.mxu0
    %v7685 = vadd.f32 %v7656, %v7684
    %7686 = vmatmul.f32.gmra.mxu0 %v6892
    %v7687 = vpop.f32.mrf.mxu0
    %v7688 = vadd.f32 %v7659, %v7687
    %7689 = vdwg.mxu0
    %7690 = vmatpush.msra.mxu0 %v7002
    %7691 = vmatpush.msra.mxu0 %v6995
    %7692 = vmatpush.msra.mxu0 %v6988
    %7693 = vmatpush.msra.mxu0 %v6981
    %7694 = vmatpush.msra.mxu0 %v6974
    %7695 = vmatpush.msra.mxu0 %v6967
    %7696 = vmatpush.msra.mxu0 %v6960
    %7697 = vmatpush.msra.mxu0 %v6953
    %7698 = vmatpush.msra.mxu0 %v6946
    %7699 = vmatpush.msra.mxu0 %v6939
    %7700 = vmatpush.msra.mxu0 %v6932
    %7701 = vmatpush.msra.mxu0 %v6925
    %7702 = vmatpush.msra.mxu0 %v6918
    %7703 = vmatpush.msra.mxu0 %v6911
    %7704 = vmatpush.msra.mxu0 %v6904
    %7705 = vmatpush.msra.mxu0 %v6897
    %7706 = vmatmul.f32.gmra.mxu0 %v6796
    %v7707 = vpop.f32.mrf.mxu0
    %v7708 = vadd.f32 0.0, %v7707
    %7709 = vmatmul.f32.gmra.mxu0 %v6799
    %v7710 = vpop.f32.mrf.mxu0
    %v7711 = vadd.f32 0.0, %v7710
    %7712 = vmatmul.f32.gmra.mxu0 %v6802
    %v7713 = vpop.f32.mrf.mxu0
    %v7714 = vadd.f32 0.0, %v7713
    %7715 = vmatmul.f32.gmra.mxu0 %v6805
    %v7716 = vpop.f32.mrf.mxu0
    %v7717 = vadd.f32 0.0, %v7716
    %7718 = vdwg.mxu0
    %7719 = vmatpush.msra.mxu0 %v7114
    %7720 = vmatpush.msra.mxu0 %v7107
    %7721 = vmatpush.msra.mxu0 %v7100
    %7722 = vmatpush.msra.mxu0 %v7093
    %7723 = vmatpush.msra.mxu0 %v7086
    %7724 = vmatpush.msra.mxu0 %v7079
    %7725 = vmatpush.msra.mxu0 %v7072
    %7726 = vmatpush.msra.mxu0 %v7065
    %7727 = vmatpush.msra.mxu0 %v7058
    %7728 = vmatpush.msra.mxu0 %v7051
    %7729 = vmatpush.msra.mxu0 %v7044
    %7730 = vmatpush.msra.mxu0 %v7037
    %7731 = vmatpush.msra.mxu0 %v7030
    %7732 = vmatpush.msra.mxu0 %v7023
    %7733 = vmatpush.msra.mxu0 %v7016
    %7734 = vmatpush.msra.mxu0 %v7009
    %7735 = vmatmul.f32.gmra.mxu0 %v6825
    %v7736 = vpop.f32.mrf.mxu0
    %v7737 = vadd.f32 %v7708, %v7736
    %7738 = vmatmul.f32.gmra.mxu0 %v6828
    %v7739 = vpop.f32.mrf.mxu0
    %v7740 = vadd.f32 %v7711, %v7739
    %7741 = vmatmul.f32.gmra.mxu0 %v6831
    %v7742 = vpop.f32.mrf.mxu0
    %v7743 = vadd.f32 %v7714, %v7742
    %7744 = vmatmul.f32.gmra.mxu0 %v6834
    %v7745 = vpop.f32.mrf.mxu0
    %v7746 = vadd.f32 %v7717, %v7745
    %7747 = vdwg.mxu0
    %7748 = vmatpush.msra.mxu0 %v7226
    %7749 = vmatpush.msra.mxu0 %v7219
    %7750 = vmatpush.msra.mxu0 %v7212
    %7751 = vmatpush.msra.mxu0 %v7205
    %7752 = vmatpush.msra.mxu0 %v7198
    %7753 = vmatpush.msra.mxu0 %v7191
    %7754 = vmatpush.msra.mxu0 %v7184
    %7755 = vmatpush.msra.mxu0 %v7177
    %7756 = vmatpush.msra.mxu0 %v7170
    %7757 = vmatpush.msra.mxu0 %v7163
    %7758 = vmatpush.msra.mxu0 %v7156
    %7759 = vmatpush.msra.mxu0 %v7149
    %7760 = vmatpush.msra.mxu0 %v7142
    %7761 = vmatpush.msra.mxu0 %v7135
    %7762 = vmatpush.msra.mxu0 %v7128
    %7763 = vmatpush.msra.mxu0 %v7121
    %7764 = vmatmul.f32.gmra.mxu0 %v6854
    %v7765 = vpop.f32.mrf.mxu0
    %v7766 = vadd.f32 %v7737, %v7765
    %7767 = vmatmul.f32.gmra.mxu0 %v6857
    %v7768 = vpop.f32.mrf.mxu0
    %v7769 = vadd.f32 %v7740, %v7768
    %7770 = vmatmul.f32.gmra.mxu0 %v6860
    %v7771 = vpop.f32.mrf.mxu0
    %v7772 = vadd.f32 %v7743, %v7771
    %7773 = vmatmul.f32.gmra.mxu0 %v6863
    %v7774 = vpop.f32.mrf.mxu0
    %v7775 = vadd.f32 %v7746, %v7774
    %7776 = vdwg.mxu0
    %7777 = vmatpush.msra.mxu0 %v7338
    %7778 = vmatpush.msra.mxu0 %v7331
    %7779 = vmatpush.msra.mxu0 %v7324
    %7780 = vmatpush.msra.mxu0 %v7317
    %7781 = vmatpush.msra.mxu0 %v7310
    %7782 = vmatpush.msra.mxu0 %v7303
    %7783 = vmatpush.msra.mxu0 %v7296
    %7784 = vmatpush.msra.mxu0 %v7289
    %7785 = vmatpush.msra.mxu0 %v7282
    %7786 = vmatpush.msra.mxu0 %v7275
    %7787 = vmatpush.msra.mxu0 %v7268
    %7788 = vmatpush.msra.mxu0 %v7261
    %7789 = vmatpush.msra.mxu0 %v7254
    %7790 = vmatpush.msra.mxu0 %v7247
    %7791 = vmatpush.msra.mxu0 %v7240
    %7792 = vmatpush.msra.mxu0 %v7233
    %7793 = vmatmul.f32.gmra.mxu0 %v6883
    %v7794 = vpop.f32.mrf.mxu0
    %v7795 = vadd.f32 %v7766, %v7794
    %7796 = vmatmul.f32.gmra.mxu0 %v6886
    %v7797 = vpop.f32.mrf.mxu0
    %v7798 = vadd.f32 %v7769, %v7797
    %7799 = vmatmul.f32.gmra.mxu0 %v6889
    %v7800 = vpop.f32.mrf.mxu0
    %v7801 = vadd.f32 %v7772, %v7800
    %7802 = vmatmul.f32.gmra.mxu0 %v6892
    %v7803 = vpop.f32.mrf.mxu0
    %v7804 = vadd.f32 %v7775, %v7803
    %7805 = vdwg.mxu0
    %7806 = vmatpush.msra.mxu0 %v7003
    %7807 = vmatpush.msra.mxu0 %v6996
    %7808 = vmatpush.msra.mxu0 %v6989
    %7809 = vmatpush.msra.mxu0 %v6982
    %7810 = vmatpush.msra.mxu0 %v6975
    %7811 = vmatpush.msra.mxu0 %v6968
    %7812 = vmatpush.msra.mxu0 %v6961
    %7813 = vmatpush.msra.mxu0 %v6954
    %7814 = vmatpush.msra.mxu0 %v6947
    %7815 = vmatpush.msra.mxu0 %v6940
    %7816 = vmatpush.msra.mxu0 %v6933
    %7817 = vmatpush.msra.mxu0 %v6926
    %7818 = vmatpush.msra.mxu0 %v6919
    %7819 = vmatpush.msra.mxu0 %v6912
    %7820 = vmatpush.msra.mxu0 %v6905
    %7821 = vmatpush.msra.mxu0 %v6898
    %7822 = vmatmul.f32.gmra.mxu0 %v6796
    %v7823 = vpop.f32.mrf.mxu0
    %v7824 = vadd.f32 0.0, %v7823
    %7825 = vmatmul.f32.gmra.mxu0 %v6799
    %v7826 = vpop.f32.mrf.mxu0
    %v7827 = vadd.f32 0.0, %v7826
    %7828 = vmatmul.f32.gmra.mxu0 %v6802
    %v7829 = vpop.f32.mrf.mxu0
    %v7830 = vadd.f32 0.0, %v7829
    %7831 = vmatmul.f32.gmra.mxu0 %v6805
    %v7832 = vpop.f32.mrf.mxu0
    %v7833 = vadd.f32 0.0, %v7832
    %7834 = vdwg.mxu0
    %7835 = vmatpush.msra.mxu0 %v7115
    %7836 = vmatpush.msra.mxu0 %v7108
    %7837 = vmatpush.msra.mxu0 %v7101
    %7838 = vmatpush.msra.mxu0 %v7094
    %7839 = vmatpush.msra.mxu0 %v7087
    %7840 = vmatpush.msra.mxu0 %v7080
    %7841 = vmatpush.msra.mxu0 %v7073
    %7842 = vmatpush.msra.mxu0 %v7066
    %7843 = vmatpush.msra.mxu0 %v7059
    %7844 = vmatpush.msra.mxu0 %v7052
    %7845 = vmatpush.msra.mxu0 %v7045
    %7846 = vmatpush.msra.mxu0 %v7038
    %7847 = vmatpush.msra.mxu0 %v7031
    %7848 = vmatpush.msra.mxu0 %v7024
    %7849 = vmatpush.msra.mxu0 %v7017
    %7850 = vmatpush.msra.mxu0 %v7010
    %7851 = vmatmul.f32.gmra.mxu0 %v6825
    %v7852 = vpop.f32.mrf.mxu0
    %v7853 = vadd.f32 %v7824, %v7852
    %7854 = vmatmul.f32.gmra.mxu0 %v6828
    %v7855 = vpop.f32.mrf.mxu0
    %v7856 = vadd.f32 %v7827, %v7855
    %7857 = vmatmul.f32.gmra.mxu0 %v6831
    %v7858 = vpop.f32.mrf.mxu0
    %v7859 = vadd.f32 %v7830, %v7858
    %7860 = vmatmul.f32.gmra.mxu0 %v6834
    %v7861 = vpop.f32.mrf.mxu0
    %v7862 = vadd.f32 %v7833, %v7861
    %7863 = vdwg.mxu0
    %7864 = vmatpush.msra.mxu0 %v7227
    %7865 = vmatpush.msra.mxu0 %v7220
    %7866 = vmatpush.msra.mxu0 %v7213
    %7867 = vmatpush.msra.mxu0 %v7206
    %7868 = vmatpush.msra.mxu0 %v7199
    %7869 = vmatpush.msra.mxu0 %v7192
    %7870 = vmatpush.msra.mxu0 %v7185
    %7871 = vmatpush.msra.mxu0 %v7178
    %7872 = vmatpush.msra.mxu0 %v7171
    %7873 = vmatpush.msra.mxu0 %v7164
    %7874 = vmatpush.msra.mxu0 %v7157
    %7875 = vmatpush.msra.mxu0 %v7150
    %7876 = vmatpush.msra.mxu0 %v7143
    %7877 = vmatpush.msra.mxu0 %v7136
    %7878 = vmatpush.msra.mxu0 %v7129
    %7879 = vmatpush.msra.mxu0 %v7122
    %7880 = vmatmul.f32.gmra.mxu0 %v6854
    %v7881 = vpop.f32.mrf.mxu0
    %v7882 = vadd.f32 %v7853, %v7881
    %7883 = vmatmul.f32.gmra.mxu0 %v6857
    %v7884 = vpop.f32.mrf.mxu0
    %v7885 = vadd.f32 %v7856, %v7884
    %7886 = vmatmul.f32.gmra.mxu0 %v6860
    %v7887 = vpop.f32.mrf.mxu0
    %v7888 = vadd.f32 %v7859, %v7887
    %7889 = vmatmul.f32.gmra.mxu0 %v6863
    %v7890 = vpop.f32.mrf.mxu0
    %v7891 = vadd.f32 %v7862, %v7890
    %7892 = vdwg.mxu0
    %7893 = vmatpush.msra.mxu0 %v7339
    %7894 = vmatpush.msra.mxu0 %v7332
    %7895 = vmatpush.msra.mxu0 %v7325
    %7896 = vmatpush.msra.mxu0 %v7318
    %7897 = vmatpush.msra.mxu0 %v7311
    %7898 = vmatpush.msra.mxu0 %v7304
    %7899 = vmatpush.msra.mxu0 %v7297
    %7900 = vmatpush.msra.mxu0 %v7290
    %7901 = vmatpush.msra.mxu0 %v7283
    %7902 = vmatpush.msra.mxu0 %v7276
    %7903 = vmatpush.msra.mxu0 %v7269
    %7904 = vmatpush.msra.mxu0 %v7262
    %7905 = vmatpush.msra.mxu0 %v7255
    %7906 = vmatpush.msra.mxu0 %v7248
    %7907 = vmatpush.msra.mxu0 %v7241
    %7908 = vmatpush.msra.mxu0 %v7234
    %7909 = vmatmul.f32.gmra.mxu0 %v6883
    %v7910 = vpop.f32.mrf.mxu0
    %v7911 = vadd.f32 %v7882, %v7910
    %7912 = vmatmul.f32.gmra.mxu0 %v6886
    %v7913 = vpop.f32.mrf.mxu0
    %v7914 = vadd.f32 %v7885, %v7913
    %7915 = vmatmul.f32.gmra.mxu0 %v6889
    %v7916 = vpop.f32.mrf.mxu0
    %v7917 = vadd.f32 %v7888, %v7916
    %7918 = vmatmul.f32.gmra.mxu0 %v6892
    %v7919 = vpop.f32.mrf.mxu0
    %v7920 = vadd.f32 %v7891, %v7919
    %7921 = vdwg.mxu0
    %7922 = vmatpush.msra.mxu0 %v7004
    %7923 = vmatpush.msra.mxu0 %v6997
    %7924 = vmatpush.msra.mxu0 %v6990
    %7925 = vmatpush.msra.mxu0 %v6983
    %7926 = vmatpush.msra.mxu0 %v6976
    %7927 = vmatpush.msra.mxu0 %v6969
    %7928 = vmatpush.msra.mxu0 %v6962
    %7929 = vmatpush.msra.mxu0 %v6955
    %7930 = vmatpush.msra.mxu0 %v6948
    %7931 = vmatpush.msra.mxu0 %v6941
    %7932 = vmatpush.msra.mxu0 %v6934
    %7933 = vmatpush.msra.mxu0 %v6927
    %7934 = vmatpush.msra.mxu0 %v6920
    %7935 = vmatpush.msra.mxu0 %v6913
    %7936 = vmatpush.msra.mxu0 %v6906
    %7937 = vmatpush.msra.mxu0 %v6899
    %7938 = vmatmul.f32.gmra.mxu0 %v6796
    %v7939 = vpop.f32.mrf.mxu0
    %v7940 = vadd.f32 0.0, %v7939
    %7941 = vmatmul.f32.gmra.mxu0 %v6799
    %v7942 = vpop.f32.mrf.mxu0
    %v7943 = vadd.f32 0.0, %v7942
    %7944 = vmatmul.f32.gmra.mxu0 %v6802
    %v7945 = vpop.f32.mrf.mxu0
    %v7946 = vadd.f32 0.0, %v7945
    %7947 = vmatmul.f32.gmra.mxu0 %v6805
    %v7948 = vpop.f32.mrf.mxu0
    %v7949 = vadd.f32 0.0, %v7948
    %7950 = vdwg.mxu0
    %7951 = vmatpush.msra.mxu0 %v7116
    %7952 = vmatpush.msra.mxu0 %v7109
    %7953 = vmatpush.msra.mxu0 %v7102
    %7954 = vmatpush.msra.mxu0 %v7095
    %7955 = vmatpush.msra.mxu0 %v7088
    %7956 = vmatpush.msra.mxu0 %v7081
    %7957 = vmatpush.msra.mxu0 %v7074
    %7958 = vmatpush.msra.mxu0 %v7067
    %7959 = vmatpush.msra.mxu0 %v7060
    %7960 = vmatpush.msra.mxu0 %v7053
    %7961 = vmatpush.msra.mxu0 %v7046
    %7962 = vmatpush.msra.mxu0 %v7039
    %7963 = vmatpush.msra.mxu0 %v7032
    %7964 = vmatpush.msra.mxu0 %v7025
    %7965 = vmatpush.msra.mxu0 %v7018
    %7966 = vmatpush.msra.mxu0 %v7011
    %7967 = vmatmul.f32.gmra.mxu0 %v6825
    %v7968 = vpop.f32.mrf.mxu0
    %v7969 = vadd.f32 %v7940, %v7968
    %7970 = vmatmul.f32.gmra.mxu0 %v6828
    %v7971 = vpop.f32.mrf.mxu0
    %v7972 = vadd.f32 %v7943, %v7971
    %7973 = vmatmul.f32.gmra.mxu0 %v6831
    %v7974 = vpop.f32.mrf.mxu0
    %v7975 = vadd.f32 %v7946, %v7974
    %7976 = vmatmul.f32.gmra.mxu0 %v6834
    %v7977 = vpop.f32.mrf.mxu0
    %v7978 = vadd.f32 %v7949, %v7977
    %7979 = vdwg.mxu0
    %7980 = vmatpush.msra.mxu0 %v7228
    %7981 = vmatpush.msra.mxu0 %v7221
    %7982 = vmatpush.msra.mxu0 %v7214
    %7983 = vmatpush.msra.mxu0 %v7207
    %7984 = vmatpush.msra.mxu0 %v7200
    %7985 = vmatpush.msra.mxu0 %v7193
    %7986 = vmatpush.msra.mxu0 %v7186
    %7987 = vmatpush.msra.mxu0 %v7179
    %7988 = vmatpush.msra.mxu0 %v7172
    %7989 = vmatpush.msra.mxu0 %v7165
    %7990 = vmatpush.msra.mxu0 %v7158
    %7991 = vmatpush.msra.mxu0 %v7151
    %7992 = vmatpush.msra.mxu0 %v7144
    %7993 = vmatpush.msra.mxu0 %v7137
    %7994 = vmatpush.msra.mxu0 %v7130
    %7995 = vmatpush.msra.mxu0 %v7123
    %7996 = vmatmul.f32.gmra.mxu0 %v6854
    %v7997 = vpop.f32.mrf.mxu0
    %v7998 = vadd.f32 %v7969, %v7997
    %7999 = vmatmul.f32.gmra.mxu0 %v6857
    %v8000 = vpop.f32.mrf.mxu0
    %v8001 = vadd.f32 %v7972, %v8000
    %8002 = vmatmul.f32.gmra.mxu0 %v6860
    %v8003 = vpop.f32.mrf.mxu0
    %v8004 = vadd.f32 %v7975, %v8003
    %8005 = vmatmul.f32.gmra.mxu0 %v6863
    %v8006 = vpop.f32.mrf.mxu0
    %v8007 = vadd.f32 %v7978, %v8006
    %8008 = vdwg.mxu0
    %8009 = vmatpush.msra.mxu0 %v7340
    %8010 = vmatpush.msra.mxu0 %v7333
    %8011 = vmatpush.msra.mxu0 %v7326
    %8012 = vmatpush.msra.mxu0 %v7319
    %8013 = vmatpush.msra.mxu0 %v7312
    %8014 = vmatpush.msra.mxu0 %v7305
    %8015 = vmatpush.msra.mxu0 %v7298
    %8016 = vmatpush.msra.mxu0 %v7291
    %8017 = vmatpush.msra.mxu0 %v7284
    %8018 = vmatpush.msra.mxu0 %v7277
    %8019 = vmatpush.msra.mxu0 %v7270
    %8020 = vmatpush.msra.mxu0 %v7263
    %8021 = vmatpush.msra.mxu0 %v7256
    %8022 = vmatpush.msra.mxu0 %v7249
    %8023 = vmatpush.msra.mxu0 %v7242
    %8024 = vmatpush.msra.mxu0 %v7235
    %8025 = vmatmul.f32.gmra.mxu0 %v6883
    %v8026 = vpop.f32.mrf.mxu0
    %v8027 = vadd.f32 %v7998, %v8026
    %8028 = vmatmul.f32.gmra.mxu0 %v6886
    %v8029 = vpop.f32.mrf.mxu0
    %v8030 = vadd.f32 %v8001, %v8029
    %8031 = vmatmul.f32.gmra.mxu0 %v6889
    %v8032 = vpop.f32.mrf.mxu0
    %v8033 = vadd.f32 %v8004, %v8032
    %8034 = vmatmul.f32.gmra.mxu0 %v6892
    %v8035 = vpop.f32.mrf.mxu0
    %v8036 = vadd.f32 %v8007, %v8035
    %8037 = vdwg.mxu0
    %8038 = vmatpush.msra.mxu0 %v7005
    %8039 = vmatpush.msra.mxu0 %v6998
    %8040 = vmatpush.msra.mxu0 %v6991
    %8041 = vmatpush.msra.mxu0 %v6984
    %8042 = vmatpush.msra.mxu0 %v6977
    %8043 = vmatpush.msra.mxu0 %v6970
    %8044 = vmatpush.msra.mxu0 %v6963
    %8045 = vmatpush.msra.mxu0 %v6956
    %8046 = vmatpush.msra.mxu0 %v6949
    %8047 = vmatpush.msra.mxu0 %v6942
    %8048 = vmatpush.msra.mxu0 %v6935
    %8049 = vmatpush.msra.mxu0 %v6928
    %8050 = vmatpush.msra.mxu0 %v6921
    %8051 = vmatpush.msra.mxu0 %v6914
    %8052 = vmatpush.msra.mxu0 %v6907
    %8053 = vmatpush.msra.mxu0 %v6900
    %8054 = vmatmul.f32.gmra.mxu0 %v6796
    %v8055 = vpop.f32.mrf.mxu0
    %v8056 = vadd.f32 0.0, %v8055
    %8057 = vmatmul.f32.gmra.mxu0 %v6799
    %v8058 = vpop.f32.mrf.mxu0
    %v8059 = vadd.f32 0.0, %v8058
    %8060 = vmatmul.f32.gmra.mxu0 %v6802
    %v8061 = vpop.f32.mrf.mxu0
    %v8062 = vadd.f32 0.0, %v8061
    %8063 = vmatmul.f32.gmra.mxu0 %v6805
    %v8064 = vpop.f32.mrf.mxu0
    %v8065 = vadd.f32 0.0, %v8064
    %8066 = vdwg.mxu0
    %8067 = vmatpush.msra.mxu0 %v7117
    %8068 = vmatpush.msra.mxu0 %v7110
    %8069 = vmatpush.msra.mxu0 %v7103
    %8070 = vmatpush.msra.mxu0 %v7096
    %8071 = vmatpush.msra.mxu0 %v7089
    %8072 = vmatpush.msra.mxu0 %v7082
    %8073 = vmatpush.msra.mxu0 %v7075
    %8074 = vmatpush.msra.mxu0 %v7068
    %8075 = vmatpush.msra.mxu0 %v7061
    %8076 = vmatpush.msra.mxu0 %v7054
    %8077 = vmatpush.msra.mxu0 %v7047
    %8078 = vmatpush.msra.mxu0 %v7040
    %8079 = vmatpush.msra.mxu0 %v7033
    %8080 = vmatpush.msra.mxu0 %v7026
    %8081 = vmatpush.msra.mxu0 %v7019
    %8082 = vmatpush.msra.mxu0 %v7012
    %8083 = vmatmul.f32.gmra.mxu0 %v6825
    %v8084 = vpop.f32.mrf.mxu0
    %v8085 = vadd.f32 %v8056, %v8084
    %8086 = vmatmul.f32.gmra.mxu0 %v6828
    %v8087 = vpop.f32.mrf.mxu0
    %v8088 = vadd.f32 %v8059, %v8087
    %8089 = vmatmul.f32.gmra.mxu0 %v6831
    %v8090 = vpop.f32.mrf.mxu0
    %v8091 = vadd.f32 %v8062, %v8090
    %8092 = vmatmul.f32.gmra.mxu0 %v6834
    %v8093 = vpop.f32.mrf.mxu0
    %v8094 = vadd.f32 %v8065, %v8093
    %8095 = vdwg.mxu0
    %8096 = vmatpush.msra.mxu0 %v7229
    %8097 = vmatpush.msra.mxu0 %v7222
    %8098 = vmatpush.msra.mxu0 %v7215
    %8099 = vmatpush.msra.mxu0 %v7208
    %8100 = vmatpush.msra.mxu0 %v7201
    %8101 = vmatpush.msra.mxu0 %v7194
    %8102 = vmatpush.msra.mxu0 %v7187
    %8103 = vmatpush.msra.mxu0 %v7180
    %8104 = vmatpush.msra.mxu0 %v7173
    %8105 = vmatpush.msra.mxu0 %v7166
    %8106 = vmatpush.msra.mxu0 %v7159
    %8107 = vmatpush.msra.mxu0 %v7152
    %8108 = vmatpush.msra.mxu0 %v7145
    %8109 = vmatpush.msra.mxu0 %v7138
    %8110 = vmatpush.msra.mxu0 %v7131
    %8111 = vmatpush.msra.mxu0 %v7124
    %8112 = vmatmul.f32.gmra.mxu0 %v6854
    %v8113 = vpop.f32.mrf.mxu0
    %v8114 = vadd.f32 %v8085, %v8113
    %8115 = vmatmul.f32.gmra.mxu0 %v6857
    %v8116 = vpop.f32.mrf.mxu0
    %v8117 = vadd.f32 %v8088, %v8116
    %8118 = vmatmul.f32.gmra.mxu0 %v6860
    %v8119 = vpop.f32.mrf.mxu0
    %v8120 = vadd.f32 %v8091, %v8119
    %8121 = vmatmul.f32.gmra.mxu0 %v6863
    %v8122 = vpop.f32.mrf.mxu0
    %v8123 = vadd.f32 %v8094, %v8122
    %8124 = vdwg.mxu0
    %8125 = vmatpush.msra.mxu0 %v7341
    %8126 = vmatpush.msra.mxu0 %v7334
    %8127 = vmatpush.msra.mxu0 %v7327
    %8128 = vmatpush.msra.mxu0 %v7320
    %8129 = vmatpush.msra.mxu0 %v7313
    %8130 = vmatpush.msra.mxu0 %v7306
    %8131 = vmatpush.msra.mxu0 %v7299
    %8132 = vmatpush.msra.mxu0 %v7292
    %8133 = vmatpush.msra.mxu0 %v7285
    %8134 = vmatpush.msra.mxu0 %v7278
    %8135 = vmatpush.msra.mxu0 %v7271
    %8136 = vmatpush.msra.mxu0 %v7264
    %8137 = vmatpush.msra.mxu0 %v7257
    %8138 = vmatpush.msra.mxu0 %v7250
    %8139 = vmatpush.msra.mxu0 %v7243
    %8140 = vmatpush.msra.mxu0 %v7236
    %8141 = vmatmul.f32.gmra.mxu0 %v6883
    %v8142 = vpop.f32.mrf.mxu0
    %v8143 = vadd.f32 %v8114, %v8142
    %8144 = vmatmul.f32.gmra.mxu0 %v6886
    %v8145 = vpop.f32.mrf.mxu0
    %v8146 = vadd.f32 %v8117, %v8145
    %8147 = vmatmul.f32.gmra.mxu0 %v6889
    %v8148 = vpop.f32.mrf.mxu0
    %v8149 = vadd.f32 %v8120, %v8148
    %8150 = vmatmul.f32.gmra.mxu0 %v6892
    %v8151 = vpop.f32.mrf.mxu0
    %v8152 = vadd.f32 %v8123, %v8151
    %8153 = vdwg.mxu0
    %8154 = vst [vmem:[#allocation13] sm:$0xff] %v7447
    %8155 = vst [vmem:[#allocation13 + $0x8] sm:$0xff] %v7563
    %8156 = vst [vmem:[#allocation13 + $0x10] sm:$0xff] %v7679
    %8157 = vst [vmem:[#allocation13 + $0x18] sm:$0xff] %v7795
    %8158 = vst [vmem:[#allocation13 + $0x20] sm:$0xff] %v7911
    %8159 = vst [vmem:[#allocation13 + $0x28] sm:$0xff] %v8027
    %8160 = vst [vmem:[#allocation13 + $0x30] sm:$0xff] %v8143
    %8161 = vst [vmem:[#allocation13 + $0x38] sm:$0xff] %v7450
    %8162 = vst [vmem:[#allocation13 + $0x40] sm:$0xff] %v7566
    %8163 = vst [vmem:[#allocation13 + $0x48] sm:$0xff] %v7682
    %8164 = vst [vmem:[#allocation13 + $0x50] sm:$0xff] %v7798
    %8165 = vst [vmem:[#allocation13 + $0x58] sm:$0xff] %v7914
    %8166 = vst [vmem:[#allocation13 + $0x60] sm:$0xff] %v8030
    %8167 = vst [vmem:[#allocation13 + $0x68] sm:$0xff] %v8146
    %8168 = vst [vmem:[#allocation13 + $0x70] sm:$0xff] %v7453
    %8169 = vst [vmem:[#allocation13 + $0x78] sm:$0xff] %v7569
    %8170 = vst [vmem:[#allocation13 + $0x80] sm:$0xff] %v7685
    %8171 = vst [vmem:[#allocation13 + $0x88] sm:$0xff] %v7801
    %8172 = vst [vmem:[#allocation13 + $0x90] sm:$0xff] %v7917
    %8173 = vst [vmem:[#allocation13 + $0x98] sm:$0xff] %v8033
    %8174 = vst [vmem:[#allocation13 + $0xa0] sm:$0xff] %v8149
    %8175 = vst [vmem:[#allocation13 + $0xa8] sm:$0xf] %v7456
    %8176 = vst [vmem:[#allocation13 + $0xb0] sm:$0xf] %v7572
    %8177 = vst [vmem:[#allocation13 + $0xb8] sm:$0xf] %v7688
    %8178 = vst [vmem:[#allocation13 + $0xc0] sm:$0xf] %v7804
    %8179 = vst [vmem:[#allocation13 + $0xc8] sm:$0xf] %v7920
    %8180 = vst [vmem:[#allocation13 + $0xd0] sm:$0xf] %v8036
    %8181 = vst [vmem:[#allocation13 + $0xd8] sm:$0xf] %v8152
    // Predicated region
    $region46: #{tpu_custom_call.1} parent=1 // pred_check
      _
    $region47: #{tpu_custom_call.1} parent=1 // pred_check_branch
      %8183 = sbr.rel (0) target = $region49
    $region48: #{tpu_custom_call.1} parent=1 // pred_region
      %8185 = vsyncadd [#allocation5], 0
      %s8186 = sshll.u32 [#allocation13], 4
      %s8187 = int_to_ptr.vmem [resolvable:$true] %s8186
      %s8188 = sshll.u32 %s6, 4
      %s8189 = int_to_ptr.hbm [resolvable:$true] %s8188
      %8194 = dma.vmem_to_hbm [thread:$0]  %s8187, 3584, %s8189, [#allocation5], 896, 896, 56
    $region49: #{tpu_custom_call.1} parent=1 // pred_fallthru
      _
    // Predicated region
    $region50: #{tpu_custom_call.1} parent=1 // pred_check
      _
    $region51: #{tpu_custom_call.1} parent=1 // pred_check_branch
      %8196 = sbr.rel (0) target = $region53
    $region52: #{tpu_custom_call.1} parent=1 // pred_region
      %8198 = dma.done [#allocation5], 3584
    $region53: #{tpu_custom_call.1} parent=1 // pred_fallthru
      _
    %8199 = vsyncpa [#allocation4], 1
    %8200 = vsyncpa [#allocation11], 1
    %8201 = vsyncpa [#allocation5], 1
    %8202 = vsyncpa [#allocation6], 1
    %8203 = vsyncpa [#allocation9], 1

</llo_original>
